<compile_context>
chip_gen: v7x
topology: tpu7x:2x2x1
jax: 0.10.0
libtpu: 0.0.40
codegen_flags: <defaults>
</compile_context>

<pallas_src>
import functools

import jax
import jax.numpy as jnp
import numpy as np
from jax import lax
from jax.experimental import pallas as pl
from jax.experimental.pallas import tpu as pltpu


# -----------------------------------------------------------------------------
# Pallas kernel: one (batch-block, timestep) grid step of a fused ConvLSTM layer
# -----------------------------------------------------------------------------
def _convlstm_layer_kernel(x_ref, w_ref, b_ref, h_seq_ref, c_ref,
                           xh_pad_ref, xw_ref,
                           *, H, W, Cin, hidden, kh, kw):
    """Refs (per grid step):

    x_ref      : (H, W, Cin)            bf16  current frame
    w_ref      : (kh, kw*C, 4*hidden)   bf16  conv weights, K axis packs (dx, c)
    b_ref      : (1, 4*hidden)          f32   conv bias
    h_seq_ref  : (H, W, hidden)         bf16  output slot for h_t (indexed by t)
    c_ref      : (H, W, hidden)         f32   cell state, VMEM-resident across t
    xh_pad_ref : (H+2p, W+2p, C)        bf16  zero-padded concat([x_t, h_{t-1}])
    xw_ref     : ((H+2p)*W, kw*C)       bf16  dx-folded im2col rows
    """
    t = pl.program_id(1)
    p = kh // 2
    C = Cin + hidden
    Hp = H + 2 * p
    KW = kw * C
    M = H * W

    # ---- recurrence init: h_0 = c_0 = 0 (fresh for every batch block) ------
    @pl.when(t == 0)
    def _init():
        xh_pad_ref[...] = jnp.zeros_like(xh_pad_ref)   # zero halo + h region
        c_ref[...] = jnp.zeros_like(c_ref)

    # ---- place the current frame into the padded combined buffer -----------
    xh_pad_ref[p:p + H, p:p + W, 0:Cin] = x_ref[...]

    # ---- fold the kw taps into the contraction axis -------------------------
    # xw[yp*W + x, dx*C + c] = xh_pad[yp, x + dx, c]
    for dx in range(kw):
        shifted = xh_pad_ref[:, dx:dx + W, :].reshape(Hp * W, C)
        xw_ref[:, dx * C:(dx + 1) * C] = shifted

    # ---- convolution: kh MXU matmuls with K = kw*C --------------------------
    acc = jnp.zeros((M, 4 * hidden), jnp.float32)
    for dy in range(kh):
        lhs = xw_ref[dy * W:dy * W + M, :]             # rows (y+dy)*W + x
        acc = acc + jnp.dot(lhs, w_ref[dy],
                            preferred_element_type=jnp.float32)
    acc = acc + b_ref[...]

    # ---- fused LSTM gates (f32 elementwise; gate order i, f, o, g) ----------
    i = jax.nn.sigmoid(acc[:, 0 * hidden:1 * hidden])
    f = jax.nn.sigmoid(acc[:, 1 * hidden:2 * hidden])
    o = jax.nn.sigmoid(acc[:, 2 * hidden:3 * hidden])
    g = jnp.tanh(acc[:, 3 * hidden:4 * hidden])

    c_prev = c_ref[...].reshape(M, hidden)
    c_next = f * c_prev + i * g
    h_next = o * jnp.tanh(c_next)

    c_ref[...] = c_next.reshape(H, W, hidden)
    h_bf16 = h_next.astype(jnp.bfloat16).reshape(H, W, hidden)
    h_seq_ref[...] = h_bf16
    # stash h_t into the combined buffer (lanes [Cin, C)) for timestep t+1
    xh_pad_ref[p:p + H, p:p + W, Cin:C] = h_bf16


def convlstm_layer(x_seq, w, bias, hidden, kernel_size):
    """One ConvLSTM layer over the whole sequence.

    x_seq : (T, B, H, W, Cin) bf16
    w     : (kh, kw, Cin+hidden, 4*hidden) f32   (HWIO)
    bias  : (4*hidden,) f32
    returns (h_seq (T, B, H, W, hidden) bf16, c_T (B, H, W, hidden) f32)
    """
    T, B, H, W, Cin = x_seq.shape
    kh, kw = kernel_size
    p = kh // 2
    C = Cin + hidden
    Hp, Wp = H + 2 * p, W + 2 * p

    # (kh, kw, C, 4*hid) -> (kh, kw*C, 4*hid): K axis packs (dx, c), matches xw.
    wk = w.reshape(kh, kw * C, 4 * hidden).astype(jnp.bfloat16)
    b2 = bias.reshape(1, 4 * hidden).astype(jnp.float32)

    kernel = functools.partial(_convlstm_layer_kernel, H=H, W=W, Cin=Cin,
                               hidden=hidden, kh=kh, kw=kw)

    h_seq, c_last = pl.pallas_call(
        kernel,
        grid=(B, T),
        in_specs=[
            # current frame: streamed / pipelined over (b, t)
            pl.BlockSpec((None, None, H, W, Cin),
                         lambda b, t: (t, b, 0, 0, 0)),
            # weights & bias: t-invariant index map -> DMA'd once, VMEM-resident
            pl.BlockSpec((kh, kw * C, 4 * hidden), lambda b, t: (0, 0, 0)),
            pl.BlockSpec((1, 4 * hidden), lambda b, t: (0, 0)),
        ],
        out_specs=(
            # h_t written directly into its (t, b) slot of the sequence output
            pl.BlockSpec((None, None, H, W, hidden),
                         lambda b, t: (t, b, 0, 0, 0)),
            # cell state: accumulator pattern (index ignores t)
            pl.BlockSpec((None, H, W, hidden), lambda b, t: (b, 0, 0, 0)),
        ),
        out_shape=(
            jax.ShapeDtypeStruct((T, B, H, W, hidden), jnp.bfloat16),
            jax.ShapeDtypeStruct((B, H, W, hidden), jnp.float32),
        ),
        scratch_shapes=[
            pltpu.VMEM((Hp, Wp, C), jnp.bfloat16),       # padded concat([x, h])
            pltpu.VMEM((Hp * W, kw * C), jnp.bfloat16),  # dx-folded im2col rows
        ],
        compiler_params=pltpu.CompilerParams(
            dimension_semantics=("parallel", "arbitrary"),
            vmem_limit_bytes=32 * 1024 * 1024,
        ),
    )(x_seq, wk, b2)
    return h_seq, c_last


# -----------------------------------------------------------------------------
# Multi-layer ConvLSTM wrapper (plain-JAX glue; PyTorch NCHW layouts outside)
# -----------------------------------------------------------------------------
def init_convlstm_params(key, input_dim, hidden_dims, kernel_sizes):
    """Deterministic parameter init. Conv weights stored in HWIO layout."""
    params = []
    cur_in = input_dim
    for layer, (hid, (kh, kw)) in enumerate(zip(hidden_dims, kernel_sizes)):
        wkey, bkey = jax.random.split(jax.random.fold_in(key, layer))
        cin = cur_in + hid
        fan_in = cin * kh * kw
        bound = 1.0 / np.sqrt(fan_in)
        w = jax.random.uniform(wkey, (kh, kw, cin, 4 * hid),
                               jnp.float32, -bound, bound)
        b = jax.random.uniform(bkey, (4 * hid,), jnp.float32, -bound, bound)
        params.append((w, b))
        cur_in = hid
    return params


def convlstm_forward(x, params, hidden_dims, kernel_sizes):
    """x: (B, T, Cin, H, W) NCHW frames (batch_first=True).

    Returns (last_layer_output_seq, (h_n, c_n)) with PyTorch layouts:
      last_layer_output_seq : (B, T, Chid_last, H, W)
      h_n, c_n              : (num_layers, B, Chid, H, W)
    """
    B, T, _, H, W = x.shape
    # NCHW frames -> time-major NHWC bf16 (MXU operand dtype).
    cur = jnp.transpose(x, (1, 0, 3, 4, 2)).astype(jnp.bfloat16)  # (T,B,H,W,C)

    h_last, c_last = [], []
    for hid, ks, (w, b) in zip(hidden_dims, kernel_sizes, params):
        cur, c_T = convlstm_layer(cur, w, b, hid, ks)
        h_last.append(cur[-1])          # h at t = T-1, (B, H, W, hid) bf16
        c_last.append(c_T)              # (B, H, W, hid) f32

    layer_out = jnp.transpose(cur.astype(jnp.float32), (1, 0, 4, 2, 3))
    h_n = jnp.stack([jnp.transpose(h.astype(jnp.float32), (0, 3, 1, 2))
                     for h in h_last], axis=0)
    c_n = jnp.stack([jnp.transpose(c, (0, 3, 1, 2)) for c in c_last], axis=0)
    return layer_out, (h_n, c_n)


# -----------------------------------------------------------------------------
# Pure-JAX reference (lax.conv, same bf16 matmul-operand precision) for checking
# -----------------------------------------------------------------------------
def _reference_forward(x, params, hidden_dims, kernel_sizes):
    B, T, _, H, W = x.shape
    cur = jnp.transpose(x, (0, 1, 3, 4, 2)).astype(jnp.bfloat16)  # (B,T,H,W,C)
    h_last, c_last = [], []
    for hid, (kh, kw), (w, b) in zip(hidden_dims, kernel_sizes, params):
        wb = w.astype(jnp.bfloat16)
        h = jnp.zeros((B, H, W, hid), jnp.float32)
        c = jnp.zeros((B, H, W, hid), jnp.float32)
        outs = []
        for t in range(T):
            combined = jnp.concatenate([cur[:, t], h.astype(jnp.bfloat16)],
                                       axis=-1)
            conv = lax.conv_general_dilated(
                combined, wb, window_strides=(1, 1), padding="SAME",
                dimension_numbers=("NHWC", "HWIO", "NHWC"),
                preferred_element_type=jnp.float32)
            conv = conv + b.reshape(1, 1, 1, -1)
            i = jax.nn.sigmoid(conv[..., 0 * hid:1 * hid])
            f = jax.nn.sigmoid(conv[..., 1 * hid:2 * hid])
            o = jax.nn.sigmoid(conv[..., 2 * hid:3 * hid])
            g = jnp.tanh(conv[..., 3 * hid:4 * hid])
            c = f * c + i * g
            h = o * jnp.tanh(c)
            outs.append(h)
        cur = jnp.stack(outs, axis=1).astype(jnp.bfloat16)
        h_last.append(h)
        c_last.append(c)
    layer_out = jnp.transpose(cur.astype(jnp.float32), (0, 1, 4, 2, 3))
    h_n = jnp.stack([jnp.transpose(h, (0, 3, 1, 2)) for h in h_last], axis=0)
    c_n = jnp.stack([jnp.transpose(c, (0, 3, 1, 2)) for c in c_last], axis=0)
    return layer_out, (h_n, c_n)


if __name__ == "__main__":
    # Small config consistent with the module: 2 layers, 3x3 kernels.
    B, T, Cin, H, W = 2, 8, 4, 16, 16
    hidden_dims = [32, 32]
    kernel_sizes = [(3, 3), (3, 3)]

    key = jax.random.PRNGKey(0)
    x_key, p_key = jax.random.split(key)
    x = jax.random.normal(x_key, (B, T, Cin, H, W), jnp.float32)
    params = init_convlstm_params(p_key, Cin, hidden_dims, kernel_sizes)

    fwd = jax.jit(lambda xx, pp: convlstm_forward(xx, pp, hidden_dims,
                                                  kernel_sizes))
    out_seq, (h_n, c_n) = fwd(x, params)
    out_seq = jax.block_until_ready(out_seq)
    h_n = jax.block_until_ready(h_n)
    c_n = jax.block_until_ready(c_n)

    assert out_seq.shape == (B, T, hidden_dims[-1], H, W)
    assert h_n.shape == (len(hidden_dims), B, hidden_dims[-1], H, W)
    assert c_n.shape == (len(hidden_dims), B, hidden_dims[-1], H, W)

    # Cross-check against the pure-JAX reference implementation.
    ref_seq, (ref_h, ref_c) = _reference_forward(x, params, hidden_dims,
                                                 kernel_sizes)
    np.testing.assert_allclose(np.asarray(out_seq), np.asarray(ref_seq),
                               rtol=1e-2, atol=1e-2)
    np.testing.assert_allclose(np.asarray(h_n), np.asarray(ref_h),
                               rtol=1e-2, atol=1e-2)
    np.testing.assert_allclose(np.asarray(c_n), np.asarray(ref_c),
                               rtol=1e-2, atol=1e-2)

    print("KERNEL_OK")
</pallas_src>

<mosaic_0001>
module attributes {stable_mosaic.version = 11 : i64} {
  func.func @_convlstm_layer_kernel(%arg0: i32, %arg1: i32, %arg2: memref<1x1x16x16x4xbf16, #tpu.memory_space<vmem>>, %arg3: memref<3x108x128xbf16, #tpu.memory_space<vmem>>, %arg4: memref<1x128xf32, #tpu.memory_space<vmem>>, %arg5: memref<1x1x16x16x32xbf16, #tpu.memory_space<vmem>>, %arg6: memref<1x16x16x32xf32, #tpu.memory_space<vmem>>, %arg7: memref<18x18x36xbf16, #tpu.memory_space<vmem>>, %arg8: memref<288x108xbf16, #tpu.memory_space<vmem>>) attributes {dimension_semantics = [#tpu.dimension_semantics<parallel>, #tpu.dimension_semantics<arbitrary>], iteration_bounds = array<i64: 2, 8>, scalar_prefetch = 0 : i64, scratch_operands = 2 : i64, tpu.core_type = #tpu.core_type<tc>, window_params = [{transform_indices = @transform_0, window_bounds = array<i64: 1, 1, 16, 16, 4>}, {pipeline_mode = #tpu.pipeline_mode<synchronous>, transform_indices = @transform_1, window_bounds = array<i64: 3, 108, 128>}, {pipeline_mode = #tpu.pipeline_mode<synchronous>, transform_indices = @transform_2, window_bounds = array<i64: 1, 128>}, {transform_indices = @transform_3, window_bounds = array<i64: 1, 1, 16, 16, 32>}, {transform_indices = @transform_4, window_bounds = array<i64: 1, 16, 16, 32>}]} {
    %c0_i32 = arith.constant 0 : i32
    %0 = arith.cmpi eq, %arg1, %c0_i32 : i32
    %1 = arith.extui %0 : i1 to i32
    %c0_i32_0 = arith.constant 0 : i32
    %2 = arith.cmpi ne, %1, %c0_i32_0 : i32
    scf.if %2 {
      %cst_55 = arith.constant 0.000000e+00 : bf16
      %72 = vector.broadcast %cst_55 : bf16 to vector<18x18x36xbf16>
      %c0_56 = arith.constant 0 : index
      %c0_57 = arith.constant 0 : index
      %c0_58 = arith.constant 0 : index
      %73 = vector.load %arg7[%c0_56, %c0_57, %c0_58] : memref<18x18x36xbf16, #tpu.memory_space<vmem>>, vector<18x18x36xbf16>
      tpu.vector_store %arg7[%c0_56, %c0_57, %c0_58], %72 {strides = array<i32>} : memref<18x18x36xbf16, #tpu.memory_space<vmem>>, vector<18x18x36xbf16>,
      %cst_59 = arith.constant 0.000000e+00 : f32
      %74 = vector.broadcast %cst_59 : f32 to vector<16x16x32xf32>
      %c0_60 = arith.constant 0 : index
      %c0_61 = arith.constant 0 : index
      %c0_62 = arith.constant 0 : index
      %c0_63 = arith.constant 0 : index
      %75 = vector.load %arg6[%c0_60, %c0_61, %c0_62, %c0_63] : memref<1x16x16x32xf32, #tpu.memory_space<vmem>>, vector<1x16x16x32xf32>
      %76 = vector.shape_cast %75 : vector<1x16x16x32xf32> to vector<16x16x32xf32>
      %77 = vector.shape_cast %74 : vector<16x16x32xf32> to vector<1x16x16x32xf32>
      tpu.vector_store %arg6[%c0_60, %c0_61, %c0_62, %c0_63], %77 {strides = array<i32>} : memref<1x16x16x32xf32, #tpu.memory_space<vmem>>, vector<1x16x16x32xf32>,
    } else {
    }
    %c0 = arith.constant 0 : index
    %c0_1 = arith.constant 0 : index
    %c0_2 = arith.constant 0 : index
    %c0_3 = arith.constant 0 : index
    %c0_4 = arith.constant 0 : index
    %3 = vector.load %arg2[%c0, %c0_1, %c0_2, %c0_3, %c0_4] : memref<1x1x16x16x4xbf16, #tpu.memory_space<vmem>>, vector<1x1x16x16x4xbf16>
    %4 = vector.shape_cast %3 : vector<1x1x16x16x4xbf16> to vector<16x16x4xbf16>
    %c1 = arith.constant 1 : index
    %c1_5 = arith.constant 1 : index
    %c0_6 = arith.constant 0 : index
    %5 = vector.load %arg7[%c1, %c1_5, %c0_6] : memref<18x18x36xbf16, #tpu.memory_space<vmem>>, vector<16x16x4xbf16>
    tpu.vector_store %arg7[%c1, %c1_5, %c0_6], %4 {strides = array<i32>} : memref<18x18x36xbf16, #tpu.memory_space<vmem>>, vector<16x16x4xbf16>,
    %c0_7 = arith.constant 0 : index
    %c0_8 = arith.constant 0 : index
    %c0_9 = arith.constant 0 : index
    %6 = vector.load %arg7[%c0_7, %c0_8, %c0_9] : memref<18x18x36xbf16, #tpu.memory_space<vmem>>, vector<18x16x36xbf16>
    %7 = vector.shape_cast %6 : vector<18x16x36xbf16> to vector<288x36xbf16>
    %c0_10 = arith.constant 0 : index
    %c0_11 = arith.constant 0 : index
    %8 = vector.load %arg8[%c0_10, %c0_11] : memref<288x108xbf16, #tpu.memory_space<vmem>>, vector<288x36xbf16>
    tpu.vector_store %arg8[%c0_10, %c0_11], %7 {strides = array<i32>} : memref<288x108xbf16, #tpu.memory_space<vmem>>, vector<288x36xbf16>,
    %c0_12 = arith.constant 0 : index
    %c1_13 = arith.constant 1 : index
    %c0_14 = arith.constant 0 : index
    %9 = vector.load %arg7[%c0_12, %c1_13, %c0_14] : memref<18x18x36xbf16, #tpu.memory_space<vmem>>, vector<18x16x36xbf16>
    %10 = vector.shape_cast %9 : vector<18x16x36xbf16> to vector<288x36xbf16>
    %c0_15 = arith.constant 0 : index
    %c36 = arith.constant 36 : index
    %11 = vector.load %arg8[%c0_15, %c36] : memref<288x108xbf16, #tpu.memory_space<vmem>>, vector<288x36xbf16>
    tpu.vector_store %arg8[%c0_15, %c36], %10 {strides = array<i32>} : memref<288x108xbf16, #tpu.memory_space<vmem>>, vector<288x36xbf16>,
    %c0_16 = arith.constant 0 : index
    %c2 = arith.constant 2 : index
    %c0_17 = arith.constant 0 : index
    %12 = vector.load %arg7[%c0_16, %c2, %c0_17] : memref<18x18x36xbf16, #tpu.memory_space<vmem>>, vector<18x16x36xbf16>
    %13 = vector.shape_cast %12 : vector<18x16x36xbf16> to vector<288x36xbf16>
    %c0_18 = arith.constant 0 : index
    %c72 = arith.constant 72 : index
    %14 = vector.load %arg8[%c0_18, %c72] : memref<288x108xbf16, #tpu.memory_space<vmem>>, vector<288x36xbf16>
    tpu.vector_store %arg8[%c0_18, %c72], %13 {strides = array<i32>} : memref<288x108xbf16, #tpu.memory_space<vmem>>, vector<288x36xbf16>,
    %cst = arith.constant 0.000000e+00 : f32
    %15 = vector.broadcast %cst : f32 to vector<256x128xf32>
    %c0_19 = arith.constant 0 : index
    %c0_20 = arith.constant 0 : index
    %16 = vector.load %arg8[%c0_19, %c0_20] : memref<288x108xbf16, #tpu.memory_space<vmem>>, vector<256x108xbf16>
    %c0_21 = arith.constant 0 : index
    %c0_22 = arith.constant 0 : index
    %c0_23 = arith.constant 0 : index
    %17 = vector.load %arg3[%c0_21, %c0_22, %c0_23] : memref<3x108x128xbf16, #tpu.memory_space<vmem>>, vector<1x108x128xbf16>
    %18 = vector.shape_cast %17 : vector<1x108x128xbf16> to vector<108x128xbf16>
    %cst_24 = arith.constant dense<0.000000e+00> : vector<256x128xf32>
    %19 = tpu.matmul %16, %18, %cst_24 {dimension_numbers = #tpu.dot_dimension_numbers<[1], [0], [0], [1], [0, 0, 1, 1], [], []>} : vector<256x108xbf16>, vector<108x128xbf16>, vector<256x128xf32> -> vector<256x128xf32>
    %20 = arith.addf %15, %19 : vector<256x128xf32>
    %c16 = arith.constant 16 : index
    %c0_25 = arith.constant 0 : index
    %21 = vector.load %arg8[%c16, %c0_25] : memref<288x108xbf16, #tpu.memory_space<vmem>>, vector<256x108xbf16>
    %c1_26 = arith.constant 1 : index
    %c0_27 = arith.constant 0 : index
    %c0_28 = arith.constant 0 : index
    %22 = vector.load %arg3[%c1_26, %c0_27, %c0_28] : memref<3x108x128xbf16, #tpu.memory_space<vmem>>, vector<1x108x128xbf16>
    %23 = vector.shape_cast %22 : vector<1x108x128xbf16> to vector<108x128xbf16>
    %cst_29 = arith.constant dense<0.000000e+00> : vector<256x128xf32>
    %24 = tpu.matmul %21, %23, %cst_29 {dimension_numbers = #tpu.dot_dimension_numbers<[1], [0], [0], [1], [0, 0, 1, 1], [], []>} : vector<256x108xbf16>, vector<108x128xbf16>, vector<256x128xf32> -> vector<256x128xf32>
    %25 = arith.addf %20, %24 : vector<256x128xf32>
    %c32 = arith.constant 32 : index
    %c0_30 = arith.constant 0 : index
    %26 = vector.load %arg8[%c32, %c0_30] : memref<288x108xbf16, #tpu.memory_space<vmem>>, vector<256x108xbf16>
    %c2_31 = arith.constant 2 : index
    %c0_32 = arith.constant 0 : index
    %c0_33 = arith.constant 0 : index
    %27 = vector.load %arg3[%c2_31, %c0_32, %c0_33] : memref<3x108x128xbf16, #tpu.memory_space<vmem>>, vector<1x108x128xbf16>
    %28 = vector.shape_cast %27 : vector<1x108x128xbf16> to vector<108x128xbf16>
    %cst_34 = arith.constant dense<0.000000e+00> : vector<256x128xf32>
    %29 = tpu.matmul %26, %28, %cst_34 {dimension_numbers = #tpu.dot_dimension_numbers<[1], [0], [0], [1], [0, 0, 1, 1], [], []>} : vector<256x108xbf16>, vector<108x128xbf16>, vector<256x128xf32> -> vector<256x128xf32>
    %30 = arith.addf %25, %29 : vector<256x128xf32>
    %c0_35 = arith.constant 0 : index
    %c0_36 = arith.constant 0 : index
    %31 = vector.load %arg4[%c0_35, %c0_36] : memref<1x128xf32, #tpu.memory_space<vmem>>, vector<1x128xf32>
    %32 = vector.broadcast %31 : vector<1x128xf32> to vector<256x128xf32>
    %33 = arith.addf %30, %32 : vector<256x128xf32>
    %34 = vector.extract_strided_slice %33 {offsets = [0, 0], sizes = [256, 32], strides = [1, 1]} : vector<256x128xf32> to vector<256x32xf32>
    %35 = arith.negf %34 : vector<256x32xf32>
    %36 = math.exp %35 : vector<256x32xf32>
    %cst_37 = arith.constant 1.000000e+00 : f32
    %37 = vector.broadcast %cst_37 : f32 to vector<256x32xf32>
    %38 = arith.addf %37, %36 : vector<256x32xf32>
    %39 = arith.divf %37, %38 : vector<256x32xf32>
    %40 = vector.extract_strided_slice %33 {offsets = [0, 32], sizes = [256, 32], strides = [1, 1]} : vector<256x128xf32> to vector<256x32xf32>
    %41 = arith.negf %40 : vector<256x32xf32>
    %42 = math.exp %41 : vector<256x32xf32>
    %cst_38 = arith.constant 1.000000e+00 : f32
    %43 = vector.broadcast %cst_38 : f32 to vector<256x32xf32>
    %44 = arith.addf %43, %42 : vector<256x32xf32>
    %45 = arith.divf %43, %44 : vector<256x32xf32>
    %46 = vector.extract_strided_slice %33 {offsets = [0, 64], sizes = [256, 32], strides = [1, 1]} : vector<256x128xf32> to vector<256x32xf32>
    %47 = arith.negf %46 : vector<256x32xf32>
    %48 = math.exp %47 : vector<256x32xf32>
    %cst_39 = arith.constant 1.000000e+00 : f32
    %49 = vector.broadcast %cst_39 : f32 to vector<256x32xf32>
    %50 = arith.addf %49, %48 : vector<256x32xf32>
    %51 = arith.divf %49, %50 : vector<256x32xf32>
    %52 = vector.extract_strided_slice %33 {offsets = [0, 96], sizes = [256, 32], strides = [1, 1]} : vector<256x128xf32> to vector<256x32xf32>
    %53 = math.tanh %52 : vector<256x32xf32>
    %c0_40 = arith.constant 0 : index
    %c0_41 = arith.constant 0 : index
    %c0_42 = arith.constant 0 : index
    %c0_43 = arith.constant 0 : index
    %54 = vector.load %arg6[%c0_40, %c0_41, %c0_42, %c0_43] : memref<1x16x16x32xf32, #tpu.memory_space<vmem>>, vector<1x16x16x32xf32>
    %55 = vector.shape_cast %54 : vector<1x16x16x32xf32> to vector<16x16x32xf32>
    %56 = vector.shape_cast %55 : vector<16x16x32xf32> to vector<256x32xf32>
    %57 = arith.mulf %45, %56 : vector<256x32xf32>
    %58 = arith.mulf %39, %53 : vector<256x32xf32>
    %59 = arith.addf %57, %58 : vector<256x32xf32>
    %60 = math.tanh %59 : vector<256x32xf32>
    %61 = arith.mulf %51, %60 : vector<256x32xf32>
    %62 = vector.shape_cast %59 : vector<256x32xf32> to vector<16x16x32xf32>
    %c0_44 = arith.constant 0 : index
    %c0_45 = arith.constant 0 : index
    %c0_46 = arith.constant 0 : index
    %c0_47 = arith.constant 0 : index
    %63 = vector.load %arg6[%c0_44, %c0_45, %c0_46, %c0_47] : memref<1x16x16x32xf32, #tpu.memory_space<vmem>>, vector<1x16x16x32xf32>
    %64 = vector.shape_cast %63 : vector<1x16x16x32xf32> to vector<16x16x32xf32>
    %65 = vector.shape_cast %62 : vector<16x16x32xf32> to vector<1x16x16x32xf32>
    tpu.vector_store %arg6[%c0_44, %c0_45, %c0_46, %c0_47], %65 {strides = array<i32>} : memref<1x16x16x32xf32, #tpu.memory_space<vmem>>, vector<1x16x16x32xf32>,
    %66 = arith.truncf %61 : vector<256x32xf32> to vector<256x32xbf16>
    %67 = vector.shape_cast %66 : vector<256x32xbf16> to vector<16x16x32xbf16>
    %c0_48 = arith.constant 0 : index
    %c0_49 = arith.constant 0 : index
    %c0_50 = arith.constant 0 : index
    %c0_51 = arith.constant 0 : index
    %c0_52 = arith.constant 0 : index
    %68 = vector.load %arg5[%c0_48, %c0_49, %c0_50, %c0_51, %c0_52] : memref<1x1x16x16x32xbf16, #tpu.memory_space<vmem>>, vector<1x1x16x16x32xbf16>
    %69 = vector.shape_cast %68 : vector<1x1x16x16x32xbf16> to vector<16x16x32xbf16>
    %70 = vector.shape_cast %67 : vector<16x16x32xbf16> to vector<1x1x16x16x32xbf16>
    tpu.vector_store %arg5[%c0_48, %c0_49, %c0_50, %c0_51, %c0_52], %70 {strides = array<i32>} : memref<1x1x16x16x32xbf16, #tpu.memory_space<vmem>>, vector<1x1x16x16x32xbf16>,
    %c1_53 = arith.constant 1 : index
    %c1_54 = arith.constant 1 : index
    %c4 = arith.constant 4 : index
    %71 = vector.load %arg7[%c1_53, %c1_54, %c4] : memref<18x18x36xbf16, #tpu.memory_space<vmem>>, vector<16x16x32xbf16>
    tpu.vector_store %arg7[%c1_53, %c1_54, %c4], %67 {strides = array<i32>} : memref<18x18x36xbf16, #tpu.memory_space<vmem>>, vector<16x16x32xbf16>,
    return
  }
  func.func @transform_0(%arg0: i32, %arg1: i32) -> (i32, i32, i32, i32, i32) {
    %c0_i32 = arith.constant 0 : i32
    %c0_i32_0 = arith.constant 0 : i32
    %c0_i32_1 = arith.constant 0 : i32
    %c0_i32_2 = arith.constant 0 : i32
    return %arg1, %arg0, %c0_i32, %c0_i32_0, %c0_i32_1 : i32, i32, i32, i32, i32
  }
  func.func @transform_1(%arg0: i32, %arg1: i32) -> (i32, i32, i32) {
    %c0_i32 = arith.constant 0 : i32
    %c0_i32_0 = arith.constant 0 : i32
    %c0_i32_1 = arith.constant 0 : i32
    %c0_i32_2 = arith.constant 0 : i32
    return %c0_i32, %c0_i32_0, %c0_i32_1 : i32, i32, i32
  }
  func.func @transform_2(%arg0: i32, %arg1: i32) -> (i32, i32) {
    %c0_i32 = arith.constant 0 : i32
    %c0_i32_0 = arith.constant 0 : i32
    %c0_i32_1 = arith.constant 0 : i32
    return %c0_i32, %c0_i32_0 : i32, i32
  }
  func.func @transform_3(%arg0: i32, %arg1: i32) -> (i32, i32, i32, i32, i32) {
    %c0_i32 = arith.constant 0 : i32
    %c0_i32_0 = arith.constant 0 : i32
    %c0_i32_1 = arith.constant 0 : i32
    %c0_i32_2 = arith.constant 0 : i32
    return %arg1, %arg0, %c0_i32, %c0_i32_0, %c0_i32_1 : i32, i32, i32, i32, i32
  }
  func.func @transform_4(%arg0: i32, %arg1: i32) -> (i32, i32, i32, i32) {
    %c0_i32 = arith.constant 0 : i32
    %c0_i32_0 = arith.constant 0 : i32
    %c0_i32_1 = arith.constant 0 : i32
    %c0_i32_2 = arith.constant 0 : i32
    return %arg0, %c0_i32, %c0_i32_0, %c0_i32_1 : i32, i32, i32, i32
  }
}

module attributes {stable_mosaic.version = 11 : i64} {
  func.func @_convlstm_layer_kernel(%arg0: i32, %arg1: i32, %arg2: memref<1x1x16x16x32xbf16, #tpu.memory_space<vmem>>, %arg3: memref<3x192x128xbf16, #tpu.memory_space<vmem>>, %arg4: memref<1x128xf32, #tpu.memory_space<vmem>>, %arg5: memref<1x1x16x16x32xbf16, #tpu.memory_space<vmem>>, %arg6: memref<1x16x16x32xf32, #tpu.memory_space<vmem>>, %arg7: memref<18x18x64xbf16, #tpu.memory_space<vmem>>, %arg8: memref<288x192xbf16, #tpu.memory_space<vmem>>) attributes {dimension_semantics = [#tpu.dimension_semantics<parallel>, #tpu.dimension_semantics<arbitrary>], iteration_bounds = array<i64: 2, 8>, scalar_prefetch = 0 : i64, scratch_operands = 2 : i64, tpu.core_type = #tpu.core_type<tc>, window_params = [{transform_indices = @transform_0, window_bounds = array<i64: 1, 1, 16, 16, 32>}, {pipeline_mode = #tpu.pipeline_mode<synchronous>, transform_indices = @transform_1, window_bounds = array<i64: 3, 192, 128>}, {pipeline_mode = #tpu.pipeline_mode<synchronous>, transform_indices = @transform_2, window_bounds = array<i64: 1, 128>}, {transform_indices = @transform_3, window_bounds = array<i64: 1, 1, 16, 16, 32>}, {transform_indices = @transform_4, window_bounds = array<i64: 1, 16, 16, 32>}]} {
    %c0_i32 = arith.constant 0 : i32
    %0 = arith.cmpi eq, %arg1, %c0_i32 : i32
    %1 = arith.extui %0 : i1 to i32
    %c0_i32_0 = arith.constant 0 : i32
    %2 = arith.cmpi ne, %1, %c0_i32_0 : i32
    scf.if %2 {
      %cst_56 = arith.constant 0.000000e+00 : bf16
      %72 = vector.broadcast %cst_56 : bf16 to vector<18x18x64xbf16>
      %c0_57 = arith.constant 0 : index
      %c0_58 = arith.constant 0 : index
      %c0_59 = arith.constant 0 : index
      %73 = vector.load %arg7[%c0_57, %c0_58, %c0_59] : memref<18x18x64xbf16, #tpu.memory_space<vmem>>, vector<18x18x64xbf16>
      tpu.vector_store %arg7[%c0_57, %c0_58, %c0_59], %72 {strides = array<i32>} : memref<18x18x64xbf16, #tpu.memory_space<vmem>>, vector<18x18x64xbf16>,
      %cst_60 = arith.constant 0.000000e+00 : f32
      %74 = vector.broadcast %cst_60 : f32 to vector<16x16x32xf32>
      %c0_61 = arith.constant 0 : index
      %c0_62 = arith.constant 0 : index
      %c0_63 = arith.constant 0 : index
      %c0_64 = arith.constant 0 : index
      %75 = vector.load %arg6[%c0_61, %c0_62, %c0_63, %c0_64] : memref<1x16x16x32xf32, #tpu.memory_space<vmem>>, vector<1x16x16x32xf32>
      %76 = vector.shape_cast %75 : vector<1x16x16x32xf32> to vector<16x16x32xf32>
      %77 = vector.shape_cast %74 : vector<16x16x32xf32> to vector<1x16x16x32xf32>
      tpu.vector_store %arg6[%c0_61, %c0_62, %c0_63, %c0_64], %77 {strides = array<i32>} : memref<1x16x16x32xf32, #tpu.memory_space<vmem>>, vector<1x16x16x32xf32>,
    } else {
    }
    %c0 = arith.constant 0 : index
    %c0_1 = arith.constant 0 : index
    %c0_2 = arith.constant 0 : index
    %c0_3 = arith.constant 0 : index
    %c0_4 = arith.constant 0 : index
    %3 = vector.load %arg2[%c0, %c0_1, %c0_2, %c0_3, %c0_4] : memref<1x1x16x16x32xbf16, #tpu.memory_space<vmem>>, vector<1x1x16x16x32xbf16>
    %4 = vector.shape_cast %3 : vector<1x1x16x16x32xbf16> to vector<16x16x32xbf16>
    %c1 = arith.constant 1 : index
    %c1_5 = arith.constant 1 : index
    %c0_6 = arith.constant 0 : index
    %5 = vector.load %arg7[%c1, %c1_5, %c0_6] : memref<18x18x64xbf16, #tpu.memory_space<vmem>>, vector<16x16x32xbf16>
    tpu.vector_store %arg7[%c1, %c1_5, %c0_6], %4 {strides = array<i32>} : memref<18x18x64xbf16, #tpu.memory_space<vmem>>, vector<16x16x32xbf16>,
    %c0_7 = arith.constant 0 : index
    %c0_8 = arith.constant 0 : index
    %c0_9 = arith.constant 0 : index
    %6 = vector.load %arg7[%c0_7, %c0_8, %c0_9] : memref<18x18x64xbf16, #tpu.memory_space<vmem>>, vector<18x16x64xbf16>
    %7 = vector.shape_cast %6 : vector<18x16x64xbf16> to vector<288x64xbf16>
    %c0_10 = arith.constant 0 : index
    %c0_11 = arith.constant 0 : index
    %8 = vector.load %arg8[%c0_10, %c0_11] : memref<288x192xbf16, #tpu.memory_space<vmem>>, vector<288x64xbf16>
    tpu.vector_store %arg8[%c0_10, %c0_11], %7 {strides = array<i32>} : memref<288x192xbf16, #tpu.memory_space<vmem>>, vector<288x64xbf16>,
    %c0_12 = arith.constant 0 : index
    %c1_13 = arith.constant 1 : index
    %c0_14 = arith.constant 0 : index
    %9 = vector.load %arg7[%c0_12, %c1_13, %c0_14] : memref<18x18x64xbf16, #tpu.memory_space<vmem>>, vector<18x16x64xbf16>
    %10 = vector.shape_cast %9 : vector<18x16x64xbf16> to vector<288x64xbf16>
    %c0_15 = arith.constant 0 : index
    %c64 = arith.constant 64 : index
    %11 = vector.load %arg8[%c0_15, %c64] : memref<288x192xbf16, #tpu.memory_space<vmem>>, vector<288x64xbf16>
    tpu.vector_store %arg8[%c0_15, %c64], %10 {strides = array<i32>} : memref<288x192xbf16, #tpu.memory_space<vmem>>, vector<288x64xbf16>,
    %c0_16 = arith.constant 0 : index
    %c2 = arith.constant 2 : index
    %c0_17 = arith.constant 0 : index
    %12 = vector.load %arg7[%c0_16, %c2, %c0_17] : memref<18x18x64xbf16, #tpu.memory_space<vmem>>, vector<18x16x64xbf16>
    %13 = vector.shape_cast %12 : vector<18x16x64xbf16> to vector<288x64xbf16>
    %c0_18 = arith.constant 0 : index
    %c128 = arith.constant 128 : index
    %14 = vector.load %arg8[%c0_18, %c128] : memref<288x192xbf16, #tpu.memory_space<vmem>>, vector<288x64xbf16>
    tpu.vector_store %arg8[%c0_18, %c128], %13 {strides = array<i32>} : memref<288x192xbf16, #tpu.memory_space<vmem>>, vector<288x64xbf16>,
    %cst = arith.constant 0.000000e+00 : f32
    %15 = vector.broadcast %cst : f32 to vector<256x128xf32>
    %c0_19 = arith.constant 0 : index
    %c0_20 = arith.constant 0 : index
    %16 = vector.load %arg8[%c0_19, %c0_20] : memref<288x192xbf16, #tpu.memory_space<vmem>>, vector<256x192xbf16>
    %c0_21 = arith.constant 0 : index
    %c0_22 = arith.constant 0 : index
    %c0_23 = arith.constant 0 : index
    %17 = vector.load %arg3[%c0_21, %c0_22, %c0_23] : memref<3x192x128xbf16, #tpu.memory_space<vmem>>, vector<1x192x128xbf16>
    %18 = vector.shape_cast %17 : vector<1x192x128xbf16> to vector<192x128xbf16>
    %cst_24 = arith.constant dense<0.000000e+00> : vector<256x128xf32>
    %19 = tpu.matmul %16, %18, %cst_24 {dimension_numbers = #tpu.dot_dimension_numbers<[1], [0], [0], [1], [0, 0, 1, 1], [], []>} : vector<256x192xbf16>, vector<192x128xbf16>, vector<256x128xf32> -> vector<256x128xf32>
    %20 = arith.addf %15, %19 : vector<256x128xf32>
    %c16 = arith.constant 16 : index
    %c0_25 = arith.constant 0 : index
    %21 = vector.load %arg8[%c16, %c0_25] : memref<288x192xbf16, #tpu.memory_space<vmem>>, vector<256x192xbf16>
    %c1_26 = arith.constant 1 : index
    %c0_27 = arith.constant 0 : index
    %c0_28 = arith.constant 0 : index
    %22 = vector.load %arg3[%c1_26, %c0_27, %c0_28] : memref<3x192x128xbf16, #tpu.memory_space<vmem>>, vector<1x192x128xbf16>
    %23 = vector.shape_cast %22 : vector<1x192x128xbf16> to vector<192x128xbf16>
    %cst_29 = arith.constant dense<0.000000e+00> : vector<256x128xf32>
    %24 = tpu.matmul %21, %23, %cst_29 {dimension_numbers = #tpu.dot_dimension_numbers<[1], [0], [0], [1], [0, 0, 1, 1], [], []>} : vector<256x192xbf16>, vector<192x128xbf16>, vector<256x128xf32> -> vector<256x128xf32>
    %25 = arith.addf %20, %24 : vector<256x128xf32>
    %c32 = arith.constant 32 : index
    %c0_30 = arith.constant 0 : index
    %26 = vector.load %arg8[%c32, %c0_30] : memref<288x192xbf16, #tpu.memory_space<vmem>>, vector<256x192xbf16>
    %c2_31 = arith.constant 2 : index
    %c0_32 = arith.constant 0 : index
    %c0_33 = arith.constant 0 : index
    %27 = vector.load %arg3[%c2_31, %c0_32, %c0_33] : memref<3x192x128xbf16, #tpu.memory_space<vmem>>, vector<1x192x128xbf16>
    %28 = vector.shape_cast %27 : vector<1x192x128xbf16> to vector<192x128xbf16>
    %cst_34 = arith.constant dense<0.000000e+00> : vector<256x128xf32>
    %29 = tpu.matmul %26, %28, %cst_34 {dimension_numbers = #tpu.dot_dimension_numbers<[1], [0], [0], [1], [0, 0, 1, 1], [], []>} : vector<256x192xbf16>, vector<192x128xbf16>, vector<256x128xf32> -> vector<256x128xf32>
    %30 = arith.addf %25, %29 : vector<256x128xf32>
    %c0_35 = arith.constant 0 : index
    %c0_36 = arith.constant 0 : index
    %31 = vector.load %arg4[%c0_35, %c0_36] : memref<1x128xf32, #tpu.memory_space<vmem>>, vector<1x128xf32>
    %32 = vector.broadcast %31 : vector<1x128xf32> to vector<256x128xf32>
    %33 = arith.addf %30, %32 : vector<256x128xf32>
    %34 = vector.extract_strided_slice %33 {offsets = [0, 0], sizes = [256, 32], strides = [1, 1]} : vector<256x128xf32> to vector<256x32xf32>
    %35 = arith.negf %34 : vector<256x32xf32>
    %36 = math.exp %35 : vector<256x32xf32>
    %cst_37 = arith.constant 1.000000e+00 : f32
    %37 = vector.broadcast %cst_37 : f32 to vector<256x32xf32>
    %38 = arith.addf %37, %36 : vector<256x32xf32>
    %39 = arith.divf %37, %38 : vector<256x32xf32>
    %40 = vector.extract_strided_slice %33 {offsets = [0, 32], sizes = [256, 32], strides = [1, 1]} : vector<256x128xf32> to vector<256x32xf32>
    %41 = arith.negf %40 : vector<256x32xf32>
    %42 = math.exp %41 : vector<256x32xf32>
    %cst_38 = arith.constant 1.000000e+00 : f32
    %43 = vector.broadcast %cst_38 : f32 to vector<256x32xf32>
    %44 = arith.addf %43, %42 : vector<256x32xf32>
    %45 = arith.divf %43, %44 : vector<256x32xf32>
    %46 = vector.extract_strided_slice %33 {offsets = [0, 64], sizes = [256, 32], strides = [1, 1]} : vector<256x128xf32> to vector<256x32xf32>
    %47 = arith.negf %46 : vector<256x32xf32>
    %48 = math.exp %47 : vector<256x32xf32>
    %cst_39 = arith.constant 1.000000e+00 : f32
    %49 = vector.broadcast %cst_39 : f32 to vector<256x32xf32>
    %50 = arith.addf %49, %48 : vector<256x32xf32>
    %51 = arith.divf %49, %50 : vector<256x32xf32>
    %52 = vector.extract_strided_slice %33 {offsets = [0, 96], sizes = [256, 32], strides = [1, 1]} : vector<256x128xf32> to vector<256x32xf32>
    %53 = math.tanh %52 : vector<256x32xf32>
    %c0_40 = arith.constant 0 : index
    %c0_41 = arith.constant 0 : index
    %c0_42 = arith.constant 0 : index
    %c0_43 = arith.constant 0 : index
    %54 = vector.load %arg6[%c0_40, %c0_41, %c0_42, %c0_43] : memref<1x16x16x32xf32, #tpu.memory_space<vmem>>, vector<1x16x16x32xf32>
    %55 = vector.shape_cast %54 : vector<1x16x16x32xf32> to vector<16x16x32xf32>
    %56 = vector.shape_cast %55 : vector<16x16x32xf32> to vector<256x32xf32>
    %57 = arith.mulf %45, %56 : vector<256x32xf32>
    %58 = arith.mulf %39, %53 : vector<256x32xf32>
    %59 = arith.addf %57, %58 : vector<256x32xf32>
    %60 = math.tanh %59 : vector<256x32xf32>
    %61 = arith.mulf %51, %60 : vector<256x32xf32>
    %62 = vector.shape_cast %59 : vector<256x32xf32> to vector<16x16x32xf32>
    %c0_44 = arith.constant 0 : index
    %c0_45 = arith.constant 0 : index
    %c0_46 = arith.constant 0 : index
    %c0_47 = arith.constant 0 : index
    %63 = vector.load %arg6[%c0_44, %c0_45, %c0_46, %c0_47] : memref<1x16x16x32xf32, #tpu.memory_space<vmem>>, vector<1x16x16x32xf32>
    %64 = vector.shape_cast %63 : vector<1x16x16x32xf32> to vector<16x16x32xf32>
    %65 = vector.shape_cast %62 : vector<16x16x32xf32> to vector<1x16x16x32xf32>
    tpu.vector_store %arg6[%c0_44, %c0_45, %c0_46, %c0_47], %65 {strides = array<i32>} : memref<1x16x16x32xf32, #tpu.memory_space<vmem>>, vector<1x16x16x32xf32>,
    %66 = arith.truncf %61 : vector<256x32xf32> to vector<256x32xbf16>
    %67 = vector.shape_cast %66 : vector<256x32xbf16> to vector<16x16x32xbf16>
    %c0_48 = arith.constant 0 : index
    %c0_49 = arith.constant 0 : index
    %c0_50 = arith.constant 0 : index
    %c0_51 = arith.constant 0 : index
    %c0_52 = arith.constant 0 : index
    %68 = vector.load %arg5[%c0_48, %c0_49, %c0_50, %c0_51, %c0_52] : memref<1x1x16x16x32xbf16, #tpu.memory_space<vmem>>, vector<1x1x16x16x32xbf16>
    %69 = vector.shape_cast %68 : vector<1x1x16x16x32xbf16> to vector<16x16x32xbf16>
    %70 = vector.shape_cast %67 : vector<16x16x32xbf16> to vector<1x1x16x16x32xbf16>
    tpu.vector_store %arg5[%c0_48, %c0_49, %c0_50, %c0_51, %c0_52], %70 {strides = array<i32>} : memref<1x1x16x16x32xbf16, #tpu.memory_space<vmem>>, vector<1x1x16x16x32xbf16>,
    %c1_53 = arith.constant 1 : index
    %c1_54 = arith.constant 1 : index
    %c32_55 = arith.constant 32 : index
    %71 = vector.load %arg7[%c1_53, %c1_54, %c32_55] : memref<18x18x64xbf16, #tpu.memory_space<vmem>>, vector<16x16x32xbf16>
    tpu.vector_store %arg7[%c1_53, %c1_54, %c32_55], %67 {strides = array<i32>} : memref<18x18x64xbf16, #tpu.memory_space<vmem>>, vector<16x16x32xbf16>,
    return
  }
  func.func @transform_0(%arg0: i32, %arg1: i32) -> (i32, i32, i32, i32, i32) {
    %c0_i32 = arith.constant 0 : i32
    %c0_i32_0 = arith.constant 0 : i32
    %c0_i32_1 = arith.constant 0 : i32
    %c0_i32_2 = arith.constant 0 : i32
    return %arg1, %arg0, %c0_i32, %c0_i32_0, %c0_i32_1 : i32, i32, i32, i32, i32
  }
  func.func @transform_1(%arg0: i32, %arg1: i32) -> (i32, i32, i32) {
    %c0_i32 = arith.constant 0 : i32
    %c0_i32_0 = arith.constant 0 : i32
    %c0_i32_1 = arith.constant 0 : i32
    %c0_i32_2 = arith.constant 0 : i32
    return %c0_i32, %c0_i32_0, %c0_i32_1 : i32, i32, i32
  }
  func.func @transform_2(%arg0: i32, %arg1: i32) -> (i32, i32) {
    %c0_i32 = arith.constant 0 : i32
    %c0_i32_0 = arith.constant 0 : i32
    %c0_i32_1 = arith.constant 0 : i32
    return %c0_i32, %c0_i32_0 : i32, i32
  }
  func.func @transform_3(%arg0: i32, %arg1: i32) -> (i32, i32, i32, i32, i32) {
    %c0_i32 = arith.constant 0 : i32
    %c0_i32_0 = arith.constant 0 : i32
    %c0_i32_1 = arith.constant 0 : i32
    %c0_i32_2 = arith.constant 0 : i32
    return %arg1, %arg0, %c0_i32, %c0_i32_0, %c0_i32_1 : i32, i32, i32, i32, i32
  }
  func.func @transform_4(%arg0: i32, %arg1: i32) -> (i32, i32, i32, i32) {
    %c0_i32 = arith.constant 0 : i32
    %c0_i32_0 = arith.constant 0 : i32
    %c0_i32_1 = arith.constant 0 : i32
    %c0_i32_2 = arith.constant 0 : i32
    return %arg0, %c0_i32, %c0_i32_0, %c0_i32_1 : i32, i32, i32, i32
  }
}

</mosaic_0001>

<llo_original>
// kernel: _lambda_.2
$region0: #{_lambda_.2}
  #allocation0 [shape = 'u32[]', space=smem, size = 0x4, offset = 0x4, fixed_abs, tag = 'smem constant byte address 0x4 - core index']
  #allocation1 [shape = 'u32[144,128]{1,0:T(1,128)}', space=vmem, size = 0x12000, scoped, tag = 'internal scratch']
  #allocation2 [shape = 'bf16[18,18,36]{2,1,0:T(8,128)(2,1)}', space=vmem, size = 0x1b000, scoped, tag = 'scratch operand']
  #allocation3 [shape = 'bf16[288,108]{1,0:T(16,128)(2,1)}', space=vmem, size = 0x12000, scoped, tag = 'scratch operand']
  %s0 = inlined_call_operand.vmem [shape: bf16[8,2,16,16,4], index: 0, kind: input, shape index: {}]
  %s1 = inlined_call_operand.vmem [shape: bf16[3,108,128], index: 1, kind: input, shape index: {}]
  %s2 = inlined_call_operand.vmem [shape: f32[1,128], index: 2, kind: input, shape index: {}]
  %s3 = inlined_call_operand.vmem [shape: bf16[8,2,16,16,32], index: 3, kind: output, shape index: {0}]
  %s4 = inlined_call_operand.vmem [shape: f32[2,16,16,32], index: 4, kind: output, shape index: {1}]
  %5 = xla_tuple %s3, %s4
  %s6 = sld [smem:[#allocation0]]
  $region57: #{_lambda_.2} parent=0
    _
  %s8 = ssub.s32 1, %s6
  %s9 = scalar_select 0, %s8, %s6
  loop: start=0, step=1, limit=18
  $region2: #{_lambda_.2} parent=0 // loop_pre_header
    _
  $region3: #{_lambda_.2} parent=0 // loop_header
    %s11 = sphi 0, %s15
    %p12 = scmp.ge.s32.totalorder %s11, 18
    %s18 = sphi 0, %s30
    %s19 = sphi 0, %s26
    %s20 = sphi 0, %s18
    %s21 = sphi 0, %s19
    %s22 = sphi 0, %s20
    %s23 = sphi 0, %s21
    %s35 = sphi 0, %s37
    %s38 = sphi 0, %s35
    %s39 = sphi 0, %s38
    %s55 = sphi 0, %s39
    %s59 = sphi 0, %s59
    %s61 = sphi 0, %s59
    %s62 = sphi 0, %s61
    %s76 = sphi 0, %s62
    %s80 = sphi 0, %s80
    %s82 = sphi 0, %s80
    %s83 = sphi 0, %s82
    %s97 = sphi 0, %s83
    %s105 = sphi 0, %s107
    %s108 = sphi 0, %s105
    %s109 = sphi 0, %s108
    %s125 = sphi 0, %s109
    %s131 = sphi 0, %s133
    %s134 = sphi 0, %s131
    %s135 = sphi 0, %s134
    %s151 = sphi 0, %s135
  $region4: #{_lambda_.2} parent=0 // loop_header_branch
    %14 = sbr.rel (%p12) target = $region8
  $region5: #{_lambda_.2} parent=0 // loop_body
    %s16 = ssub.s32 %s11, 1
    %s17 = ssub.s32 %s11, 2
    %s24 = sadd.s32 1, %s19
    %p25 = scmp.ge.s32.totalorder %s24, 8
    %s26 = scalar_select %p25, 0, %s24
    %s27 = sadd.s32 1, %s18
    %s28 = scalar_select %p25, %s27, %s18
    %p29 = scmp.ge.s32.totalorder %s28, 2
    %s30 = scalar_select %p29, 0, %s28
    %s31 = ssub.s32 %s19, %s26
    %s32 = ssub.s32 %s18, %s30
    %s33 = sor.u32 %s31, %s32
    %p34 = scmp.eq.s32.totalorder %s33, 0
    %s36 = sadd.s32 %s35, 1
    %s37 = scalar_select %p34, %s35, %s36
    %p40 = pneg %p34
    %p41 = scmp.eq.s32.totalorder %s11, 15
    %p42 = por %p40, %p41
    %p43 = scmp.ne.s32.totalorder %s35, %s38
    %p44 = scmp.eq.s32.totalorder %s11, 0
    %p45 = por %p43, %p44
    %p46 = scmp.ne.s32.totalorder %s35, %s38
    %p47 = scmp.eq.s32.totalorder %s16, 15
    %p48 = por %p46, %p47
    %p49 = scmp.ne.s32.totalorder %s38, %s39
    %p50 = scmp.eq.s32.totalorder %s16, 0
    %p51 = por %p49, %p50
    %p52 = scmp.ne.s32.totalorder %s38, %s39
    %p53 = scmp.eq.s32.totalorder %s17, 15
    %p54 = por %p52, %p53
    %p56 = scmp.ne.s32.totalorder %s39, %s55
    %p57 = scmp.eq.s32.totalorder %s17, 0
    %p58 = por %p56, %p57
    %s60 = sadd.s32 %s59, 1
    %p63 = scmp.eq.s32.totalorder %s11, 15
    %p64 = scmp.ne.s32.totalorder %s59, %s61
    %p65 = scmp.eq.s32.totalorder %s11, 0
    %p66 = por %p64, %p65
    %p67 = scmp.ne.s32.totalorder %s59, %s61
    %p68 = scmp.eq.s32.totalorder %s16, 15
    %p69 = por %p67, %p68
    %p70 = scmp.ne.s32.totalorder %s61, %s62
    %p71 = scmp.eq.s32.totalorder %s16, 0
    %p72 = por %p70, %p71
    %p73 = scmp.ne.s32.totalorder %s61, %s62
    %p74 = scmp.eq.s32.totalorder %s17, 15
    %p75 = por %p73, %p74
    %p77 = scmp.ne.s32.totalorder %s62, %s76
    %p78 = scmp.eq.s32.totalorder %s17, 0
    %p79 = por %p77, %p78
    %s81 = sadd.s32 %s80, 1
    %p84 = scmp.eq.s32.totalorder %s11, 15
    %p85 = scmp.ne.s32.totalorder %s80, %s82
    %p86 = scmp.eq.s32.totalorder %s11, 0
    %p87 = por %p85, %p86
    %p88 = scmp.ne.s32.totalorder %s80, %s82
    %p89 = scmp.eq.s32.totalorder %s16, 15
    %p90 = por %p88, %p89
    %p91 = scmp.ne.s32.totalorder %s82, %s83
    %p92 = scmp.eq.s32.totalorder %s16, 0
    %p93 = por %p91, %p92
    %p94 = scmp.ne.s32.totalorder %s82, %s83
    %p95 = scmp.eq.s32.totalorder %s17, 15
    %p96 = por %p94, %p95
    %p98 = scmp.ne.s32.totalorder %s83, %s97
    %p99 = scmp.eq.s32.totalorder %s17, 0
    %p100 = por %p98, %p99
    %s101 = ssub.s32 %s19, %s26
    %s102 = ssub.s32 %s18, %s30
    %s103 = sor.u32 %s101, %s102
    %p104 = scmp.eq.s32.totalorder %s103, 0
    %s106 = sadd.s32 %s105, 1
    %s107 = scalar_select %p104, %s105, %s106
    %p110 = pneg %p104
    %p111 = scmp.eq.s32.totalorder %s11, 15
    %p112 = por %p110, %p111
    %p113 = scmp.ne.s32.totalorder %s105, %s108
    %p114 = scmp.eq.s32.totalorder %s11, 0
    %p115 = por %p113, %p114
    %p116 = scmp.ne.s32.totalorder %s105, %s108
    %p117 = scmp.eq.s32.totalorder %s16, 15
    %p118 = por %p116, %p117
    %p119 = scmp.ne.s32.totalorder %s108, %s109
    %p120 = scmp.eq.s32.totalorder %s16, 0
    %p121 = por %p119, %p120
    %p122 = scmp.ne.s32.totalorder %s108, %s109
    %p123 = scmp.eq.s32.totalorder %s17, 15
    %p124 = por %p122, %p123
    %p126 = scmp.ne.s32.totalorder %s109, %s125
    %p127 = scmp.eq.s32.totalorder %s17, 0
    %p128 = por %p126, %p127
    %s129 = ssub.s32 %s18, %s30
    %p130 = scmp.eq.s32.totalorder %s129, 0
    %s132 = sadd.s32 %s131, 1
    %s133 = scalar_select %p130, %s131, %s132
    %p136 = pneg %p130
    %p137 = scmp.eq.s32.totalorder %s11, 15
    %p138 = por %p136, %p137
    %p139 = scmp.ne.s32.totalorder %s131, %s134
    %p140 = scmp.eq.s32.totalorder %s11, 0
    %p141 = por %p139, %p140
    %p142 = scmp.ne.s32.totalorder %s131, %s134
    %p143 = scmp.eq.s32.totalorder %s16, 15
    %p144 = por %p142, %p143
    %p145 = scmp.ne.s32.totalorder %s134, %s135
    %p146 = scmp.eq.s32.totalorder %s16, 0
    %p147 = por %p145, %p146
    %p148 = scmp.ne.s32.totalorder %s134, %s135
    %p149 = scmp.eq.s32.totalorder %s17, 15
    %p150 = por %p148, %p149
    %p152 = scmp.ne.s32.totalorder %s135, %s151
    %p153 = scmp.eq.s32.totalorder %s17, 0
    %p154 = por %p152, %p153
    %p155 = scmp.le.s32.totalorder 1, %s11
    %p156 = scmp.lt.s32.totalorder %s11, 17
    %p157 = pnand %p155, %p156
    %p158 = pneg %p157
    // Predicated region
    $region9: #{_lambda_.2} parent=5 // pred_check
      _
    $region10: #{_lambda_.2} parent=5 // pred_check_branch
      %160 = sbr.rel (%p157) target = $region12
    $region11: #{_lambda_.2} parent=5 // pred_region
      %s161 = ssub.s32 %s11, 1
      // Predicated region
      $region13: #{_lambda_.2} parent=11 // pred_check
        %p162 = pneg %p72
      $region14: #{_lambda_.2} parent=11 // pred_check_branch
        %164 = sbr.rel (%p162) target = $region16
      $region15: #{_lambda_.2} parent=11 // pred_region
        _
      $region16: #{_lambda_.2} parent=11 // pred_fallthru
        _
      // Predicated region
      $region17: #{_lambda_.2} parent=11 // pred_check
        %p165 = pneg %p93
      $region18: #{_lambda_.2} parent=11 // pred_check_branch
        %167 = sbr.rel (%p165) target = $region20
      $region19: #{_lambda_.2} parent=11 // pred_region
        _
      $region20: #{_lambda_.2} parent=11 // pred_fallthru
        _
    $region12: #{_lambda_.2} parent=5 // pred_fallthru
      _
    %p168 = scmp.lt.s32.totalorder %s11, 16
    // Predicated region
    $region21: #{_lambda_.2} parent=5 // pred_check
      %p169 = pneg %p168
    $region22: #{_lambda_.2} parent=5 // pred_check_branch
      %171 = sbr.rel (%p169) target = $region24
    $region23: #{_lambda_.2} parent=5 // pred_region
      // Predicated region
      $region25: #{_lambda_.2} parent=23 // pred_check
        %p172 = pneg %p45
      $region26: #{_lambda_.2} parent=23 // pred_check_branch
        %174 = sbr.rel (%p172) target = $region28
      $region27: #{_lambda_.2} parent=23 // pred_region
        %p175 = scmp.lt.s32.totalorder %s19, 7
        %s176 = scalar_select %p175, %s19, 7
        %p177 = scmp.lt.s32.totalorder %s18, 1
        %s178 = scalar_select %p177, %s18, 1
        %s179 = smul.addr %s178, 32
        %s180 = smul.addr %s176, 64
        %s181 = sadd.s32 %s179, %s180
        %s182 = smul.addr %s181, 4
        %s183 = scalar_lea.vmem %s0, %s182
      $region28: #{_lambda_.2} parent=23 // pred_fallthru
        _
    $region24: #{_lambda_.2} parent=5 // pred_fallthru
      _
    %p184 = scmp.le.s32.totalorder 1, %s11
    %p185 = scmp.lt.s32.totalorder %s11, 17
    %p186 = pnand %p184, %p185
    %p187 = pneg %p186
    // Predicated region
    $region29: #{_lambda_.2} parent=5 // pred_check
      _
    $region30: #{_lambda_.2} parent=5 // pred_check_branch
      %189 = sbr.rel (%p186) target = $region32
    $region31: #{_lambda_.2} parent=5 // pred_region
      %s190 = ssub.s32 %s11, 1
      %p191 = scmp.lt.s32.totalorder %s21, 7
      %s192 = scalar_select %p191, %s21, 7
      %p193 = scmp.lt.s32.totalorder %s20, 1
      %s194 = scalar_select %p193, %s20, 1
      %s195 = smul.addr %s194, 32
      %s196 = smul.addr %s192, 64
      %s197 = sadd.s32 %s195, %s196
      %s198 = smul.addr %s197, 4
      %s199 = scalar_lea.vmem %s0, %s198
      %p200 = pneg %p51
      %p201 = pneg %p48
      %p202 = pneg %p72
      %p203 = pneg %p69
      %p204 = pneg %p93
      %p205 = pneg %p90
      %p206 = pneg %p121
      %p207 = pneg %p118
      %p208 = scmp.lt.s32.totalorder %s21, 7
      %s209 = scalar_select %p208, %s21, 7
      %p210 = scmp.lt.s32.totalorder %s20, 1
      %s211 = scalar_select %p210, %s20, 1
      %s212 = smul.addr %s211, 32
      %s213 = smul.addr %s209, 64
      %s214 = sadd.s32 %s212, %s213
      %s215 = smul.addr %s214, 4
      %s216 = scalar_lea.vmem %s3, %s215
      %p217 = pneg %p147
      %p218 = pneg %p144
      %p219 = scmp.lt.s32.totalorder %s20, 1
      %s220 = scalar_select %p219, %s20, 1
      %s221 = smul.addr %s220, 32
      %s222 = smul.addr %s221, 8
      %s223 = scalar_lea.vmem %s4, %s222
      %p224 = scmp.lt.s32.totalorder %s21, 7
      %s225 = scalar_select %p224, %s21, 7
      %p226 = scmp.lt.s32.totalorder %s20, 1
      %s227 = scalar_select %p226, %s20, 1
      %s228 = smul.addr %s227, 32
      %s229 = smul.addr %s225, 64
      %s230 = sadd.s32 %s228, %s229
      %s231 = smul.addr %s230, 4
      %s232 = scalar_lea.vmem %s0, %s231
      %p233 = scmp.lt.s32.totalorder %s21, 7
      %s234 = scalar_select %p233, %s21, 7
      %p235 = scmp.lt.s32.totalorder %s20, 1
      %s236 = scalar_select %p235, %s20, 1
      %s237 = smul.addr %s236, 32
      %s238 = smul.addr %s234, 64
      %s239 = sadd.s32 %s237, %s238
      %s240 = smul.addr %s239, 4
      %s241 = scalar_lea.vmem %s3, %s240
      %p242 = scmp.lt.s32.totalorder %s20, 1
      %s243 = scalar_select %p242, %s20, 1
      %s244 = smul.addr %s243, 32
      %s245 = smul.addr %s244, 8
      %s246 = scalar_lea.vmem %s4, %s245
      %p248 = scmp.eq.s32.totalorder %s21, 0
      // Predicated region
      $region33: #{_lambda_.2} parent=31 // pred_check
        %p249 = pneg %p248
      $region34: #{_lambda_.2} parent=31 // pred_check_branch
        %251 = sbr.rel (%p249) target = $region36
      $region35: #{_lambda_.2} parent=31 // pred_region
        %vm252 = vcmask 289792
        %253 = vst.msk [vmem:[#allocation2] sm:$0xf] %vm252, 0
        %254 = vst.msk [vmem:[#allocation2 + $0x4] sm:$0xf] %vm252, 0
        %vm255 = vcmask 286720
        %256 = vst.msk [vmem:[#allocation2 + $0x8] sm:$0x1] %vm255, 0
        %257 = vst.msk [vmem:[#allocation2 + $0xc] sm:$0xf] %vm252, 0
        %258 = vst.msk [vmem:[#allocation2 + $0x10] sm:$0xf] %vm252, 0
        %259 = vst.msk [vmem:[#allocation2 + $0x14] sm:$0x1] %vm255, 0
        %260 = vst.msk [vmem:[#allocation2 + $0x18] sm:$0xf] %vm252, 0
        %261 = vst.msk [vmem:[#allocation2 + $0x1c] sm:$0xf] %vm252, 0
        %262 = vst.msk [vmem:[#allocation2 + $0x20] sm:$0x1] %vm255, 0
        %263 = vst.msk [vmem:[#allocation2 + $0x24] sm:$0xf] %vm252, 0
        %264 = vst.msk [vmem:[#allocation2 + $0x28] sm:$0xf] %vm252, 0
        %265 = vst.msk [vmem:[#allocation2 + $0x2c] sm:$0x1] %vm255, 0
        %266 = vst.msk [vmem:[#allocation2 + $0x30] sm:$0xf] %vm252, 0
        %267 = vst.msk [vmem:[#allocation2 + $0x34] sm:$0xf] %vm252, 0
        %268 = vst.msk [vmem:[#allocation2 + $0x38] sm:$0x1] %vm255, 0
        %269 = vst.msk [vmem:[#allocation2 + $0x3c] sm:$0xf] %vm252, 0
        %270 = vst.msk [vmem:[#allocation2 + $0x40] sm:$0xf] %vm252, 0
        %271 = vst.msk [vmem:[#allocation2 + $0x44] sm:$0x1] %vm255, 0
        %272 = vst.msk [vmem:[#allocation2 + $0x48] sm:$0xf] %vm252, 0
        %273 = vst.msk [vmem:[#allocation2 + $0x4c] sm:$0xf] %vm252, 0
        %274 = vst.msk [vmem:[#allocation2 + $0x50] sm:$0x1] %vm255, 0
        %275 = vst.msk [vmem:[#allocation2 + $0x54] sm:$0xf] %vm252, 0
        %276 = vst.msk [vmem:[#allocation2 + $0x58] sm:$0xf] %vm252, 0
        %277 = vst.msk [vmem:[#allocation2 + $0x5c] sm:$0x1] %vm255, 0
        %278 = vst.msk [vmem:[#allocation2 + $0x60] sm:$0xf] %vm252, 0
        %279 = vst.msk [vmem:[#allocation2 + $0x64] sm:$0xf] %vm252, 0
        %280 = vst.msk [vmem:[#allocation2 + $0x68] sm:$0x1] %vm255, 0
        %281 = vst.msk [vmem:[#allocation2 + $0x6c] sm:$0xf] %vm252, 0
        %282 = vst.msk [vmem:[#allocation2 + $0x70] sm:$0xf] %vm252, 0
        %283 = vst.msk [vmem:[#allocation2 + $0x74] sm:$0x1] %vm255, 0
        %284 = vst.msk [vmem:[#allocation2 + $0x78] sm:$0xf] %vm252, 0
        %285 = vst.msk [vmem:[#allocation2 + $0x7c] sm:$0xf] %vm252, 0
        %286 = vst.msk [vmem:[#allocation2 + $0x80] sm:$0x1] %vm255, 0
        %287 = vst.msk [vmem:[#allocation2 + $0x84] sm:$0xf] %vm252, 0
        %288 = vst.msk [vmem:[#allocation2 + $0x88] sm:$0xf] %vm252, 0
        %289 = vst.msk [vmem:[#allocation2 + $0x8c] sm:$0x1] %vm255, 0
        %290 = vst.msk [vmem:[#allocation2 + $0x90] sm:$0xf] %vm252, 0
        %291 = vst.msk [vmem:[#allocation2 + $0x94] sm:$0xf] %vm252, 0
        %292 = vst.msk [vmem:[#allocation2 + $0x98] sm:$0x1] %vm255, 0
        %293 = vst.msk [vmem:[#allocation2 + $0x9c] sm:$0xf] %vm252, 0
        %294 = vst.msk [vmem:[#allocation2 + $0xa0] sm:$0xf] %vm252, 0
        %295 = vst.msk [vmem:[#allocation2 + $0xa4] sm:$0x1] %vm255, 0
        %296 = vst.msk [vmem:[#allocation2 + $0xa8] sm:$0xf] %vm252, 0
        %297 = vst.msk [vmem:[#allocation2 + $0xac] sm:$0xf] %vm252, 0
        %298 = vst.msk [vmem:[#allocation2 + $0xb0] sm:$0x1] %vm255, 0
        %299 = vst.msk [vmem:[#allocation2 + $0xb4] sm:$0xf] %vm252, 0
        %300 = vst.msk [vmem:[#allocation2 + $0xb8] sm:$0xf] %vm252, 0
        %301 = vst.msk [vmem:[#allocation2 + $0xbc] sm:$0x1] %vm255, 0
        %302 = vst.msk [vmem:[#allocation2 + $0xc0] sm:$0xf] %vm252, 0
        %303 = vst.msk [vmem:[#allocation2 + $0xc4] sm:$0xf] %vm252, 0
        %304 = vst.msk [vmem:[#allocation2 + $0xc8] sm:$0x1] %vm255, 0
        %305 = vst.msk [vmem:[#allocation2 + $0xcc] sm:$0xf] %vm252, 0
        %306 = vst.msk [vmem:[#allocation2 + $0xd0] sm:$0xf] %vm252, 0
        %307 = vst.msk [vmem:[#allocation2 + $0xd4] sm:$0x1] %vm255, 0
        %vm308 = vcmask 261120
        %309 = vst.msk [vmem:[%s246] sm:$0xff] %vm308, 0.0
        %310 = vst.msk [vmem:[%s246 + $0x8] sm:$0xff] %vm308, 0.0
        %311 = vst.msk [vmem:[%s246 + $0x10] sm:$0xff] %vm308, 0.0
        %312 = vst.msk [vmem:[%s246 + $0x18] sm:$0xff] %vm308, 0.0
        %313 = vst.msk [vmem:[%s246 + $0x20] sm:$0xff] %vm308, 0.0
        %314 = vst.msk [vmem:[%s246 + $0x28] sm:$0xff] %vm308, 0.0
        %315 = vst.msk [vmem:[%s246 + $0x30] sm:$0xff] %vm308, 0.0
        %316 = vst.msk [vmem:[%s246 + $0x38] sm:$0xff] %vm308, 0.0
        %317 = vst.msk [vmem:[%s246 + $0x40] sm:$0xff] %vm308, 0.0
        %318 = vst.msk [vmem:[%s246 + $0x48] sm:$0xff] %vm308, 0.0
        %319 = vst.msk [vmem:[%s246 + $0x50] sm:$0xff] %vm308, 0.0
        %320 = vst.msk [vmem:[%s246 + $0x58] sm:$0xff] %vm308, 0.0
        %321 = vst.msk [vmem:[%s246 + $0x60] sm:$0xff] %vm308, 0.0
        %322 = vst.msk [vmem:[%s246 + $0x68] sm:$0xff] %vm308, 0.0
        %323 = vst.msk [vmem:[%s246 + $0x70] sm:$0xff] %vm308, 0.0
        %324 = vst.msk [vmem:[%s246 + $0x78] sm:$0xff] %vm308, 0.0
        %325 = vst.msk [vmem:[%s246 + $0x80] sm:$0xff] %vm308, 0.0
        %326 = vst.msk [vmem:[%s246 + $0x88] sm:$0xff] %vm308, 0.0
        %327 = vst.msk [vmem:[%s246 + $0x90] sm:$0xff] %vm308, 0.0
        %328 = vst.msk [vmem:[%s246 + $0x98] sm:$0xff] %vm308, 0.0
        %329 = vst.msk [vmem:[%s246 + $0xa0] sm:$0xff] %vm308, 0.0
        %330 = vst.msk [vmem:[%s246 + $0xa8] sm:$0xff] %vm308, 0.0
        %331 = vst.msk [vmem:[%s246 + $0xb0] sm:$0xff] %vm308, 0.0
        %332 = vst.msk [vmem:[%s246 + $0xb8] sm:$0xff] %vm308, 0.0
        %333 = vst.msk [vmem:[%s246 + $0xc0] sm:$0xff] %vm308, 0.0
        %334 = vst.msk [vmem:[%s246 + $0xc8] sm:$0xff] %vm308, 0.0
        %335 = vst.msk [vmem:[%s246 + $0xd0] sm:$0xff] %vm308, 0.0
        %336 = vst.msk [vmem:[%s246 + $0xd8] sm:$0xff] %vm308, 0.0
        %337 = vst.msk [vmem:[%s246 + $0xe0] sm:$0xff] %vm308, 0.0
        %338 = vst.msk [vmem:[%s246 + $0xe8] sm:$0xff] %vm308, 0.0
        %339 = vst.msk [vmem:[%s246 + $0xf0] sm:$0xff] %vm308, 0.0
        %340 = vst.msk [vmem:[%s246 + $0xf8] sm:$0xff] %vm308, 0.0
      $region36: #{_lambda_.2} parent=31 // pred_fallthru
        _
      %v341 = vld [vmem:[%s232] sm:$0xf]
      %v342 = vld [vmem:[%s232 + $0x4] sm:$0xf]
      %v343 = vld [vmem:[%s232 + $0x8] sm:$0xf]
      %v344 = vld [vmem:[%s232 + $0xc] sm:$0xf]
      %v345 = vld [vmem:[%s232 + $0x10] sm:$0xf]
      %v346 = vld [vmem:[%s232 + $0x14] sm:$0xf]
      %v347 = vld [vmem:[%s232 + $0x18] sm:$0xf]
      %v348 = vld [vmem:[%s232 + $0x1c] sm:$0xf]
      %v349 = vld [vmem:[%s232 + $0x20] sm:$0xf]
      %v350 = vld [vmem:[%s232 + $0x24] sm:$0xf]
      %v351 = vld [vmem:[%s232 + $0x28] sm:$0xf]
      %v352 = vld [vmem:[%s232 + $0x2c] sm:$0xf]
      %v353 = vld [vmem:[%s232 + $0x30] sm:$0xf]
      %v354 = vld [vmem:[%s232 + $0x34] sm:$0xf]
      %v355 = vld [vmem:[%s232 + $0x38] sm:$0xf]
      %v356 = vld [vmem:[%s232 + $0x3c] sm:$0xf]
      %v357 = vld [vmem:[%s232 + $0x40] sm:$0xf]
      %v358 = vld [vmem:[%s232 + $0x44] sm:$0xf]
      %v359 = vld [vmem:[%s232 + $0x48] sm:$0xf]
      %v360 = vld [vmem:[%s232 + $0x4c] sm:$0xf]
      %v361 = vld [vmem:[%s232 + $0x50] sm:$0xf]
      %v362 = vld [vmem:[%s232 + $0x54] sm:$0xf]
      %v363 = vld [vmem:[%s232 + $0x58] sm:$0xf]
      %v364 = vld [vmem:[%s232 + $0x5c] sm:$0xf]
      %v365 = vld [vmem:[%s232 + $0x60] sm:$0xf]
      %v366 = vld [vmem:[%s232 + $0x64] sm:$0xf]
      %v367 = vld [vmem:[%s232 + $0x68] sm:$0xf]
      %v368 = vld [vmem:[%s232 + $0x6c] sm:$0xf]
      %v369 = vld [vmem:[%s232 + $0x70] sm:$0xf]
      %v370 = vld [vmem:[%s232 + $0x74] sm:$0xf]
      %v371 = vld [vmem:[%s232 + $0x78] sm:$0xf]
      %v372 = vld [vmem:[%s232 + $0x7c] sm:$0xf]
      %vm373 = vsmask.f32 256
      %vm374 = vsmask.f32 4368
      %vm375 = vmor %vm373, %vm374
      %v377 = vshrl.u32 %v341, 16
      %v379 = vrot.slane %v377, 7
      %v380 = vshll.u32 %v341, 16
      %v382 = vor.u32 %v379, %v380
      %v383 = vrot.slane %v379, 4
      %v385 = vshrl.u32 %v342, 16
      %v387 = vrot.slane %v385, 7
      %v388 = vshll.u32 %v342, 16
      %v390 = vor.u32 %v387, %v388
      %v391 = vsel %vm375, %v383, %v390
      %v392 = vrot.slane %v387, 4
      %v394 = vshrl.u32 %v343, 16
      %v396 = vrot.slane %v394, 7
      %v397 = vshll.u32 %v343, 16
      %v399 = vor.u32 %v396, %v397
      %v400 = vrot.slane %v396, 4
      %v402 = vshrl.u32 %v344, 16
      %v404 = vrot.slane %v402, 7
      %v405 = vshll.u32 %v344, 16
      %v407 = vor.u32 %v404, %v405
      %v408 = vsel %vm375, %v400, %v407
      %v409 = vrot.slane %v404, 4
      %v411 = vshrl.u32 %v345, 16
      %v413 = vrot.slane %v411, 7
      %v414 = vshll.u32 %v345, 16
      %v416 = vor.u32 %v413, %v414
      %v417 = vrot.slane %v413, 4
      %v419 = vshrl.u32 %v346, 16
      %v421 = vrot.slane %v419, 7
      %v422 = vshll.u32 %v346, 16
      %v424 = vor.u32 %v421, %v422
      %v425 = vsel %vm375, %v417, %v424
      %v426 = vrot.slane %v421, 4
      %v428 = vshrl.u32 %v347, 16
      %v430 = vrot.slane %v428, 7
      %v431 = vshll.u32 %v347, 16
      %v433 = vor.u32 %v430, %v431
      %v434 = vrot.slane %v430, 4
      %v436 = vshrl.u32 %v348, 16
      %v438 = vrot.slane %v436, 7
      %v439 = vshll.u32 %v348, 16
      %v441 = vor.u32 %v438, %v439
      %v442 = vsel %vm375, %v434, %v441
      %v443 = vrot.slane %v438, 4
      %v445 = vshrl.u32 %v349, 16
      %v447 = vrot.slane %v445, 7
      %v448 = vshll.u32 %v349, 16
      %v450 = vor.u32 %v447, %v448
      %v451 = vrot.slane %v447, 4
      %v453 = vshrl.u32 %v350, 16
      %v455 = vrot.slane %v453, 7
      %v456 = vshll.u32 %v350, 16
      %v458 = vor.u32 %v455, %v456
      %v459 = vsel %vm375, %v451, %v458
      %v460 = vrot.slane %v455, 4
      %v462 = vshrl.u32 %v351, 16
      %v464 = vrot.slane %v462, 7
      %v465 = vshll.u32 %v351, 16
      %v467 = vor.u32 %v464, %v465
      %v468 = vrot.slane %v464, 4
      %v470 = vshrl.u32 %v352, 16
      %v472 = vrot.slane %v470, 7
      %v473 = vshll.u32 %v352, 16
      %v475 = vor.u32 %v472, %v473
      %v476 = vsel %vm375, %v468, %v475
      %v477 = vrot.slane %v472, 4
      %v479 = vshrl.u32 %v353, 16
      %v481 = vrot.slane %v479, 7
      %v482 = vshll.u32 %v353, 16
      %v484 = vor.u32 %v481, %v482
      %v485 = vrot.slane %v481, 4
      %v487 = vshrl.u32 %v354, 16
      %v489 = vrot.slane %v487, 7
      %v490 = vshll.u32 %v354, 16
      %v492 = vor.u32 %v489, %v490
      %v493 = vsel %vm375, %v485, %v492
      %v494 = vrot.slane %v489, 4
      %v496 = vshrl.u32 %v355, 16
      %v498 = vrot.slane %v496, 7
      %v499 = vshll.u32 %v355, 16
      %v501 = vor.u32 %v498, %v499
      %v502 = vrot.slane %v498, 4
      %v504 = vshrl.u32 %v356, 16
      %v506 = vrot.slane %v504, 7
      %v507 = vshll.u32 %v356, 16
      %v509 = vor.u32 %v506, %v507
      %v510 = vsel %vm375, %v502, %v509
      %v511 = vrot.slane %v506, 4
      %v513 = vshrl.u32 %v357, 16
      %v515 = vrot.slane %v513, 7
      %v516 = vshll.u32 %v357, 16
      %v518 = vor.u32 %v515, %v516
      %v519 = vrot.slane %v515, 4
      %v521 = vshrl.u32 %v358, 16
      %v523 = vrot.slane %v521, 7
      %v524 = vshll.u32 %v358, 16
      %v526 = vor.u32 %v523, %v524
      %v527 = vsel %vm375, %v519, %v526
      %v528 = vrot.slane %v523, 4
      %v530 = vshrl.u32 %v359, 16
      %v532 = vrot.slane %v530, 7
      %v533 = vshll.u32 %v359, 16
      %v535 = vor.u32 %v532, %v533
      %v536 = vrot.slane %v532, 4
      %v538 = vshrl.u32 %v360, 16
      %v540 = vrot.slane %v538, 7
      %v541 = vshll.u32 %v360, 16
      %v543 = vor.u32 %v540, %v541
      %v544 = vsel %vm375, %v536, %v543
      %v545 = vrot.slane %v540, 4
      %v547 = vshrl.u32 %v361, 16
      %v549 = vrot.slane %v547, 7
      %v550 = vshll.u32 %v361, 16
      %v552 = vor.u32 %v549, %v550
      %v553 = vrot.slane %v549, 4
      %v555 = vshrl.u32 %v362, 16
      %v557 = vrot.slane %v555, 7
      %v558 = vshll.u32 %v362, 16
      %v560 = vor.u32 %v557, %v558
      %v561 = vsel %vm375, %v553, %v560
      %v562 = vrot.slane %v557, 4
      %v564 = vshrl.u32 %v363, 16
      %v566 = vrot.slane %v564, 7
      %v567 = vshll.u32 %v363, 16
      %v569 = vor.u32 %v566, %v567
      %v570 = vrot.slane %v566, 4
      %v572 = vshrl.u32 %v364, 16
      %v574 = vrot.slane %v572, 7
      %v575 = vshll.u32 %v364, 16
      %v577 = vor.u32 %v574, %v575
      %v578 = vsel %vm375, %v570, %v577
      %v579 = vrot.slane %v574, 4
      %v581 = vshrl.u32 %v365, 16
      %v583 = vrot.slane %v581, 7
      %v584 = vshll.u32 %v365, 16
      %v586 = vor.u32 %v583, %v584
      %v587 = vrot.slane %v583, 4
      %v589 = vshrl.u32 %v366, 16
      %v591 = vrot.slane %v589, 7
      %v592 = vshll.u32 %v366, 16
      %v594 = vor.u32 %v591, %v592
      %v595 = vsel %vm375, %v587, %v594
      %v596 = vrot.slane %v591, 4
      %v598 = vshrl.u32 %v367, 16
      %v600 = vrot.slane %v598, 7
      %v601 = vshll.u32 %v367, 16
      %v603 = vor.u32 %v600, %v601
      %v604 = vrot.slane %v600, 4
      %v606 = vshrl.u32 %v368, 16
      %v608 = vrot.slane %v606, 7
      %v609 = vshll.u32 %v368, 16
      %v611 = vor.u32 %v608, %v609
      %v612 = vsel %vm375, %v604, %v611
      %v613 = vrot.slane %v608, 4
      %v615 = vshrl.u32 %v369, 16
      %v617 = vrot.slane %v615, 7
      %v618 = vshll.u32 %v369, 16
      %v620 = vor.u32 %v617, %v618
      %v621 = vrot.slane %v617, 4
      %v623 = vshrl.u32 %v370, 16
      %v625 = vrot.slane %v623, 7
      %v626 = vshll.u32 %v370, 16
      %v628 = vor.u32 %v625, %v626
      %v629 = vsel %vm375, %v621, %v628
      %v630 = vrot.slane %v625, 4
      %v632 = vshrl.u32 %v371, 16
      %v634 = vrot.slane %v632, 7
      %v635 = vshll.u32 %v371, 16
      %v637 = vor.u32 %v634, %v635
      %v638 = vrot.slane %v634, 4
      %v640 = vshrl.u32 %v372, 16
      %v642 = vrot.slane %v640, 7
      %v643 = vshll.u32 %v372, 16
      %v645 = vor.u32 %v642, %v643
      %v646 = vsel %vm375, %v638, %v645
      %v647 = vrot.slane %v642, 4
      %s696 = scalar_lea.vmem [#allocation2], 12
      %vm697 = vcmask 27648
      %vm698 = vsmask.f32 7938
      %vm699 = vmand %vm697, %vm698
      %v700 = vld [vmem:[%s696] sm:$0xf]
      %v701 = vsel %vm699, %v382, %v700
      %702 = vst [vmem:[%s696] sm:$0xf] %v701
      %vm703 = vcmask 27648
      %704 = vst.msk [vmem:[%s696 + $0x4] sm:$0xf] %vm703, %v391
      %vm705 = vcmask 24576
      %vm706 = vmand %vm705, %vm373
      %v707 = vld [vmem:[%s696 + $0x8] sm:$0x1]
      %v708 = vsel %vm706, %v392, %v707
      %709 = vst [vmem:[%s696 + $0x8] sm:$0x1] %v708
      %v710 = vld [vmem:[%s696 + $0xc] sm:$0xf]
      %v711 = vsel %vm699, %v399, %v710
      %712 = vst [vmem:[%s696 + $0xc] sm:$0xf] %v711
      %713 = vst.msk [vmem:[%s696 + $0x10] sm:$0xf] %vm703, %v408
      %v714 = vld [vmem:[%s696 + $0x14] sm:$0x1]
      %v715 = vsel %vm706, %v409, %v714
      %716 = vst [vmem:[%s696 + $0x14] sm:$0x1] %v715
      %v717 = vld [vmem:[%s696 + $0x18] sm:$0xf]
      %v718 = vsel %vm699, %v416, %v717
      %719 = vst [vmem:[%s696 + $0x18] sm:$0xf] %v718
      %720 = vst.msk [vmem:[%s696 + $0x1c] sm:$0xf] %vm703, %v425
      %v721 = vld [vmem:[%s696 + $0x20] sm:$0x1]
      %v722 = vsel %vm706, %v426, %v721
      %723 = vst [vmem:[%s696 + $0x20] sm:$0x1] %v722
      %v724 = vld [vmem:[%s696 + $0x24] sm:$0xf]
      %v725 = vsel %vm699, %v433, %v724
      %726 = vst [vmem:[%s696 + $0x24] sm:$0xf] %v725
      %727 = vst.msk [vmem:[%s696 + $0x28] sm:$0xf] %vm703, %v442
      %v728 = vld [vmem:[%s696 + $0x2c] sm:$0x1]
      %v729 = vsel %vm706, %v443, %v728
      %730 = vst [vmem:[%s696 + $0x2c] sm:$0x1] %v729
      %v731 = vld [vmem:[%s696 + $0x30] sm:$0xf]
      %v732 = vsel %vm699, %v450, %v731
      %733 = vst [vmem:[%s696 + $0x30] sm:$0xf] %v732
      %734 = vst.msk [vmem:[%s696 + $0x34] sm:$0xf] %vm703, %v459
      %v735 = vld [vmem:[%s696 + $0x38] sm:$0x1]
      %v736 = vsel %vm706, %v460, %v735
      %737 = vst [vmem:[%s696 + $0x38] sm:$0x1] %v736
      %v738 = vld [vmem:[%s696 + $0x3c] sm:$0xf]
      %v739 = vsel %vm699, %v467, %v738
      %740 = vst [vmem:[%s696 + $0x3c] sm:$0xf] %v739
      %741 = vst.msk [vmem:[%s696 + $0x40] sm:$0xf] %vm703, %v476
      %v742 = vld [vmem:[%s696 + $0x44] sm:$0x1]
      %v743 = vsel %vm706, %v477, %v742
      %744 = vst [vmem:[%s696 + $0x44] sm:$0x1] %v743
      %v745 = vld [vmem:[%s696 + $0x48] sm:$0xf]
      %v746 = vsel %vm699, %v484, %v745
      %747 = vst [vmem:[%s696 + $0x48] sm:$0xf] %v746
      %748 = vst.msk [vmem:[%s696 + $0x4c] sm:$0xf] %vm703, %v493
      %v749 = vld [vmem:[%s696 + $0x50] sm:$0x1]
      %v750 = vsel %vm706, %v494, %v749
      %751 = vst [vmem:[%s696 + $0x50] sm:$0x1] %v750
      %v752 = vld [vmem:[%s696 + $0x54] sm:$0xf]
      %v753 = vsel %vm699, %v501, %v752
      %754 = vst [vmem:[%s696 + $0x54] sm:$0xf] %v753
      %755 = vst.msk [vmem:[%s696 + $0x58] sm:$0xf] %vm703, %v510
      %v756 = vld [vmem:[%s696 + $0x5c] sm:$0x1]
      %v757 = vsel %vm706, %v511, %v756
      %758 = vst [vmem:[%s696 + $0x5c] sm:$0x1] %v757
      %v759 = vld [vmem:[%s696 + $0x60] sm:$0xf]
      %v760 = vsel %vm699, %v518, %v759
      %761 = vst [vmem:[%s696 + $0x60] sm:$0xf] %v760
      %762 = vst.msk [vmem:[%s696 + $0x64] sm:$0xf] %vm703, %v527
      %v763 = vld [vmem:[%s696 + $0x68] sm:$0x1]
      %v764 = vsel %vm706, %v528, %v763
      %765 = vst [vmem:[%s696 + $0x68] sm:$0x1] %v764
      %v766 = vld [vmem:[%s696 + $0x6c] sm:$0xf]
      %v767 = vsel %vm699, %v535, %v766
      %768 = vst [vmem:[%s696 + $0x6c] sm:$0xf] %v767
      %769 = vst.msk [vmem:[%s696 + $0x70] sm:$0xf] %vm703, %v544
      %v770 = vld [vmem:[%s696 + $0x74] sm:$0x1]
      %v771 = vsel %vm706, %v545, %v770
      %772 = vst [vmem:[%s696 + $0x74] sm:$0x1] %v771
      %v773 = vld [vmem:[%s696 + $0x78] sm:$0xf]
      %v774 = vsel %vm699, %v552, %v773
      %775 = vst [vmem:[%s696 + $0x78] sm:$0xf] %v774
      %776 = vst.msk [vmem:[%s696 + $0x7c] sm:$0xf] %vm703, %v561
      %v777 = vld [vmem:[%s696 + $0x80] sm:$0x1]
      %v778 = vsel %vm706, %v562, %v777
      %779 = vst [vmem:[%s696 + $0x80] sm:$0x1] %v778
      %v780 = vld [vmem:[%s696 + $0x84] sm:$0xf]
      %v781 = vsel %vm699, %v569, %v780
      %782 = vst [vmem:[%s696 + $0x84] sm:$0xf] %v781
      %783 = vst.msk [vmem:[%s696 + $0x88] sm:$0xf] %vm703, %v578
      %v784 = vld [vmem:[%s696 + $0x8c] sm:$0x1]
      %v785 = vsel %vm706, %v579, %v784
      %786 = vst [vmem:[%s696 + $0x8c] sm:$0x1] %v785
      %v787 = vld [vmem:[%s696 + $0x90] sm:$0xf]
      %v788 = vsel %vm699, %v586, %v787
      %789 = vst [vmem:[%s696 + $0x90] sm:$0xf] %v788
      %790 = vst.msk [vmem:[%s696 + $0x94] sm:$0xf] %vm703, %v595
      %v791 = vld [vmem:[%s696 + $0x98] sm:$0x1]
      %v792 = vsel %vm706, %v596, %v791
      %793 = vst [vmem:[%s696 + $0x98] sm:$0x1] %v792
      %v794 = vld [vmem:[%s696 + $0x9c] sm:$0xf]
      %v795 = vsel %vm699, %v603, %v794
      %796 = vst [vmem:[%s696 + $0x9c] sm:$0xf] %v795
      %797 = vst.msk [vmem:[%s696 + $0xa0] sm:$0xf] %vm703, %v612
      %v798 = vld [vmem:[%s696 + $0xa4] sm:$0x1]
      %v799 = vsel %vm706, %v613, %v798
      %800 = vst [vmem:[%s696 + $0xa4] sm:$0x1] %v799
      %v801 = vld [vmem:[%s696 + $0xa8] sm:$0xf]
      %v802 = vsel %vm699, %v620, %v801
      %803 = vst [vmem:[%s696 + $0xa8] sm:$0xf] %v802
      %804 = vst.msk [vmem:[%s696 + $0xac] sm:$0xf] %vm703, %v629
      %v805 = vld [vmem:[%s696 + $0xb0] sm:$0x1]
      %v806 = vsel %vm706, %v630, %v805
      %807 = vst [vmem:[%s696 + $0xb0] sm:$0x1] %v806
      %v808 = vld [vmem:[%s696 + $0xb4] sm:$0xf]
      %v809 = vsel %vm699, %v637, %v808
      %810 = vst [vmem:[%s696 + $0xb4] sm:$0xf] %v809
      %811 = vst.msk [vmem:[%s696 + $0xb8] sm:$0xf] %vm703, %v646
      %v812 = vld [vmem:[%s696 + $0xbc] sm:$0x1]
      %v813 = vsel %vm706, %v647, %v812
      %814 = vst [vmem:[%s696 + $0xbc] sm:$0x1] %v813
      %v815 = vld [vmem:[#allocation2] sm:$0xf]
      %v816 = vld [vmem:[#allocation2 + $0x4] sm:$0xf]
      %v817 = vld [vmem:[#allocation2 + $0xc] sm:$0xf]
      %v818 = vld [vmem:[#allocation2 + $0x10] sm:$0xf]
      %v819 = vld [vmem:[#allocation2 + $0x18] sm:$0xf]
      %v820 = vld [vmem:[#allocation2 + $0x1c] sm:$0xf]
      %v821 = vld [vmem:[#allocation2 + $0x24] sm:$0xf]
      %v822 = vld [vmem:[#allocation2 + $0x28] sm:$0xf]
      %v823 = vld [vmem:[#allocation2 + $0x30] sm:$0xf]
      %v824 = vld [vmem:[#allocation2 + $0x34] sm:$0xf]
      %v825 = vld [vmem:[#allocation2 + $0x3c] sm:$0xf]
      %v826 = vld [vmem:[#allocation2 + $0x40] sm:$0xf]
      %v827 = vld [vmem:[#allocation2 + $0x48] sm:$0xf]
      %v828 = vld [vmem:[#allocation2 + $0x4c] sm:$0xf]
      %v829 = vld [vmem:[#allocation2 + $0x54] sm:$0xf]
      %v830 = vld [vmem:[#allocation2 + $0x58] sm:$0xf]
      %v831 = vld [vmem:[#allocation2 + $0x60] sm:$0xf]
      %v832 = vld [vmem:[#allocation2 + $0x64] sm:$0xf]
      %v833 = vld [vmem:[#allocation2 + $0x6c] sm:$0xf]
      %v834 = vld [vmem:[#allocation2 + $0x70] sm:$0xf]
      %v835 = vld [vmem:[#allocation2 + $0x78] sm:$0xf]
      %v836 = vld [vmem:[#allocation2 + $0x7c] sm:$0xf]
      %v837 = vld [vmem:[#allocation2 + $0x84] sm:$0xf]
      %v838 = vld [vmem:[#allocation2 + $0x88] sm:$0xf]
      %v839 = vld [vmem:[#allocation2 + $0x90] sm:$0xf]
      %v840 = vld [vmem:[#allocation2 + $0x94] sm:$0xf]
      %v841 = vld [vmem:[#allocation2 + $0x9c] sm:$0xf]
      %v842 = vld [vmem:[#allocation2 + $0xa0] sm:$0xf]
      %v843 = vld [vmem:[#allocation2 + $0xa8] sm:$0xf]
      %v844 = vld [vmem:[#allocation2 + $0xac] sm:$0xf]
      %v845 = vld [vmem:[#allocation2 + $0xb4] sm:$0xf]
      %v846 = vld [vmem:[#allocation2 + $0xb8] sm:$0xf]
      %v847 = vld [vmem:[#allocation2 + $0xc0] sm:$0xf]
      %v848 = vld [vmem:[#allocation2 + $0xc4] sm:$0xf]
      %v849 = vld [vmem:[#allocation2 + $0xcc] sm:$0xf]
      %v850 = vld [vmem:[#allocation2 + $0xd0] sm:$0xf]
      %v887 = vunpack.c.l.b16 %v815
      %v888 = vunpack.c.l.b16 %v816
      %v889 = vunpack.c.l.b16 %v817
      %v890 = vunpack.c.l.b16 %v818
      %v891 = vunpack.c.l.b16 %v819
      %v892 = vunpack.c.l.b16 %v820
      %v893 = vunpack.c.l.b16 %v821
      %v894 = vunpack.c.l.b16 %v822
      %v895 = vunpack.c.l.b16 %v823
      %v896 = vunpack.c.l.b16 %v824
      %v897 = vunpack.c.l.b16 %v825
      %v898 = vunpack.c.l.b16 %v826
      %v899 = vunpack.c.l.b16 %v827
      %v900 = vunpack.c.l.b16 %v828
      %v901 = vunpack.c.l.b16 %v829
      %v902 = vunpack.c.l.b16 %v830
      %v903 = vunpack.c.l.b16 %v831
      %v904 = vunpack.c.l.b16 %v832
      %v905 = vunpack.c.l.b16 %v833
      %v906 = vunpack.c.l.b16 %v834
      %v907 = vunpack.c.l.b16 %v835
      %v908 = vunpack.c.l.b16 %v836
      %v909 = vunpack.c.l.b16 %v837
      %v910 = vunpack.c.l.b16 %v838
      %v911 = vunpack.c.l.b16 %v839
      %v912 = vunpack.c.l.b16 %v840
      %v913 = vunpack.c.l.b16 %v841
      %v914 = vunpack.c.l.b16 %v842
      %v915 = vunpack.c.l.b16 %v843
      %v916 = vunpack.c.l.b16 %v844
      %v917 = vunpack.c.l.b16 %v845
      %v918 = vunpack.c.l.b16 %v846
      %v919 = vunpack.c.l.b16 %v847
      %v920 = vunpack.c.l.b16 %v848
      %v921 = vunpack.c.l.b16 %v849
      %v922 = vunpack.c.l.b16 %v850
      %v923 = vpack.c.b16 %v888, %v887
      %v924 = vpack.c.b16 %v890, %v889
      %v925 = vpack.c.b16 %v892, %v891
      %v926 = vpack.c.b16 %v894, %v893
      %v927 = vpack.c.b16 %v896, %v895
      %v928 = vpack.c.b16 %v898, %v897
      %v929 = vpack.c.b16 %v900, %v899
      %v930 = vpack.c.b16 %v902, %v901
      %v931 = vpack.c.b16 %v904, %v903
      %v932 = vpack.c.b16 %v906, %v905
      %v933 = vpack.c.b16 %v908, %v907
      %v934 = vpack.c.b16 %v910, %v909
      %v935 = vpack.c.b16 %v912, %v911
      %v936 = vpack.c.b16 %v914, %v913
      %v937 = vpack.c.b16 %v916, %v915
      %v938 = vpack.c.b16 %v918, %v917
      %v939 = vpack.c.b16 %v920, %v919
      %v940 = vpack.c.b16 %v922, %v921
      %vm959 = vcmask 293888
      %960 = vst.msk [vmem:[#allocation3] sm:$0xff] %vm959, %v923
      %961 = vst.msk [vmem:[#allocation3 + $0x8] sm:$0xff] %vm959, %v924
      %962 = vst.msk [vmem:[#allocation3 + $0x10] sm:$0xff] %vm959, %v925
      %963 = vst.msk [vmem:[#allocation3 + $0x18] sm:$0xff] %vm959, %v926
      %964 = vst.msk [vmem:[#allocation3 + $0x20] sm:$0xff] %vm959, %v927
      %965 = vst.msk [vmem:[#allocation3 + $0x28] sm:$0xff] %vm959, %v928
      %966 = vst.msk [vmem:[#allocation3 + $0x30] sm:$0xff] %vm959, %v929
      %967 = vst.msk [vmem:[#allocation3 + $0x38] sm:$0xff] %vm959, %v930
      %968 = vst.msk [vmem:[#allocation3 + $0x40] sm:$0xff] %vm959, %v931
      %969 = vst.msk [vmem:[#allocation3 + $0x48] sm:$0xff] %vm959, %v932
      %970 = vst.msk [vmem:[#allocation3 + $0x50] sm:$0xff] %vm959, %v933
      %971 = vst.msk [vmem:[#allocation3 + $0x58] sm:$0xff] %vm959, %v934
      %972 = vst.msk [vmem:[#allocation3 + $0x60] sm:$0xff] %vm959, %v935
      %973 = vst.msk [vmem:[#allocation3 + $0x68] sm:$0xff] %vm959, %v936
      %974 = vst.msk [vmem:[#allocation3 + $0x70] sm:$0xff] %vm959, %v937
      %975 = vst.msk [vmem:[#allocation3 + $0x78] sm:$0xff] %vm959, %v938
      %976 = vst.msk [vmem:[#allocation3 + $0x80] sm:$0xff] %vm959, %v939
      %977 = vst.msk [vmem:[#allocation3 + $0x88] sm:$0xff] %vm959, %v940
      %v978 = vld [vmem:[#allocation2] sm:$0xf]
      %v979 = vld [vmem:[#allocation2 + $0x4] sm:$0xf]
      %v980 = vld [vmem:[#allocation2 + $0x8] sm:$0x1]
      %v981 = vld [vmem:[#allocation2 + $0xc] sm:$0xf]
      %v982 = vld [vmem:[#allocation2 + $0x10] sm:$0xf]
      %v983 = vld [vmem:[#allocation2 + $0x14] sm:$0x1]
      %v984 = vld [vmem:[#allocation2 + $0x18] sm:$0xf]
      %v985 = vld [vmem:[#allocation2 + $0x1c] sm:$0xf]
      %v986 = vld [vmem:[#allocation2 + $0x20] sm:$0x1]
      %v987 = vld [vmem:[#allocation2 + $0x24] sm:$0xf]
      %v988 = vld [vmem:[#allocation2 + $0x28] sm:$0xf]
      %v989 = vld [vmem:[#allocation2 + $0x2c] sm:$0x1]
      %v990 = vld [vmem:[#allocation2 + $0x30] sm:$0xf]
      %v991 = vld [vmem:[#allocation2 + $0x34] sm:$0xf]
      %v992 = vld [vmem:[#allocation2 + $0x38] sm:$0x1]
      %v993 = vld [vmem:[#allocation2 + $0x3c] sm:$0xf]
      %v994 = vld [vmem:[#allocation2 + $0x40] sm:$0xf]
      %v995 = vld [vmem:[#allocation2 + $0x44] sm:$0x1]
      %v996 = vld [vmem:[#allocation2 + $0x48] sm:$0xf]
      %v997 = vld [vmem:[#allocation2 + $0x4c] sm:$0xf]
      %v998 = vld [vmem:[#allocation2 + $0x50] sm:$0x1]
      %v999 = vld [vmem:[#allocation2 + $0x54] sm:$0xf]
      %v1000 = vld [vmem:[#allocation2 + $0x58] sm:$0xf]
      %v1001 = vld [vmem:[#allocation2 + $0x5c] sm:$0x1]
      %v1002 = vld [vmem:[#allocation2 + $0x60] sm:$0xf]
      %v1003 = vld [vmem:[#allocation2 + $0x64] sm:$0xf]
      %v1004 = vld [vmem:[#allocation2 + $0x68] sm:$0x1]
      %v1005 = vld [vmem:[#allocation2 + $0x6c] sm:$0xf]
      %v1006 = vld [vmem:[#allocation2 + $0x70] sm:$0xf]
      %v1007 = vld [vmem:[#allocation2 + $0x74] sm:$0x1]
      %v1008 = vld [vmem:[#allocation2 + $0x78] sm:$0xf]
      %v1009 = vld [vmem:[#allocation2 + $0x7c] sm:$0xf]
      %v1010 = vld [vmem:[#allocation2 + $0x80] sm:$0x1]
      %v1011 = vld [vmem:[#allocation2 + $0x84] sm:$0xf]
      %v1012 = vld [vmem:[#allocation2 + $0x88] sm:$0xf]
      %v1013 = vld [vmem:[#allocation2 + $0x8c] sm:$0x1]
      %v1014 = vld [vmem:[#allocation2 + $0x90] sm:$0xf]
      %v1015 = vld [vmem:[#allocation2 + $0x94] sm:$0xf]
      %v1016 = vld [vmem:[#allocation2 + $0x98] sm:$0x1]
      %v1017 = vld [vmem:[#allocation2 + $0x9c] sm:$0xf]
      %v1018 = vld [vmem:[#allocation2 + $0xa0] sm:$0xf]
      %v1019 = vld [vmem:[#allocation2 + $0xa4] sm:$0x1]
      %v1020 = vld [vmem:[#allocation2 + $0xa8] sm:$0xf]
      %v1021 = vld [vmem:[#allocation2 + $0xac] sm:$0xf]
      %v1022 = vld [vmem:[#allocation2 + $0xb0] sm:$0x1]
      %v1023 = vld [vmem:[#allocation2 + $0xb4] sm:$0xf]
      %v1024 = vld [vmem:[#allocation2 + $0xb8] sm:$0xf]
      %v1025 = vld [vmem:[#allocation2 + $0xbc] sm:$0x1]
      %v1026 = vld [vmem:[#allocation2 + $0xc0] sm:$0xf]
      %v1027 = vld [vmem:[#allocation2 + $0xc4] sm:$0xf]
      %v1028 = vld [vmem:[#allocation2 + $0xc8] sm:$0x1]
      %v1029 = vld [vmem:[#allocation2 + $0xcc] sm:$0xf]
      %v1030 = vld [vmem:[#allocation2 + $0xd0] sm:$0xf]
      %v1031 = vld [vmem:[#allocation2 + $0xd4] sm:$0x1]
      %vm1032 = vsmask.f32 3328
      %vm1033 = vsmask.f32 7440
      %vm1034 = vmor %vm1032, %vm1033
      %v1036 = vshrl.u32 %v978, 16
      %v1038 = vrot.slane %v1036, 4
      %v1039 = vshll.u32 %v978, 16
      %v1041 = vrot.slane %v1039, 5
      %v1042 = vor.u32 %v1038, %v1041
      %v1043 = vrot.slane %v1042, 4
      %v1045 = vshll.u32 %v979, 16
      %v1047 = vrot.slane %v1045, 5
      %v1048 = vsel %vm1034, %v1043, %v1047
      %v1049 = vshrl.u32 %v979, 16
      %v1051 = vrot.slane %v1049, 4
      %v1052 = vor.u32 %v1051, %v1047
      %v1053 = vrot.slane %v1052, 4
      %v1055 = vshll.u32 %v980, 16
      %v1057 = vrot.slane %v1055, 5
      %v1058 = vsel %vm1034, %v1053, %v1057
      %v1060 = vshrl.u32 %v981, 16
      %v1062 = vrot.slane %v1060, 4
      %v1063 = vshll.u32 %v981, 16
      %v1065 = vrot.slane %v1063, 5
      %v1066 = vor.u32 %v1062, %v1065
      %v1067 = vrot.slane %v1066, 4
      %v1069 = vshll.u32 %v982, 16
      %v1071 = vrot.slane %v1069, 5
      %v1072 = vsel %vm1034, %v1067, %v1071
      %v1073 = vshrl.u32 %v982, 16
      %v1075 = vrot.slane %v1073, 4
      %v1076 = vor.u32 %v1075, %v1071
      %v1077 = vrot.slane %v1076, 4
      %v1079 = vshll.u32 %v983, 16
      %v1081 = vrot.slane %v1079, 5
      %v1082 = vsel %vm1034, %v1077, %v1081
      %v1084 = vshrl.u32 %v984, 16
      %v1086 = vrot.slane %v1084, 4
      %v1087 = vshll.u32 %v984, 16
      %v1089 = vrot.slane %v1087, 5
      %v1090 = vor.u32 %v1086, %v1089
      %v1091 = vrot.slane %v1090, 4
      %v1093 = vshll.u32 %v985, 16
      %v1095 = vrot.slane %v1093, 5
      %v1096 = vsel %vm1034, %v1091, %v1095
      %v1097 = vshrl.u32 %v985, 16
      %v1099 = vrot.slane %v1097, 4
      %v1100 = vor.u32 %v1099, %v1095
      %v1101 = vrot.slane %v1100, 4
      %v1103 = vshll.u32 %v986, 16
      %v1105 = vrot.slane %v1103, 5
      %v1106 = vsel %vm1034, %v1101, %v1105
      %v1108 = vshrl.u32 %v987, 16
      %v1110 = vrot.slane %v1108, 4
      %v1111 = vshll.u32 %v987, 16
      %v1113 = vrot.slane %v1111, 5
      %v1114 = vor.u32 %v1110, %v1113
      %v1115 = vrot.slane %v1114, 4
      %v1117 = vshll.u32 %v988, 16
      %v1119 = vrot.slane %v1117, 5
      %v1120 = vsel %vm1034, %v1115, %v1119
      %v1121 = vshrl.u32 %v988, 16
      %v1123 = vrot.slane %v1121, 4
      %v1124 = vor.u32 %v1123, %v1119
      %v1125 = vrot.slane %v1124, 4
      %v1127 = vshll.u32 %v989, 16
      %v1129 = vrot.slane %v1127, 5
      %v1130 = vsel %vm1034, %v1125, %v1129
      %v1132 = vshrl.u32 %v990, 16
      %v1134 = vrot.slane %v1132, 4
      %v1135 = vshll.u32 %v990, 16
      %v1137 = vrot.slane %v1135, 5
      %v1138 = vor.u32 %v1134, %v1137
      %v1139 = vrot.slane %v1138, 4
      %v1141 = vshll.u32 %v991, 16
      %v1143 = vrot.slane %v1141, 5
      %v1144 = vsel %vm1034, %v1139, %v1143
      %v1145 = vshrl.u32 %v991, 16
      %v1147 = vrot.slane %v1145, 4
      %v1148 = vor.u32 %v1147, %v1143
      %v1149 = vrot.slane %v1148, 4
      %v1151 = vshll.u32 %v992, 16
      %v1153 = vrot.slane %v1151, 5
      %v1154 = vsel %vm1034, %v1149, %v1153
      %v1156 = vshrl.u32 %v993, 16
      %v1158 = vrot.slane %v1156, 4
      %v1159 = vshll.u32 %v993, 16
      %v1161 = vrot.slane %v1159, 5
      %v1162 = vor.u32 %v1158, %v1161
      %v1163 = vrot.slane %v1162, 4
      %v1165 = vshll.u32 %v994, 16
      %v1167 = vrot.slane %v1165, 5
      %v1168 = vsel %vm1034, %v1163, %v1167
      %v1169 = vshrl.u32 %v994, 16
      %v1171 = vrot.slane %v1169, 4
      %v1172 = vor.u32 %v1171, %v1167
      %v1173 = vrot.slane %v1172, 4
      %v1175 = vshll.u32 %v995, 16
      %v1177 = vrot.slane %v1175, 5
      %v1178 = vsel %vm1034, %v1173, %v1177
      %v1180 = vshrl.u32 %v996, 16
      %v1182 = vrot.slane %v1180, 4
      %v1183 = vshll.u32 %v996, 16
      %v1185 = vrot.slane %v1183, 5
      %v1186 = vor.u32 %v1182, %v1185
      %v1187 = vrot.slane %v1186, 4
      %v1189 = vshll.u32 %v997, 16
      %v1191 = vrot.slane %v1189, 5
      %v1192 = vsel %vm1034, %v1187, %v1191
      %v1193 = vshrl.u32 %v997, 16
      %v1195 = vrot.slane %v1193, 4
      %v1196 = vor.u32 %v1195, %v1191
      %v1197 = vrot.slane %v1196, 4
      %v1199 = vshll.u32 %v998, 16
      %v1201 = vrot.slane %v1199, 5
      %v1202 = vsel %vm1034, %v1197, %v1201
      %v1204 = vshrl.u32 %v999, 16
      %v1206 = vrot.slane %v1204, 4
      %v1207 = vshll.u32 %v999, 16
      %v1209 = vrot.slane %v1207, 5
      %v1210 = vor.u32 %v1206, %v1209
      %v1211 = vrot.slane %v1210, 4
      %v1213 = vshll.u32 %v1000, 16
      %v1215 = vrot.slane %v1213, 5
      %v1216 = vsel %vm1034, %v1211, %v1215
      %v1217 = vshrl.u32 %v1000, 16
      %v1219 = vrot.slane %v1217, 4
      %v1220 = vor.u32 %v1219, %v1215
      %v1221 = vrot.slane %v1220, 4
      %v1223 = vshll.u32 %v1001, 16
      %v1225 = vrot.slane %v1223, 5
      %v1226 = vsel %vm1034, %v1221, %v1225
      %v1228 = vshrl.u32 %v1002, 16
      %v1230 = vrot.slane %v1228, 4
      %v1231 = vshll.u32 %v1002, 16
      %v1233 = vrot.slane %v1231, 5
      %v1234 = vor.u32 %v1230, %v1233
      %v1235 = vrot.slane %v1234, 4
      %v1237 = vshll.u32 %v1003, 16
      %v1239 = vrot.slane %v1237, 5
      %v1240 = vsel %vm1034, %v1235, %v1239
      %v1241 = vshrl.u32 %v1003, 16
      %v1243 = vrot.slane %v1241, 4
      %v1244 = vor.u32 %v1243, %v1239
      %v1245 = vrot.slane %v1244, 4
      %v1247 = vshll.u32 %v1004, 16
      %v1249 = vrot.slane %v1247, 5
      %v1250 = vsel %vm1034, %v1245, %v1249
      %v1252 = vshrl.u32 %v1005, 16
      %v1254 = vrot.slane %v1252, 4
      %v1255 = vshll.u32 %v1005, 16
      %v1257 = vrot.slane %v1255, 5
      %v1258 = vor.u32 %v1254, %v1257
      %v1259 = vrot.slane %v1258, 4
      %v1261 = vshll.u32 %v1006, 16
      %v1263 = vrot.slane %v1261, 5
      %v1264 = vsel %vm1034, %v1259, %v1263
      %v1265 = vshrl.u32 %v1006, 16
      %v1267 = vrot.slane %v1265, 4
      %v1268 = vor.u32 %v1267, %v1263
      %v1269 = vrot.slane %v1268, 4
      %v1271 = vshll.u32 %v1007, 16
      %v1273 = vrot.slane %v1271, 5
      %v1274 = vsel %vm1034, %v1269, %v1273
      %v1276 = vshrl.u32 %v1008, 16
      %v1278 = vrot.slane %v1276, 4
      %v1279 = vshll.u32 %v1008, 16
      %v1281 = vrot.slane %v1279, 5
      %v1282 = vor.u32 %v1278, %v1281
      %v1283 = vrot.slane %v1282, 4
      %v1285 = vshll.u32 %v1009, 16
      %v1287 = vrot.slane %v1285, 5
      %v1288 = vsel %vm1034, %v1283, %v1287
      %v1289 = vshrl.u32 %v1009, 16
      %v1291 = vrot.slane %v1289, 4
      %v1292 = vor.u32 %v1291, %v1287
      %v1293 = vrot.slane %v1292, 4
      %v1295 = vshll.u32 %v1010, 16
      %v1297 = vrot.slane %v1295, 5
      %v1298 = vsel %vm1034, %v1293, %v1297
      %v1300 = vshrl.u32 %v1011, 16
      %v1302 = vrot.slane %v1300, 4
      %v1303 = vshll.u32 %v1011, 16
      %v1305 = vrot.slane %v1303, 5
      %v1306 = vor.u32 %v1302, %v1305
      %v1307 = vrot.slane %v1306, 4
      %v1309 = vshll.u32 %v1012, 16
      %v1311 = vrot.slane %v1309, 5
      %v1312 = vsel %vm1034, %v1307, %v1311
      %v1313 = vshrl.u32 %v1012, 16
      %v1315 = vrot.slane %v1313, 4
      %v1316 = vor.u32 %v1315, %v1311
      %v1317 = vrot.slane %v1316, 4
      %v1319 = vshll.u32 %v1013, 16
      %v1321 = vrot.slane %v1319, 5
      %v1322 = vsel %vm1034, %v1317, %v1321
      %v1324 = vshrl.u32 %v1014, 16
      %v1326 = vrot.slane %v1324, 4
      %v1327 = vshll.u32 %v1014, 16
      %v1329 = vrot.slane %v1327, 5
      %v1330 = vor.u32 %v1326, %v1329
      %v1331 = vrot.slane %v1330, 4
      %v1333 = vshll.u32 %v1015, 16
      %v1335 = vrot.slane %v1333, 5
      %v1336 = vsel %vm1034, %v1331, %v1335
      %v1337 = vshrl.u32 %v1015, 16
      %v1339 = vrot.slane %v1337, 4
      %v1340 = vor.u32 %v1339, %v1335
      %v1341 = vrot.slane %v1340, 4
      %v1343 = vshll.u32 %v1016, 16
      %v1345 = vrot.slane %v1343, 5
      %v1346 = vsel %vm1034, %v1341, %v1345
      %v1348 = vshrl.u32 %v1017, 16
      %v1350 = vrot.slane %v1348, 4
      %v1351 = vshll.u32 %v1017, 16
      %v1353 = vrot.slane %v1351, 5
      %v1354 = vor.u32 %v1350, %v1353
      %v1355 = vrot.slane %v1354, 4
      %v1357 = vshll.u32 %v1018, 16
      %v1359 = vrot.slane %v1357, 5
      %v1360 = vsel %vm1034, %v1355, %v1359
      %v1361 = vshrl.u32 %v1018, 16
      %v1363 = vrot.slane %v1361, 4
      %v1364 = vor.u32 %v1363, %v1359
      %v1365 = vrot.slane %v1364, 4
      %v1367 = vshll.u32 %v1019, 16
      %v1369 = vrot.slane %v1367, 5
      %v1370 = vsel %vm1034, %v1365, %v1369
      %v1372 = vshrl.u32 %v1020, 16
      %v1374 = vrot.slane %v1372, 4
      %v1375 = vshll.u32 %v1020, 16
      %v1377 = vrot.slane %v1375, 5
      %v1378 = vor.u32 %v1374, %v1377
      %v1379 = vrot.slane %v1378, 4
      %v1381 = vshll.u32 %v1021, 16
      %v1383 = vrot.slane %v1381, 5
      %v1384 = vsel %vm1034, %v1379, %v1383
      %v1385 = vshrl.u32 %v1021, 16
      %v1387 = vrot.slane %v1385, 4
      %v1388 = vor.u32 %v1387, %v1383
      %v1389 = vrot.slane %v1388, 4
      %v1391 = vshll.u32 %v1022, 16
      %v1393 = vrot.slane %v1391, 5
      %v1394 = vsel %vm1034, %v1389, %v1393
      %v1396 = vshrl.u32 %v1023, 16
      %v1398 = vrot.slane %v1396, 4
      %v1399 = vshll.u32 %v1023, 16
      %v1401 = vrot.slane %v1399, 5
      %v1402 = vor.u32 %v1398, %v1401
      %v1403 = vrot.slane %v1402, 4
      %v1405 = vshll.u32 %v1024, 16
      %v1407 = vrot.slane %v1405, 5
      %v1408 = vsel %vm1034, %v1403, %v1407
      %v1409 = vshrl.u32 %v1024, 16
      %v1411 = vrot.slane %v1409, 4
      %v1412 = vor.u32 %v1411, %v1407
      %v1413 = vrot.slane %v1412, 4
      %v1415 = vshll.u32 %v1025, 16
      %v1417 = vrot.slane %v1415, 5
      %v1418 = vsel %vm1034, %v1413, %v1417
      %v1420 = vshrl.u32 %v1026, 16
      %v1422 = vrot.slane %v1420, 4
      %v1423 = vshll.u32 %v1026, 16
      %v1425 = vrot.slane %v1423, 5
      %v1426 = vor.u32 %v1422, %v1425
      %v1427 = vrot.slane %v1426, 4
      %v1429 = vshll.u32 %v1027, 16
      %v1431 = vrot.slane %v1429, 5
      %v1432 = vsel %vm1034, %v1427, %v1431
      %v1433 = vshrl.u32 %v1027, 16
      %v1435 = vrot.slane %v1433, 4
      %v1436 = vor.u32 %v1435, %v1431
      %v1437 = vrot.slane %v1436, 4
      %v1439 = vshll.u32 %v1028, 16
      %v1441 = vrot.slane %v1439, 5
      %v1442 = vsel %vm1034, %v1437, %v1441
      %v1444 = vshrl.u32 %v1029, 16
      %v1446 = vrot.slane %v1444, 4
      %v1447 = vshll.u32 %v1029, 16
      %v1449 = vrot.slane %v1447, 5
      %v1450 = vor.u32 %v1446, %v1449
      %v1451 = vrot.slane %v1450, 4
      %v1453 = vshll.u32 %v1030, 16
      %v1455 = vrot.slane %v1453, 5
      %v1456 = vsel %vm1034, %v1451, %v1455
      %v1457 = vshrl.u32 %v1030, 16
      %v1459 = vrot.slane %v1457, 4
      %v1460 = vor.u32 %v1459, %v1455
      %v1461 = vrot.slane %v1460, 4
      %v1463 = vshll.u32 %v1031, 16
      %v1465 = vrot.slane %v1463, 5
      %v1466 = vsel %vm1034, %v1461, %v1465
      %v1467 = vunpack.c.l.b16 %v1048
      %v1468 = vunpack.c.l.b16 %v1058
      %v1469 = vunpack.c.l.b16 %v1072
      %v1470 = vunpack.c.l.b16 %v1082
      %v1471 = vunpack.c.l.b16 %v1096
      %v1472 = vunpack.c.l.b16 %v1106
      %v1473 = vunpack.c.l.b16 %v1120
      %v1474 = vunpack.c.l.b16 %v1130
      %v1475 = vunpack.c.l.b16 %v1144
      %v1476 = vunpack.c.l.b16 %v1154
      %v1477 = vunpack.c.l.b16 %v1168
      %v1478 = vunpack.c.l.b16 %v1178
      %v1479 = vunpack.c.l.b16 %v1192
      %v1480 = vunpack.c.l.b16 %v1202
      %v1481 = vunpack.c.l.b16 %v1216
      %v1482 = vunpack.c.l.b16 %v1226
      %v1483 = vunpack.c.l.b16 %v1240
      %v1484 = vunpack.c.l.b16 %v1250
      %v1485 = vunpack.c.l.b16 %v1264
      %v1486 = vunpack.c.l.b16 %v1274
      %v1487 = vunpack.c.l.b16 %v1288
      %v1488 = vunpack.c.l.b16 %v1298
      %v1489 = vunpack.c.l.b16 %v1312
      %v1490 = vunpack.c.l.b16 %v1322
      %v1491 = vunpack.c.l.b16 %v1336
      %v1492 = vunpack.c.l.b16 %v1346
      %v1493 = vunpack.c.l.b16 %v1360
      %v1494 = vunpack.c.l.b16 %v1370
      %v1495 = vunpack.c.l.b16 %v1384
      %v1496 = vunpack.c.l.b16 %v1394
      %v1497 = vunpack.c.l.b16 %v1408
      %v1498 = vunpack.c.l.b16 %v1418
      %v1499 = vunpack.c.l.b16 %v1432
      %v1500 = vunpack.c.l.b16 %v1442
      %v1501 = vunpack.c.l.b16 %v1456
      %v1502 = vunpack.c.l.b16 %v1466
      %v1503 = vpack.c.b16 %v1468, %v1467
      %v1504 = vpack.c.b16 %v1470, %v1469
      %v1505 = vpack.c.b16 %v1472, %v1471
      %v1506 = vpack.c.b16 %v1474, %v1473
      %v1507 = vpack.c.b16 %v1476, %v1475
      %v1508 = vpack.c.b16 %v1478, %v1477
      %v1509 = vpack.c.b16 %v1480, %v1479
      %v1510 = vpack.c.b16 %v1482, %v1481
      %v1511 = vpack.c.b16 %v1484, %v1483
      %v1512 = vpack.c.b16 %v1486, %v1485
      %v1513 = vpack.c.b16 %v1488, %v1487
      %v1514 = vpack.c.b16 %v1490, %v1489
      %v1515 = vpack.c.b16 %v1492, %v1491
      %v1516 = vpack.c.b16 %v1494, %v1493
      %v1517 = vpack.c.b16 %v1496, %v1495
      %v1518 = vpack.c.b16 %v1498, %v1497
      %v1519 = vpack.c.b16 %v1500, %v1499
      %v1520 = vpack.c.b16 %v1502, %v1501
      %1521 = vrot.lane.b32.xlu0 %v1503, 36
      %v1522 = vpop.permute.xlu0 %1521
      %1523 = vrot.lane.b32.xlu0 %v1504, 36
      %v1524 = vpop.permute.xlu0 %1523
      %1525 = vrot.lane.b32.xlu0 %v1505, 36
      %v1526 = vpop.permute.xlu0 %1525
      %1527 = vrot.lane.b32.xlu0 %v1506, 36
      %v1528 = vpop.permute.xlu0 %1527
      %1529 = vrot.lane.b32.xlu0 %v1507, 36
      %v1530 = vpop.permute.xlu0 %1529
      %1531 = vrot.lane.b32.xlu0 %v1508, 36
      %v1532 = vpop.permute.xlu0 %1531
      %1533 = vrot.lane.b32.xlu0 %v1509, 36
      %v1534 = vpop.permute.xlu0 %1533
      %1535 = vrot.lane.b32.xlu0 %v1510, 36
      %v1536 = vpop.permute.xlu0 %1535
      %1537 = vrot.lane.b32.xlu0 %v1511, 36
      %v1538 = vpop.permute.xlu0 %1537
      %1539 = vrot.lane.b32.xlu0 %v1512, 36
      %v1540 = vpop.permute.xlu0 %1539
      %1541 = vrot.lane.b32.xlu0 %v1513, 36
      %v1542 = vpop.permute.xlu0 %1541
      %1543 = vrot.lane.b32.xlu0 %v1514, 36
      %v1544 = vpop.permute.xlu0 %1543
      %1545 = vrot.lane.b32.xlu0 %v1515, 36
      %v1546 = vpop.permute.xlu0 %1545
      %1547 = vrot.lane.b32.xlu0 %v1516, 36
      %v1548 = vpop.permute.xlu0 %1547
      %1549 = vrot.lane.b32.xlu0 %v1517, 36
      %v1550 = vpop.permute.xlu0 %1549
      %1551 = vrot.lane.b32.xlu0 %v1518, 36
      %v1552 = vpop.permute.xlu0 %1551
      %1553 = vrot.lane.b32.xlu0 %v1519, 36
      %v1554 = vpop.permute.xlu0 %1553
      %1555 = vrot.lane.b32.xlu0 %v1520, 36
      %v1556 = vpop.permute.xlu0 %1555
      %vm1575 = vcmask 589088
      %1576 = vst.msk [vmem:[#allocation3] sm:$0xff] %vm1575, %v1522
      %1577 = vst.msk [vmem:[#allocation3 + $0x8] sm:$0xff] %vm1575, %v1524
      %1578 = vst.msk [vmem:[#allocation3 + $0x10] sm:$0xff] %vm1575, %v1526
      %1579 = vst.msk [vmem:[#allocation3 + $0x18] sm:$0xff] %vm1575, %v1528
      %1580 = vst.msk [vmem:[#allocation3 + $0x20] sm:$0xff] %vm1575, %v1530
      %1581 = vst.msk [vmem:[#allocation3 + $0x28] sm:$0xff] %vm1575, %v1532
      %1582 = vst.msk [vmem:[#allocation3 + $0x30] sm:$0xff] %vm1575, %v1534
      %1583 = vst.msk [vmem:[#allocation3 + $0x38] sm:$0xff] %vm1575, %v1536
      %1584 = vst.msk [vmem:[#allocation3 + $0x40] sm:$0xff] %vm1575, %v1538
      %1585 = vst.msk [vmem:[#allocation3 + $0x48] sm:$0xff] %vm1575, %v1540
      %1586 = vst.msk [vmem:[#allocation3 + $0x50] sm:$0xff] %vm1575, %v1542
      %1587 = vst.msk [vmem:[#allocation3 + $0x58] sm:$0xff] %vm1575, %v1544
      %1588 = vst.msk [vmem:[#allocation3 + $0x60] sm:$0xff] %vm1575, %v1546
      %1589 = vst.msk [vmem:[#allocation3 + $0x68] sm:$0xff] %vm1575, %v1548
      %1590 = vst.msk [vmem:[#allocation3 + $0x70] sm:$0xff] %vm1575, %v1550
      %1591 = vst.msk [vmem:[#allocation3 + $0x78] sm:$0xff] %vm1575, %v1552
      %1592 = vst.msk [vmem:[#allocation3 + $0x80] sm:$0xff] %vm1575, %v1554
      %1593 = vst.msk [vmem:[#allocation3 + $0x88] sm:$0xff] %vm1575, %v1556
      %v1594 = vld [vmem:[#allocation2] sm:$0xe]
      %v1595 = vld [vmem:[#allocation2 + $0x4] sm:$0xf]
      %v1596 = vld [vmem:[#allocation2 + $0x8] sm:$0x1]
      %v1597 = vld [vmem:[#allocation2 + $0xc] sm:$0xe]
      %v1598 = vld [vmem:[#allocation2 + $0x10] sm:$0xf]
      %v1599 = vld [vmem:[#allocation2 + $0x14] sm:$0x1]
      %v1600 = vld [vmem:[#allocation2 + $0x18] sm:$0xe]
      %v1601 = vld [vmem:[#allocation2 + $0x1c] sm:$0xf]
      %v1602 = vld [vmem:[#allocation2 + $0x20] sm:$0x1]
      %v1603 = vld [vmem:[#allocation2 + $0x24] sm:$0xe]
      %v1604 = vld [vmem:[#allocation2 + $0x28] sm:$0xf]
      %v1605 = vld [vmem:[#allocation2 + $0x2c] sm:$0x1]
      %v1606 = vld [vmem:[#allocation2 + $0x30] sm:$0xe]
      %v1607 = vld [vmem:[#allocation2 + $0x34] sm:$0xf]
      %v1608 = vld [vmem:[#allocation2 + $0x38] sm:$0x1]
      %v1609 = vld [vmem:[#allocation2 + $0x3c] sm:$0xe]
      %v1610 = vld [vmem:[#allocation2 + $0x40] sm:$0xf]
      %v1611 = vld [vmem:[#allocation2 + $0x44] sm:$0x1]
      %v1612 = vld [vmem:[#allocation2 + $0x48] sm:$0xe]
      %v1613 = vld [vmem:[#allocation2 + $0x4c] sm:$0xf]
      %v1614 = vld [vmem:[#allocation2 + $0x50] sm:$0x1]
      %v1615 = vld [vmem:[#allocation2 + $0x54] sm:$0xe]
      %v1616 = vld [vmem:[#allocation2 + $0x58] sm:$0xf]
      %v1617 = vld [vmem:[#allocation2 + $0x5c] sm:$0x1]
      %v1618 = vld [vmem:[#allocation2 + $0x60] sm:$0xe]
      %v1619 = vld [vmem:[#allocation2 + $0x64] sm:$0xf]
      %v1620 = vld [vmem:[#allocation2 + $0x68] sm:$0x1]
      %v1621 = vld [vmem:[#allocation2 + $0x6c] sm:$0xe]
      %v1622 = vld [vmem:[#allocation2 + $0x70] sm:$0xf]
      %v1623 = vld [vmem:[#allocation2 + $0x74] sm:$0x1]
      %v1624 = vld [vmem:[#allocation2 + $0x78] sm:$0xe]
      %v1625 = vld [vmem:[#allocation2 + $0x7c] sm:$0xf]
      %v1626 = vld [vmem:[#allocation2 + $0x80] sm:$0x1]
      %v1627 = vld [vmem:[#allocation2 + $0x84] sm:$0xe]
      %v1628 = vld [vmem:[#allocation2 + $0x88] sm:$0xf]
      %v1629 = vld [vmem:[#allocation2 + $0x8c] sm:$0x1]
      %v1630 = vld [vmem:[#allocation2 + $0x90] sm:$0xe]
      %v1631 = vld [vmem:[#allocation2 + $0x94] sm:$0xf]
      %v1632 = vld [vmem:[#allocation2 + $0x98] sm:$0x1]
      %v1633 = vld [vmem:[#allocation2 + $0x9c] sm:$0xe]
      %v1634 = vld [vmem:[#allocation2 + $0xa0] sm:$0xf]
      %v1635 = vld [vmem:[#allocation2 + $0xa4] sm:$0x1]
      %v1636 = vld [vmem:[#allocation2 + $0xa8] sm:$0xe]
      %v1637 = vld [vmem:[#allocation2 + $0xac] sm:$0xf]
      %v1638 = vld [vmem:[#allocation2 + $0xb0] sm:$0x1]
      %v1639 = vld [vmem:[#allocation2 + $0xb4] sm:$0xe]
      %v1640 = vld [vmem:[#allocation2 + $0xb8] sm:$0xf]
      %v1641 = vld [vmem:[#allocation2 + $0xbc] sm:$0x1]
      %v1642 = vld [vmem:[#allocation2 + $0xc0] sm:$0xe]
      %v1643 = vld [vmem:[#allocation2 + $0xc4] sm:$0xf]
      %v1644 = vld [vmem:[#allocation2 + $0xc8] sm:$0x1]
      %v1645 = vld [vmem:[#allocation2 + $0xcc] sm:$0xe]
      %v1646 = vld [vmem:[#allocation2 + $0xd0] sm:$0xf]
      %v1647 = vld [vmem:[#allocation2 + $0xd4] sm:$0x1]
      %vm1702 = vcmask 1042432
      %vm1703 = vcmask 1046532
      %vm1704 = vmor %vm1702, %vm1703
      %v1705 = vrot.slane %v1594, 5
      %v1706 = vrot.slane %v1705, 4
      %v1707 = vrot.slane %v1595, 5
      %v1708 = vsel %vm1704, %v1706, %v1707
      %v1709 = vrot.slane %v1707, 4
      %v1710 = vrot.slane %v1596, 5
      %v1711 = vsel %vm1704, %v1709, %v1710
      %v1712 = vrot.slane %v1597, 5
      %v1713 = vrot.slane %v1712, 4
      %v1714 = vrot.slane %v1598, 5
      %v1715 = vsel %vm1704, %v1713, %v1714
      %v1716 = vrot.slane %v1714, 4
      %v1717 = vrot.slane %v1599, 5
      %v1718 = vsel %vm1704, %v1716, %v1717
      %v1719 = vrot.slane %v1600, 5
      %v1720 = vrot.slane %v1719, 4
      %v1721 = vrot.slane %v1601, 5
      %v1722 = vsel %vm1704, %v1720, %v1721
      %v1723 = vrot.slane %v1721, 4
      %v1724 = vrot.slane %v1602, 5
      %v1725 = vsel %vm1704, %v1723, %v1724
      %v1726 = vrot.slane %v1603, 5
      %v1727 = vrot.slane %v1726, 4
      %v1728 = vrot.slane %v1604, 5
      %v1729 = vsel %vm1704, %v1727, %v1728
      %v1730 = vrot.slane %v1728, 4
      %v1731 = vrot.slane %v1605, 5
      %v1732 = vsel %vm1704, %v1730, %v1731
      %v1733 = vrot.slane %v1606, 5
      %v1734 = vrot.slane %v1733, 4
      %v1735 = vrot.slane %v1607, 5
      %v1736 = vsel %vm1704, %v1734, %v1735
      %v1737 = vrot.slane %v1735, 4
      %v1738 = vrot.slane %v1608, 5
      %v1739 = vsel %vm1704, %v1737, %v1738
      %v1740 = vrot.slane %v1609, 5
      %v1741 = vrot.slane %v1740, 4
      %v1742 = vrot.slane %v1610, 5
      %v1743 = vsel %vm1704, %v1741, %v1742
      %v1744 = vrot.slane %v1742, 4
      %v1745 = vrot.slane %v1611, 5
      %v1746 = vsel %vm1704, %v1744, %v1745
      %v1747 = vrot.slane %v1612, 5
      %v1748 = vrot.slane %v1747, 4
      %v1749 = vrot.slane %v1613, 5
      %v1750 = vsel %vm1704, %v1748, %v1749
      %v1751 = vrot.slane %v1749, 4
      %v1752 = vrot.slane %v1614, 5
      %v1753 = vsel %vm1704, %v1751, %v1752
      %v1754 = vrot.slane %v1615, 5
      %v1755 = vrot.slane %v1754, 4
      %v1756 = vrot.slane %v1616, 5
      %v1757 = vsel %vm1704, %v1755, %v1756
      %v1758 = vrot.slane %v1756, 4
      %v1759 = vrot.slane %v1617, 5
      %v1760 = vsel %vm1704, %v1758, %v1759
      %v1761 = vrot.slane %v1618, 5
      %v1762 = vrot.slane %v1761, 4
      %v1763 = vrot.slane %v1619, 5
      %v1764 = vsel %vm1704, %v1762, %v1763
      %v1765 = vrot.slane %v1763, 4
      %v1766 = vrot.slane %v1620, 5
      %v1767 = vsel %vm1704, %v1765, %v1766
      %v1768 = vrot.slane %v1621, 5
      %v1769 = vrot.slane %v1768, 4
      %v1770 = vrot.slane %v1622, 5
      %v1771 = vsel %vm1704, %v1769, %v1770
      %v1772 = vrot.slane %v1770, 4
      %v1773 = vrot.slane %v1623, 5
      %v1774 = vsel %vm1704, %v1772, %v1773
      %v1775 = vrot.slane %v1624, 5
      %v1776 = vrot.slane %v1775, 4
      %v1777 = vrot.slane %v1625, 5
      %v1778 = vsel %vm1704, %v1776, %v1777
      %v1779 = vrot.slane %v1777, 4
      %v1780 = vrot.slane %v1626, 5
      %v1781 = vsel %vm1704, %v1779, %v1780
      %v1782 = vrot.slane %v1627, 5
      %v1783 = vrot.slane %v1782, 4
      %v1784 = vrot.slane %v1628, 5
      %v1785 = vsel %vm1704, %v1783, %v1784
      %v1786 = vrot.slane %v1784, 4
      %v1787 = vrot.slane %v1629, 5
      %v1788 = vsel %vm1704, %v1786, %v1787
      %v1789 = vrot.slane %v1630, 5
      %v1790 = vrot.slane %v1789, 4
      %v1791 = vrot.slane %v1631, 5
      %v1792 = vsel %vm1704, %v1790, %v1791
      %v1793 = vrot.slane %v1791, 4
      %v1794 = vrot.slane %v1632, 5
      %v1795 = vsel %vm1704, %v1793, %v1794
      %v1796 = vrot.slane %v1633, 5
      %v1797 = vrot.slane %v1796, 4
      %v1798 = vrot.slane %v1634, 5
      %v1799 = vsel %vm1704, %v1797, %v1798
      %v1800 = vrot.slane %v1798, 4
      %v1801 = vrot.slane %v1635, 5
      %v1802 = vsel %vm1704, %v1800, %v1801
      %v1803 = vrot.slane %v1636, 5
      %v1804 = vrot.slane %v1803, 4
      %v1805 = vrot.slane %v1637, 5
      %v1806 = vsel %vm1704, %v1804, %v1805
      %v1807 = vrot.slane %v1805, 4
      %v1808 = vrot.slane %v1638, 5
      %v1809 = vsel %vm1704, %v1807, %v1808
      %v1810 = vrot.slane %v1639, 5
      %v1811 = vrot.slane %v1810, 4
      %v1812 = vrot.slane %v1640, 5
      %v1813 = vsel %vm1704, %v1811, %v1812
      %v1814 = vrot.slane %v1812, 4
      %v1815 = vrot.slane %v1641, 5
      %v1816 = vsel %vm1704, %v1814, %v1815
      %v1817 = vrot.slane %v1642, 5
      %v1818 = vrot.slane %v1817, 4
      %v1819 = vrot.slane %v1643, 5
      %v1820 = vsel %vm1704, %v1818, %v1819
      %v1821 = vrot.slane %v1819, 4
      %v1822 = vrot.slane %v1644, 5
      %v1823 = vsel %vm1704, %v1821, %v1822
      %v1824 = vrot.slane %v1645, 5
      %v1825 = vrot.slane %v1824, 4
      %v1826 = vrot.slane %v1646, 5
      %v1827 = vsel %vm1704, %v1825, %v1826
      %v1828 = vrot.slane %v1826, 4
      %v1829 = vrot.slane %v1647, 5
      %v1830 = vsel %vm1704, %v1828, %v1829
      %v1831 = vunpack.c.l.b16 %v1708
      %v1832 = vunpack.c.l.b16 %v1711
      %v1833 = vunpack.c.l.b16 %v1715
      %v1834 = vunpack.c.l.b16 %v1718
      %v1835 = vunpack.c.l.b16 %v1722
      %v1836 = vunpack.c.l.b16 %v1725
      %v1837 = vunpack.c.l.b16 %v1729
      %v1838 = vunpack.c.l.b16 %v1732
      %v1839 = vunpack.c.l.b16 %v1736
      %v1840 = vunpack.c.l.b16 %v1739
      %v1841 = vunpack.c.l.b16 %v1743
      %v1842 = vunpack.c.l.b16 %v1746
      %v1843 = vunpack.c.l.b16 %v1750
      %v1844 = vunpack.c.l.b16 %v1753
      %v1845 = vunpack.c.l.b16 %v1757
      %v1846 = vunpack.c.l.b16 %v1760
      %v1847 = vunpack.c.l.b16 %v1764
      %v1848 = vunpack.c.l.b16 %v1767
      %v1849 = vunpack.c.l.b16 %v1771
      %v1850 = vunpack.c.l.b16 %v1774
      %v1851 = vunpack.c.l.b16 %v1778
      %v1852 = vunpack.c.l.b16 %v1781
      %v1853 = vunpack.c.l.b16 %v1785
      %v1854 = vunpack.c.l.b16 %v1788
      %v1855 = vunpack.c.l.b16 %v1792
      %v1856 = vunpack.c.l.b16 %v1795
      %v1857 = vunpack.c.l.b16 %v1799
      %v1858 = vunpack.c.l.b16 %v1802
      %v1859 = vunpack.c.l.b16 %v1806
      %v1860 = vunpack.c.l.b16 %v1809
      %v1861 = vunpack.c.l.b16 %v1813
      %v1862 = vunpack.c.l.b16 %v1816
      %v1863 = vunpack.c.l.b16 %v1820
      %v1864 = vunpack.c.l.b16 %v1823
      %v1865 = vunpack.c.l.b16 %v1827
      %v1866 = vunpack.c.l.b16 %v1830
      %v1867 = vpack.c.b16 %v1832, %v1831
      %v1868 = vpack.c.b16 %v1834, %v1833
      %v1869 = vpack.c.b16 %v1836, %v1835
      %v1870 = vpack.c.b16 %v1838, %v1837
      %v1871 = vpack.c.b16 %v1840, %v1839
      %v1872 = vpack.c.b16 %v1842, %v1841
      %v1873 = vpack.c.b16 %v1844, %v1843
      %v1874 = vpack.c.b16 %v1846, %v1845
      %v1875 = vpack.c.b16 %v1848, %v1847
      %v1876 = vpack.c.b16 %v1850, %v1849
      %v1877 = vpack.c.b16 %v1852, %v1851
      %v1878 = vpack.c.b16 %v1854, %v1853
      %v1879 = vpack.c.b16 %v1856, %v1855
      %v1880 = vpack.c.b16 %v1858, %v1857
      %v1881 = vpack.c.b16 %v1860, %v1859
      %v1882 = vpack.c.b16 %v1862, %v1861
      %v1883 = vpack.c.b16 %v1864, %v1863
      %v1884 = vpack.c.b16 %v1866, %v1865
      %1885 = vrot.lane.b32.xlu0 %v1867, 72
      %v1886 = vpop.permute.xlu0 %1885
      %1887 = vrot.lane.b32.xlu0 %v1868, 72
      %v1888 = vpop.permute.xlu0 %1887
      %1889 = vrot.lane.b32.xlu0 %v1869, 72
      %v1890 = vpop.permute.xlu0 %1889
      %1891 = vrot.lane.b32.xlu0 %v1870, 72
      %v1892 = vpop.permute.xlu0 %1891
      %1893 = vrot.lane.b32.xlu0 %v1871, 72
      %v1894 = vpop.permute.xlu0 %1893
      %1895 = vrot.lane.b32.xlu0 %v1872, 72
      %v1896 = vpop.permute.xlu0 %1895
      %1897 = vrot.lane.b32.xlu0 %v1873, 72
      %v1898 = vpop.permute.xlu0 %1897
      %1899 = vrot.lane.b32.xlu0 %v1874, 72
      %v1900 = vpop.permute.xlu0 %1899
      %1901 = vrot.lane.b32.xlu0 %v1875, 72
      %v1902 = vpop.permute.xlu0 %1901
      %1903 = vrot.lane.b32.xlu0 %v1876, 72
      %v1904 = vpop.permute.xlu0 %1903
      %1905 = vrot.lane.b32.xlu0 %v1877, 72
      %v1906 = vpop.permute.xlu0 %1905
      %1907 = vrot.lane.b32.xlu0 %v1878, 72
      %v1908 = vpop.permute.xlu0 %1907
      %1909 = vrot.lane.b32.xlu0 %v1879, 72
      %v1910 = vpop.permute.xlu0 %1909
      %1911 = vrot.lane.b32.xlu0 %v1880, 72
      %v1912 = vpop.permute.xlu0 %1911
      %1913 = vrot.lane.b32.xlu0 %v1881, 72
      %v1914 = vpop.permute.xlu0 %1913
      %1915 = vrot.lane.b32.xlu0 %v1882, 72
      %v1916 = vpop.permute.xlu0 %1915
      %1917 = vrot.lane.b32.xlu0 %v1883, 72
      %v1918 = vpop.permute.xlu0 %1917
      %1919 = vrot.lane.b32.xlu0 %v1884, 72
      %v1920 = vpop.permute.xlu0 %1919
      %vm1939 = vcmask 884288
      %1940 = vst.msk [vmem:[#allocation3] sm:$0xff] %vm1939, %v1886
      %1941 = vst.msk [vmem:[#allocation3 + $0x8] sm:$0xff] %vm1939, %v1888
      %1942 = vst.msk [vmem:[#allocation3 + $0x10] sm:$0xff] %vm1939, %v1890
      %1943 = vst.msk [vmem:[#allocation3 + $0x18] sm:$0xff] %vm1939, %v1892
      %1944 = vst.msk [vmem:[#allocation3 + $0x20] sm:$0xff] %vm1939, %v1894
      %1945 = vst.msk [vmem:[#allocation3 + $0x28] sm:$0xff] %vm1939, %v1896
      %1946 = vst.msk [vmem:[#allocation3 + $0x30] sm:$0xff] %vm1939, %v1898
      %1947 = vst.msk [vmem:[#allocation3 + $0x38] sm:$0xff] %vm1939, %v1900
      %1948 = vst.msk [vmem:[#allocation3 + $0x40] sm:$0xff] %vm1939, %v1902
      %1949 = vst.msk [vmem:[#allocation3 + $0x48] sm:$0xff] %vm1939, %v1904
      %1950 = vst.msk [vmem:[#allocation3 + $0x50] sm:$0xff] %vm1939, %v1906
      %1951 = vst.msk [vmem:[#allocation3 + $0x58] sm:$0xff] %vm1939, %v1908
      %1952 = vst.msk [vmem:[#allocation3 + $0x60] sm:$0xff] %vm1939, %v1910
      %1953 = vst.msk [vmem:[#allocation3 + $0x68] sm:$0xff] %vm1939, %v1912
      %1954 = vst.msk [vmem:[#allocation3 + $0x70] sm:$0xff] %vm1939, %v1914
      %1955 = vst.msk [vmem:[#allocation3 + $0x78] sm:$0xff] %vm1939, %v1916
      %1956 = vst.msk [vmem:[#allocation3 + $0x80] sm:$0xff] %vm1939, %v1918
      %1957 = vst.msk [vmem:[#allocation3 + $0x88] sm:$0xff] %vm1939, %v1920
      %v1958 = vld [vmem:[#allocation3] sm:$0xff]
      %v1959 = vld [vmem:[#allocation3 + $0x8] sm:$0xff]
      %v1960 = vld [vmem:[#allocation3 + $0x10] sm:$0xff]
      %v1961 = vld [vmem:[#allocation3 + $0x18] sm:$0xff]
      %v1962 = vld [vmem:[#allocation3 + $0x20] sm:$0xff]
      %v1963 = vld [vmem:[#allocation3 + $0x28] sm:$0xff]
      %v1964 = vld [vmem:[#allocation3 + $0x30] sm:$0xff]
      %v1965 = vld [vmem:[#allocation3 + $0x38] sm:$0xff]
      %v1966 = vld [vmem:[#allocation3 + $0x40] sm:$0xff]
      %v1967 = vld [vmem:[#allocation3 + $0x48] sm:$0xff]
      %v1968 = vld [vmem:[#allocation3 + $0x50] sm:$0xff]
      %v1969 = vld [vmem:[#allocation3 + $0x58] sm:$0xff]
      %v1970 = vld [vmem:[#allocation3 + $0x60] sm:$0xff]
      %v1971 = vld [vmem:[#allocation3 + $0x68] sm:$0xff]
      %v1972 = vld [vmem:[#allocation3 + $0x70] sm:$0xff]
      %v1973 = vld [vmem:[#allocation3 + $0x78] sm:$0xff]
      %v1974 = vld [vmem:[%s1] sm:$0xf]
      %v1975 = vld [vmem:[%s1 + $0x4] sm:$0xf]
      %v1976 = vld [vmem:[%s1 + $0x8] sm:$0xf]
      %v1977 = vld [vmem:[%s1 + $0xc] sm:$0xf]
      %v1978 = vld [vmem:[%s1 + $0x10] sm:$0xf]
      %v1979 = vld [vmem:[%s1 + $0x14] sm:$0xf]
      %v1980 = vld [vmem:[%s1 + $0x18] sm:$0xf]
      %v1981 = vld [vmem:[%s1 + $0x1c] sm:$0xf]
      %v1982 = vld [vmem:[%s1 + $0x20] sm:$0xf]
      %v1983 = vld [vmem:[%s1 + $0x24] sm:$0xf]
      %v1984 = vld [vmem:[%s1 + $0x28] sm:$0xf]
      %v1985 = vld [vmem:[%s1 + $0x2c] sm:$0xf]
      %v1986 = vld [vmem:[%s1 + $0x30] sm:$0xf]
      %v1987 = vld [vmem:[%s1 + $0x34] sm:$0x3]
      %v1988 = vld [vmem:[#allocation3 + $0x80] sm:$0xff]
      %s1989 = scalar_lea.vmem %s1, 56
      %v1990 = vld [vmem:[%s1989] sm:$0xf]
      %v1991 = vld [vmem:[%s1989 + $0x4] sm:$0xf]
      %v1992 = vld [vmem:[%s1989 + $0x8] sm:$0xf]
      %v1993 = vld [vmem:[%s1989 + $0xc] sm:$0xf]
      %v1994 = vld [vmem:[%s1989 + $0x10] sm:$0xf]
      %v1995 = vld [vmem:[%s1989 + $0x14] sm:$0xf]
      %v1996 = vld [vmem:[%s1989 + $0x18] sm:$0xf]
      %v1997 = vld [vmem:[%s1989 + $0x1c] sm:$0xf]
      %v1998 = vld [vmem:[%s1989 + $0x20] sm:$0xf]
      %v1999 = vld [vmem:[%s1989 + $0x24] sm:$0xf]
      %v2000 = vld [vmem:[%s1989 + $0x28] sm:$0xf]
      %v2001 = vld [vmem:[%s1989 + $0x2c] sm:$0xf]
      %v2002 = vld [vmem:[%s1989 + $0x30] sm:$0xf]
      %v2003 = vld [vmem:[%s1989 + $0x34] sm:$0x3]
      %v2018 = vunpack.c.l.b16 %v1990
      %v2019 = vunpack.c.l.b16 %v1991
      %v2020 = vunpack.c.l.b16 %v1992
      %v2021 = vunpack.c.l.b16 %v1993
      %v2022 = vunpack.c.l.b16 %v1994
      %v2023 = vunpack.c.l.b16 %v1995
      %v2024 = vunpack.c.l.b16 %v1996
      %v2025 = vunpack.c.l.b16 %v1997
      %v2026 = vunpack.c.l.b16 %v1998
      %v2027 = vunpack.c.l.b16 %v1999
      %v2028 = vunpack.c.l.b16 %v2000
      %v2029 = vunpack.c.l.b16 %v2001
      %v2030 = vunpack.c.l.b16 %v2002
      %v2031 = vunpack.c.l.b16 %v2003
      %v2032 = vpack.c.b16 %v2019, %v2018
      %v2033 = vpack.c.b16 %v2021, %v2020
      %v2034 = vpack.c.b16 %v2023, %v2022
      %v2035 = vpack.c.b16 %v2025, %v2024
      %v2036 = vpack.c.b16 %v2027, %v2026
      %v2037 = vpack.c.b16 %v2029, %v2028
      %v2038 = vpack.c.b16 %v2031, %v2030
      %vm2045 = vcmask 883712
      %v2047 = vsel %vm2045, %v1959, 0
      %v2050 = vsel %vm2045, %v1960, 0
      %v2053 = vsel %vm2045, %v1961, 0
      %v2056 = vsel %vm2045, %v1962, 0
      %v2059 = vsel %vm2045, %v1963, 0
      %v2062 = vsel %vm2045, %v1964, 0
      %v2065 = vsel %vm2045, %v1965, 0
      %v2068 = vsel %vm2045, %v1966, 0
      %v2071 = vsel %vm2045, %v1967, 0
      %v2074 = vsel %vm2045, %v1968, 0
      %v2077 = vsel %vm2045, %v1969, 0
      %v2080 = vsel %vm2045, %v1970, 0
      %v2083 = vsel %vm2045, %v1971, 0
      %v2086 = vsel %vm2045, %v1972, 0
      %v2089 = vsel %vm2045, %v1973, 0
      %v2092 = vsel %vm2045, %v1988, 0
      %vm2094 = vcmask 1045504
      %v2096 = vsel %vm2094, %v2038, 0
      %2098 = vmatprep.subr.bf16.mxu0 0
      %2099 = vmatpush1.bf16.msra.mxu0 %v2032
      %2100 = vmatprep.subr.bf16.mxu0 0
      %2101 = vmatpush1.bf16.msra.mxu0 %v2033
      %2102 = vmatprep.subr.bf16.mxu0 0
      %2103 = vmatpush1.bf16.msra.mxu0 %v2034
      %2104 = vmatprep.subr.bf16.mxu0 0
      %2105 = vmatpush1.bf16.msra.mxu0 %v2035
      %2106 = vmatprep.subr.bf16.mxu0 0
      %2107 = vmatpush1.bf16.msra.mxu0 %v2036
      %2108 = vmatprep.subr.bf16.mxu0 0
      %2109 = vmatpush1.bf16.msra.mxu0 %v2037
      %2110 = vmatprep.subr.bf16.mxu0 0
      %2111 = vmatpush1.bf16.msra.mxu0 %v2096
      %2112 = vmatprep.subr.bf16.mxu0 0
      %2113 = vmatpush1.bf16.msra.mxu0 0
      %2114 = vmatprep.subr.bf16.mxu0 0
      %2115 = vmatpush1.bf16.msra.mxu0 0
      %2116 = vmatprep.subr.bf16.mxu0 0
      %2117 = vmatpush1.bf16.msra.mxu0 0
      %2118 = vmatprep.subr.bf16.mxu0 0
      %2119 = vmatpush1.bf16.msra.mxu0 0
      %2120 = vmatprep.subr.bf16.mxu0 0
      %2121 = vmatpush1.bf16.msra.mxu0 0
      %2122 = vmatprep.subr.bf16.mxu0 0
      %2123 = vmatpush1.bf16.msra.mxu0 0
      %2124 = vmatprep.subr.bf16.mxu0 0
      %2125 = vmatpush1.bf16.msra.mxu0 0
      %2126 = vmatprep.subr.bf16.mxu0 0
      %2127 = vmatpush1.bf16.msra.mxu0 0
      %2128 = vmatprep.subr.bf16.mxu0 0
      %2129 = vmatpush1.bf16.msra.mxu0 0
      %2130 = vmatprep.mubr.bf16.mxu0 0
      %2131 = vmatmul.mubr.bf16.gmra.mrb[0].mxu0 %v2047
      %v2132 = vpop.f32.mrb[0].mxu0
      %v2133 = vadd.f32 0.0, %v2132
      %v2134 = vpop.f32.mrb[0].mxu0
      %v2135 = vpop.f32.mrb[0].mxu0
      %v2136 = vadd.f32 0.0, %v2135
      %v2137 = vpop.f32.mrb[0].mxu0
      %2138 = vmatprep.mubr.bf16.mxu0 0
      %2139 = vmatmul.mubr.bf16.gmra.mrb[0].mxu0 %v2050
      %v2140 = vpop.f32.mrb[0].mxu0
      %v2141 = vadd.f32 0.0, %v2140
      %v2142 = vpop.f32.mrb[0].mxu0
      %v2143 = vpop.f32.mrb[0].mxu0
      %v2144 = vadd.f32 0.0, %v2143
      %v2145 = vpop.f32.mrb[0].mxu0
      %2146 = vmatprep.mubr.bf16.mxu0 0
      %2147 = vmatmul.mubr.bf16.gmra.mrb[0].mxu0 %v2053
      %v2148 = vpop.f32.mrb[0].mxu0
      %v2149 = vadd.f32 0.0, %v2148
      %v2150 = vpop.f32.mrb[0].mxu0
      %v2151 = vpop.f32.mrb[0].mxu0
      %v2152 = vadd.f32 0.0, %v2151
      %v2153 = vpop.f32.mrb[0].mxu0
      %2154 = vmatprep.mubr.bf16.mxu0 0
      %2155 = vmatmul.mubr.bf16.gmra.mrb[0].mxu0 %v2056
      %v2156 = vpop.f32.mrb[0].mxu0
      %v2157 = vadd.f32 0.0, %v2156
      %v2158 = vpop.f32.mrb[0].mxu0
      %v2159 = vpop.f32.mrb[0].mxu0
      %v2160 = vadd.f32 0.0, %v2159
      %v2161 = vpop.f32.mrb[0].mxu0
      %2162 = vmatprep.mubr.bf16.mxu0 0
      %2163 = vmatmul.mubr.bf16.gmra.mrb[0].mxu0 %v2059
      %v2164 = vpop.f32.mrb[0].mxu0
      %v2165 = vadd.f32 0.0, %v2164
      %v2166 = vpop.f32.mrb[0].mxu0
      %v2167 = vpop.f32.mrb[0].mxu0
      %v2168 = vadd.f32 0.0, %v2167
      %v2169 = vpop.f32.mrb[0].mxu0
      %2170 = vmatprep.mubr.bf16.mxu0 0
      %2171 = vmatmul.mubr.bf16.gmra.mrb[0].mxu0 %v2062
      %v2172 = vpop.f32.mrb[0].mxu0
      %v2173 = vadd.f32 0.0, %v2172
      %v2174 = vpop.f32.mrb[0].mxu0
      %v2175 = vpop.f32.mrb[0].mxu0
      %v2176 = vadd.f32 0.0, %v2175
      %v2177 = vpop.f32.mrb[0].mxu0
      %2178 = vmatprep.mubr.bf16.mxu0 0
      %2179 = vmatmul.mubr.bf16.gmra.mrb[0].mxu0 %v2065
      %v2180 = vpop.f32.mrb[0].mxu0
      %v2181 = vadd.f32 0.0, %v2180
      %v2182 = vpop.f32.mrb[0].mxu0
      %v2183 = vpop.f32.mrb[0].mxu0
      %v2184 = vadd.f32 0.0, %v2183
      %v2185 = vpop.f32.mrb[0].mxu0
      %2186 = vmatprep.mubr.bf16.mxu0 0
      %2187 = vmatmul.mubr.bf16.gmra.mrb[0].mxu0 %v2068
      %v2188 = vpop.f32.mrb[0].mxu0
      %v2189 = vadd.f32 0.0, %v2188
      %v2190 = vpop.f32.mrb[0].mxu0
      %v2191 = vpop.f32.mrb[0].mxu0
      %v2192 = vadd.f32 0.0, %v2191
      %v2193 = vpop.f32.mrb[0].mxu0
      %2194 = vmatprep.mubr.bf16.mxu0 0
      %2195 = vmatmul.mubr.bf16.gmra.mrb[0].mxu0 %v2071
      %v2196 = vpop.f32.mrb[0].mxu0
      %v2197 = vadd.f32 0.0, %v2196
      %v2198 = vpop.f32.mrb[0].mxu0
      %v2199 = vpop.f32.mrb[0].mxu0
      %v2200 = vadd.f32 0.0, %v2199
      %v2201 = vpop.f32.mrb[0].mxu0
      %2202 = vmatprep.mubr.bf16.mxu0 0
      %2203 = vmatmul.mubr.bf16.gmra.mrb[0].mxu0 %v2074
      %v2204 = vpop.f32.mrb[0].mxu0
      %v2205 = vadd.f32 0.0, %v2204
      %v2206 = vpop.f32.mrb[0].mxu0
      %v2207 = vpop.f32.mrb[0].mxu0
      %v2208 = vadd.f32 0.0, %v2207
      %v2209 = vpop.f32.mrb[0].mxu0
      %2210 = vmatprep.mubr.bf16.mxu0 0
      %2211 = vmatmul.mubr.bf16.gmra.mrb[0].mxu0 %v2077
      %v2212 = vpop.f32.mrb[0].mxu0
      %v2213 = vadd.f32 0.0, %v2212
      %v2214 = vpop.f32.mrb[0].mxu0
      %v2215 = vpop.f32.mrb[0].mxu0
      %v2216 = vadd.f32 0.0, %v2215
      %v2217 = vpop.f32.mrb[0].mxu0
      %2218 = vmatprep.mubr.bf16.mxu0 0
      %2219 = vmatmul.mubr.bf16.gmra.mrb[0].mxu0 %v2080
      %v2220 = vpop.f32.mrb[0].mxu0
      %v2221 = vadd.f32 0.0, %v2220
      %v2222 = vpop.f32.mrb[0].mxu0
      %v2223 = vpop.f32.mrb[0].mxu0
      %v2224 = vadd.f32 0.0, %v2223
      %v2225 = vpop.f32.mrb[0].mxu0
      %2226 = vmatprep.mubr.bf16.mxu0 0
      %2227 = vmatmul.mubr.bf16.gmra.mrb[0].mxu0 %v2083
      %v2228 = vpop.f32.mrb[0].mxu0
      %v2229 = vadd.f32 0.0, %v2228
      %v2230 = vpop.f32.mrb[0].mxu0
      %v2231 = vpop.f32.mrb[0].mxu0
      %v2232 = vadd.f32 0.0, %v2231
      %v2233 = vpop.f32.mrb[0].mxu0
      %2234 = vmatprep.mubr.bf16.mxu0 0
      %2235 = vmatmul.mubr.bf16.gmra.mrb[0].mxu0 %v2086
      %v2236 = vpop.f32.mrb[0].mxu0
      %v2237 = vadd.f32 0.0, %v2236
      %v2238 = vpop.f32.mrb[0].mxu0
      %v2239 = vpop.f32.mrb[0].mxu0
      %v2240 = vadd.f32 0.0, %v2239
      %v2241 = vpop.f32.mrb[0].mxu0
      %2242 = vmatprep.mubr.bf16.mxu0 0
      %2243 = vmatmul.mubr.bf16.gmra.mrb[0].mxu0 %v2089
      %v2244 = vpop.f32.mrb[0].mxu0
      %v2245 = vadd.f32 0.0, %v2244
      %v2246 = vpop.f32.mrb[0].mxu0
      %v2247 = vpop.f32.mrb[0].mxu0
      %v2248 = vadd.f32 0.0, %v2247
      %v2249 = vpop.f32.mrb[0].mxu0
      %2250 = vmatprep.mubr.bf16.mxu0 0
      %2251 = vmatmul.mubr.bf16.gmra.mrb[0].mxu0 %v2092
      %v2252 = vpop.f32.mrb[0].mxu0
      %v2253 = vadd.f32 0.0, %v2252
      %v2254 = vpop.f32.mrb[0].mxu0
      %v2255 = vpop.f32.mrb[0].mxu0
      %v2256 = vadd.f32 0.0, %v2255
      %v2257 = vpop.f32.mrb[0].mxu0
      %2258 = vdwg.mxu0
      %v2273 = vunpack.c.l.b16 %v1974
      %v2274 = vunpack.c.l.b16 %v1975
      %v2275 = vunpack.c.l.b16 %v1976
      %v2276 = vunpack.c.l.b16 %v1977
      %v2277 = vunpack.c.l.b16 %v1978
      %v2278 = vunpack.c.l.b16 %v1979
      %v2279 = vunpack.c.l.b16 %v1980
      %v2280 = vunpack.c.l.b16 %v1981
      %v2281 = vunpack.c.l.b16 %v1982
      %v2282 = vunpack.c.l.b16 %v1983
      %v2283 = vunpack.c.l.b16 %v1984
      %v2284 = vunpack.c.l.b16 %v1985
      %v2285 = vunpack.c.l.b16 %v1986
      %v2286 = vunpack.c.l.b16 %v1987
      %v2287 = vpack.c.b16 %v2274, %v2273
      %v2288 = vpack.c.b16 %v2276, %v2275
      %v2289 = vpack.c.b16 %v2278, %v2277
      %v2290 = vpack.c.b16 %v2280, %v2279
      %v2291 = vpack.c.b16 %v2282, %v2281
      %v2292 = vpack.c.b16 %v2284, %v2283
      %v2293 = vpack.c.b16 %v2286, %v2285
      %v2301 = vsel %vm2045, %v1958, 0
      %v2304 = vsel %vm2094, %v2293, 0
      %2306 = vmatprep.subr.bf16.mxu0 0
      %2307 = vmatpush1.bf16.msra.mxu0 %v2287
      %2308 = vmatprep.subr.bf16.mxu0 0
      %2309 = vmatpush1.bf16.msra.mxu0 %v2288
      %2310 = vmatprep.subr.bf16.mxu0 0
      %2311 = vmatpush1.bf16.msra.mxu0 %v2289
      %2312 = vmatprep.subr.bf16.mxu0 0
      %2313 = vmatpush1.bf16.msra.mxu0 %v2290
      %2314 = vmatprep.subr.bf16.mxu0 0
      %2315 = vmatpush1.bf16.msra.mxu0 %v2291
      %2316 = vmatprep.subr.bf16.mxu0 0
      %2317 = vmatpush1.bf16.msra.mxu0 %v2292
      %2318 = vmatprep.subr.bf16.mxu0 0
      %2319 = vmatpush1.bf16.msra.mxu0 %v2304
      %2320 = vmatprep.subr.bf16.mxu0 0
      %2321 = vmatpush1.bf16.msra.mxu0 0
      %2322 = vmatprep.subr.bf16.mxu0 0
      %2323 = vmatpush1.bf16.msra.mxu0 0
      %2324 = vmatprep.subr.bf16.mxu0 0
      %2325 = vmatpush1.bf16.msra.mxu0 0
      %2326 = vmatprep.subr.bf16.mxu0 0
      %2327 = vmatpush1.bf16.msra.mxu0 0
      %2328 = vmatprep.subr.bf16.mxu0 0
      %2329 = vmatpush1.bf16.msra.mxu0 0
      %2330 = vmatprep.subr.bf16.mxu0 0
      %2331 = vmatpush1.bf16.msra.mxu0 0
      %2332 = vmatprep.subr.bf16.mxu0 0
      %2333 = vmatpush1.bf16.msra.mxu0 0
      %2334 = vmatprep.subr.bf16.mxu0 0
      %2335 = vmatpush1.bf16.msra.mxu0 0
      %2336 = vmatprep.subr.bf16.mxu0 0
      %2337 = vmatpush1.bf16.msra.mxu0 0
      %2338 = vmatprep.mubr.bf16.mxu0 0
      %2339 = vmatmul.mubr.bf16.gmra.mrb[0].mxu0 %v2301
      %v2340 = vpop.f32.mrb[0].mxu0
      %v2341 = vadd.f32 %v2133, %v2340
      %v2342 = vpop.f32.mrb[0].mxu0
      %v2343 = vpop.f32.mrb[0].mxu0
      %v2344 = vadd.f32 %v2136, %v2343
      %v2345 = vpop.f32.mrb[0].mxu0
      %2346 = vmatprep.mubr.bf16.mxu0 0
      %2347 = vmatmul.mubr.bf16.gmra.mrb[0].mxu0 %v2047
      %v2348 = vpop.f32.mrb[0].mxu0
      %v2349 = vadd.f32 %v2141, %v2348
      %v2350 = vpop.f32.mrb[0].mxu0
      %v2351 = vpop.f32.mrb[0].mxu0
      %v2352 = vadd.f32 %v2144, %v2351
      %v2353 = vpop.f32.mrb[0].mxu0
      %2354 = vmatprep.mubr.bf16.mxu0 0
      %2355 = vmatmul.mubr.bf16.gmra.mrb[0].mxu0 %v2050
      %v2356 = vpop.f32.mrb[0].mxu0
      %v2357 = vadd.f32 %v2149, %v2356
      %v2358 = vpop.f32.mrb[0].mxu0
      %v2359 = vpop.f32.mrb[0].mxu0
      %v2360 = vadd.f32 %v2152, %v2359
      %v2361 = vpop.f32.mrb[0].mxu0
      %2362 = vmatprep.mubr.bf16.mxu0 0
      %2363 = vmatmul.mubr.bf16.gmra.mrb[0].mxu0 %v2053
      %v2364 = vpop.f32.mrb[0].mxu0
      %v2365 = vadd.f32 %v2157, %v2364
      %v2366 = vpop.f32.mrb[0].mxu0
      %v2367 = vpop.f32.mrb[0].mxu0
      %v2368 = vadd.f32 %v2160, %v2367
      %v2369 = vpop.f32.mrb[0].mxu0
      %2370 = vmatprep.mubr.bf16.mxu0 0
      %2371 = vmatmul.mubr.bf16.gmra.mrb[0].mxu0 %v2056
      %v2372 = vpop.f32.mrb[0].mxu0
      %v2373 = vadd.f32 %v2165, %v2372
      %v2374 = vpop.f32.mrb[0].mxu0
      %v2375 = vpop.f32.mrb[0].mxu0
      %v2376 = vadd.f32 %v2168, %v2375
      %v2377 = vpop.f32.mrb[0].mxu0
      %2378 = vmatprep.mubr.bf16.mxu0 0
      %2379 = vmatmul.mubr.bf16.gmra.mrb[0].mxu0 %v2059
      %v2380 = vpop.f32.mrb[0].mxu0
      %v2381 = vadd.f32 %v2173, %v2380
      %v2382 = vpop.f32.mrb[0].mxu0
      %v2383 = vpop.f32.mrb[0].mxu0
      %v2384 = vadd.f32 %v2176, %v2383
      %v2385 = vpop.f32.mrb[0].mxu0
      %2386 = vmatprep.mubr.bf16.mxu0 0
      %2387 = vmatmul.mubr.bf16.gmra.mrb[0].mxu0 %v2062
      %v2388 = vpop.f32.mrb[0].mxu0
      %v2389 = vadd.f32 %v2181, %v2388
      %v2390 = vpop.f32.mrb[0].mxu0
      %v2391 = vpop.f32.mrb[0].mxu0
      %v2392 = vadd.f32 %v2184, %v2391
      %v2393 = vpop.f32.mrb[0].mxu0
      %2394 = vmatprep.mubr.bf16.mxu0 0
      %2395 = vmatmul.mubr.bf16.gmra.mrb[0].mxu0 %v2065
      %v2396 = vpop.f32.mrb[0].mxu0
      %v2397 = vadd.f32 %v2189, %v2396
      %v2398 = vpop.f32.mrb[0].mxu0
      %v2399 = vpop.f32.mrb[0].mxu0
      %v2400 = vadd.f32 %v2192, %v2399
      %v2401 = vpop.f32.mrb[0].mxu0
      %2402 = vmatprep.mubr.bf16.mxu0 0
      %2403 = vmatmul.mubr.bf16.gmra.mrb[0].mxu0 %v2068
      %v2404 = vpop.f32.mrb[0].mxu0
      %v2405 = vadd.f32 %v2197, %v2404
      %v2406 = vpop.f32.mrb[0].mxu0
      %v2407 = vpop.f32.mrb[0].mxu0
      %v2408 = vadd.f32 %v2200, %v2407
      %v2409 = vpop.f32.mrb[0].mxu0
      %2410 = vmatprep.mubr.bf16.mxu0 0
      %2411 = vmatmul.mubr.bf16.gmra.mrb[0].mxu0 %v2071
      %v2412 = vpop.f32.mrb[0].mxu0
      %v2413 = vadd.f32 %v2205, %v2412
      %v2414 = vpop.f32.mrb[0].mxu0
      %v2415 = vpop.f32.mrb[0].mxu0
      %v2416 = vadd.f32 %v2208, %v2415
      %v2417 = vpop.f32.mrb[0].mxu0
      %2418 = vmatprep.mubr.bf16.mxu0 0
      %2419 = vmatmul.mubr.bf16.gmra.mrb[0].mxu0 %v2074
      %v2420 = vpop.f32.mrb[0].mxu0
      %v2421 = vadd.f32 %v2213, %v2420
      %v2422 = vpop.f32.mrb[0].mxu0
      %v2423 = vpop.f32.mrb[0].mxu0
      %v2424 = vadd.f32 %v2216, %v2423
      %v2425 = vpop.f32.mrb[0].mxu0
      %2426 = vmatprep.mubr.bf16.mxu0 0
      %2427 = vmatmul.mubr.bf16.gmra.mrb[0].mxu0 %v2077
      %v2428 = vpop.f32.mrb[0].mxu0
      %v2429 = vadd.f32 %v2221, %v2428
      %v2430 = vpop.f32.mrb[0].mxu0
      %v2431 = vpop.f32.mrb[0].mxu0
      %v2432 = vadd.f32 %v2224, %v2431
      %v2433 = vpop.f32.mrb[0].mxu0
      %2434 = vmatprep.mubr.bf16.mxu0 0
      %2435 = vmatmul.mubr.bf16.gmra.mrb[0].mxu0 %v2080
      %v2436 = vpop.f32.mrb[0].mxu0
      %v2437 = vadd.f32 %v2229, %v2436
      %v2438 = vpop.f32.mrb[0].mxu0
      %v2439 = vpop.f32.mrb[0].mxu0
      %v2440 = vadd.f32 %v2232, %v2439
      %v2441 = vpop.f32.mrb[0].mxu0
      %2442 = vmatprep.mubr.bf16.mxu0 0
      %2443 = vmatmul.mubr.bf16.gmra.mrb[0].mxu0 %v2083
      %v2444 = vpop.f32.mrb[0].mxu0
      %v2445 = vadd.f32 %v2237, %v2444
      %v2446 = vpop.f32.mrb[0].mxu0
      %v2447 = vpop.f32.mrb[0].mxu0
      %v2448 = vadd.f32 %v2240, %v2447
      %v2449 = vpop.f32.mrb[0].mxu0
      %2450 = vmatprep.mubr.bf16.mxu0 0
      %2451 = vmatmul.mubr.bf16.gmra.mrb[0].mxu0 %v2086
      %v2452 = vpop.f32.mrb[0].mxu0
      %v2453 = vadd.f32 %v2245, %v2452
      %v2454 = vpop.f32.mrb[0].mxu0
      %v2455 = vpop.f32.mrb[0].mxu0
      %v2456 = vadd.f32 %v2248, %v2455
      %v2457 = vpop.f32.mrb[0].mxu0
      %2458 = vmatprep.mubr.bf16.mxu0 0
      %2459 = vmatmul.mubr.bf16.gmra.mrb[0].mxu0 %v2089
      %v2460 = vpop.f32.mrb[0].mxu0
      %v2461 = vadd.f32 %v2253, %v2460
      %v2462 = vpop.f32.mrb[0].mxu0
      %v2463 = vpop.f32.mrb[0].mxu0
      %v2464 = vadd.f32 %v2256, %v2463
      %v2465 = vpop.f32.mrb[0].mxu0
      %2466 = vdwg.mxu0
      %v2467 = vld [vmem:[#allocation3 + $0x10] sm:$0xff]
      %v2468 = vld [vmem:[#allocation3 + $0x18] sm:$0xff]
      %v2469 = vld [vmem:[#allocation3 + $0x20] sm:$0xff]
      %v2470 = vld [vmem:[#allocation3 + $0x28] sm:$0xff]
      %v2471 = vld [vmem:[#allocation3 + $0x30] sm:$0xff]
      %v2472 = vld [vmem:[#allocation3 + $0x38] sm:$0xff]
      %v2473 = vld [vmem:[#allocation3 + $0x40] sm:$0xff]
      %v2474 = vld [vmem:[#allocation3 + $0x48] sm:$0xff]
      %v2475 = vld [vmem:[#allocation3 + $0x50] sm:$0xff]
      %v2476 = vld [vmem:[#allocation3 + $0x58] sm:$0xff]
      %v2477 = vld [vmem:[#allocation3 + $0x60] sm:$0xff]
      %v2478 = vld [vmem:[#allocation3 + $0x68] sm:$0xff]
      %v2479 = vld [vmem:[#allocation3 + $0x70] sm:$0xff]
      %v2480 = vld [vmem:[#allocation3 + $0x78] sm:$0xff]
      %v2481 = vld [vmem:[#allocation3 + $0x80] sm:$0xff]
      %v2482 = vld [vmem:[#allocation3 + $0x88] sm:$0xff]
      %s2483 = scalar_lea.vmem %s1, 112
      %v2484 = vld [vmem:[%s2483] sm:$0xf]
      %v2485 = vld [vmem:[%s2483 + $0x4] sm:$0xf]
      %v2486 = vld [vmem:[%s2483 + $0x8] sm:$0xf]
      %v2487 = vld [vmem:[%s2483 + $0xc] sm:$0xf]
      %v2488 = vld [vmem:[%s2483 + $0x10] sm:$0xf]
      %v2489 = vld [vmem:[%s2483 + $0x14] sm:$0xf]
      %v2490 = vld [vmem:[%s2483 + $0x18] sm:$0xf]
      %v2491 = vld [vmem:[%s2483 + $0x1c] sm:$0xf]
      %v2492 = vld [vmem:[%s2483 + $0x20] sm:$0xf]
      %v2493 = vld [vmem:[%s2483 + $0x24] sm:$0xf]
      %v2494 = vld [vmem:[%s2483 + $0x28] sm:$0xf]
      %v2495 = vld [vmem:[%s2483 + $0x2c] sm:$0xf]
      %v2496 = vld [vmem:[%s2483 + $0x30] sm:$0xf]
      %v2497 = vld [vmem:[%s2483 + $0x34] sm:$0x3]
      %v2512 = vunpack.c.l.b16 %v2484
      %v2513 = vunpack.c.l.b16 %v2485
      %v2514 = vunpack.c.l.b16 %v2486
      %v2515 = vunpack.c.l.b16 %v2487
      %v2516 = vunpack.c.l.b16 %v2488
      %v2517 = vunpack.c.l.b16 %v2489
      %v2518 = vunpack.c.l.b16 %v2490
      %v2519 = vunpack.c.l.b16 %v2491
      %v2520 = vunpack.c.l.b16 %v2492
      %v2521 = vunpack.c.l.b16 %v2493
      %v2522 = vunpack.c.l.b16 %v2494
      %v2523 = vunpack.c.l.b16 %v2495
      %v2524 = vunpack.c.l.b16 %v2496
      %v2525 = vunpack.c.l.b16 %v2497
      %v2526 = vpack.c.b16 %v2513, %v2512
      %v2527 = vpack.c.b16 %v2515, %v2514
      %v2528 = vpack.c.b16 %v2517, %v2516
      %v2529 = vpack.c.b16 %v2519, %v2518
      %v2530 = vpack.c.b16 %v2521, %v2520
      %v2531 = vpack.c.b16 %v2523, %v2522
      %v2532 = vpack.c.b16 %v2525, %v2524
      %v2540 = vsel %vm2045, %v2467, 0
      %v2543 = vsel %vm2045, %v2468, 0
      %v2546 = vsel %vm2045, %v2469, 0
      %v2549 = vsel %vm2045, %v2470, 0
      %v2552 = vsel %vm2045, %v2471, 0
      %v2555 = vsel %vm2045, %v2472, 0
      %v2558 = vsel %vm2045, %v2473, 0
      %v2561 = vsel %vm2045, %v2474, 0
      %v2564 = vsel %vm2045, %v2475, 0
      %v2567 = vsel %vm2045, %v2476, 0
      %v2570 = vsel %vm2045, %v2477, 0
      %v2573 = vsel %vm2045, %v2478, 0
      %v2576 = vsel %vm2045, %v2479, 0
      %v2579 = vsel %vm2045, %v2480, 0
      %v2582 = vsel %vm2045, %v2481, 0
      %v2585 = vsel %vm2045, %v2482, 0
      %v2588 = vsel %vm2094, %v2532, 0
      %2590 = vmatprep.subr.bf16.mxu0 0
      %2591 = vmatpush1.bf16.msra.mxu0 %v2526
      %2592 = vmatprep.subr.bf16.mxu0 0
      %2593 = vmatpush1.bf16.msra.mxu0 %v2527
      %2594 = vmatprep.subr.bf16.mxu0 0
      %2595 = vmatpush1.bf16.msra.mxu0 %v2528
      %2596 = vmatprep.subr.bf16.mxu0 0
      %2597 = vmatpush1.bf16.msra.mxu0 %v2529
      %2598 = vmatprep.subr.bf16.mxu0 0
      %2599 = vmatpush1.bf16.msra.mxu0 %v2530
      %2600 = vmatprep.subr.bf16.mxu0 0
      %2601 = vmatpush1.bf16.msra.mxu0 %v2531
      %2602 = vmatprep.subr.bf16.mxu0 0
      %2603 = vmatpush1.bf16.msra.mxu0 %v2588
      %2604 = vmatprep.subr.bf16.mxu0 0
      %2605 = vmatpush1.bf16.msra.mxu0 0
      %2606 = vmatprep.subr.bf16.mxu0 0
      %2607 = vmatpush1.bf16.msra.mxu0 0
      %2608 = vmatprep.subr.bf16.mxu0 0
      %2609 = vmatpush1.bf16.msra.mxu0 0
      %2610 = vmatprep.subr.bf16.mxu0 0
      %2611 = vmatpush1.bf16.msra.mxu0 0
      %2612 = vmatprep.subr.bf16.mxu0 0
      %2613 = vmatpush1.bf16.msra.mxu0 0
      %2614 = vmatprep.subr.bf16.mxu0 0
      %2615 = vmatpush1.bf16.msra.mxu0 0
      %2616 = vmatprep.subr.bf16.mxu0 0
      %2617 = vmatpush1.bf16.msra.mxu0 0
      %2618 = vmatprep.subr.bf16.mxu0 0
      %2619 = vmatpush1.bf16.msra.mxu0 0
      %2620 = vmatprep.subr.bf16.mxu0 0
      %2621 = vmatpush1.bf16.msra.mxu0 0
      %2622 = vmatprep.mubr.bf16.mxu0 0
      %2623 = vmatmul.mubr.bf16.gmra.mrb[0].mxu0 %v2540
      %v2624 = vpop.f32.mrb[0].mxu0
      %v2625 = vadd.f32 0.0, %v2624
      %v2626 = vpop.f32.mrb[0].mxu0
      %v2627 = vpop.f32.mrb[0].mxu0
      %v2628 = vadd.f32 0.0, %v2627
      %v2629 = vpop.f32.mrb[0].mxu0
      %2630 = vmatprep.mubr.bf16.mxu0 0
      %2631 = vmatmul.mubr.bf16.gmra.mrb[0].mxu0 %v2543
      %v2632 = vpop.f32.mrb[0].mxu0
      %v2633 = vadd.f32 0.0, %v2632
      %v2634 = vpop.f32.mrb[0].mxu0
      %v2635 = vpop.f32.mrb[0].mxu0
      %v2636 = vadd.f32 0.0, %v2635
      %v2637 = vpop.f32.mrb[0].mxu0
      %2638 = vmatprep.mubr.bf16.mxu0 0
      %2639 = vmatmul.mubr.bf16.gmra.mrb[0].mxu0 %v2546
      %v2640 = vpop.f32.mrb[0].mxu0
      %v2641 = vadd.f32 0.0, %v2640
      %v2642 = vpop.f32.mrb[0].mxu0
      %v2643 = vpop.f32.mrb[0].mxu0
      %v2644 = vadd.f32 0.0, %v2643
      %v2645 = vpop.f32.mrb[0].mxu0
      %2646 = vmatprep.mubr.bf16.mxu0 0
      %2647 = vmatmul.mubr.bf16.gmra.mrb[0].mxu0 %v2549
      %v2648 = vpop.f32.mrb[0].mxu0
      %v2649 = vadd.f32 0.0, %v2648
      %v2650 = vpop.f32.mrb[0].mxu0
      %v2651 = vpop.f32.mrb[0].mxu0
      %v2652 = vadd.f32 0.0, %v2651
      %v2653 = vpop.f32.mrb[0].mxu0
      %2654 = vmatprep.mubr.bf16.mxu0 0
      %2655 = vmatmul.mubr.bf16.gmra.mrb[0].mxu0 %v2552
      %v2656 = vpop.f32.mrb[0].mxu0
      %v2657 = vadd.f32 0.0, %v2656
      %v2658 = vpop.f32.mrb[0].mxu0
      %v2659 = vpop.f32.mrb[0].mxu0
      %v2660 = vadd.f32 0.0, %v2659
      %v2661 = vpop.f32.mrb[0].mxu0
      %2662 = vmatprep.mubr.bf16.mxu0 0
      %2663 = vmatmul.mubr.bf16.gmra.mrb[0].mxu0 %v2555
      %v2664 = vpop.f32.mrb[0].mxu0
      %v2665 = vadd.f32 0.0, %v2664
      %v2666 = vpop.f32.mrb[0].mxu0
      %v2667 = vpop.f32.mrb[0].mxu0
      %v2668 = vadd.f32 0.0, %v2667
      %v2669 = vpop.f32.mrb[0].mxu0
      %2670 = vmatprep.mubr.bf16.mxu0 0
      %2671 = vmatmul.mubr.bf16.gmra.mrb[0].mxu0 %v2558
      %v2672 = vpop.f32.mrb[0].mxu0
      %v2673 = vadd.f32 0.0, %v2672
      %v2674 = vpop.f32.mrb[0].mxu0
      %v2675 = vpop.f32.mrb[0].mxu0
      %v2676 = vadd.f32 0.0, %v2675
      %v2677 = vpop.f32.mrb[0].mxu0
      %2678 = vmatprep.mubr.bf16.mxu0 0
      %2679 = vmatmul.mubr.bf16.gmra.mrb[0].mxu0 %v2561
      %v2680 = vpop.f32.mrb[0].mxu0
      %v2681 = vadd.f32 0.0, %v2680
      %v2682 = vpop.f32.mrb[0].mxu0
      %v2683 = vpop.f32.mrb[0].mxu0
      %v2684 = vadd.f32 0.0, %v2683
      %v2685 = vpop.f32.mrb[0].mxu0
      %2686 = vmatprep.mubr.bf16.mxu0 0
      %2687 = vmatmul.mubr.bf16.gmra.mrb[0].mxu0 %v2564
      %v2688 = vpop.f32.mrb[0].mxu0
      %v2689 = vadd.f32 0.0, %v2688
      %v2690 = vpop.f32.mrb[0].mxu0
      %v2691 = vpop.f32.mrb[0].mxu0
      %v2692 = vadd.f32 0.0, %v2691
      %v2693 = vpop.f32.mrb[0].mxu0
      %2694 = vmatprep.mubr.bf16.mxu0 0
      %2695 = vmatmul.mubr.bf16.gmra.mrb[0].mxu0 %v2567
      %v2696 = vpop.f32.mrb[0].mxu0
      %v2697 = vadd.f32 0.0, %v2696
      %v2698 = vpop.f32.mrb[0].mxu0
      %v2699 = vpop.f32.mrb[0].mxu0
      %v2700 = vadd.f32 0.0, %v2699
      %v2701 = vpop.f32.mrb[0].mxu0
      %2702 = vmatprep.mubr.bf16.mxu0 0
      %2703 = vmatmul.mubr.bf16.gmra.mrb[0].mxu0 %v2570
      %v2704 = vpop.f32.mrb[0].mxu0
      %v2705 = vadd.f32 0.0, %v2704
      %v2706 = vpop.f32.mrb[0].mxu0
      %v2707 = vpop.f32.mrb[0].mxu0
      %v2708 = vadd.f32 0.0, %v2707
      %v2709 = vpop.f32.mrb[0].mxu0
      %2710 = vmatprep.mubr.bf16.mxu0 0
      %2711 = vmatmul.mubr.bf16.gmra.mrb[0].mxu0 %v2573
      %v2712 = vpop.f32.mrb[0].mxu0
      %v2713 = vadd.f32 0.0, %v2712
      %v2714 = vpop.f32.mrb[0].mxu0
      %v2715 = vpop.f32.mrb[0].mxu0
      %v2716 = vadd.f32 0.0, %v2715
      %v2717 = vpop.f32.mrb[0].mxu0
      %2718 = vmatprep.mubr.bf16.mxu0 0
      %2719 = vmatmul.mubr.bf16.gmra.mrb[0].mxu0 %v2576
      %v2720 = vpop.f32.mrb[0].mxu0
      %v2721 = vadd.f32 0.0, %v2720
      %v2722 = vpop.f32.mrb[0].mxu0
      %v2723 = vpop.f32.mrb[0].mxu0
      %v2724 = vadd.f32 0.0, %v2723
      %v2725 = vpop.f32.mrb[0].mxu0
      %2726 = vmatprep.mubr.bf16.mxu0 0
      %2727 = vmatmul.mubr.bf16.gmra.mrb[0].mxu0 %v2579
      %v2728 = vpop.f32.mrb[0].mxu0
      %v2729 = vadd.f32 0.0, %v2728
      %v2730 = vpop.f32.mrb[0].mxu0
      %v2731 = vpop.f32.mrb[0].mxu0
      %v2732 = vadd.f32 0.0, %v2731
      %v2733 = vpop.f32.mrb[0].mxu0
      %2734 = vmatprep.mubr.bf16.mxu0 0
      %2735 = vmatmul.mubr.bf16.gmra.mrb[0].mxu0 %v2582
      %v2736 = vpop.f32.mrb[0].mxu0
      %v2737 = vadd.f32 0.0, %v2736
      %v2738 = vpop.f32.mrb[0].mxu0
      %v2739 = vpop.f32.mrb[0].mxu0
      %v2740 = vadd.f32 0.0, %v2739
      %v2741 = vpop.f32.mrb[0].mxu0
      %2742 = vmatprep.mubr.bf16.mxu0 0
      %2743 = vmatmul.mubr.bf16.gmra.mrb[0].mxu0 %v2585
      %v2744 = vpop.f32.mrb[0].mxu0
      %v2745 = vadd.f32 0.0, %v2744
      %v2746 = vpop.f32.mrb[0].mxu0
      %v2747 = vpop.f32.mrb[0].mxu0
      %v2748 = vadd.f32 0.0, %v2747
      %v2749 = vpop.f32.mrb[0].mxu0
      %2750 = vdwg.mxu0
      %v2751 = vadd.f32 %v2341, %v2625
      %v2752 = vadd.f32 %v2344, %v2628
      %v2753 = vadd.f32 %v2349, %v2633
      %v2754 = vadd.f32 %v2352, %v2636
      %v2755 = vadd.f32 %v2357, %v2641
      %v2756 = vadd.f32 %v2360, %v2644
      %v2757 = vadd.f32 %v2365, %v2649
      %v2758 = vadd.f32 %v2368, %v2652
      %v2759 = vadd.f32 %v2373, %v2657
      %v2760 = vadd.f32 %v2376, %v2660
      %v2761 = vadd.f32 %v2381, %v2665
      %v2762 = vadd.f32 %v2384, %v2668
      %v2763 = vadd.f32 %v2389, %v2673
      %v2764 = vadd.f32 %v2392, %v2676
      %v2765 = vadd.f32 %v2397, %v2681
      %v2766 = vadd.f32 %v2400, %v2684
      %v2767 = vadd.f32 %v2405, %v2689
      %v2768 = vadd.f32 %v2408, %v2692
      %v2769 = vadd.f32 %v2413, %v2697
      %v2770 = vadd.f32 %v2416, %v2700
      %v2771 = vadd.f32 %v2421, %v2705
      %v2772 = vadd.f32 %v2424, %v2708
      %v2773 = vadd.f32 %v2429, %v2713
      %v2774 = vadd.f32 %v2432, %v2716
      %v2775 = vadd.f32 %v2437, %v2721
      %v2776 = vadd.f32 %v2440, %v2724
      %v2777 = vadd.f32 %v2445, %v2729
      %v2778 = vadd.f32 %v2448, %v2732
      %v2779 = vadd.f32 %v2453, %v2737
      %v2780 = vadd.f32 %v2456, %v2740
      %v2781 = vadd.f32 %v2461, %v2745
      %v2782 = vadd.f32 %v2464, %v2748
      %v2783 = vld [vmem:[%s2] sm:$0x1]
      %v2785 = vlaneseq
      %v2786 = vshrl.u32 %v2785, 7
      %v2787 = vsub.s32 0, %v2786
      %v2788 = vrot.slane %v2783, %v2787
      %v2790 = vadd.f32 %v2751, %v2788
      %v2791 = vadd.f32 %v2752, %v2788
      %v2792 = vadd.f32 %v2753, %v2788
      %v2793 = vadd.f32 %v2754, %v2788
      %v2794 = vadd.f32 %v2755, %v2788
      %v2795 = vadd.f32 %v2756, %v2788
      %v2796 = vadd.f32 %v2757, %v2788
      %v2797 = vadd.f32 %v2758, %v2788
      %v2798 = vadd.f32 %v2759, %v2788
      %v2799 = vadd.f32 %v2760, %v2788
      %v2800 = vadd.f32 %v2761, %v2788
      %v2801 = vadd.f32 %v2762, %v2788
      %v2802 = vadd.f32 %v2763, %v2788
      %v2803 = vadd.f32 %v2764, %v2788
      %v2804 = vadd.f32 %v2765, %v2788
      %v2805 = vadd.f32 %v2766, %v2788
      %v2806 = vadd.f32 %v2767, %v2788
      %v2807 = vadd.f32 %v2768, %v2788
      %v2808 = vadd.f32 %v2769, %v2788
      %v2809 = vadd.f32 %v2770, %v2788
      %v2810 = vadd.f32 %v2771, %v2788
      %v2811 = vadd.f32 %v2772, %v2788
      %v2812 = vadd.f32 %v2773, %v2788
      %v2813 = vadd.f32 %v2774, %v2788
      %v2814 = vadd.f32 %v2775, %v2788
      %v2815 = vadd.f32 %v2776, %v2788
      %v2816 = vadd.f32 %v2777, %v2788
      %v2817 = vadd.f32 %v2778, %v2788
      %v2818 = vadd.f32 %v2779, %v2788
      %v2819 = vadd.f32 %v2780, %v2788
      %v2820 = vadd.f32 %v2781, %v2788
      %v2821 = vadd.f32 %v2782, %v2788
      %v2822 = vxor.u32 %v2790, 2147483648
      %v2823 = vxor.u32 %v2791, 2147483648
      %v2824 = vxor.u32 %v2792, 2147483648
      %v2825 = vxor.u32 %v2793, 2147483648
      %v2826 = vxor.u32 %v2794, 2147483648
      %v2827 = vxor.u32 %v2795, 2147483648
      %v2828 = vxor.u32 %v2796, 2147483648
      %v2829 = vxor.u32 %v2797, 2147483648
      %v2830 = vxor.u32 %v2798, 2147483648
      %v2831 = vxor.u32 %v2799, 2147483648
      %v2832 = vxor.u32 %v2800, 2147483648
      %v2833 = vxor.u32 %v2801, 2147483648
      %v2834 = vxor.u32 %v2802, 2147483648
      %v2835 = vxor.u32 %v2803, 2147483648
      %v2836 = vxor.u32 %v2804, 2147483648
      %v2837 = vxor.u32 %v2805, 2147483648
      %v2838 = vxor.u32 %v2806, 2147483648
      %v2839 = vxor.u32 %v2807, 2147483648
      %v2840 = vxor.u32 %v2808, 2147483648
      %v2841 = vxor.u32 %v2809, 2147483648
      %v2842 = vxor.u32 %v2810, 2147483648
      %v2843 = vxor.u32 %v2811, 2147483648
      %v2844 = vxor.u32 %v2812, 2147483648
      %v2845 = vxor.u32 %v2813, 2147483648
      %v2846 = vxor.u32 %v2814, 2147483648
      %v2847 = vxor.u32 %v2815, 2147483648
      %v2848 = vxor.u32 %v2816, 2147483648
      %v2849 = vxor.u32 %v2817, 2147483648
      %v2850 = vxor.u32 %v2818, 2147483648
      %v2851 = vxor.u32 %v2819, 2147483648
      %v2852 = vxor.u32 %v2820, 2147483648
      %v2853 = vxor.u32 %v2821, 2147483648
      %v2854 = vmul.f32 %v2822, 1.442695
      %v2855 = vpow.pop %v2854
      %v2856 = vmul.f32 %v2823, 1.442695
      %v2857 = vpow.pop %v2856
      %v2858 = vmul.f32 %v2824, 1.442695
      %v2859 = vpow.pop %v2858
      %v2860 = vmul.f32 %v2825, 1.442695
      %v2861 = vpow.pop %v2860
      %v2862 = vmul.f32 %v2826, 1.442695
      %v2863 = vpow.pop %v2862
      %v2864 = vmul.f32 %v2827, 1.442695
      %v2865 = vpow.pop %v2864
      %v2866 = vmul.f32 %v2828, 1.442695
      %v2867 = vpow.pop %v2866
      %v2868 = vmul.f32 %v2829, 1.442695
      %v2869 = vpow.pop %v2868
      %v2870 = vmul.f32 %v2830, 1.442695
      %v2871 = vpow.pop %v2870
      %v2872 = vmul.f32 %v2831, 1.442695
      %v2873 = vpow.pop %v2872
      %v2874 = vmul.f32 %v2832, 1.442695
      %v2875 = vpow.pop %v2874
      %v2876 = vmul.f32 %v2833, 1.442695
      %v2877 = vpow.pop %v2876
      %v2878 = vmul.f32 %v2834, 1.442695
      %v2879 = vpow.pop %v2878
      %v2880 = vmul.f32 %v2835, 1.442695
      %v2881 = vpow.pop %v2880
      %v2882 = vmul.f32 %v2836, 1.442695
      %v2883 = vpow.pop %v2882
      %v2884 = vmul.f32 %v2837, 1.442695
      %v2885 = vpow.pop %v2884
      %v2886 = vmul.f32 %v2838, 1.442695
      %v2887 = vpow.pop %v2886
      %v2888 = vmul.f32 %v2839, 1.442695
      %v2889 = vpow.pop %v2888
      %v2890 = vmul.f32 %v2840, 1.442695
      %v2891 = vpow.pop %v2890
      %v2892 = vmul.f32 %v2841, 1.442695
      %v2893 = vpow.pop %v2892
      %v2894 = vmul.f32 %v2842, 1.442695
      %v2895 = vpow.pop %v2894
      %v2896 = vmul.f32 %v2843, 1.442695
      %v2897 = vpow.pop %v2896
      %v2898 = vmul.f32 %v2844, 1.442695
      %v2899 = vpow.pop %v2898
      %v2900 = vmul.f32 %v2845, 1.442695
      %v2901 = vpow.pop %v2900
      %v2902 = vmul.f32 %v2846, 1.442695
      %v2903 = vpow.pop %v2902
      %v2904 = vmul.f32 %v2847, 1.442695
      %v2905 = vpow.pop %v2904
      %v2906 = vmul.f32 %v2848, 1.442695
      %v2907 = vpow.pop %v2906
      %v2908 = vmul.f32 %v2849, 1.442695
      %v2909 = vpow.pop %v2908
      %v2910 = vmul.f32 %v2850, 1.442695
      %v2911 = vpow.pop %v2910
      %v2912 = vmul.f32 %v2851, 1.442695
      %v2913 = vpow.pop %v2912
      %v2914 = vmul.f32 %v2852, 1.442695
      %v2915 = vpow.pop %v2914
      %v2916 = vmul.f32 %v2853, 1.442695
      %v2917 = vpow.pop %v2916
      %v2918 = vadd.f32 %v2855, 1.0
      %v2919 = vadd.f32 %v2857, 1.0
      %v2920 = vadd.f32 %v2859, 1.0
      %v2921 = vadd.f32 %v2861, 1.0
      %v2922 = vadd.f32 %v2863, 1.0
      %v2923 = vadd.f32 %v2865, 1.0
      %v2924 = vadd.f32 %v2867, 1.0
      %v2925 = vadd.f32 %v2869, 1.0
      %v2926 = vadd.f32 %v2871, 1.0
      %v2927 = vadd.f32 %v2873, 1.0
      %v2928 = vadd.f32 %v2875, 1.0
      %v2929 = vadd.f32 %v2877, 1.0
      %v2930 = vadd.f32 %v2879, 1.0
      %v2931 = vadd.f32 %v2881, 1.0
      %v2932 = vadd.f32 %v2883, 1.0
      %v2933 = vadd.f32 %v2885, 1.0
      %v2934 = vadd.f32 %v2887, 1.0
      %v2935 = vadd.f32 %v2889, 1.0
      %v2936 = vadd.f32 %v2891, 1.0
      %v2937 = vadd.f32 %v2893, 1.0
      %v2938 = vadd.f32 %v2895, 1.0
      %v2939 = vadd.f32 %v2897, 1.0
      %v2940 = vadd.f32 %v2899, 1.0
      %v2941 = vadd.f32 %v2901, 1.0
      %v2942 = vadd.f32 %v2903, 1.0
      %v2943 = vadd.f32 %v2905, 1.0
      %v2944 = vadd.f32 %v2907, 1.0
      %v2945 = vadd.f32 %v2909, 1.0
      %v2946 = vadd.f32 %v2911, 1.0
      %v2947 = vadd.f32 %v2913, 1.0
      %v2948 = vadd.f32 %v2915, 1.0
      %v2949 = vadd.f32 %v2917, 1.0
      %v2950 = vrcp.pop %v2918
      %v2951 = vmul.f32 1.0, %v2950
      %v2952 = vrcp.pop %v2919
      %v2953 = vmul.f32 1.0, %v2952
      %v2954 = vrcp.pop %v2920
      %v2955 = vmul.f32 1.0, %v2954
      %v2956 = vrcp.pop %v2921
      %v2957 = vmul.f32 1.0, %v2956
      %v2958 = vrcp.pop %v2922
      %v2959 = vmul.f32 1.0, %v2958
      %v2960 = vrcp.pop %v2923
      %v2961 = vmul.f32 1.0, %v2960
      %v2962 = vrcp.pop %v2924
      %v2963 = vmul.f32 1.0, %v2962
      %v2964 = vrcp.pop %v2925
      %v2965 = vmul.f32 1.0, %v2964
      %v2966 = vrcp.pop %v2926
      %v2967 = vmul.f32 1.0, %v2966
      %v2968 = vrcp.pop %v2927
      %v2969 = vmul.f32 1.0, %v2968
      %v2970 = vrcp.pop %v2928
      %v2971 = vmul.f32 1.0, %v2970
      %v2972 = vrcp.pop %v2929
      %v2973 = vmul.f32 1.0, %v2972
      %v2974 = vrcp.pop %v2930
      %v2975 = vmul.f32 1.0, %v2974
      %v2976 = vrcp.pop %v2931
      %v2977 = vmul.f32 1.0, %v2976
      %v2978 = vrcp.pop %v2932
      %v2979 = vmul.f32 1.0, %v2978
      %v2980 = vrcp.pop %v2933
      %v2981 = vmul.f32 1.0, %v2980
      %v2982 = vrcp.pop %v2934
      %v2983 = vmul.f32 1.0, %v2982
      %v2984 = vrcp.pop %v2935
      %v2985 = vmul.f32 1.0, %v2984
      %v2986 = vrcp.pop %v2936
      %v2987 = vmul.f32 1.0, %v2986
      %v2988 = vrcp.pop %v2937
      %v2989 = vmul.f32 1.0, %v2988
      %v2990 = vrcp.pop %v2938
      %v2991 = vmul.f32 1.0, %v2990
      %v2992 = vrcp.pop %v2939
      %v2993 = vmul.f32 1.0, %v2992
      %v2994 = vrcp.pop %v2940
      %v2995 = vmul.f32 1.0, %v2994
      %v2996 = vrcp.pop %v2941
      %v2997 = vmul.f32 1.0, %v2996
      %v2998 = vrcp.pop %v2942
      %v2999 = vmul.f32 1.0, %v2998
      %v3000 = vrcp.pop %v2943
      %v3001 = vmul.f32 1.0, %v3000
      %v3002 = vrcp.pop %v2944
      %v3003 = vmul.f32 1.0, %v3002
      %v3004 = vrcp.pop %v2945
      %v3005 = vmul.f32 1.0, %v3004
      %v3006 = vrcp.pop %v2946
      %v3007 = vmul.f32 1.0, %v3006
      %v3008 = vrcp.pop %v2947
      %v3009 = vmul.f32 1.0, %v3008
      %v3010 = vrcp.pop %v2948
      %v3011 = vmul.f32 1.0, %v3010
      %v3012 = vrcp.pop %v2949
      %v3013 = vmul.f32 1.0, %v3012
      %v3014 = vtanh.pop %v2790
      %v3015 = vtanh.pop %v2791
      %v3016 = vtanh.pop %v2792
      %v3017 = vtanh.pop %v2793
      %v3018 = vtanh.pop %v2794
      %v3019 = vtanh.pop %v2795
      %v3020 = vtanh.pop %v2796
      %v3021 = vtanh.pop %v2797
      %v3022 = vtanh.pop %v2798
      %v3023 = vtanh.pop %v2799
      %v3024 = vtanh.pop %v2800
      %v3025 = vtanh.pop %v2801
      %v3026 = vtanh.pop %v2802
      %v3027 = vtanh.pop %v2803
      %v3028 = vtanh.pop %v2804
      %v3029 = vtanh.pop %v2805
      %v3030 = vtanh.pop %v2806
      %v3031 = vtanh.pop %v2807
      %v3032 = vtanh.pop %v2808
      %v3033 = vtanh.pop %v2809
      %v3034 = vtanh.pop %v2810
      %v3035 = vtanh.pop %v2811
      %v3036 = vtanh.pop %v2812
      %v3037 = vtanh.pop %v2813
      %v3038 = vtanh.pop %v2814
      %v3039 = vtanh.pop %v2815
      %v3040 = vtanh.pop %v2816
      %v3041 = vtanh.pop %v2817
      %v3042 = vtanh.pop %v2818
      %v3043 = vtanh.pop %v2819
      %v3044 = vtanh.pop %v2820
      %v3045 = vtanh.pop %v2821
      %v3046 = vld [vmem:[%s246] sm:$0xff]
      %v3047 = vld [vmem:[%s246 + $0x8] sm:$0xff]
      %v3048 = vld [vmem:[%s246 + $0x10] sm:$0xff]
      %v3049 = vld [vmem:[%s246 + $0x18] sm:$0xff]
      %v3050 = vld [vmem:[%s246 + $0x20] sm:$0xff]
      %v3051 = vld [vmem:[%s246 + $0x28] sm:$0xff]
      %v3052 = vld [vmem:[%s246 + $0x30] sm:$0xff]
      %v3053 = vld [vmem:[%s246 + $0x38] sm:$0xff]
      %v3054 = vld [vmem:[%s246 + $0x40] sm:$0xff]
      %v3055 = vld [vmem:[%s246 + $0x48] sm:$0xff]
      %v3056 = vld [vmem:[%s246 + $0x50] sm:$0xff]
      %v3057 = vld [vmem:[%s246 + $0x58] sm:$0xff]
      %v3058 = vld [vmem:[%s246 + $0x60] sm:$0xff]
      %v3059 = vld [vmem:[%s246 + $0x68] sm:$0xff]
      %v3060 = vld [vmem:[%s246 + $0x70] sm:$0xff]
      %v3061 = vld [vmem:[%s246 + $0x78] sm:$0xff]
      %v3062 = vld [vmem:[%s246 + $0x80] sm:$0xff]
      %v3063 = vld [vmem:[%s246 + $0x88] sm:$0xff]
      %v3064 = vld [vmem:[%s246 + $0x90] sm:$0xff]
      %v3065 = vld [vmem:[%s246 + $0x98] sm:$0xff]
      %v3066 = vld [vmem:[%s246 + $0xa0] sm:$0xff]
      %v3067 = vld [vmem:[%s246 + $0xa8] sm:$0xff]
      %v3068 = vld [vmem:[%s246 + $0xb0] sm:$0xff]
      %v3069 = vld [vmem:[%s246 + $0xb8] sm:$0xff]
      %v3070 = vld [vmem:[%s246 + $0xc0] sm:$0xff]
      %v3071 = vld [vmem:[%s246 + $0xc8] sm:$0xff]
      %v3072 = vld [vmem:[%s246 + $0xd0] sm:$0xff]
      %v3073 = vld [vmem:[%s246 + $0xd8] sm:$0xff]
      %v3074 = vld [vmem:[%s246 + $0xe0] sm:$0xff]
      %v3075 = vld [vmem:[%s246 + $0xe8] sm:$0xff]
      %v3076 = vld [vmem:[%s246 + $0xf0] sm:$0xff]
      %v3077 = vld [vmem:[%s246 + $0xf8] sm:$0xff]
      %3110 = vrot.lane.b32.xlu0 %v3046, 32
      %v3111 = vpop.permute.xlu0 %3110
      %3112 = vrot.lane.b32.xlu0 %v3047, 32
      %v3113 = vpop.permute.xlu0 %3112
      %3114 = vrot.lane.b32.xlu0 %v3048, 32
      %v3115 = vpop.permute.xlu0 %3114
      %3116 = vrot.lane.b32.xlu0 %v3049, 32
      %v3117 = vpop.permute.xlu0 %3116
      %3118 = vrot.lane.b32.xlu0 %v3050, 32
      %v3119 = vpop.permute.xlu0 %3118
      %3120 = vrot.lane.b32.xlu0 %v3051, 32
      %v3121 = vpop.permute.xlu0 %3120
      %3122 = vrot.lane.b32.xlu0 %v3052, 32
      %v3123 = vpop.permute.xlu0 %3122
      %3124 = vrot.lane.b32.xlu0 %v3053, 32
      %v3125 = vpop.permute.xlu0 %3124
      %3126 = vrot.lane.b32.xlu0 %v3054, 32
      %v3127 = vpop.permute.xlu0 %3126
      %3128 = vrot.lane.b32.xlu0 %v3055, 32
      %v3129 = vpop.permute.xlu0 %3128
      %3130 = vrot.lane.b32.xlu0 %v3056, 32
      %v3131 = vpop.permute.xlu0 %3130
      %3132 = vrot.lane.b32.xlu0 %v3057, 32
      %v3133 = vpop.permute.xlu0 %3132
      %3134 = vrot.lane.b32.xlu0 %v3058, 32
      %v3135 = vpop.permute.xlu0 %3134
      %3136 = vrot.lane.b32.xlu0 %v3059, 32
      %v3137 = vpop.permute.xlu0 %3136
      %3138 = vrot.lane.b32.xlu0 %v3060, 32
      %v3139 = vpop.permute.xlu0 %3138
      %3140 = vrot.lane.b32.xlu0 %v3061, 32
      %v3141 = vpop.permute.xlu0 %3140
      %3142 = vrot.lane.b32.xlu0 %v3062, 32
      %v3143 = vpop.permute.xlu0 %3142
      %3144 = vrot.lane.b32.xlu0 %v3063, 32
      %v3145 = vpop.permute.xlu0 %3144
      %3146 = vrot.lane.b32.xlu0 %v3064, 32
      %v3147 = vpop.permute.xlu0 %3146
      %3148 = vrot.lane.b32.xlu0 %v3065, 32
      %v3149 = vpop.permute.xlu0 %3148
      %3150 = vrot.lane.b32.xlu0 %v3066, 32
      %v3151 = vpop.permute.xlu0 %3150
      %3152 = vrot.lane.b32.xlu0 %v3067, 32
      %v3153 = vpop.permute.xlu0 %3152
      %3154 = vrot.lane.b32.xlu0 %v3068, 32
      %v3155 = vpop.permute.xlu0 %3154
      %3156 = vrot.lane.b32.xlu0 %v3069, 32
      %v3157 = vpop.permute.xlu0 %3156
      %3158 = vrot.lane.b32.xlu0 %v3070, 32
      %v3159 = vpop.permute.xlu0 %3158
      %3160 = vrot.lane.b32.xlu0 %v3071, 32
      %v3161 = vpop.permute.xlu0 %3160
      %3162 = vrot.lane.b32.xlu0 %v3072, 32
      %v3163 = vpop.permute.xlu0 %3162
      %3164 = vrot.lane.b32.xlu0 %v3073, 32
      %v3165 = vpop.permute.xlu0 %3164
      %3166 = vrot.lane.b32.xlu0 %v3074, 32
      %v3167 = vpop.permute.xlu0 %3166
      %3168 = vrot.lane.b32.xlu0 %v3075, 32
      %v3169 = vpop.permute.xlu0 %3168
      %3170 = vrot.lane.b32.xlu0 %v3076, 32
      %v3171 = vpop.permute.xlu0 %3170
      %3172 = vrot.lane.b32.xlu0 %v3077, 32
      %v3173 = vpop.permute.xlu0 %3172
      %v3206 = vmul.f32 %v2951, %v3111
      %v3207 = vmul.f32 %v2953, %v3113
      %v3208 = vmul.f32 %v2955, %v3115
      %v3209 = vmul.f32 %v2957, %v3117
      %v3210 = vmul.f32 %v2959, %v3119
      %v3211 = vmul.f32 %v2961, %v3121
      %v3212 = vmul.f32 %v2963, %v3123
      %v3213 = vmul.f32 %v2965, %v3125
      %v3214 = vmul.f32 %v2967, %v3127
      %v3215 = vmul.f32 %v2969, %v3129
      %v3216 = vmul.f32 %v2971, %v3131
      %v3217 = vmul.f32 %v2973, %v3133
      %v3218 = vmul.f32 %v2975, %v3135
      %v3219 = vmul.f32 %v2977, %v3137
      %v3220 = vmul.f32 %v2979, %v3139
      %v3221 = vmul.f32 %v2981, %v3141
      %v3222 = vmul.f32 %v2983, %v3143
      %v3223 = vmul.f32 %v2985, %v3145
      %v3224 = vmul.f32 %v2987, %v3147
      %v3225 = vmul.f32 %v2989, %v3149
      %v3226 = vmul.f32 %v2991, %v3151
      %v3227 = vmul.f32 %v2993, %v3153
      %v3228 = vmul.f32 %v2995, %v3155
      %v3229 = vmul.f32 %v2997, %v3157
      %v3230 = vmul.f32 %v2999, %v3159
      %v3231 = vmul.f32 %v3001, %v3161
      %v3232 = vmul.f32 %v3003, %v3163
      %v3233 = vmul.f32 %v3005, %v3165
      %v3234 = vmul.f32 %v3007, %v3167
      %v3235 = vmul.f32 %v3009, %v3169
      %v3236 = vmul.f32 %v3011, %v3171
      %v3237 = vmul.f32 %v3013, %v3173
      %3270 = vrot.lane.b32.xlu0 %v3014, 32
      %v3271 = vpop.permute.xlu0 %3270
      %3272 = vrot.lane.b32.xlu0 %v3015, 32
      %v3273 = vpop.permute.xlu0 %3272
      %3274 = vrot.lane.b32.xlu0 %v3016, 32
      %v3275 = vpop.permute.xlu0 %3274
      %3276 = vrot.lane.b32.xlu0 %v3017, 32
      %v3277 = vpop.permute.xlu0 %3276
      %3278 = vrot.lane.b32.xlu0 %v3018, 32
      %v3279 = vpop.permute.xlu0 %3278
      %3280 = vrot.lane.b32.xlu0 %v3019, 32
      %v3281 = vpop.permute.xlu0 %3280
      %3282 = vrot.lane.b32.xlu0 %v3020, 32
      %v3283 = vpop.permute.xlu0 %3282
      %3284 = vrot.lane.b32.xlu0 %v3021, 32
      %v3285 = vpop.permute.xlu0 %3284
      %3286 = vrot.lane.b32.xlu0 %v3022, 32
      %v3287 = vpop.permute.xlu0 %3286
      %3288 = vrot.lane.b32.xlu0 %v3023, 32
      %v3289 = vpop.permute.xlu0 %3288
      %3290 = vrot.lane.b32.xlu0 %v3024, 32
      %v3291 = vpop.permute.xlu0 %3290
      %3292 = vrot.lane.b32.xlu0 %v3025, 32
      %v3293 = vpop.permute.xlu0 %3292
      %3294 = vrot.lane.b32.xlu0 %v3026, 32
      %v3295 = vpop.permute.xlu0 %3294
      %3296 = vrot.lane.b32.xlu0 %v3027, 32
      %v3297 = vpop.permute.xlu0 %3296
      %3298 = vrot.lane.b32.xlu0 %v3028, 32
      %v3299 = vpop.permute.xlu0 %3298
      %3300 = vrot.lane.b32.xlu0 %v3029, 32
      %v3301 = vpop.permute.xlu0 %3300
      %3302 = vrot.lane.b32.xlu0 %v3030, 32
      %v3303 = vpop.permute.xlu0 %3302
      %3304 = vrot.lane.b32.xlu0 %v3031, 32
      %v3305 = vpop.permute.xlu0 %3304
      %3306 = vrot.lane.b32.xlu0 %v3032, 32
      %v3307 = vpop.permute.xlu0 %3306
      %3308 = vrot.lane.b32.xlu0 %v3033, 32
      %v3309 = vpop.permute.xlu0 %3308
      %3310 = vrot.lane.b32.xlu0 %v3034, 32
      %v3311 = vpop.permute.xlu0 %3310
      %3312 = vrot.lane.b32.xlu0 %v3035, 32
      %v3313 = vpop.permute.xlu0 %3312
      %3314 = vrot.lane.b32.xlu0 %v3036, 32
      %v3315 = vpop.permute.xlu0 %3314
      %3316 = vrot.lane.b32.xlu0 %v3037, 32
      %v3317 = vpop.permute.xlu0 %3316
      %3318 = vrot.lane.b32.xlu0 %v3038, 32
      %v3319 = vpop.permute.xlu0 %3318
      %3320 = vrot.lane.b32.xlu0 %v3039, 32
      %v3321 = vpop.permute.xlu0 %3320
      %3322 = vrot.lane.b32.xlu0 %v3040, 32
      %v3323 = vpop.permute.xlu0 %3322
      %3324 = vrot.lane.b32.xlu0 %v3041, 32
      %v3325 = vpop.permute.xlu0 %3324
      %3326 = vrot.lane.b32.xlu0 %v3042, 32
      %v3327 = vpop.permute.xlu0 %3326
      %3328 = vrot.lane.b32.xlu0 %v3043, 32
      %v3329 = vpop.permute.xlu0 %3328
      %3330 = vrot.lane.b32.xlu0 %v3044, 32
      %v3331 = vpop.permute.xlu0 %3330
      %3332 = vrot.lane.b32.xlu0 %v3045, 32
      %v3333 = vpop.permute.xlu0 %3332
      %v3366 = vmul.f32 %v2951, %v3271
      %v3367 = vmul.f32 %v2953, %v3273
      %v3368 = vmul.f32 %v2955, %v3275
      %v3369 = vmul.f32 %v2957, %v3277
      %v3370 = vmul.f32 %v2959, %v3279
      %v3371 = vmul.f32 %v2961, %v3281
      %v3372 = vmul.f32 %v2963, %v3283
      %v3373 = vmul.f32 %v2965, %v3285
      %v3374 = vmul.f32 %v2967, %v3287
      %v3375 = vmul.f32 %v2969, %v3289
      %v3376 = vmul.f32 %v2971, %v3291
      %v3377 = vmul.f32 %v2973, %v3293
      %v3378 = vmul.f32 %v2975, %v3295
      %v3379 = vmul.f32 %v2977, %v3297
      %v3380 = vmul.f32 %v2979, %v3299
      %v3381 = vmul.f32 %v2981, %v3301
      %v3382 = vmul.f32 %v2983, %v3303
      %v3383 = vmul.f32 %v2985, %v3305
      %v3384 = vmul.f32 %v2987, %v3307
      %v3385 = vmul.f32 %v2989, %v3309
      %v3386 = vmul.f32 %v2991, %v3311
      %v3387 = vmul.f32 %v2993, %v3313
      %v3388 = vmul.f32 %v2995, %v3315
      %v3389 = vmul.f32 %v2997, %v3317
      %v3390 = vmul.f32 %v2999, %v3319
      %v3391 = vmul.f32 %v3001, %v3321
      %v3392 = vmul.f32 %v3003, %v3323
      %v3393 = vmul.f32 %v3005, %v3325
      %v3394 = vmul.f32 %v3007, %v3327
      %v3395 = vmul.f32 %v3009, %v3329
      %v3396 = vmul.f32 %v3011, %v3331
      %v3397 = vmul.f32 %v3013, %v3333
      %3430 = vrot.lane.b32.xlu0 %v3366, 32
      %v3431 = vpop.permute.xlu0 %3430
      %3432 = vrot.lane.b32.xlu0 %v3367, 32
      %v3433 = vpop.permute.xlu0 %3432
      %3434 = vrot.lane.b32.xlu0 %v3368, 32
      %v3435 = vpop.permute.xlu0 %3434
      %3436 = vrot.lane.b32.xlu0 %v3369, 32
      %v3437 = vpop.permute.xlu0 %3436
      %3438 = vrot.lane.b32.xlu0 %v3370, 32
      %v3439 = vpop.permute.xlu0 %3438
      %3440 = vrot.lane.b32.xlu0 %v3371, 32
      %v3441 = vpop.permute.xlu0 %3440
      %3442 = vrot.lane.b32.xlu0 %v3372, 32
      %v3443 = vpop.permute.xlu0 %3442
      %3444 = vrot.lane.b32.xlu0 %v3373, 32
      %v3445 = vpop.permute.xlu0 %3444
      %3446 = vrot.lane.b32.xlu0 %v3374, 32
      %v3447 = vpop.permute.xlu0 %3446
      %3448 = vrot.lane.b32.xlu0 %v3375, 32
      %v3449 = vpop.permute.xlu0 %3448
      %3450 = vrot.lane.b32.xlu0 %v3376, 32
      %v3451 = vpop.permute.xlu0 %3450
      %3452 = vrot.lane.b32.xlu0 %v3377, 32
      %v3453 = vpop.permute.xlu0 %3452
      %3454 = vrot.lane.b32.xlu0 %v3378, 32
      %v3455 = vpop.permute.xlu0 %3454
      %3456 = vrot.lane.b32.xlu0 %v3379, 32
      %v3457 = vpop.permute.xlu0 %3456
      %3458 = vrot.lane.b32.xlu0 %v3380, 32
      %v3459 = vpop.permute.xlu0 %3458
      %3460 = vrot.lane.b32.xlu0 %v3381, 32
      %v3461 = vpop.permute.xlu0 %3460
      %3462 = vrot.lane.b32.xlu0 %v3382, 32
      %v3463 = vpop.permute.xlu0 %3462
      %3464 = vrot.lane.b32.xlu0 %v3383, 32
      %v3465 = vpop.permute.xlu0 %3464
      %3466 = vrot.lane.b32.xlu0 %v3384, 32
      %v3467 = vpop.permute.xlu0 %3466
      %3468 = vrot.lane.b32.xlu0 %v3385, 32
      %v3469 = vpop.permute.xlu0 %3468
      %3470 = vrot.lane.b32.xlu0 %v3386, 32
      %v3471 = vpop.permute.xlu0 %3470
      %3472 = vrot.lane.b32.xlu0 %v3387, 32
      %v3473 = vpop.permute.xlu0 %3472
      %3474 = vrot.lane.b32.xlu0 %v3388, 32
      %v3475 = vpop.permute.xlu0 %3474
      %3476 = vrot.lane.b32.xlu0 %v3389, 32
      %v3477 = vpop.permute.xlu0 %3476
      %3478 = vrot.lane.b32.xlu0 %v3390, 32
      %v3479 = vpop.permute.xlu0 %3478
      %3480 = vrot.lane.b32.xlu0 %v3391, 32
      %v3481 = vpop.permute.xlu0 %3480
      %3482 = vrot.lane.b32.xlu0 %v3392, 32
      %v3483 = vpop.permute.xlu0 %3482
      %3484 = vrot.lane.b32.xlu0 %v3393, 32
      %v3485 = vpop.permute.xlu0 %3484
      %3486 = vrot.lane.b32.xlu0 %v3394, 32
      %v3487 = vpop.permute.xlu0 %3486
      %3488 = vrot.lane.b32.xlu0 %v3395, 32
      %v3489 = vpop.permute.xlu0 %3488
      %3490 = vrot.lane.b32.xlu0 %v3396, 32
      %v3491 = vpop.permute.xlu0 %3490
      %3492 = vrot.lane.b32.xlu0 %v3397, 32
      %v3493 = vpop.permute.xlu0 %3492
      %v3526 = vadd.f32 %v3206, %v3431
      %v3527 = vadd.f32 %v3207, %v3433
      %v3528 = vadd.f32 %v3208, %v3435
      %v3529 = vadd.f32 %v3209, %v3437
      %v3530 = vadd.f32 %v3210, %v3439
      %v3531 = vadd.f32 %v3211, %v3441
      %v3532 = vadd.f32 %v3212, %v3443
      %v3533 = vadd.f32 %v3213, %v3445
      %v3534 = vadd.f32 %v3214, %v3447
      %v3535 = vadd.f32 %v3215, %v3449
      %v3536 = vadd.f32 %v3216, %v3451
      %v3537 = vadd.f32 %v3217, %v3453
      %v3538 = vadd.f32 %v3218, %v3455
      %v3539 = vadd.f32 %v3219, %v3457
      %v3540 = vadd.f32 %v3220, %v3459
      %v3541 = vadd.f32 %v3221, %v3461
      %v3542 = vadd.f32 %v3222, %v3463
      %v3543 = vadd.f32 %v3223, %v3465
      %v3544 = vadd.f32 %v3224, %v3467
      %v3545 = vadd.f32 %v3225, %v3469
      %v3546 = vadd.f32 %v3226, %v3471
      %v3547 = vadd.f32 %v3227, %v3473
      %v3548 = vadd.f32 %v3228, %v3475
      %v3549 = vadd.f32 %v3229, %v3477
      %v3550 = vadd.f32 %v3230, %v3479
      %v3551 = vadd.f32 %v3231, %v3481
      %v3552 = vadd.f32 %v3232, %v3483
      %v3553 = vadd.f32 %v3233, %v3485
      %v3554 = vadd.f32 %v3234, %v3487
      %v3555 = vadd.f32 %v3235, %v3489
      %v3556 = vadd.f32 %v3236, %v3491
      %v3557 = vadd.f32 %v3237, %v3493
      %v3558 = vtanh.pop %v3526
      %v3559 = vtanh.pop %v3527
      %v3560 = vtanh.pop %v3528
      %v3561 = vtanh.pop %v3529
      %v3562 = vtanh.pop %v3530
      %v3563 = vtanh.pop %v3531
      %v3564 = vtanh.pop %v3532
      %v3565 = vtanh.pop %v3533
      %v3566 = vtanh.pop %v3534
      %v3567 = vtanh.pop %v3535
      %v3568 = vtanh.pop %v3536
      %v3569 = vtanh.pop %v3537
      %v3570 = vtanh.pop %v3538
      %v3571 = vtanh.pop %v3539
      %v3572 = vtanh.pop %v3540
      %v3573 = vtanh.pop %v3541
      %v3574 = vtanh.pop %v3542
      %v3575 = vtanh.pop %v3543
      %v3576 = vtanh.pop %v3544
      %v3577 = vtanh.pop %v3545
      %v3578 = vtanh.pop %v3546
      %v3579 = vtanh.pop %v3547
      %v3580 = vtanh.pop %v3548
      %v3581 = vtanh.pop %v3549
      %v3582 = vtanh.pop %v3550
      %v3583 = vtanh.pop %v3551
      %v3584 = vtanh.pop %v3552
      %v3585 = vtanh.pop %v3553
      %v3586 = vtanh.pop %v3554
      %v3587 = vtanh.pop %v3555
      %v3588 = vtanh.pop %v3556
      %v3589 = vtanh.pop %v3557
      %3622 = vrot.lane.b32.xlu0 %v3558, 32
      %v3623 = vpop.permute.xlu0 %3622
      %3624 = vrot.lane.b32.xlu0 %v3559, 32
      %v3625 = vpop.permute.xlu0 %3624
      %3626 = vrot.lane.b32.xlu0 %v3560, 32
      %v3627 = vpop.permute.xlu0 %3626
      %3628 = vrot.lane.b32.xlu0 %v3561, 32
      %v3629 = vpop.permute.xlu0 %3628
      %3630 = vrot.lane.b32.xlu0 %v3562, 32
      %v3631 = vpop.permute.xlu0 %3630
      %3632 = vrot.lane.b32.xlu0 %v3563, 32
      %v3633 = vpop.permute.xlu0 %3632
      %3634 = vrot.lane.b32.xlu0 %v3564, 32
      %v3635 = vpop.permute.xlu0 %3634
      %3636 = vrot.lane.b32.xlu0 %v3565, 32
      %v3637 = vpop.permute.xlu0 %3636
      %3638 = vrot.lane.b32.xlu0 %v3566, 32
      %v3639 = vpop.permute.xlu0 %3638
      %3640 = vrot.lane.b32.xlu0 %v3567, 32
      %v3641 = vpop.permute.xlu0 %3640
      %3642 = vrot.lane.b32.xlu0 %v3568, 32
      %v3643 = vpop.permute.xlu0 %3642
      %3644 = vrot.lane.b32.xlu0 %v3569, 32
      %v3645 = vpop.permute.xlu0 %3644
      %3646 = vrot.lane.b32.xlu0 %v3570, 32
      %v3647 = vpop.permute.xlu0 %3646
      %3648 = vrot.lane.b32.xlu0 %v3571, 32
      %v3649 = vpop.permute.xlu0 %3648
      %3650 = vrot.lane.b32.xlu0 %v3572, 32
      %v3651 = vpop.permute.xlu0 %3650
      %3652 = vrot.lane.b32.xlu0 %v3573, 32
      %v3653 = vpop.permute.xlu0 %3652
      %3654 = vrot.lane.b32.xlu0 %v3574, 32
      %v3655 = vpop.permute.xlu0 %3654
      %3656 = vrot.lane.b32.xlu0 %v3575, 32
      %v3657 = vpop.permute.xlu0 %3656
      %3658 = vrot.lane.b32.xlu0 %v3576, 32
      %v3659 = vpop.permute.xlu0 %3658
      %3660 = vrot.lane.b32.xlu0 %v3577, 32
      %v3661 = vpop.permute.xlu0 %3660
      %3662 = vrot.lane.b32.xlu0 %v3578, 32
      %v3663 = vpop.permute.xlu0 %3662
      %3664 = vrot.lane.b32.xlu0 %v3579, 32
      %v3665 = vpop.permute.xlu0 %3664
      %3666 = vrot.lane.b32.xlu0 %v3580, 32
      %v3667 = vpop.permute.xlu0 %3666
      %3668 = vrot.lane.b32.xlu0 %v3581, 32
      %v3669 = vpop.permute.xlu0 %3668
      %3670 = vrot.lane.b32.xlu0 %v3582, 32
      %v3671 = vpop.permute.xlu0 %3670
      %3672 = vrot.lane.b32.xlu0 %v3583, 32
      %v3673 = vpop.permute.xlu0 %3672
      %3674 = vrot.lane.b32.xlu0 %v3584, 32
      %v3675 = vpop.permute.xlu0 %3674
      %3676 = vrot.lane.b32.xlu0 %v3585, 32
      %v3677 = vpop.permute.xlu0 %3676
      %3678 = vrot.lane.b32.xlu0 %v3586, 32
      %v3679 = vpop.permute.xlu0 %3678
      %3680 = vrot.lane.b32.xlu0 %v3587, 32
      %v3681 = vpop.permute.xlu0 %3680
      %3682 = vrot.lane.b32.xlu0 %v3588, 32
      %v3683 = vpop.permute.xlu0 %3682
      %3684 = vrot.lane.b32.xlu0 %v3589, 32
      %v3685 = vpop.permute.xlu0 %3684
      %v3718 = vmul.f32 %v2951, %v3623
      %v3719 = vmul.f32 %v2953, %v3625
      %v3720 = vmul.f32 %v2955, %v3627
      %v3721 = vmul.f32 %v2957, %v3629
      %v3722 = vmul.f32 %v2959, %v3631
      %v3723 = vmul.f32 %v2961, %v3633
      %v3724 = vmul.f32 %v2963, %v3635
      %v3725 = vmul.f32 %v2965, %v3637
      %v3726 = vmul.f32 %v2967, %v3639
      %v3727 = vmul.f32 %v2969, %v3641
      %v3728 = vmul.f32 %v2971, %v3643
      %v3729 = vmul.f32 %v2973, %v3645
      %v3730 = vmul.f32 %v2975, %v3647
      %v3731 = vmul.f32 %v2977, %v3649
      %v3732 = vmul.f32 %v2979, %v3651
      %v3733 = vmul.f32 %v2981, %v3653
      %v3734 = vmul.f32 %v2983, %v3655
      %v3735 = vmul.f32 %v2985, %v3657
      %v3736 = vmul.f32 %v2987, %v3659
      %v3737 = vmul.f32 %v2989, %v3661
      %v3738 = vmul.f32 %v2991, %v3663
      %v3739 = vmul.f32 %v2993, %v3665
      %v3740 = vmul.f32 %v2995, %v3667
      %v3741 = vmul.f32 %v2997, %v3669
      %v3742 = vmul.f32 %v2999, %v3671
      %v3743 = vmul.f32 %v3001, %v3673
      %v3744 = vmul.f32 %v3003, %v3675
      %v3745 = vmul.f32 %v3005, %v3677
      %v3746 = vmul.f32 %v3007, %v3679
      %v3747 = vmul.f32 %v3009, %v3681
      %v3748 = vmul.f32 %v3011, %v3683
      %v3749 = vmul.f32 %v3013, %v3685
      %3782 = vrot.lane.b32.xlu0 %v3526, 96
      %v3783 = vpop.permute.xlu0 %3782
      %3784 = vrot.lane.b32.xlu0 %v3527, 96
      %v3785 = vpop.permute.xlu0 %3784
      %3786 = vrot.lane.b32.xlu0 %v3528, 96
      %v3787 = vpop.permute.xlu0 %3786
      %3788 = vrot.lane.b32.xlu0 %v3529, 96
      %v3789 = vpop.permute.xlu0 %3788
      %3790 = vrot.lane.b32.xlu0 %v3530, 96
      %v3791 = vpop.permute.xlu0 %3790
      %3792 = vrot.lane.b32.xlu0 %v3531, 96
      %v3793 = vpop.permute.xlu0 %3792
      %3794 = vrot.lane.b32.xlu0 %v3532, 96
      %v3795 = vpop.permute.xlu0 %3794
      %3796 = vrot.lane.b32.xlu0 %v3533, 96
      %v3797 = vpop.permute.xlu0 %3796
      %3798 = vrot.lane.b32.xlu0 %v3534, 96
      %v3799 = vpop.permute.xlu0 %3798
      %3800 = vrot.lane.b32.xlu0 %v3535, 96
      %v3801 = vpop.permute.xlu0 %3800
      %3802 = vrot.lane.b32.xlu0 %v3536, 96
      %v3803 = vpop.permute.xlu0 %3802
      %3804 = vrot.lane.b32.xlu0 %v3537, 96
      %v3805 = vpop.permute.xlu0 %3804
      %3806 = vrot.lane.b32.xlu0 %v3538, 96
      %v3807 = vpop.permute.xlu0 %3806
      %3808 = vrot.lane.b32.xlu0 %v3539, 96
      %v3809 = vpop.permute.xlu0 %3808
      %3810 = vrot.lane.b32.xlu0 %v3540, 96
      %v3811 = vpop.permute.xlu0 %3810
      %3812 = vrot.lane.b32.xlu0 %v3541, 96
      %v3813 = vpop.permute.xlu0 %3812
      %3814 = vrot.lane.b32.xlu0 %v3542, 96
      %v3815 = vpop.permute.xlu0 %3814
      %3816 = vrot.lane.b32.xlu0 %v3543, 96
      %v3817 = vpop.permute.xlu0 %3816
      %3818 = vrot.lane.b32.xlu0 %v3544, 96
      %v3819 = vpop.permute.xlu0 %3818
      %3820 = vrot.lane.b32.xlu0 %v3545, 96
      %v3821 = vpop.permute.xlu0 %3820
      %3822 = vrot.lane.b32.xlu0 %v3546, 96
      %v3823 = vpop.permute.xlu0 %3822
      %3824 = vrot.lane.b32.xlu0 %v3547, 96
      %v3825 = vpop.permute.xlu0 %3824
      %3826 = vrot.lane.b32.xlu0 %v3548, 96
      %v3827 = vpop.permute.xlu0 %3826
      %3828 = vrot.lane.b32.xlu0 %v3549, 96
      %v3829 = vpop.permute.xlu0 %3828
      %3830 = vrot.lane.b32.xlu0 %v3550, 96
      %v3831 = vpop.permute.xlu0 %3830
      %3832 = vrot.lane.b32.xlu0 %v3551, 96
      %v3833 = vpop.permute.xlu0 %3832
      %3834 = vrot.lane.b32.xlu0 %v3552, 96
      %v3835 = vpop.permute.xlu0 %3834
      %3836 = vrot.lane.b32.xlu0 %v3553, 96
      %v3837 = vpop.permute.xlu0 %3836
      %3838 = vrot.lane.b32.xlu0 %v3554, 96
      %v3839 = vpop.permute.xlu0 %3838
      %3840 = vrot.lane.b32.xlu0 %v3555, 96
      %v3841 = vpop.permute.xlu0 %3840
      %3842 = vrot.lane.b32.xlu0 %v3556, 96
      %v3843 = vpop.permute.xlu0 %3842
      %3844 = vrot.lane.b32.xlu0 %v3557, 96
      %v3845 = vpop.permute.xlu0 %3844
      %vm3878 = vcmask 261120
      %3879 = vst.msk [vmem:[%s246] sm:$0xff] %vm3878, %v3783
      %3880 = vst.msk [vmem:[%s246 + $0x8] sm:$0xff] %vm3878, %v3785
      %3881 = vst.msk [vmem:[%s246 + $0x10] sm:$0xff] %vm3878, %v3787
      %3882 = vst.msk [vmem:[%s246 + $0x18] sm:$0xff] %vm3878, %v3789
      %3883 = vst.msk [vmem:[%s246 + $0x20] sm:$0xff] %vm3878, %v3791
      %3884 = vst.msk [vmem:[%s246 + $0x28] sm:$0xff] %vm3878, %v3793
      %3885 = vst.msk [vmem:[%s246 + $0x30] sm:$0xff] %vm3878, %v3795
      %3886 = vst.msk [vmem:[%s246 + $0x38] sm:$0xff] %vm3878, %v3797
      %3887 = vst.msk [vmem:[%s246 + $0x40] sm:$0xff] %vm3878, %v3799
      %3888 = vst.msk [vmem:[%s246 + $0x48] sm:$0xff] %vm3878, %v3801
      %3889 = vst.msk [vmem:[%s246 + $0x50] sm:$0xff] %vm3878, %v3803
      %3890 = vst.msk [vmem:[%s246 + $0x58] sm:$0xff] %vm3878, %v3805
      %3891 = vst.msk [vmem:[%s246 + $0x60] sm:$0xff] %vm3878, %v3807
      %3892 = vst.msk [vmem:[%s246 + $0x68] sm:$0xff] %vm3878, %v3809
      %3893 = vst.msk [vmem:[%s246 + $0x70] sm:$0xff] %vm3878, %v3811
      %3894 = vst.msk [vmem:[%s246 + $0x78] sm:$0xff] %vm3878, %v3813
      %3895 = vst.msk [vmem:[%s246 + $0x80] sm:$0xff] %vm3878, %v3815
      %3896 = vst.msk [vmem:[%s246 + $0x88] sm:$0xff] %vm3878, %v3817
      %3897 = vst.msk [vmem:[%s246 + $0x90] sm:$0xff] %vm3878, %v3819
      %3898 = vst.msk [vmem:[%s246 + $0x98] sm:$0xff] %vm3878, %v3821
      %3899 = vst.msk [vmem:[%s246 + $0xa0] sm:$0xff] %vm3878, %v3823
      %3900 = vst.msk [vmem:[%s246 + $0xa8] sm:$0xff] %vm3878, %v3825
      %3901 = vst.msk [vmem:[%s246 + $0xb0] sm:$0xff] %vm3878, %v3827
      %3902 = vst.msk [vmem:[%s246 + $0xb8] sm:$0xff] %vm3878, %v3829
      %3903 = vst.msk [vmem:[%s246 + $0xc0] sm:$0xff] %vm3878, %v3831
      %3904 = vst.msk [vmem:[%s246 + $0xc8] sm:$0xff] %vm3878, %v3833
      %3905 = vst.msk [vmem:[%s246 + $0xd0] sm:$0xff] %vm3878, %v3835
      %3906 = vst.msk [vmem:[%s246 + $0xd8] sm:$0xff] %vm3878, %v3837
      %3907 = vst.msk [vmem:[%s246 + $0xe0] sm:$0xff] %vm3878, %v3839
      %3908 = vst.msk [vmem:[%s246 + $0xe8] sm:$0xff] %vm3878, %v3841
      %3909 = vst.msk [vmem:[%s246 + $0xf0] sm:$0xff] %vm3878, %v3843
      %3910 = vst.msk [vmem:[%s246 + $0xf8] sm:$0xff] %vm3878, %v3845
      %v3911 = vpack.c.bf16 %v3719, %v3718
      %v3912 = vpack.c.bf16 %v3721, %v3720
      %v3913 = vpack.c.bf16 %v3723, %v3722
      %v3914 = vpack.c.bf16 %v3725, %v3724
      %v3915 = vpack.c.bf16 %v3727, %v3726
      %v3916 = vpack.c.bf16 %v3729, %v3728
      %v3917 = vpack.c.bf16 %v3731, %v3730
      %v3918 = vpack.c.bf16 %v3733, %v3732
      %v3919 = vpack.c.bf16 %v3735, %v3734
      %v3920 = vpack.c.bf16 %v3737, %v3736
      %v3921 = vpack.c.bf16 %v3739, %v3738
      %v3922 = vpack.c.bf16 %v3741, %v3740
      %v3923 = vpack.c.bf16 %v3743, %v3742
      %v3924 = vpack.c.bf16 %v3745, %v3744
      %v3925 = vpack.c.bf16 %v3747, %v3746
      %v3926 = vpack.c.bf16 %v3749, %v3748
      %v3943 = vunpack.c.l.b16 %v3911
      %v3944 = vunpack.c.h.b16 %v3911
      %v3945 = vunpack.c.l.b16 %v3912
      %v3946 = vunpack.c.h.b16 %v3912
      %v3947 = vunpack.c.l.b16 %v3913
      %v3948 = vunpack.c.h.b16 %v3913
      %v3949 = vunpack.c.l.b16 %v3914
      %v3950 = vunpack.c.h.b16 %v3914
      %v3951 = vunpack.c.l.b16 %v3915
      %v3952 = vunpack.c.h.b16 %v3915
      %v3953 = vunpack.c.l.b16 %v3916
      %v3954 = vunpack.c.h.b16 %v3916
      %v3955 = vunpack.c.l.b16 %v3917
      %v3956 = vunpack.c.h.b16 %v3917
      %v3957 = vunpack.c.l.b16 %v3918
      %v3958 = vunpack.c.h.b16 %v3918
      %v3959 = vunpack.c.l.b16 %v3919
      %v3960 = vunpack.c.h.b16 %v3919
      %v3961 = vunpack.c.l.b16 %v3920
      %v3962 = vunpack.c.h.b16 %v3920
      %v3963 = vunpack.c.l.b16 %v3921
      %v3964 = vunpack.c.h.b16 %v3921
      %v3965 = vunpack.c.l.b16 %v3922
      %v3966 = vunpack.c.h.b16 %v3922
      %v3967 = vunpack.c.l.b16 %v3923
      %v3968 = vunpack.c.h.b16 %v3923
      %v3969 = vunpack.c.l.b16 %v3924
      %v3970 = vunpack.c.h.b16 %v3924
      %v3971 = vunpack.c.l.b16 %v3925
      %v3972 = vunpack.c.h.b16 %v3925
      %v3973 = vunpack.c.l.b16 %v3926
      %v3974 = vunpack.c.h.b16 %v3926
      %v3975 = vpack.c.b16 %v3943, %v3943
      %v3976 = vpack.c.b16 %v3944, %v3944
      %v3977 = vpack.c.b16 %v3945, %v3945
      %v3978 = vpack.c.b16 %v3946, %v3946
      %v3979 = vpack.c.b16 %v3947, %v3947
      %v3980 = vpack.c.b16 %v3948, %v3948
      %v3981 = vpack.c.b16 %v3949, %v3949
      %v3982 = vpack.c.b16 %v3950, %v3950
      %v3983 = vpack.c.b16 %v3951, %v3951
      %v3984 = vpack.c.b16 %v3952, %v3952
      %v3985 = vpack.c.b16 %v3953, %v3953
      %v3986 = vpack.c.b16 %v3954, %v3954
      %v3987 = vpack.c.b16 %v3955, %v3955
      %v3988 = vpack.c.b16 %v3956, %v3956
      %v3989 = vpack.c.b16 %v3957, %v3957
      %v3990 = vpack.c.b16 %v3958, %v3958
      %v3991 = vpack.c.b16 %v3959, %v3959
      %v3992 = vpack.c.b16 %v3960, %v3960
      %v3993 = vpack.c.b16 %v3961, %v3961
      %v3994 = vpack.c.b16 %v3962, %v3962
      %v3995 = vpack.c.b16 %v3963, %v3963
      %v3996 = vpack.c.b16 %v3964, %v3964
      %v3997 = vpack.c.b16 %v3965, %v3965
      %v3998 = vpack.c.b16 %v3966, %v3966
      %v3999 = vpack.c.b16 %v3967, %v3967
      %v4000 = vpack.c.b16 %v3968, %v3968
      %v4001 = vpack.c.b16 %v3969, %v3969
      %v4002 = vpack.c.b16 %v3970, %v3970
      %v4003 = vpack.c.b16 %v3971, %v3971
      %v4004 = vpack.c.b16 %v3972, %v3972
      %v4005 = vpack.c.b16 %v3973, %v3973
      %v4006 = vpack.c.b16 %v3974, %v3974
      %4007 = vrot.lane.b32.xlu0 %v3975, 64
      %v4008 = vpop.permute.xlu0 %4007
      %4009 = vrot.lane.b32.xlu0 %v3976, 64
      %v4010 = vpop.permute.xlu0 %4009
      %4011 = vrot.lane.b32.xlu0 %v3977, 64
      %v4012 = vpop.permute.xlu0 %4011
      %4013 = vrot.lane.b32.xlu0 %v3978, 64
      %v4014 = vpop.permute.xlu0 %4013
      %4015 = vrot.lane.b32.xlu0 %v3979, 64
      %v4016 = vpop.permute.xlu0 %4015
      %4017 = vrot.lane.b32.xlu0 %v3980, 64
      %v4018 = vpop.permute.xlu0 %4017
      %4019 = vrot.lane.b32.xlu0 %v3981, 64
      %v4020 = vpop.permute.xlu0 %4019
      %4021 = vrot.lane.b32.xlu0 %v3982, 64
      %v4022 = vpop.permute.xlu0 %4021
      %4023 = vrot.lane.b32.xlu0 %v3983, 64
      %v4024 = vpop.permute.xlu0 %4023
      %4025 = vrot.lane.b32.xlu0 %v3984, 64
      %v4026 = vpop.permute.xlu0 %4025
      %4027 = vrot.lane.b32.xlu0 %v3985, 64
      %v4028 = vpop.permute.xlu0 %4027
      %4029 = vrot.lane.b32.xlu0 %v3986, 64
      %v4030 = vpop.permute.xlu0 %4029
      %4031 = vrot.lane.b32.xlu0 %v3987, 64
      %v4032 = vpop.permute.xlu0 %4031
      %4033 = vrot.lane.b32.xlu0 %v3988, 64
      %v4034 = vpop.permute.xlu0 %4033
      %4035 = vrot.lane.b32.xlu0 %v3989, 64
      %v4036 = vpop.permute.xlu0 %4035
      %4037 = vrot.lane.b32.xlu0 %v3990, 64
      %v4038 = vpop.permute.xlu0 %4037
      %4039 = vrot.lane.b32.xlu0 %v3991, 64
      %v4040 = vpop.permute.xlu0 %4039
      %4041 = vrot.lane.b32.xlu0 %v3992, 64
      %v4042 = vpop.permute.xlu0 %4041
      %4043 = vrot.lane.b32.xlu0 %v3993, 64
      %v4044 = vpop.permute.xlu0 %4043
      %4045 = vrot.lane.b32.xlu0 %v3994, 64
      %v4046 = vpop.permute.xlu0 %4045
      %4047 = vrot.lane.b32.xlu0 %v3995, 64
      %v4048 = vpop.permute.xlu0 %4047
      %4049 = vrot.lane.b32.xlu0 %v3996, 64
      %v4050 = vpop.permute.xlu0 %4049
      %4051 = vrot.lane.b32.xlu0 %v3997, 64
      %v4052 = vpop.permute.xlu0 %4051
      %4053 = vrot.lane.b32.xlu0 %v3998, 64
      %v4054 = vpop.permute.xlu0 %4053
      %4055 = vrot.lane.b32.xlu0 %v3999, 64
      %v4056 = vpop.permute.xlu0 %4055
      %4057 = vrot.lane.b32.xlu0 %v4000, 64
      %v4058 = vpop.permute.xlu0 %4057
      %4059 = vrot.lane.b32.xlu0 %v4001, 64
      %v4060 = vpop.permute.xlu0 %4059
      %4061 = vrot.lane.b32.xlu0 %v4002, 64
      %v4062 = vpop.permute.xlu0 %4061
      %4063 = vrot.lane.b32.xlu0 %v4003, 64
      %v4064 = vpop.permute.xlu0 %4063
      %4065 = vrot.lane.b32.xlu0 %v4004, 64
      %v4066 = vpop.permute.xlu0 %4065
      %4067 = vrot.lane.b32.xlu0 %v4005, 64
      %v4068 = vpop.permute.xlu0 %4067
      %4069 = vrot.lane.b32.xlu0 %v4006, 64
      %v4070 = vpop.permute.xlu0 %4069
      %vm4103 = vcmask 257024
      %4104 = vst.msk [vmem:[%s241] sm:$0xf] %vm4103, %v4008
      %4105 = vst.msk [vmem:[%s241 + $0x4] sm:$0xf] %vm4103, %v4010
      %4106 = vst.msk [vmem:[%s241 + $0x8] sm:$0xf] %vm4103, %v4012
      %4107 = vst.msk [vmem:[%s241 + $0xc] sm:$0xf] %vm4103, %v4014
      %4108 = vst.msk [vmem:[%s241 + $0x10] sm:$0xf] %vm4103, %v4016
      %4109 = vst.msk [vmem:[%s241 + $0x14] sm:$0xf] %vm4103, %v4018
      %4110 = vst.msk [vmem:[%s241 + $0x18] sm:$0xf] %vm4103, %v4020
      %4111 = vst.msk [vmem:[%s241 + $0x1c] sm:$0xf] %vm4103, %v4022
      %4112 = vst.msk [vmem:[%s241 + $0x20] sm:$0xf] %vm4103, %v4024
      %4113 = vst.msk [vmem:[%s241 + $0x24] sm:$0xf] %vm4103, %v4026
      %4114 = vst.msk [vmem:[%s241 + $0x28] sm:$0xf] %vm4103, %v4028
      %4115 = vst.msk [vmem:[%s241 + $0x2c] sm:$0xf] %vm4103, %v4030
      %4116 = vst.msk [vmem:[%s241 + $0x30] sm:$0xf] %vm4103, %v4032
      %4117 = vst.msk [vmem:[%s241 + $0x34] sm:$0xf] %vm4103, %v4034
      %4118 = vst.msk [vmem:[%s241 + $0x38] sm:$0xf] %vm4103, %v4036
      %4119 = vst.msk [vmem:[%s241 + $0x3c] sm:$0xf] %vm4103, %v4038
      %4120 = vst.msk [vmem:[%s241 + $0x40] sm:$0xf] %vm4103, %v4040
      %4121 = vst.msk [vmem:[%s241 + $0x44] sm:$0xf] %vm4103, %v4042
      %4122 = vst.msk [vmem:[%s241 + $0x48] sm:$0xf] %vm4103, %v4044
      %4123 = vst.msk [vmem:[%s241 + $0x4c] sm:$0xf] %vm4103, %v4046
      %4124 = vst.msk [vmem:[%s241 + $0x50] sm:$0xf] %vm4103, %v4048
      %4125 = vst.msk [vmem:[%s241 + $0x54] sm:$0xf] %vm4103, %v4050
      %4126 = vst.msk [vmem:[%s241 + $0x58] sm:$0xf] %vm4103, %v4052
      %4127 = vst.msk [vmem:[%s241 + $0x5c] sm:$0xf] %vm4103, %v4054
      %4128 = vst.msk [vmem:[%s241 + $0x60] sm:$0xf] %vm4103, %v4056
      %4129 = vst.msk [vmem:[%s241 + $0x64] sm:$0xf] %vm4103, %v4058
      %4130 = vst.msk [vmem:[%s241 + $0x68] sm:$0xf] %vm4103, %v4060
      %4131 = vst.msk [vmem:[%s241 + $0x6c] sm:$0xf] %vm4103, %v4062
      %4132 = vst.msk [vmem:[%s241 + $0x70] sm:$0xf] %vm4103, %v4064
      %4133 = vst.msk [vmem:[%s241 + $0x74] sm:$0xf] %vm4103, %v4066
      %4134 = vst.msk [vmem:[%s241 + $0x78] sm:$0xf] %vm4103, %v4068
      %4135 = vst.msk [vmem:[%s241 + $0x7c] sm:$0xf] %vm4103, %v4070
      %v4137 = vshrl.u32 %v3975, 16
      %v4139 = vrot.slane %v4137, 7
      %v4140 = vshll.u32 %v3975, 16
      %v4142 = vor.u32 %v4139, %v4140
      %v4143 = vrot.slane %v4139, 4
      %v4145 = vshrl.u32 %v3976, 16
      %v4147 = vrot.slane %v4145, 7
      %v4148 = vshll.u32 %v3976, 16
      %v4150 = vor.u32 %v4147, %v4148
      %v4151 = vsel %vm375, %v4143, %v4150
      %v4152 = vrot.slane %v4147, 4
      %v4154 = vshrl.u32 %v3977, 16
      %v4156 = vrot.slane %v4154, 7
      %v4157 = vshll.u32 %v3977, 16
      %v4159 = vor.u32 %v4156, %v4157
      %v4160 = vrot.slane %v4156, 4
      %v4162 = vshrl.u32 %v3978, 16
      %v4164 = vrot.slane %v4162, 7
      %v4165 = vshll.u32 %v3978, 16
      %v4167 = vor.u32 %v4164, %v4165
      %v4168 = vsel %vm375, %v4160, %v4167
      %v4169 = vrot.slane %v4164, 4
      %v4171 = vshrl.u32 %v3979, 16
      %v4173 = vrot.slane %v4171, 7
      %v4174 = vshll.u32 %v3979, 16
      %v4176 = vor.u32 %v4173, %v4174
      %v4177 = vrot.slane %v4173, 4
      %v4179 = vshrl.u32 %v3980, 16
      %v4181 = vrot.slane %v4179, 7
      %v4182 = vshll.u32 %v3980, 16
      %v4184 = vor.u32 %v4181, %v4182
      %v4185 = vsel %vm375, %v4177, %v4184
      %v4186 = vrot.slane %v4181, 4
      %v4188 = vshrl.u32 %v3981, 16
      %v4190 = vrot.slane %v4188, 7
      %v4191 = vshll.u32 %v3981, 16
      %v4193 = vor.u32 %v4190, %v4191
      %v4194 = vrot.slane %v4190, 4
      %v4196 = vshrl.u32 %v3982, 16
      %v4198 = vrot.slane %v4196, 7
      %v4199 = vshll.u32 %v3982, 16
      %v4201 = vor.u32 %v4198, %v4199
      %v4202 = vsel %vm375, %v4194, %v4201
      %v4203 = vrot.slane %v4198, 4
      %v4205 = vshrl.u32 %v3983, 16
      %v4207 = vrot.slane %v4205, 7
      %v4208 = vshll.u32 %v3983, 16
      %v4210 = vor.u32 %v4207, %v4208
      %v4211 = vrot.slane %v4207, 4
      %v4213 = vshrl.u32 %v3984, 16
      %v4215 = vrot.slane %v4213, 7
      %v4216 = vshll.u32 %v3984, 16
      %v4218 = vor.u32 %v4215, %v4216
      %v4219 = vsel %vm375, %v4211, %v4218
      %v4220 = vrot.slane %v4215, 4
      %v4222 = vshrl.u32 %v3985, 16
      %v4224 = vrot.slane %v4222, 7
      %v4225 = vshll.u32 %v3985, 16
      %v4227 = vor.u32 %v4224, %v4225
      %v4228 = vrot.slane %v4224, 4
      %v4230 = vshrl.u32 %v3986, 16
      %v4232 = vrot.slane %v4230, 7
      %v4233 = vshll.u32 %v3986, 16
      %v4235 = vor.u32 %v4232, %v4233
      %v4236 = vsel %vm375, %v4228, %v4235
      %v4237 = vrot.slane %v4232, 4
      %v4239 = vshrl.u32 %v3987, 16
      %v4241 = vrot.slane %v4239, 7
      %v4242 = vshll.u32 %v3987, 16
      %v4244 = vor.u32 %v4241, %v4242
      %v4245 = vrot.slane %v4241, 4
      %v4247 = vshrl.u32 %v3988, 16
      %v4249 = vrot.slane %v4247, 7
      %v4250 = vshll.u32 %v3988, 16
      %v4252 = vor.u32 %v4249, %v4250
      %v4253 = vsel %vm375, %v4245, %v4252
      %v4254 = vrot.slane %v4249, 4
      %v4256 = vshrl.u32 %v3989, 16
      %v4258 = vrot.slane %v4256, 7
      %v4259 = vshll.u32 %v3989, 16
      %v4261 = vor.u32 %v4258, %v4259
      %v4262 = vrot.slane %v4258, 4
      %v4264 = vshrl.u32 %v3990, 16
      %v4266 = vrot.slane %v4264, 7
      %v4267 = vshll.u32 %v3990, 16
      %v4269 = vor.u32 %v4266, %v4267
      %v4270 = vsel %vm375, %v4262, %v4269
      %v4271 = vrot.slane %v4266, 4
      %v4273 = vshrl.u32 %v3991, 16
      %v4275 = vrot.slane %v4273, 7
      %v4276 = vshll.u32 %v3991, 16
      %v4278 = vor.u32 %v4275, %v4276
      %v4279 = vrot.slane %v4275, 4
      %v4281 = vshrl.u32 %v3992, 16
      %v4283 = vrot.slane %v4281, 7
      %v4284 = vshll.u32 %v3992, 16
      %v4286 = vor.u32 %v4283, %v4284
      %v4287 = vsel %vm375, %v4279, %v4286
      %v4288 = vrot.slane %v4283, 4
      %v4290 = vshrl.u32 %v3993, 16
      %v4292 = vrot.slane %v4290, 7
      %v4293 = vshll.u32 %v3993, 16
      %v4295 = vor.u32 %v4292, %v4293
      %v4296 = vrot.slane %v4292, 4
      %v4298 = vshrl.u32 %v3994, 16
      %v4300 = vrot.slane %v4298, 7
      %v4301 = vshll.u32 %v3994, 16
      %v4303 = vor.u32 %v4300, %v4301
      %v4304 = vsel %vm375, %v4296, %v4303
      %v4305 = vrot.slane %v4300, 4
      %v4307 = vshrl.u32 %v3995, 16
      %v4309 = vrot.slane %v4307, 7
      %v4310 = vshll.u32 %v3995, 16
      %v4312 = vor.u32 %v4309, %v4310
      %v4313 = vrot.slane %v4309, 4
      %v4315 = vshrl.u32 %v3996, 16
      %v4317 = vrot.slane %v4315, 7
      %v4318 = vshll.u32 %v3996, 16
      %v4320 = vor.u32 %v4317, %v4318
      %v4321 = vsel %vm375, %v4313, %v4320
      %v4322 = vrot.slane %v4317, 4
      %v4324 = vshrl.u32 %v3997, 16
      %v4326 = vrot.slane %v4324, 7
      %v4327 = vshll.u32 %v3997, 16
      %v4329 = vor.u32 %v4326, %v4327
      %v4330 = vrot.slane %v4326, 4
      %v4332 = vshrl.u32 %v3998, 16
      %v4334 = vrot.slane %v4332, 7
      %v4335 = vshll.u32 %v3998, 16
      %v4337 = vor.u32 %v4334, %v4335
      %v4338 = vsel %vm375, %v4330, %v4337
      %v4339 = vrot.slane %v4334, 4
      %v4341 = vshrl.u32 %v3999, 16
      %v4343 = vrot.slane %v4341, 7
      %v4344 = vshll.u32 %v3999, 16
      %v4346 = vor.u32 %v4343, %v4344
      %v4347 = vrot.slane %v4343, 4
      %v4349 = vshrl.u32 %v4000, 16
      %v4351 = vrot.slane %v4349, 7
      %v4352 = vshll.u32 %v4000, 16
      %v4354 = vor.u32 %v4351, %v4352
      %v4355 = vsel %vm375, %v4347, %v4354
      %v4356 = vrot.slane %v4351, 4
      %v4358 = vshrl.u32 %v4001, 16
      %v4360 = vrot.slane %v4358, 7
      %v4361 = vshll.u32 %v4001, 16
      %v4363 = vor.u32 %v4360, %v4361
      %v4364 = vrot.slane %v4360, 4
      %v4366 = vshrl.u32 %v4002, 16
      %v4368 = vrot.slane %v4366, 7
      %v4369 = vshll.u32 %v4002, 16
      %v4371 = vor.u32 %v4368, %v4369
      %v4372 = vsel %vm375, %v4364, %v4371
      %v4373 = vrot.slane %v4368, 4
      %v4375 = vshrl.u32 %v4003, 16
      %v4377 = vrot.slane %v4375, 7
      %v4378 = vshll.u32 %v4003, 16
      %v4380 = vor.u32 %v4377, %v4378
      %v4381 = vrot.slane %v4377, 4
      %v4383 = vshrl.u32 %v4004, 16
      %v4385 = vrot.slane %v4383, 7
      %v4386 = vshll.u32 %v4004, 16
      %v4388 = vor.u32 %v4385, %v4386
      %v4389 = vsel %vm375, %v4381, %v4388
      %v4390 = vrot.slane %v4385, 4
      %v4392 = vshrl.u32 %v4005, 16
      %v4394 = vrot.slane %v4392, 7
      %v4395 = vshll.u32 %v4005, 16
      %v4397 = vor.u32 %v4394, %v4395
      %v4398 = vrot.slane %v4394, 4
      %v4400 = vshrl.u32 %v4006, 16
      %v4402 = vrot.slane %v4400, 7
      %v4403 = vshll.u32 %v4006, 16
      %v4405 = vor.u32 %v4402, %v4403
      %v4406 = vsel %vm375, %v4398, %v4405
      %v4407 = vrot.slane %v4402, 4
      %4408 = vrot.lane.b32.xlu0 %v4142, 68
      %v4409 = vpop.permute.xlu0 %4408
      %4410 = vrot.lane.b32.xlu0 %v4151, 68
      %v4411 = vpop.permute.xlu0 %4410
      %4412 = vrot.lane.b32.xlu0 %v4152, 68
      %v4413 = vpop.permute.xlu0 %4412
      %4414 = vrot.lane.b32.xlu0 %v4159, 68
      %v4415 = vpop.permute.xlu0 %4414
      %4416 = vrot.lane.b32.xlu0 %v4168, 68
      %v4417 = vpop.permute.xlu0 %4416
      %4418 = vrot.lane.b32.xlu0 %v4169, 68
      %v4419 = vpop.permute.xlu0 %4418
      %4420 = vrot.lane.b32.xlu0 %v4176, 68
      %v4421 = vpop.permute.xlu0 %4420
      %4422 = vrot.lane.b32.xlu0 %v4185, 68
      %v4423 = vpop.permute.xlu0 %4422
      %4424 = vrot.lane.b32.xlu0 %v4186, 68
      %v4425 = vpop.permute.xlu0 %4424
      %4426 = vrot.lane.b32.xlu0 %v4193, 68
      %v4427 = vpop.permute.xlu0 %4426
      %4428 = vrot.lane.b32.xlu0 %v4202, 68
      %v4429 = vpop.permute.xlu0 %4428
      %4430 = vrot.lane.b32.xlu0 %v4203, 68
      %v4431 = vpop.permute.xlu0 %4430
      %4432 = vrot.lane.b32.xlu0 %v4210, 68
      %v4433 = vpop.permute.xlu0 %4432
      %4434 = vrot.lane.b32.xlu0 %v4219, 68
      %v4435 = vpop.permute.xlu0 %4434
      %4436 = vrot.lane.b32.xlu0 %v4220, 68
      %v4437 = vpop.permute.xlu0 %4436
      %4438 = vrot.lane.b32.xlu0 %v4227, 68
      %v4439 = vpop.permute.xlu0 %4438
      %4440 = vrot.lane.b32.xlu0 %v4236, 68
      %v4441 = vpop.permute.xlu0 %4440
      %4442 = vrot.lane.b32.xlu0 %v4237, 68
      %v4443 = vpop.permute.xlu0 %4442
      %4444 = vrot.lane.b32.xlu0 %v4244, 68
      %v4445 = vpop.permute.xlu0 %4444
      %4446 = vrot.lane.b32.xlu0 %v4253, 68
      %v4447 = vpop.permute.xlu0 %4446
      %4448 = vrot.lane.b32.xlu0 %v4254, 68
      %v4449 = vpop.permute.xlu0 %4448
      %4450 = vrot.lane.b32.xlu0 %v4261, 68
      %v4451 = vpop.permute.xlu0 %4450
      %4452 = vrot.lane.b32.xlu0 %v4270, 68
      %v4453 = vpop.permute.xlu0 %4452
      %4454 = vrot.lane.b32.xlu0 %v4271, 68
      %v4455 = vpop.permute.xlu0 %4454
      %4456 = vrot.lane.b32.xlu0 %v4278, 68
      %v4457 = vpop.permute.xlu0 %4456
      %4458 = vrot.lane.b32.xlu0 %v4287, 68
      %v4459 = vpop.permute.xlu0 %4458
      %4460 = vrot.lane.b32.xlu0 %v4288, 68
      %v4461 = vpop.permute.xlu0 %4460
      %4462 = vrot.lane.b32.xlu0 %v4295, 68
      %v4463 = vpop.permute.xlu0 %4462
      %4464 = vrot.lane.b32.xlu0 %v4304, 68
      %v4465 = vpop.permute.xlu0 %4464
      %4466 = vrot.lane.b32.xlu0 %v4305, 68
      %v4467 = vpop.permute.xlu0 %4466
      %4468 = vrot.lane.b32.xlu0 %v4312, 68
      %v4469 = vpop.permute.xlu0 %4468
      %4470 = vrot.lane.b32.xlu0 %v4321, 68
      %v4471 = vpop.permute.xlu0 %4470
      %4472 = vrot.lane.b32.xlu0 %v4322, 68
      %v4473 = vpop.permute.xlu0 %4472
      %4474 = vrot.lane.b32.xlu0 %v4329, 68
      %v4475 = vpop.permute.xlu0 %4474
      %4476 = vrot.lane.b32.xlu0 %v4338, 68
      %v4477 = vpop.permute.xlu0 %4476
      %4478 = vrot.lane.b32.xlu0 %v4339, 68
      %v4479 = vpop.permute.xlu0 %4478
      %4480 = vrot.lane.b32.xlu0 %v4346, 68
      %v4481 = vpop.permute.xlu0 %4480
      %4482 = vrot.lane.b32.xlu0 %v4355, 68
      %v4483 = vpop.permute.xlu0 %4482
      %4484 = vrot.lane.b32.xlu0 %v4356, 68
      %v4485 = vpop.permute.xlu0 %4484
      %4486 = vrot.lane.b32.xlu0 %v4363, 68
      %v4487 = vpop.permute.xlu0 %4486
      %4488 = vrot.lane.b32.xlu0 %v4372, 68
      %v4489 = vpop.permute.xlu0 %4488
      %4490 = vrot.lane.b32.xlu0 %v4373, 68
      %v4491 = vpop.permute.xlu0 %4490
      %4492 = vrot.lane.b32.xlu0 %v4380, 68
      %v4493 = vpop.permute.xlu0 %4492
      %4494 = vrot.lane.b32.xlu0 %v4389, 68
      %v4495 = vpop.permute.xlu0 %4494
      %4496 = vrot.lane.b32.xlu0 %v4390, 68
      %v4497 = vpop.permute.xlu0 %4496
      %4498 = vrot.lane.b32.xlu0 %v4397, 68
      %v4499 = vpop.permute.xlu0 %4498
      %4500 = vrot.lane.b32.xlu0 %v4406, 68
      %v4501 = vpop.permute.xlu0 %4500
      %4502 = vrot.lane.b32.xlu0 %v4407, 68
      %v4503 = vpop.permute.xlu0 %4502
      %vm4552 = vcmask 289824
      %vm4553 = vmand %vm4552, %vm698
      %v4554 = vld [vmem:[%s696] sm:$0xf]
      %v4555 = vsel %vm4553, %v4409, %v4554
      %4556 = vst [vmem:[%s696] sm:$0xf] %v4555
      %vm4557 = vcmask 289824
      %4558 = vst.msk [vmem:[%s696 + $0x4] sm:$0xf] %vm4557, %v4411
      %vm4559 = vcmask 286752
      %vm4560 = vmand %vm4559, %vm373
      %v4561 = vld [vmem:[%s696 + $0x8] sm:$0x1]
      %v4562 = vsel %vm4560, %v4413, %v4561
      %4563 = vst [vmem:[%s696 + $0x8] sm:$0x1] %v4562
      %v4564 = vld [vmem:[%s696 + $0xc] sm:$0xf]
      %v4565 = vsel %vm4553, %v4415, %v4564
      %4566 = vst [vmem:[%s696 + $0xc] sm:$0xf] %v4565
      %4567 = vst.msk [vmem:[%s696 + $0x10] sm:$0xf] %vm4557, %v4417
      %v4568 = vld [vmem:[%s696 + $0x14] sm:$0x1]
      %v4569 = vsel %vm4560, %v4419, %v4568
      %4570 = vst [vmem:[%s696 + $0x14] sm:$0x1] %v4569
      %v4571 = vld [vmem:[%s696 + $0x18] sm:$0xf]
      %v4572 = vsel %vm4553, %v4421, %v4571
      %4573 = vst [vmem:[%s696 + $0x18] sm:$0xf] %v4572
      %4574 = vst.msk [vmem:[%s696 + $0x1c] sm:$0xf] %vm4557, %v4423
      %v4575 = vld [vmem:[%s696 + $0x20] sm:$0x1]
      %v4576 = vsel %vm4560, %v4425, %v4575
      %4577 = vst [vmem:[%s696 + $0x20] sm:$0x1] %v4576
      %v4578 = vld [vmem:[%s696 + $0x24] sm:$0xf]
      %v4579 = vsel %vm4553, %v4427, %v4578
      %4580 = vst [vmem:[%s696 + $0x24] sm:$0xf] %v4579
      %4581 = vst.msk [vmem:[%s696 + $0x28] sm:$0xf] %vm4557, %v4429
      %v4582 = vld [vmem:[%s696 + $0x2c] sm:$0x1]
      %v4583 = vsel %vm4560, %v4431, %v4582
      %4584 = vst [vmem:[%s696 + $0x2c] sm:$0x1] %v4583
      %v4585 = vld [vmem:[%s696 + $0x30] sm:$0xf]
      %v4586 = vsel %vm4553, %v4433, %v4585
      %4587 = vst [vmem:[%s696 + $0x30] sm:$0xf] %v4586
      %4588 = vst.msk [vmem:[%s696 + $0x34] sm:$0xf] %vm4557, %v4435
      %v4589 = vld [vmem:[%s696 + $0x38] sm:$0x1]
      %v4590 = vsel %vm4560, %v4437, %v4589
      %4591 = vst [vmem:[%s696 + $0x38] sm:$0x1] %v4590
      %v4592 = vld [vmem:[%s696 + $0x3c] sm:$0xf]
      %v4593 = vsel %vm4553, %v4439, %v4592
      %4594 = vst [vmem:[%s696 + $0x3c] sm:$0xf] %v4593
      %4595 = vst.msk [vmem:[%s696 + $0x40] sm:$0xf] %vm4557, %v4441
      %v4596 = vld [vmem:[%s696 + $0x44] sm:$0x1]
      %v4597 = vsel %vm4560, %v4443, %v4596
      %4598 = vst [vmem:[%s696 + $0x44] sm:$0x1] %v4597
      %v4599 = vld [vmem:[%s696 + $0x48] sm:$0xf]
      %v4600 = vsel %vm4553, %v4445, %v4599
      %4601 = vst [vmem:[%s696 + $0x48] sm:$0xf] %v4600
      %4602 = vst.msk [vmem:[%s696 + $0x4c] sm:$0xf] %vm4557, %v4447
      %v4603 = vld [vmem:[%s696 + $0x50] sm:$0x1]
      %v4604 = vsel %vm4560, %v4449, %v4603
      %4605 = vst [vmem:[%s696 + $0x50] sm:$0x1] %v4604
      %v4606 = vld [vmem:[%s696 + $0x54] sm:$0xf]
      %v4607 = vsel %vm4553, %v4451, %v4606
      %4608 = vst [vmem:[%s696 + $0x54] sm:$0xf] %v4607
      %4609 = vst.msk [vmem:[%s696 + $0x58] sm:$0xf] %vm4557, %v4453
      %v4610 = vld [vmem:[%s696 + $0x5c] sm:$0x1]
      %v4611 = vsel %vm4560, %v4455, %v4610
      %4612 = vst [vmem:[%s696 + $0x5c] sm:$0x1] %v4611
      %v4613 = vld [vmem:[%s696 + $0x60] sm:$0xf]
      %v4614 = vsel %vm4553, %v4457, %v4613
      %4615 = vst [vmem:[%s696 + $0x60] sm:$0xf] %v4614
      %4616 = vst.msk [vmem:[%s696 + $0x64] sm:$0xf] %vm4557, %v4459
      %v4617 = vld [vmem:[%s696 + $0x68] sm:$0x1]
      %v4618 = vsel %vm4560, %v4461, %v4617
      %4619 = vst [vmem:[%s696 + $0x68] sm:$0x1] %v4618
      %v4620 = vld [vmem:[%s696 + $0x6c] sm:$0xf]
      %v4621 = vsel %vm4553, %v4463, %v4620
      %4622 = vst [vmem:[%s696 + $0x6c] sm:$0xf] %v4621
      %4623 = vst.msk [vmem:[%s696 + $0x70] sm:$0xf] %vm4557, %v4465
      %v4624 = vld [vmem:[%s696 + $0x74] sm:$0x1]
      %v4625 = vsel %vm4560, %v4467, %v4624
      %4626 = vst [vmem:[%s696 + $0x74] sm:$0x1] %v4625
      %v4627 = vld [vmem:[%s696 + $0x78] sm:$0xf]
      %v4628 = vsel %vm4553, %v4469, %v4627
      %4629 = vst [vmem:[%s696 + $0x78] sm:$0xf] %v4628
      %4630 = vst.msk [vmem:[%s696 + $0x7c] sm:$0xf] %vm4557, %v4471
      %v4631 = vld [vmem:[%s696 + $0x80] sm:$0x1]
      %v4632 = vsel %vm4560, %v4473, %v4631
      %4633 = vst [vmem:[%s696 + $0x80] sm:$0x1] %v4632
      %v4634 = vld [vmem:[%s696 + $0x84] sm:$0xf]
      %v4635 = vsel %vm4553, %v4475, %v4634
      %4636 = vst [vmem:[%s696 + $0x84] sm:$0xf] %v4635
      %4637 = vst.msk [vmem:[%s696 + $0x88] sm:$0xf] %vm4557, %v4477
      %v4638 = vld [vmem:[%s696 + $0x8c] sm:$0x1]
      %v4639 = vsel %vm4560, %v4479, %v4638
      %4640 = vst [vmem:[%s696 + $0x8c] sm:$0x1] %v4639
      %v4641 = vld [vmem:[%s696 + $0x90] sm:$0xf]
      %v4642 = vsel %vm4553, %v4481, %v4641
      %4643 = vst [vmem:[%s696 + $0x90] sm:$0xf] %v4642
      %4644 = vst.msk [vmem:[%s696 + $0x94] sm:$0xf] %vm4557, %v4483
      %v4645 = vld [vmem:[%s696 + $0x98] sm:$0x1]
      %v4646 = vsel %vm4560, %v4485, %v4645
      %4647 = vst [vmem:[%s696 + $0x98] sm:$0x1] %v4646
      %v4648 = vld [vmem:[%s696 + $0x9c] sm:$0xf]
      %v4649 = vsel %vm4553, %v4487, %v4648
      %4650 = vst [vmem:[%s696 + $0x9c] sm:$0xf] %v4649
      %4651 = vst.msk [vmem:[%s696 + $0xa0] sm:$0xf] %vm4557, %v4489
      %v4652 = vld [vmem:[%s696 + $0xa4] sm:$0x1]
      %v4653 = vsel %vm4560, %v4491, %v4652
      %4654 = vst [vmem:[%s696 + $0xa4] sm:$0x1] %v4653
      %v4655 = vld [vmem:[%s696 + $0xa8] sm:$0xf]
      %v4656 = vsel %vm4553, %v4493, %v4655
      %4657 = vst [vmem:[%s696 + $0xa8] sm:$0xf] %v4656
      %4658 = vst.msk [vmem:[%s696 + $0xac] sm:$0xf] %vm4557, %v4495
      %v4659 = vld [vmem:[%s696 + $0xb0] sm:$0x1]
      %v4660 = vsel %vm4560, %v4497, %v4659
      %4661 = vst [vmem:[%s696 + $0xb0] sm:$0x1] %v4660
      %v4662 = vld [vmem:[%s696 + $0xb4] sm:$0xf]
      %v4663 = vsel %vm4553, %v4499, %v4662
      %4664 = vst [vmem:[%s696 + $0xb4] sm:$0xf] %v4663
      %4665 = vst.msk [vmem:[%s696 + $0xb8] sm:$0xf] %vm4557, %v4501
      %v4666 = vld [vmem:[%s696 + $0xbc] sm:$0x1]
      %v4667 = vsel %vm4560, %v4503, %v4666
      %4668 = vst [vmem:[%s696 + $0xbc] sm:$0x1] %v4667
      %p4669 = scmp.lt.s32.totalorder %s21, 7
      %s4670 = scalar_select %p4669, %s21, 7
      %p4671 = scmp.lt.s32.totalorder %s20, 1
      %s4672 = scalar_select %p4671, %s20, 1
      %s4673 = smul.addr %s4672, 32
      %s4674 = smul.addr %s4670, 64
      %s4675 = sadd.s32 %s4673, %s4674
      %s4676 = smul.addr %s4675, 4
      %s4677 = scalar_lea.vmem %s3, %s4676
      %p4678 = scmp.lt.s32.totalorder %s20, 1
      %s4679 = scalar_select %p4678, %s20, 1
      %s4680 = smul.addr %s4679, 32
      %s4681 = smul.addr %s4680, 8
      %s4682 = scalar_lea.vmem %s4, %s4681
      // Predicated region
      $region37: #{_lambda_.2} parent=31 // pred_check
        %p4683 = pneg %p118
      $region38: #{_lambda_.2} parent=31 // pred_check_branch
        %4685 = sbr.rel (%p4683) target = $region40
      $region39: #{_lambda_.2} parent=31 // pred_region
        _
      $region40: #{_lambda_.2} parent=31 // pred_fallthru
        _
      // Predicated region
      $region41: #{_lambda_.2} parent=31 // pred_check
        %p4686 = pneg %p144
      $region42: #{_lambda_.2} parent=31 // pred_check_branch
        %4688 = sbr.rel (%p4686) target = $region44
      $region43: #{_lambda_.2} parent=31 // pred_region
        _
      $region44: #{_lambda_.2} parent=31 // pred_fallthru
        _
    $region32: #{_lambda_.2} parent=5 // pred_fallthru
      _
    %p4689 = scmp.le.s32.totalorder 2, %s11
    // Predicated region
    $region45: #{_lambda_.2} parent=5 // pred_check
      %p4690 = pneg %p4689
    $region46: #{_lambda_.2} parent=5 // pred_check_branch
      %4692 = sbr.rel (%p4690) target = $region48
    $region47: #{_lambda_.2} parent=5 // pred_region
      %s4693 = ssub.s32 %s11, 2
      // Predicated region
      $region49: #{_lambda_.2} parent=47 // pred_check
        %p4694 = pneg %p124
      $region50: #{_lambda_.2} parent=47 // pred_check_branch
        %4696 = sbr.rel (%p4694) target = $region52
      $region51: #{_lambda_.2} parent=47 // pred_region
        %p4697 = scmp.lt.s32.totalorder %s23, 7
        %s4698 = scalar_select %p4697, %s23, 7
        %p4699 = scmp.lt.s32.totalorder %s22, 1
        %s4700 = scalar_select %p4699, %s22, 1
        %s4701 = smul.addr %s4700, 32
        %s4702 = smul.addr %s4698, 64
        %s4703 = sadd.s32 %s4701, %s4702
        %s4704 = smul.addr %s4703, 4
        %s4705 = scalar_lea.vmem %s3, %s4704
      $region52: #{_lambda_.2} parent=47 // pred_fallthru
        _
      // Predicated region
      $region53: #{_lambda_.2} parent=47 // pred_check
        %p4706 = pneg %p150
      $region54: #{_lambda_.2} parent=47 // pred_check_branch
        %4708 = sbr.rel (%p4706) target = $region56
      $region55: #{_lambda_.2} parent=47 // pred_region
        %p4709 = scmp.lt.s32.totalorder %s22, 1
        %s4710 = scalar_select %p4709, %s22, 1
        %s4711 = smul.addr %s4710, 32
        %s4712 = smul.addr %s4711, 8
        %s4713 = scalar_lea.vmem %s4, %s4712
      $region56: #{_lambda_.2} parent=47 // pred_fallthru
        _
    $region48: #{_lambda_.2} parent=5 // pred_fallthru
      _
  $region6: #{_lambda_.2} parent=0 // loop_footer
    %s15 = sadd.s32 1, %s11
  $region7: #{_lambda_.2} parent=0 // loop_footer_branch
    %10 = sbr.rel target = $region3
  $region8: #{_lambda_.2} parent=0 // loop_exit
    _

// kernel: _lambda_.3
$region0: #{_lambda_.3}
  #allocation0 [shape = 'u32[]', space=smem, size = 0x4, offset = 0x4, fixed_abs, tag = 'smem constant byte address 0x4 - core index']
  #allocation1 [shape = 'u32[144,128]{1,0:T(1,128)}', space=vmem, size = 0x12000, scoped, tag = 'internal scratch']
  #allocation2 [shape = 'bf16[18,18,64]{2,1,0:T(8,128)(2,1)}', space=vmem, size = 0x1b000, scoped, tag = 'scratch operand']
  #allocation3 [shape = 'bf16[288,192]{1,0:T(16,128)(2,1)}', space=vmem, size = 0x24000, scoped, tag = 'scratch operand']
  %s0 = inlined_call_operand.vmem [shape: bf16[8,2,16,16,32], index: 0, kind: input, shape index: {}]
  %s1 = inlined_call_operand.vmem [shape: bf16[3,192,128], index: 1, kind: input, shape index: {}]
  %s2 = inlined_call_operand.vmem [shape: f32[1,128], index: 2, kind: input, shape index: {}]
  %s3 = inlined_call_operand.vmem [shape: bf16[8,2,16,16,32], index: 3, kind: output, shape index: {0}]
  %s4 = inlined_call_operand.vmem [shape: f32[2,16,16,32], index: 4, kind: output, shape index: {1}]
  %5 = xla_tuple %s3, %s4
  %s6 = sld [smem:[#allocation0]]
  $region57: #{_lambda_.3} parent=0
    _
  %s8 = ssub.s32 1, %s6
  %s9 = scalar_select 0, %s8, %s6
  loop: start=0, step=1, limit=18
  $region2: #{_lambda_.3} parent=0 // loop_pre_header
    _
  $region3: #{_lambda_.3} parent=0 // loop_header
    %s11 = sphi 0, %s15
    %p12 = scmp.ge.s32.totalorder %s11, 18
    %s18 = sphi 0, %s30
    %s19 = sphi 0, %s26
    %s20 = sphi 0, %s18
    %s21 = sphi 0, %s19
    %s22 = sphi 0, %s20
    %s23 = sphi 0, %s21
    %s35 = sphi 0, %s37
    %s38 = sphi 0, %s35
    %s39 = sphi 0, %s38
    %s55 = sphi 0, %s39
    %s59 = sphi 0, %s59
    %s61 = sphi 0, %s59
    %s62 = sphi 0, %s61
    %s76 = sphi 0, %s62
    %s80 = sphi 0, %s80
    %s82 = sphi 0, %s80
    %s83 = sphi 0, %s82
    %s97 = sphi 0, %s83
    %s105 = sphi 0, %s107
    %s108 = sphi 0, %s105
    %s109 = sphi 0, %s108
    %s125 = sphi 0, %s109
    %s131 = sphi 0, %s133
    %s134 = sphi 0, %s131
    %s135 = sphi 0, %s134
    %s151 = sphi 0, %s135
  $region4: #{_lambda_.3} parent=0 // loop_header_branch
    %14 = sbr.rel (%p12) target = $region8
  $region5: #{_lambda_.3} parent=0 // loop_body
    %s16 = ssub.s32 %s11, 1
    %s17 = ssub.s32 %s11, 2
    %s24 = sadd.s32 1, %s19
    %p25 = scmp.ge.s32.totalorder %s24, 8
    %s26 = scalar_select %p25, 0, %s24
    %s27 = sadd.s32 1, %s18
    %s28 = scalar_select %p25, %s27, %s18
    %p29 = scmp.ge.s32.totalorder %s28, 2
    %s30 = scalar_select %p29, 0, %s28
    %s31 = ssub.s32 %s19, %s26
    %s32 = ssub.s32 %s18, %s30
    %s33 = sor.u32 %s31, %s32
    %p34 = scmp.eq.s32.totalorder %s33, 0
    %s36 = sadd.s32 %s35, 1
    %s37 = scalar_select %p34, %s35, %s36
    %p40 = pneg %p34
    %p41 = scmp.eq.s32.totalorder %s11, 15
    %p42 = por %p40, %p41
    %p43 = scmp.ne.s32.totalorder %s35, %s38
    %p44 = scmp.eq.s32.totalorder %s11, 0
    %p45 = por %p43, %p44
    %p46 = scmp.ne.s32.totalorder %s35, %s38
    %p47 = scmp.eq.s32.totalorder %s16, 15
    %p48 = por %p46, %p47
    %p49 = scmp.ne.s32.totalorder %s38, %s39
    %p50 = scmp.eq.s32.totalorder %s16, 0
    %p51 = por %p49, %p50
    %p52 = scmp.ne.s32.totalorder %s38, %s39
    %p53 = scmp.eq.s32.totalorder %s17, 15
    %p54 = por %p52, %p53
    %p56 = scmp.ne.s32.totalorder %s39, %s55
    %p57 = scmp.eq.s32.totalorder %s17, 0
    %p58 = por %p56, %p57
    %s60 = sadd.s32 %s59, 1
    %p63 = scmp.eq.s32.totalorder %s11, 15
    %p64 = scmp.ne.s32.totalorder %s59, %s61
    %p65 = scmp.eq.s32.totalorder %s11, 0
    %p66 = por %p64, %p65
    %p67 = scmp.ne.s32.totalorder %s59, %s61
    %p68 = scmp.eq.s32.totalorder %s16, 15
    %p69 = por %p67, %p68
    %p70 = scmp.ne.s32.totalorder %s61, %s62
    %p71 = scmp.eq.s32.totalorder %s16, 0
    %p72 = por %p70, %p71
    %p73 = scmp.ne.s32.totalorder %s61, %s62
    %p74 = scmp.eq.s32.totalorder %s17, 15
    %p75 = por %p73, %p74
    %p77 = scmp.ne.s32.totalorder %s62, %s76
    %p78 = scmp.eq.s32.totalorder %s17, 0
    %p79 = por %p77, %p78
    %s81 = sadd.s32 %s80, 1
    %p84 = scmp.eq.s32.totalorder %s11, 15
    %p85 = scmp.ne.s32.totalorder %s80, %s82
    %p86 = scmp.eq.s32.totalorder %s11, 0
    %p87 = por %p85, %p86
    %p88 = scmp.ne.s32.totalorder %s80, %s82
    %p89 = scmp.eq.s32.totalorder %s16, 15
    %p90 = por %p88, %p89
    %p91 = scmp.ne.s32.totalorder %s82, %s83
    %p92 = scmp.eq.s32.totalorder %s16, 0
    %p93 = por %p91, %p92
    %p94 = scmp.ne.s32.totalorder %s82, %s83
    %p95 = scmp.eq.s32.totalorder %s17, 15
    %p96 = por %p94, %p95
    %p98 = scmp.ne.s32.totalorder %s83, %s97
    %p99 = scmp.eq.s32.totalorder %s17, 0
    %p100 = por %p98, %p99
    %s101 = ssub.s32 %s19, %s26
    %s102 = ssub.s32 %s18, %s30
    %s103 = sor.u32 %s101, %s102
    %p104 = scmp.eq.s32.totalorder %s103, 0
    %s106 = sadd.s32 %s105, 1
    %s107 = scalar_select %p104, %s105, %s106
    %p110 = pneg %p104
    %p111 = scmp.eq.s32.totalorder %s11, 15
    %p112 = por %p110, %p111
    %p113 = scmp.ne.s32.totalorder %s105, %s108
    %p114 = scmp.eq.s32.totalorder %s11, 0
    %p115 = por %p113, %p114
    %p116 = scmp.ne.s32.totalorder %s105, %s108
    %p117 = scmp.eq.s32.totalorder %s16, 15
    %p118 = por %p116, %p117
    %p119 = scmp.ne.s32.totalorder %s108, %s109
    %p120 = scmp.eq.s32.totalorder %s16, 0
    %p121 = por %p119, %p120
    %p122 = scmp.ne.s32.totalorder %s108, %s109
    %p123 = scmp.eq.s32.totalorder %s17, 15
    %p124 = por %p122, %p123
    %p126 = scmp.ne.s32.totalorder %s109, %s125
    %p127 = scmp.eq.s32.totalorder %s17, 0
    %p128 = por %p126, %p127
    %s129 = ssub.s32 %s18, %s30
    %p130 = scmp.eq.s32.totalorder %s129, 0
    %s132 = sadd.s32 %s131, 1
    %s133 = scalar_select %p130, %s131, %s132
    %p136 = pneg %p130
    %p137 = scmp.eq.s32.totalorder %s11, 15
    %p138 = por %p136, %p137
    %p139 = scmp.ne.s32.totalorder %s131, %s134
    %p140 = scmp.eq.s32.totalorder %s11, 0
    %p141 = por %p139, %p140
    %p142 = scmp.ne.s32.totalorder %s131, %s134
    %p143 = scmp.eq.s32.totalorder %s16, 15
    %p144 = por %p142, %p143
    %p145 = scmp.ne.s32.totalorder %s134, %s135
    %p146 = scmp.eq.s32.totalorder %s16, 0
    %p147 = por %p145, %p146
    %p148 = scmp.ne.s32.totalorder %s134, %s135
    %p149 = scmp.eq.s32.totalorder %s17, 15
    %p150 = por %p148, %p149
    %p152 = scmp.ne.s32.totalorder %s135, %s151
    %p153 = scmp.eq.s32.totalorder %s17, 0
    %p154 = por %p152, %p153
    %p155 = scmp.le.s32.totalorder 1, %s11
    %p156 = scmp.lt.s32.totalorder %s11, 17
    %p157 = pnand %p155, %p156
    %p158 = pneg %p157
    // Predicated region
    $region9: #{_lambda_.3} parent=5 // pred_check
      _
    $region10: #{_lambda_.3} parent=5 // pred_check_branch
      %160 = sbr.rel (%p157) target = $region12
    $region11: #{_lambda_.3} parent=5 // pred_region
      %s161 = ssub.s32 %s11, 1
      // Predicated region
      $region13: #{_lambda_.3} parent=11 // pred_check
        %p162 = pneg %p72
      $region14: #{_lambda_.3} parent=11 // pred_check_branch
        %164 = sbr.rel (%p162) target = $region16
      $region15: #{_lambda_.3} parent=11 // pred_region
        _
      $region16: #{_lambda_.3} parent=11 // pred_fallthru
        _
      // Predicated region
      $region17: #{_lambda_.3} parent=11 // pred_check
        %p165 = pneg %p93
      $region18: #{_lambda_.3} parent=11 // pred_check_branch
        %167 = sbr.rel (%p165) target = $region20
      $region19: #{_lambda_.3} parent=11 // pred_region
        _
      $region20: #{_lambda_.3} parent=11 // pred_fallthru
        _
    $region12: #{_lambda_.3} parent=5 // pred_fallthru
      _
    %p168 = scmp.lt.s32.totalorder %s11, 16
    // Predicated region
    $region21: #{_lambda_.3} parent=5 // pred_check
      %p169 = pneg %p168
    $region22: #{_lambda_.3} parent=5 // pred_check_branch
      %171 = sbr.rel (%p169) target = $region24
    $region23: #{_lambda_.3} parent=5 // pred_region
      // Predicated region
      $region25: #{_lambda_.3} parent=23 // pred_check
        %p172 = pneg %p45
      $region26: #{_lambda_.3} parent=23 // pred_check_branch
        %174 = sbr.rel (%p172) target = $region28
      $region27: #{_lambda_.3} parent=23 // pred_region
        %p175 = scmp.lt.s32.totalorder %s19, 7
        %s176 = scalar_select %p175, %s19, 7
        %p177 = scmp.lt.s32.totalorder %s18, 1
        %s178 = scalar_select %p177, %s18, 1
        %s179 = smul.addr %s178, 32
        %s180 = smul.addr %s176, 64
        %s181 = sadd.s32 %s179, %s180
        %s182 = smul.addr %s181, 4
        %s183 = scalar_lea.vmem %s0, %s182
      $region28: #{_lambda_.3} parent=23 // pred_fallthru
        _
    $region24: #{_lambda_.3} parent=5 // pred_fallthru
      _
    %p184 = scmp.le.s32.totalorder 1, %s11
    %p185 = scmp.lt.s32.totalorder %s11, 17
    %p186 = pnand %p184, %p185
    %p187 = pneg %p186
    // Predicated region
    $region29: #{_lambda_.3} parent=5 // pred_check
      _
    $region30: #{_lambda_.3} parent=5 // pred_check_branch
      %189 = sbr.rel (%p186) target = $region32
    $region31: #{_lambda_.3} parent=5 // pred_region
      %s190 = ssub.s32 %s11, 1
      %p191 = scmp.lt.s32.totalorder %s21, 7
      %s192 = scalar_select %p191, %s21, 7
      %p193 = scmp.lt.s32.totalorder %s20, 1
      %s194 = scalar_select %p193, %s20, 1
      %s195 = smul.addr %s194, 32
      %s196 = smul.addr %s192, 64
      %s197 = sadd.s32 %s195, %s196
      %s198 = smul.addr %s197, 4
      %s199 = scalar_lea.vmem %s0, %s198
      %p200 = pneg %p51
      %p201 = pneg %p48
      %p202 = pneg %p72
      %p203 = pneg %p69
      %p204 = pneg %p93
      %p205 = pneg %p90
      %p206 = pneg %p121
      %p207 = pneg %p118
      %p208 = scmp.lt.s32.totalorder %s21, 7
      %s209 = scalar_select %p208, %s21, 7
      %p210 = scmp.lt.s32.totalorder %s20, 1
      %s211 = scalar_select %p210, %s20, 1
      %s212 = smul.addr %s211, 32
      %s213 = smul.addr %s209, 64
      %s214 = sadd.s32 %s212, %s213
      %s215 = smul.addr %s214, 4
      %s216 = scalar_lea.vmem %s3, %s215
      %p217 = pneg %p147
      %p218 = pneg %p144
      %p219 = scmp.lt.s32.totalorder %s20, 1
      %s220 = scalar_select %p219, %s20, 1
      %s221 = smul.addr %s220, 32
      %s222 = smul.addr %s221, 8
      %s223 = scalar_lea.vmem %s4, %s222
      %p224 = scmp.lt.s32.totalorder %s21, 7
      %s225 = scalar_select %p224, %s21, 7
      %p226 = scmp.lt.s32.totalorder %s20, 1
      %s227 = scalar_select %p226, %s20, 1
      %s228 = smul.addr %s227, 32
      %s229 = smul.addr %s225, 64
      %s230 = sadd.s32 %s228, %s229
      %s231 = smul.addr %s230, 4
      %s232 = scalar_lea.vmem %s0, %s231
      %p233 = scmp.lt.s32.totalorder %s21, 7
      %s234 = scalar_select %p233, %s21, 7
      %p235 = scmp.lt.s32.totalorder %s20, 1
      %s236 = scalar_select %p235, %s20, 1
      %s237 = smul.addr %s236, 32
      %s238 = smul.addr %s234, 64
      %s239 = sadd.s32 %s237, %s238
      %s240 = smul.addr %s239, 4
      %s241 = scalar_lea.vmem %s3, %s240
      %p242 = scmp.lt.s32.totalorder %s20, 1
      %s243 = scalar_select %p242, %s20, 1
      %s244 = smul.addr %s243, 32
      %s245 = smul.addr %s244, 8
      %s246 = scalar_lea.vmem %s4, %s245
      %p248 = scmp.eq.s32.totalorder %s21, 0
      // Predicated region
      $region33: #{_lambda_.3} parent=31 // pred_check
        %p249 = pneg %p248
      $region34: #{_lambda_.3} parent=31 // pred_check_branch
        %251 = sbr.rel (%p249) target = $region36
      $region35: #{_lambda_.3} parent=31 // pred_region
        %vm252 = vcmask 519168
        %253 = vst.msk [vmem:[#allocation2] sm:$0xf] %vm252, 0
        %254 = vst.msk [vmem:[#allocation2 + $0x4] sm:$0xf] %vm252, 0
        %vm255 = vcmask 516096
        %256 = vst.msk [vmem:[#allocation2 + $0x8] sm:$0x1] %vm255, 0
        %257 = vst.msk [vmem:[#allocation2 + $0xc] sm:$0xf] %vm252, 0
        %258 = vst.msk [vmem:[#allocation2 + $0x10] sm:$0xf] %vm252, 0
        %259 = vst.msk [vmem:[#allocation2 + $0x14] sm:$0x1] %vm255, 0
        %260 = vst.msk [vmem:[#allocation2 + $0x18] sm:$0xf] %vm252, 0
        %261 = vst.msk [vmem:[#allocation2 + $0x1c] sm:$0xf] %vm252, 0
        %262 = vst.msk [vmem:[#allocation2 + $0x20] sm:$0x1] %vm255, 0
        %263 = vst.msk [vmem:[#allocation2 + $0x24] sm:$0xf] %vm252, 0
        %264 = vst.msk [vmem:[#allocation2 + $0x28] sm:$0xf] %vm252, 0
        %265 = vst.msk [vmem:[#allocation2 + $0x2c] sm:$0x1] %vm255, 0
        %266 = vst.msk [vmem:[#allocation2 + $0x30] sm:$0xf] %vm252, 0
        %267 = vst.msk [vmem:[#allocation2 + $0x34] sm:$0xf] %vm252, 0
        %268 = vst.msk [vmem:[#allocation2 + $0x38] sm:$0x1] %vm255, 0
        %269 = vst.msk [vmem:[#allocation2 + $0x3c] sm:$0xf] %vm252, 0
        %270 = vst.msk [vmem:[#allocation2 + $0x40] sm:$0xf] %vm252, 0
        %271 = vst.msk [vmem:[#allocation2 + $0x44] sm:$0x1] %vm255, 0
        %272 = vst.msk [vmem:[#allocation2 + $0x48] sm:$0xf] %vm252, 0
        %273 = vst.msk [vmem:[#allocation2 + $0x4c] sm:$0xf] %vm252, 0
        %274 = vst.msk [vmem:[#allocation2 + $0x50] sm:$0x1] %vm255, 0
        %275 = vst.msk [vmem:[#allocation2 + $0x54] sm:$0xf] %vm252, 0
        %276 = vst.msk [vmem:[#allocation2 + $0x58] sm:$0xf] %vm252, 0
        %277 = vst.msk [vmem:[#allocation2 + $0x5c] sm:$0x1] %vm255, 0
        %278 = vst.msk [vmem:[#allocation2 + $0x60] sm:$0xf] %vm252, 0
        %279 = vst.msk [vmem:[#allocation2 + $0x64] sm:$0xf] %vm252, 0
        %280 = vst.msk [vmem:[#allocation2 + $0x68] sm:$0x1] %vm255, 0
        %281 = vst.msk [vmem:[#allocation2 + $0x6c] sm:$0xf] %vm252, 0
        %282 = vst.msk [vmem:[#allocation2 + $0x70] sm:$0xf] %vm252, 0
        %283 = vst.msk [vmem:[#allocation2 + $0x74] sm:$0x1] %vm255, 0
        %284 = vst.msk [vmem:[#allocation2 + $0x78] sm:$0xf] %vm252, 0
        %285 = vst.msk [vmem:[#allocation2 + $0x7c] sm:$0xf] %vm252, 0
        %286 = vst.msk [vmem:[#allocation2 + $0x80] sm:$0x1] %vm255, 0
        %287 = vst.msk [vmem:[#allocation2 + $0x84] sm:$0xf] %vm252, 0
        %288 = vst.msk [vmem:[#allocation2 + $0x88] sm:$0xf] %vm252, 0
        %289 = vst.msk [vmem:[#allocation2 + $0x8c] sm:$0x1] %vm255, 0
        %290 = vst.msk [vmem:[#allocation2 + $0x90] sm:$0xf] %vm252, 0
        %291 = vst.msk [vmem:[#allocation2 + $0x94] sm:$0xf] %vm252, 0
        %292 = vst.msk [vmem:[#allocation2 + $0x98] sm:$0x1] %vm255, 0
        %293 = vst.msk [vmem:[#allocation2 + $0x9c] sm:$0xf] %vm252, 0
        %294 = vst.msk [vmem:[#allocation2 + $0xa0] sm:$0xf] %vm252, 0
        %295 = vst.msk [vmem:[#allocation2 + $0xa4] sm:$0x1] %vm255, 0
        %296 = vst.msk [vmem:[#allocation2 + $0xa8] sm:$0xf] %vm252, 0
        %297 = vst.msk [vmem:[#allocation2 + $0xac] sm:$0xf] %vm252, 0
        %298 = vst.msk [vmem:[#allocation2 + $0xb0] sm:$0x1] %vm255, 0
        %299 = vst.msk [vmem:[#allocation2 + $0xb4] sm:$0xf] %vm252, 0
        %300 = vst.msk [vmem:[#allocation2 + $0xb8] sm:$0xf] %vm252, 0
        %301 = vst.msk [vmem:[#allocation2 + $0xbc] sm:$0x1] %vm255, 0
        %302 = vst.msk [vmem:[#allocation2 + $0xc0] sm:$0xf] %vm252, 0
        %303 = vst.msk [vmem:[#allocation2 + $0xc4] sm:$0xf] %vm252, 0
        %304 = vst.msk [vmem:[#allocation2 + $0xc8] sm:$0x1] %vm255, 0
        %305 = vst.msk [vmem:[#allocation2 + $0xcc] sm:$0xf] %vm252, 0
        %306 = vst.msk [vmem:[#allocation2 + $0xd0] sm:$0xf] %vm252, 0
        %307 = vst.msk [vmem:[#allocation2 + $0xd4] sm:$0x1] %vm255, 0
        %vm308 = vcmask 261120
        %309 = vst.msk [vmem:[%s246] sm:$0xff] %vm308, 0.0
        %310 = vst.msk [vmem:[%s246 + $0x8] sm:$0xff] %vm308, 0.0
        %311 = vst.msk [vmem:[%s246 + $0x10] sm:$0xff] %vm308, 0.0
        %312 = vst.msk [vmem:[%s246 + $0x18] sm:$0xff] %vm308, 0.0
        %313 = vst.msk [vmem:[%s246 + $0x20] sm:$0xff] %vm308, 0.0
        %314 = vst.msk [vmem:[%s246 + $0x28] sm:$0xff] %vm308, 0.0
        %315 = vst.msk [vmem:[%s246 + $0x30] sm:$0xff] %vm308, 0.0
        %316 = vst.msk [vmem:[%s246 + $0x38] sm:$0xff] %vm308, 0.0
        %317 = vst.msk [vmem:[%s246 + $0x40] sm:$0xff] %vm308, 0.0
        %318 = vst.msk [vmem:[%s246 + $0x48] sm:$0xff] %vm308, 0.0
        %319 = vst.msk [vmem:[%s246 + $0x50] sm:$0xff] %vm308, 0.0
        %320 = vst.msk [vmem:[%s246 + $0x58] sm:$0xff] %vm308, 0.0
        %321 = vst.msk [vmem:[%s246 + $0x60] sm:$0xff] %vm308, 0.0
        %322 = vst.msk [vmem:[%s246 + $0x68] sm:$0xff] %vm308, 0.0
        %323 = vst.msk [vmem:[%s246 + $0x70] sm:$0xff] %vm308, 0.0
        %324 = vst.msk [vmem:[%s246 + $0x78] sm:$0xff] %vm308, 0.0
        %325 = vst.msk [vmem:[%s246 + $0x80] sm:$0xff] %vm308, 0.0
        %326 = vst.msk [vmem:[%s246 + $0x88] sm:$0xff] %vm308, 0.0
        %327 = vst.msk [vmem:[%s246 + $0x90] sm:$0xff] %vm308, 0.0
        %328 = vst.msk [vmem:[%s246 + $0x98] sm:$0xff] %vm308, 0.0
        %329 = vst.msk [vmem:[%s246 + $0xa0] sm:$0xff] %vm308, 0.0
        %330 = vst.msk [vmem:[%s246 + $0xa8] sm:$0xff] %vm308, 0.0
        %331 = vst.msk [vmem:[%s246 + $0xb0] sm:$0xff] %vm308, 0.0
        %332 = vst.msk [vmem:[%s246 + $0xb8] sm:$0xff] %vm308, 0.0
        %333 = vst.msk [vmem:[%s246 + $0xc0] sm:$0xff] %vm308, 0.0
        %334 = vst.msk [vmem:[%s246 + $0xc8] sm:$0xff] %vm308, 0.0
        %335 = vst.msk [vmem:[%s246 + $0xd0] sm:$0xff] %vm308, 0.0
        %336 = vst.msk [vmem:[%s246 + $0xd8] sm:$0xff] %vm308, 0.0
        %337 = vst.msk [vmem:[%s246 + $0xe0] sm:$0xff] %vm308, 0.0
        %338 = vst.msk [vmem:[%s246 + $0xe8] sm:$0xff] %vm308, 0.0
        %339 = vst.msk [vmem:[%s246 + $0xf0] sm:$0xff] %vm308, 0.0
        %340 = vst.msk [vmem:[%s246 + $0xf8] sm:$0xff] %vm308, 0.0
      $region36: #{_lambda_.3} parent=31 // pred_fallthru
        _
      %v341 = vld [vmem:[%s232] sm:$0xf]
      %v342 = vld [vmem:[%s232 + $0x4] sm:$0xf]
      %v343 = vld [vmem:[%s232 + $0x8] sm:$0xf]
      %v344 = vld [vmem:[%s232 + $0xc] sm:$0xf]
      %v345 = vld [vmem:[%s232 + $0x10] sm:$0xf]
      %v346 = vld [vmem:[%s232 + $0x14] sm:$0xf]
      %v347 = vld [vmem:[%s232 + $0x18] sm:$0xf]
      %v348 = vld [vmem:[%s232 + $0x1c] sm:$0xf]
      %v349 = vld [vmem:[%s232 + $0x20] sm:$0xf]
      %v350 = vld [vmem:[%s232 + $0x24] sm:$0xf]
      %v351 = vld [vmem:[%s232 + $0x28] sm:$0xf]
      %v352 = vld [vmem:[%s232 + $0x2c] sm:$0xf]
      %v353 = vld [vmem:[%s232 + $0x30] sm:$0xf]
      %v354 = vld [vmem:[%s232 + $0x34] sm:$0xf]
      %v355 = vld [vmem:[%s232 + $0x38] sm:$0xf]
      %v356 = vld [vmem:[%s232 + $0x3c] sm:$0xf]
      %v357 = vld [vmem:[%s232 + $0x40] sm:$0xf]
      %v358 = vld [vmem:[%s232 + $0x44] sm:$0xf]
      %v359 = vld [vmem:[%s232 + $0x48] sm:$0xf]
      %v360 = vld [vmem:[%s232 + $0x4c] sm:$0xf]
      %v361 = vld [vmem:[%s232 + $0x50] sm:$0xf]
      %v362 = vld [vmem:[%s232 + $0x54] sm:$0xf]
      %v363 = vld [vmem:[%s232 + $0x58] sm:$0xf]
      %v364 = vld [vmem:[%s232 + $0x5c] sm:$0xf]
      %v365 = vld [vmem:[%s232 + $0x60] sm:$0xf]
      %v366 = vld [vmem:[%s232 + $0x64] sm:$0xf]
      %v367 = vld [vmem:[%s232 + $0x68] sm:$0xf]
      %v368 = vld [vmem:[%s232 + $0x6c] sm:$0xf]
      %v369 = vld [vmem:[%s232 + $0x70] sm:$0xf]
      %v370 = vld [vmem:[%s232 + $0x74] sm:$0xf]
      %v371 = vld [vmem:[%s232 + $0x78] sm:$0xf]
      %v372 = vld [vmem:[%s232 + $0x7c] sm:$0xf]
      %vm373 = vsmask.f32 256
      %vm374 = vsmask.f32 4368
      %vm375 = vmor %vm373, %vm374
      %v377 = vshrl.u32 %v341, 16
      %v379 = vrot.slane %v377, 7
      %v380 = vshll.u32 %v341, 16
      %v382 = vor.u32 %v379, %v380
      %v383 = vrot.slane %v379, 4
      %v385 = vshrl.u32 %v342, 16
      %v387 = vrot.slane %v385, 7
      %v388 = vshll.u32 %v342, 16
      %v390 = vor.u32 %v387, %v388
      %v391 = vsel %vm375, %v383, %v390
      %v392 = vrot.slane %v387, 4
      %v394 = vshrl.u32 %v343, 16
      %v396 = vrot.slane %v394, 7
      %v397 = vshll.u32 %v343, 16
      %v399 = vor.u32 %v396, %v397
      %v400 = vrot.slane %v396, 4
      %v402 = vshrl.u32 %v344, 16
      %v404 = vrot.slane %v402, 7
      %v405 = vshll.u32 %v344, 16
      %v407 = vor.u32 %v404, %v405
      %v408 = vsel %vm375, %v400, %v407
      %v409 = vrot.slane %v404, 4
      %v411 = vshrl.u32 %v345, 16
      %v413 = vrot.slane %v411, 7
      %v414 = vshll.u32 %v345, 16
      %v416 = vor.u32 %v413, %v414
      %v417 = vrot.slane %v413, 4
      %v419 = vshrl.u32 %v346, 16
      %v421 = vrot.slane %v419, 7
      %v422 = vshll.u32 %v346, 16
      %v424 = vor.u32 %v421, %v422
      %v425 = vsel %vm375, %v417, %v424
      %v426 = vrot.slane %v421, 4
      %v428 = vshrl.u32 %v347, 16
      %v430 = vrot.slane %v428, 7
      %v431 = vshll.u32 %v347, 16
      %v433 = vor.u32 %v430, %v431
      %v434 = vrot.slane %v430, 4
      %v436 = vshrl.u32 %v348, 16
      %v438 = vrot.slane %v436, 7
      %v439 = vshll.u32 %v348, 16
      %v441 = vor.u32 %v438, %v439
      %v442 = vsel %vm375, %v434, %v441
      %v443 = vrot.slane %v438, 4
      %v445 = vshrl.u32 %v349, 16
      %v447 = vrot.slane %v445, 7
      %v448 = vshll.u32 %v349, 16
      %v450 = vor.u32 %v447, %v448
      %v451 = vrot.slane %v447, 4
      %v453 = vshrl.u32 %v350, 16
      %v455 = vrot.slane %v453, 7
      %v456 = vshll.u32 %v350, 16
      %v458 = vor.u32 %v455, %v456
      %v459 = vsel %vm375, %v451, %v458
      %v460 = vrot.slane %v455, 4
      %v462 = vshrl.u32 %v351, 16
      %v464 = vrot.slane %v462, 7
      %v465 = vshll.u32 %v351, 16
      %v467 = vor.u32 %v464, %v465
      %v468 = vrot.slane %v464, 4
      %v470 = vshrl.u32 %v352, 16
      %v472 = vrot.slane %v470, 7
      %v473 = vshll.u32 %v352, 16
      %v475 = vor.u32 %v472, %v473
      %v476 = vsel %vm375, %v468, %v475
      %v477 = vrot.slane %v472, 4
      %v479 = vshrl.u32 %v353, 16
      %v481 = vrot.slane %v479, 7
      %v482 = vshll.u32 %v353, 16
      %v484 = vor.u32 %v481, %v482
      %v485 = vrot.slane %v481, 4
      %v487 = vshrl.u32 %v354, 16
      %v489 = vrot.slane %v487, 7
      %v490 = vshll.u32 %v354, 16
      %v492 = vor.u32 %v489, %v490
      %v493 = vsel %vm375, %v485, %v492
      %v494 = vrot.slane %v489, 4
      %v496 = vshrl.u32 %v355, 16
      %v498 = vrot.slane %v496, 7
      %v499 = vshll.u32 %v355, 16
      %v501 = vor.u32 %v498, %v499
      %v502 = vrot.slane %v498, 4
      %v504 = vshrl.u32 %v356, 16
      %v506 = vrot.slane %v504, 7
      %v507 = vshll.u32 %v356, 16
      %v509 = vor.u32 %v506, %v507
      %v510 = vsel %vm375, %v502, %v509
      %v511 = vrot.slane %v506, 4
      %v513 = vshrl.u32 %v357, 16
      %v515 = vrot.slane %v513, 7
      %v516 = vshll.u32 %v357, 16
      %v518 = vor.u32 %v515, %v516
      %v519 = vrot.slane %v515, 4
      %v521 = vshrl.u32 %v358, 16
      %v523 = vrot.slane %v521, 7
      %v524 = vshll.u32 %v358, 16
      %v526 = vor.u32 %v523, %v524
      %v527 = vsel %vm375, %v519, %v526
      %v528 = vrot.slane %v523, 4
      %v530 = vshrl.u32 %v359, 16
      %v532 = vrot.slane %v530, 7
      %v533 = vshll.u32 %v359, 16
      %v535 = vor.u32 %v532, %v533
      %v536 = vrot.slane %v532, 4
      %v538 = vshrl.u32 %v360, 16
      %v540 = vrot.slane %v538, 7
      %v541 = vshll.u32 %v360, 16
      %v543 = vor.u32 %v540, %v541
      %v544 = vsel %vm375, %v536, %v543
      %v545 = vrot.slane %v540, 4
      %v547 = vshrl.u32 %v361, 16
      %v549 = vrot.slane %v547, 7
      %v550 = vshll.u32 %v361, 16
      %v552 = vor.u32 %v549, %v550
      %v553 = vrot.slane %v549, 4
      %v555 = vshrl.u32 %v362, 16
      %v557 = vrot.slane %v555, 7
      %v558 = vshll.u32 %v362, 16
      %v560 = vor.u32 %v557, %v558
      %v561 = vsel %vm375, %v553, %v560
      %v562 = vrot.slane %v557, 4
      %v564 = vshrl.u32 %v363, 16
      %v566 = vrot.slane %v564, 7
      %v567 = vshll.u32 %v363, 16
      %v569 = vor.u32 %v566, %v567
      %v570 = vrot.slane %v566, 4
      %v572 = vshrl.u32 %v364, 16
      %v574 = vrot.slane %v572, 7
      %v575 = vshll.u32 %v364, 16
      %v577 = vor.u32 %v574, %v575
      %v578 = vsel %vm375, %v570, %v577
      %v579 = vrot.slane %v574, 4
      %v581 = vshrl.u32 %v365, 16
      %v583 = vrot.slane %v581, 7
      %v584 = vshll.u32 %v365, 16
      %v586 = vor.u32 %v583, %v584
      %v587 = vrot.slane %v583, 4
      %v589 = vshrl.u32 %v366, 16
      %v591 = vrot.slane %v589, 7
      %v592 = vshll.u32 %v366, 16
      %v594 = vor.u32 %v591, %v592
      %v595 = vsel %vm375, %v587, %v594
      %v596 = vrot.slane %v591, 4
      %v598 = vshrl.u32 %v367, 16
      %v600 = vrot.slane %v598, 7
      %v601 = vshll.u32 %v367, 16
      %v603 = vor.u32 %v600, %v601
      %v604 = vrot.slane %v600, 4
      %v606 = vshrl.u32 %v368, 16
      %v608 = vrot.slane %v606, 7
      %v609 = vshll.u32 %v368, 16
      %v611 = vor.u32 %v608, %v609
      %v612 = vsel %vm375, %v604, %v611
      %v613 = vrot.slane %v608, 4
      %v615 = vshrl.u32 %v369, 16
      %v617 = vrot.slane %v615, 7
      %v618 = vshll.u32 %v369, 16
      %v620 = vor.u32 %v617, %v618
      %v621 = vrot.slane %v617, 4
      %v623 = vshrl.u32 %v370, 16
      %v625 = vrot.slane %v623, 7
      %v626 = vshll.u32 %v370, 16
      %v628 = vor.u32 %v625, %v626
      %v629 = vsel %vm375, %v621, %v628
      %v630 = vrot.slane %v625, 4
      %v632 = vshrl.u32 %v371, 16
      %v634 = vrot.slane %v632, 7
      %v635 = vshll.u32 %v371, 16
      %v637 = vor.u32 %v634, %v635
      %v638 = vrot.slane %v634, 4
      %v640 = vshrl.u32 %v372, 16
      %v642 = vrot.slane %v640, 7
      %v643 = vshll.u32 %v372, 16
      %v645 = vor.u32 %v642, %v643
      %v646 = vsel %vm375, %v638, %v645
      %v647 = vrot.slane %v642, 4
      %s696 = scalar_lea.vmem [#allocation2], 12
      %vm697 = vcmask 257024
      %vm698 = vsmask.f32 7938
      %vm699 = vmand %vm697, %vm698
      %v700 = vld [vmem:[%s696] sm:$0xf]
      %v701 = vsel %vm699, %v382, %v700
      %702 = vst [vmem:[%s696] sm:$0xf] %v701
      %vm703 = vcmask 257024
      %704 = vst.msk [vmem:[%s696 + $0x4] sm:$0xf] %vm703, %v391
      %vm705 = vcmask 253952
      %vm706 = vmand %vm705, %vm373
      %v707 = vld [vmem:[%s696 + $0x8] sm:$0x1]
      %v708 = vsel %vm706, %v392, %v707
      %709 = vst [vmem:[%s696 + $0x8] sm:$0x1] %v708
      %v710 = vld [vmem:[%s696 + $0xc] sm:$0xf]
      %v711 = vsel %vm699, %v399, %v710
      %712 = vst [vmem:[%s696 + $0xc] sm:$0xf] %v711
      %713 = vst.msk [vmem:[%s696 + $0x10] sm:$0xf] %vm703, %v408
      %v714 = vld [vmem:[%s696 + $0x14] sm:$0x1]
      %v715 = vsel %vm706, %v409, %v714
      %716 = vst [vmem:[%s696 + $0x14] sm:$0x1] %v715
      %v717 = vld [vmem:[%s696 + $0x18] sm:$0xf]
      %v718 = vsel %vm699, %v416, %v717
      %719 = vst [vmem:[%s696 + $0x18] sm:$0xf] %v718
      %720 = vst.msk [vmem:[%s696 + $0x1c] sm:$0xf] %vm703, %v425
      %v721 = vld [vmem:[%s696 + $0x20] sm:$0x1]
      %v722 = vsel %vm706, %v426, %v721
      %723 = vst [vmem:[%s696 + $0x20] sm:$0x1] %v722
      %v724 = vld [vmem:[%s696 + $0x24] sm:$0xf]
      %v725 = vsel %vm699, %v433, %v724
      %726 = vst [vmem:[%s696 + $0x24] sm:$0xf] %v725
      %727 = vst.msk [vmem:[%s696 + $0x28] sm:$0xf] %vm703, %v442
      %v728 = vld [vmem:[%s696 + $0x2c] sm:$0x1]
      %v729 = vsel %vm706, %v443, %v728
      %730 = vst [vmem:[%s696 + $0x2c] sm:$0x1] %v729
      %v731 = vld [vmem:[%s696 + $0x30] sm:$0xf]
      %v732 = vsel %vm699, %v450, %v731
      %733 = vst [vmem:[%s696 + $0x30] sm:$0xf] %v732
      %734 = vst.msk [vmem:[%s696 + $0x34] sm:$0xf] %vm703, %v459
      %v735 = vld [vmem:[%s696 + $0x38] sm:$0x1]
      %v736 = vsel %vm706, %v460, %v735
      %737 = vst [vmem:[%s696 + $0x38] sm:$0x1] %v736
      %v738 = vld [vmem:[%s696 + $0x3c] sm:$0xf]
      %v739 = vsel %vm699, %v467, %v738
      %740 = vst [vmem:[%s696 + $0x3c] sm:$0xf] %v739
      %741 = vst.msk [vmem:[%s696 + $0x40] sm:$0xf] %vm703, %v476
      %v742 = vld [vmem:[%s696 + $0x44] sm:$0x1]
      %v743 = vsel %vm706, %v477, %v742
      %744 = vst [vmem:[%s696 + $0x44] sm:$0x1] %v743
      %v745 = vld [vmem:[%s696 + $0x48] sm:$0xf]
      %v746 = vsel %vm699, %v484, %v745
      %747 = vst [vmem:[%s696 + $0x48] sm:$0xf] %v746
      %748 = vst.msk [vmem:[%s696 + $0x4c] sm:$0xf] %vm703, %v493
      %v749 = vld [vmem:[%s696 + $0x50] sm:$0x1]
      %v750 = vsel %vm706, %v494, %v749
      %751 = vst [vmem:[%s696 + $0x50] sm:$0x1] %v750
      %v752 = vld [vmem:[%s696 + $0x54] sm:$0xf]
      %v753 = vsel %vm699, %v501, %v752
      %754 = vst [vmem:[%s696 + $0x54] sm:$0xf] %v753
      %755 = vst.msk [vmem:[%s696 + $0x58] sm:$0xf] %vm703, %v510
      %v756 = vld [vmem:[%s696 + $0x5c] sm:$0x1]
      %v757 = vsel %vm706, %v511, %v756
      %758 = vst [vmem:[%s696 + $0x5c] sm:$0x1] %v757
      %v759 = vld [vmem:[%s696 + $0x60] sm:$0xf]
      %v760 = vsel %vm699, %v518, %v759
      %761 = vst [vmem:[%s696 + $0x60] sm:$0xf] %v760
      %762 = vst.msk [vmem:[%s696 + $0x64] sm:$0xf] %vm703, %v527
      %v763 = vld [vmem:[%s696 + $0x68] sm:$0x1]
      %v764 = vsel %vm706, %v528, %v763
      %765 = vst [vmem:[%s696 + $0x68] sm:$0x1] %v764
      %v766 = vld [vmem:[%s696 + $0x6c] sm:$0xf]
      %v767 = vsel %vm699, %v535, %v766
      %768 = vst [vmem:[%s696 + $0x6c] sm:$0xf] %v767
      %769 = vst.msk [vmem:[%s696 + $0x70] sm:$0xf] %vm703, %v544
      %v770 = vld [vmem:[%s696 + $0x74] sm:$0x1]
      %v771 = vsel %vm706, %v545, %v770
      %772 = vst [vmem:[%s696 + $0x74] sm:$0x1] %v771
      %v773 = vld [vmem:[%s696 + $0x78] sm:$0xf]
      %v774 = vsel %vm699, %v552, %v773
      %775 = vst [vmem:[%s696 + $0x78] sm:$0xf] %v774
      %776 = vst.msk [vmem:[%s696 + $0x7c] sm:$0xf] %vm703, %v561
      %v777 = vld [vmem:[%s696 + $0x80] sm:$0x1]
      %v778 = vsel %vm706, %v562, %v777
      %779 = vst [vmem:[%s696 + $0x80] sm:$0x1] %v778
      %v780 = vld [vmem:[%s696 + $0x84] sm:$0xf]
      %v781 = vsel %vm699, %v569, %v780
      %782 = vst [vmem:[%s696 + $0x84] sm:$0xf] %v781
      %783 = vst.msk [vmem:[%s696 + $0x88] sm:$0xf] %vm703, %v578
      %v784 = vld [vmem:[%s696 + $0x8c] sm:$0x1]
      %v785 = vsel %vm706, %v579, %v784
      %786 = vst [vmem:[%s696 + $0x8c] sm:$0x1] %v785
      %v787 = vld [vmem:[%s696 + $0x90] sm:$0xf]
      %v788 = vsel %vm699, %v586, %v787
      %789 = vst [vmem:[%s696 + $0x90] sm:$0xf] %v788
      %790 = vst.msk [vmem:[%s696 + $0x94] sm:$0xf] %vm703, %v595
      %v791 = vld [vmem:[%s696 + $0x98] sm:$0x1]
      %v792 = vsel %vm706, %v596, %v791
      %793 = vst [vmem:[%s696 + $0x98] sm:$0x1] %v792
      %v794 = vld [vmem:[%s696 + $0x9c] sm:$0xf]
      %v795 = vsel %vm699, %v603, %v794
      %796 = vst [vmem:[%s696 + $0x9c] sm:$0xf] %v795
      %797 = vst.msk [vmem:[%s696 + $0xa0] sm:$0xf] %vm703, %v612
      %v798 = vld [vmem:[%s696 + $0xa4] sm:$0x1]
      %v799 = vsel %vm706, %v613, %v798
      %800 = vst [vmem:[%s696 + $0xa4] sm:$0x1] %v799
      %v801 = vld [vmem:[%s696 + $0xa8] sm:$0xf]
      %v802 = vsel %vm699, %v620, %v801
      %803 = vst [vmem:[%s696 + $0xa8] sm:$0xf] %v802
      %804 = vst.msk [vmem:[%s696 + $0xac] sm:$0xf] %vm703, %v629
      %v805 = vld [vmem:[%s696 + $0xb0] sm:$0x1]
      %v806 = vsel %vm706, %v630, %v805
      %807 = vst [vmem:[%s696 + $0xb0] sm:$0x1] %v806
      %v808 = vld [vmem:[%s696 + $0xb4] sm:$0xf]
      %v809 = vsel %vm699, %v637, %v808
      %810 = vst [vmem:[%s696 + $0xb4] sm:$0xf] %v809
      %811 = vst.msk [vmem:[%s696 + $0xb8] sm:$0xf] %vm703, %v646
      %v812 = vld [vmem:[%s696 + $0xbc] sm:$0x1]
      %v813 = vsel %vm706, %v647, %v812
      %814 = vst [vmem:[%s696 + $0xbc] sm:$0x1] %v813
      %v815 = vld [vmem:[#allocation2] sm:$0xf]
      %v816 = vld [vmem:[#allocation2 + $0x4] sm:$0xf]
      %v817 = vld [vmem:[#allocation2 + $0xc] sm:$0xf]
      %v818 = vld [vmem:[#allocation2 + $0x10] sm:$0xf]
      %v819 = vld [vmem:[#allocation2 + $0x18] sm:$0xf]
      %v820 = vld [vmem:[#allocation2 + $0x1c] sm:$0xf]
      %v821 = vld [vmem:[#allocation2 + $0x24] sm:$0xf]
      %v822 = vld [vmem:[#allocation2 + $0x28] sm:$0xf]
      %v823 = vld [vmem:[#allocation2 + $0x30] sm:$0xf]
      %v824 = vld [vmem:[#allocation2 + $0x34] sm:$0xf]
      %v825 = vld [vmem:[#allocation2 + $0x3c] sm:$0xf]
      %v826 = vld [vmem:[#allocation2 + $0x40] sm:$0xf]
      %v827 = vld [vmem:[#allocation2 + $0x48] sm:$0xf]
      %v828 = vld [vmem:[#allocation2 + $0x4c] sm:$0xf]
      %v829 = vld [vmem:[#allocation2 + $0x54] sm:$0xf]
      %v830 = vld [vmem:[#allocation2 + $0x58] sm:$0xf]
      %v831 = vld [vmem:[#allocation2 + $0x60] sm:$0xf]
      %v832 = vld [vmem:[#allocation2 + $0x64] sm:$0xf]
      %v833 = vld [vmem:[#allocation2 + $0x6c] sm:$0xf]
      %v834 = vld [vmem:[#allocation2 + $0x70] sm:$0xf]
      %v835 = vld [vmem:[#allocation2 + $0x78] sm:$0xf]
      %v836 = vld [vmem:[#allocation2 + $0x7c] sm:$0xf]
      %v837 = vld [vmem:[#allocation2 + $0x84] sm:$0xf]
      %v838 = vld [vmem:[#allocation2 + $0x88] sm:$0xf]
      %v839 = vld [vmem:[#allocation2 + $0x90] sm:$0xf]
      %v840 = vld [vmem:[#allocation2 + $0x94] sm:$0xf]
      %v841 = vld [vmem:[#allocation2 + $0x9c] sm:$0xf]
      %v842 = vld [vmem:[#allocation2 + $0xa0] sm:$0xf]
      %v843 = vld [vmem:[#allocation2 + $0xa8] sm:$0xf]
      %v844 = vld [vmem:[#allocation2 + $0xac] sm:$0xf]
      %v845 = vld [vmem:[#allocation2 + $0xb4] sm:$0xf]
      %v846 = vld [vmem:[#allocation2 + $0xb8] sm:$0xf]
      %v847 = vld [vmem:[#allocation2 + $0xc0] sm:$0xf]
      %v848 = vld [vmem:[#allocation2 + $0xc4] sm:$0xf]
      %v849 = vld [vmem:[#allocation2 + $0xcc] sm:$0xf]
      %v850 = vld [vmem:[#allocation2 + $0xd0] sm:$0xf]
      %v887 = vunpack.c.l.b16 %v815
      %v888 = vunpack.c.l.b16 %v816
      %v889 = vunpack.c.l.b16 %v817
      %v890 = vunpack.c.l.b16 %v818
      %v891 = vunpack.c.l.b16 %v819
      %v892 = vunpack.c.l.b16 %v820
      %v893 = vunpack.c.l.b16 %v821
      %v894 = vunpack.c.l.b16 %v822
      %v895 = vunpack.c.l.b16 %v823
      %v896 = vunpack.c.l.b16 %v824
      %v897 = vunpack.c.l.b16 %v825
      %v898 = vunpack.c.l.b16 %v826
      %v899 = vunpack.c.l.b16 %v827
      %v900 = vunpack.c.l.b16 %v828
      %v901 = vunpack.c.l.b16 %v829
      %v902 = vunpack.c.l.b16 %v830
      %v903 = vunpack.c.l.b16 %v831
      %v904 = vunpack.c.l.b16 %v832
      %v905 = vunpack.c.l.b16 %v833
      %v906 = vunpack.c.l.b16 %v834
      %v907 = vunpack.c.l.b16 %v835
      %v908 = vunpack.c.l.b16 %v836
      %v909 = vunpack.c.l.b16 %v837
      %v910 = vunpack.c.l.b16 %v838
      %v911 = vunpack.c.l.b16 %v839
      %v912 = vunpack.c.l.b16 %v840
      %v913 = vunpack.c.l.b16 %v841
      %v914 = vunpack.c.l.b16 %v842
      %v915 = vunpack.c.l.b16 %v843
      %v916 = vunpack.c.l.b16 %v844
      %v917 = vunpack.c.l.b16 %v845
      %v918 = vunpack.c.l.b16 %v846
      %v919 = vunpack.c.l.b16 %v847
      %v920 = vunpack.c.l.b16 %v848
      %v921 = vunpack.c.l.b16 %v849
      %v922 = vunpack.c.l.b16 %v850
      %v923 = vpack.c.b16 %v888, %v887
      %v924 = vpack.c.b16 %v890, %v889
      %v925 = vpack.c.b16 %v892, %v891
      %v926 = vpack.c.b16 %v894, %v893
      %v927 = vpack.c.b16 %v896, %v895
      %v928 = vpack.c.b16 %v898, %v897
      %v929 = vpack.c.b16 %v900, %v899
      %v930 = vpack.c.b16 %v902, %v901
      %v931 = vpack.c.b16 %v904, %v903
      %v932 = vpack.c.b16 %v906, %v905
      %v933 = vpack.c.b16 %v908, %v907
      %v934 = vpack.c.b16 %v910, %v909
      %v935 = vpack.c.b16 %v912, %v911
      %v936 = vpack.c.b16 %v914, %v913
      %v937 = vpack.c.b16 %v916, %v915
      %v938 = vpack.c.b16 %v918, %v917
      %v939 = vpack.c.b16 %v920, %v919
      %v940 = vpack.c.b16 %v922, %v921
      %vm959 = vcmask 523264
      %960 = vst.msk [vmem:[#allocation3] sm:$0xff] %vm959, %v923
      %961 = vst.msk [vmem:[#allocation3 + $0x10] sm:$0xff] %vm959, %v924
      %962 = vst.msk [vmem:[#allocation3 + $0x20] sm:$0xff] %vm959, %v925
      %963 = vst.msk [vmem:[#allocation3 + $0x30] sm:$0xff] %vm959, %v926
      %964 = vst.msk [vmem:[#allocation3 + $0x40] sm:$0xff] %vm959, %v927
      %965 = vst.msk [vmem:[#allocation3 + $0x50] sm:$0xff] %vm959, %v928
      %966 = vst.msk [vmem:[#allocation3 + $0x60] sm:$0xff] %vm959, %v929
      %967 = vst.msk [vmem:[#allocation3 + $0x70] sm:$0xff] %vm959, %v930
      %968 = vst.msk [vmem:[#allocation3 + $0x80] sm:$0xff] %vm959, %v931
      %969 = vst.msk [vmem:[#allocation3 + $0x90] sm:$0xff] %vm959, %v932
      %970 = vst.msk [vmem:[#allocation3 + $0xa0] sm:$0xff] %vm959, %v933
      %971 = vst.msk [vmem:[#allocation3 + $0xb0] sm:$0xff] %vm959, %v934
      %972 = vst.msk [vmem:[#allocation3 + $0xc0] sm:$0xff] %vm959, %v935
      %973 = vst.msk [vmem:[#allocation3 + $0xd0] sm:$0xff] %vm959, %v936
      %974 = vst.msk [vmem:[#allocation3 + $0xe0] sm:$0xff] %vm959, %v937
      %975 = vst.msk [vmem:[#allocation3 + $0xf0] sm:$0xff] %vm959, %v938
      %976 = vst.msk [vmem:[#allocation3 + $0x100] sm:$0xff] %vm959, %v939
      %977 = vst.msk [vmem:[#allocation3 + $0x110] sm:$0xff] %vm959, %v940
      %v978 = vld [vmem:[#allocation2] sm:$0xf]
      %v979 = vld [vmem:[#allocation2 + $0x4] sm:$0xf]
      %v980 = vld [vmem:[#allocation2 + $0x8] sm:$0x1]
      %v981 = vld [vmem:[#allocation2 + $0xc] sm:$0xf]
      %v982 = vld [vmem:[#allocation2 + $0x10] sm:$0xf]
      %v983 = vld [vmem:[#allocation2 + $0x14] sm:$0x1]
      %v984 = vld [vmem:[#allocation2 + $0x18] sm:$0xf]
      %v985 = vld [vmem:[#allocation2 + $0x1c] sm:$0xf]
      %v986 = vld [vmem:[#allocation2 + $0x20] sm:$0x1]
      %v987 = vld [vmem:[#allocation2 + $0x24] sm:$0xf]
      %v988 = vld [vmem:[#allocation2 + $0x28] sm:$0xf]
      %v989 = vld [vmem:[#allocation2 + $0x2c] sm:$0x1]
      %v990 = vld [vmem:[#allocation2 + $0x30] sm:$0xf]
      %v991 = vld [vmem:[#allocation2 + $0x34] sm:$0xf]
      %v992 = vld [vmem:[#allocation2 + $0x38] sm:$0x1]
      %v993 = vld [vmem:[#allocation2 + $0x3c] sm:$0xf]
      %v994 = vld [vmem:[#allocation2 + $0x40] sm:$0xf]
      %v995 = vld [vmem:[#allocation2 + $0x44] sm:$0x1]
      %v996 = vld [vmem:[#allocation2 + $0x48] sm:$0xf]
      %v997 = vld [vmem:[#allocation2 + $0x4c] sm:$0xf]
      %v998 = vld [vmem:[#allocation2 + $0x50] sm:$0x1]
      %v999 = vld [vmem:[#allocation2 + $0x54] sm:$0xf]
      %v1000 = vld [vmem:[#allocation2 + $0x58] sm:$0xf]
      %v1001 = vld [vmem:[#allocation2 + $0x5c] sm:$0x1]
      %v1002 = vld [vmem:[#allocation2 + $0x60] sm:$0xf]
      %v1003 = vld [vmem:[#allocation2 + $0x64] sm:$0xf]
      %v1004 = vld [vmem:[#allocation2 + $0x68] sm:$0x1]
      %v1005 = vld [vmem:[#allocation2 + $0x6c] sm:$0xf]
      %v1006 = vld [vmem:[#allocation2 + $0x70] sm:$0xf]
      %v1007 = vld [vmem:[#allocation2 + $0x74] sm:$0x1]
      %v1008 = vld [vmem:[#allocation2 + $0x78] sm:$0xf]
      %v1009 = vld [vmem:[#allocation2 + $0x7c] sm:$0xf]
      %v1010 = vld [vmem:[#allocation2 + $0x80] sm:$0x1]
      %v1011 = vld [vmem:[#allocation2 + $0x84] sm:$0xf]
      %v1012 = vld [vmem:[#allocation2 + $0x88] sm:$0xf]
      %v1013 = vld [vmem:[#allocation2 + $0x8c] sm:$0x1]
      %v1014 = vld [vmem:[#allocation2 + $0x90] sm:$0xf]
      %v1015 = vld [vmem:[#allocation2 + $0x94] sm:$0xf]
      %v1016 = vld [vmem:[#allocation2 + $0x98] sm:$0x1]
      %v1017 = vld [vmem:[#allocation2 + $0x9c] sm:$0xf]
      %v1018 = vld [vmem:[#allocation2 + $0xa0] sm:$0xf]
      %v1019 = vld [vmem:[#allocation2 + $0xa4] sm:$0x1]
      %v1020 = vld [vmem:[#allocation2 + $0xa8] sm:$0xf]
      %v1021 = vld [vmem:[#allocation2 + $0xac] sm:$0xf]
      %v1022 = vld [vmem:[#allocation2 + $0xb0] sm:$0x1]
      %v1023 = vld [vmem:[#allocation2 + $0xb4] sm:$0xf]
      %v1024 = vld [vmem:[#allocation2 + $0xb8] sm:$0xf]
      %v1025 = vld [vmem:[#allocation2 + $0xbc] sm:$0x1]
      %v1026 = vld [vmem:[#allocation2 + $0xc0] sm:$0xf]
      %v1027 = vld [vmem:[#allocation2 + $0xc4] sm:$0xf]
      %v1028 = vld [vmem:[#allocation2 + $0xc8] sm:$0x1]
      %v1029 = vld [vmem:[#allocation2 + $0xcc] sm:$0xf]
      %v1030 = vld [vmem:[#allocation2 + $0xd0] sm:$0xf]
      %v1031 = vld [vmem:[#allocation2 + $0xd4] sm:$0x1]
      %vm1032 = vsmask.f32 3328
      %vm1033 = vsmask.f32 7440
      %vm1034 = vmor %vm1032, %vm1033
      %v1036 = vshrl.u32 %v978, 16
      %v1038 = vrot.slane %v1036, 4
      %v1039 = vshll.u32 %v978, 16
      %v1041 = vrot.slane %v1039, 5
      %v1042 = vor.u32 %v1038, %v1041
      %v1043 = vrot.slane %v1042, 4
      %v1045 = vshll.u32 %v979, 16
      %v1047 = vrot.slane %v1045, 5
      %v1048 = vsel %vm1034, %v1043, %v1047
      %v1049 = vshrl.u32 %v979, 16
      %v1051 = vrot.slane %v1049, 4
      %v1052 = vor.u32 %v1051, %v1047
      %v1053 = vrot.slane %v1052, 4
      %v1055 = vshll.u32 %v980, 16
      %v1057 = vrot.slane %v1055, 5
      %v1058 = vsel %vm1034, %v1053, %v1057
      %v1060 = vshrl.u32 %v981, 16
      %v1062 = vrot.slane %v1060, 4
      %v1063 = vshll.u32 %v981, 16
      %v1065 = vrot.slane %v1063, 5
      %v1066 = vor.u32 %v1062, %v1065
      %v1067 = vrot.slane %v1066, 4
      %v1069 = vshll.u32 %v982, 16
      %v1071 = vrot.slane %v1069, 5
      %v1072 = vsel %vm1034, %v1067, %v1071
      %v1073 = vshrl.u32 %v982, 16
      %v1075 = vrot.slane %v1073, 4
      %v1076 = vor.u32 %v1075, %v1071
      %v1077 = vrot.slane %v1076, 4
      %v1079 = vshll.u32 %v983, 16
      %v1081 = vrot.slane %v1079, 5
      %v1082 = vsel %vm1034, %v1077, %v1081
      %v1084 = vshrl.u32 %v984, 16
      %v1086 = vrot.slane %v1084, 4
      %v1087 = vshll.u32 %v984, 16
      %v1089 = vrot.slane %v1087, 5
      %v1090 = vor.u32 %v1086, %v1089
      %v1091 = vrot.slane %v1090, 4
      %v1093 = vshll.u32 %v985, 16
      %v1095 = vrot.slane %v1093, 5
      %v1096 = vsel %vm1034, %v1091, %v1095
      %v1097 = vshrl.u32 %v985, 16
      %v1099 = vrot.slane %v1097, 4
      %v1100 = vor.u32 %v1099, %v1095
      %v1101 = vrot.slane %v1100, 4
      %v1103 = vshll.u32 %v986, 16
      %v1105 = vrot.slane %v1103, 5
      %v1106 = vsel %vm1034, %v1101, %v1105
      %v1108 = vshrl.u32 %v987, 16
      %v1110 = vrot.slane %v1108, 4
      %v1111 = vshll.u32 %v987, 16
      %v1113 = vrot.slane %v1111, 5
      %v1114 = vor.u32 %v1110, %v1113
      %v1115 = vrot.slane %v1114, 4
      %v1117 = vshll.u32 %v988, 16
      %v1119 = vrot.slane %v1117, 5
      %v1120 = vsel %vm1034, %v1115, %v1119
      %v1121 = vshrl.u32 %v988, 16
      %v1123 = vrot.slane %v1121, 4
      %v1124 = vor.u32 %v1123, %v1119
      %v1125 = vrot.slane %v1124, 4
      %v1127 = vshll.u32 %v989, 16
      %v1129 = vrot.slane %v1127, 5
      %v1130 = vsel %vm1034, %v1125, %v1129
      %v1132 = vshrl.u32 %v990, 16
      %v1134 = vrot.slane %v1132, 4
      %v1135 = vshll.u32 %v990, 16
      %v1137 = vrot.slane %v1135, 5
      %v1138 = vor.u32 %v1134, %v1137
      %v1139 = vrot.slane %v1138, 4
      %v1141 = vshll.u32 %v991, 16
      %v1143 = vrot.slane %v1141, 5
      %v1144 = vsel %vm1034, %v1139, %v1143
      %v1145 = vshrl.u32 %v991, 16
      %v1147 = vrot.slane %v1145, 4
      %v1148 = vor.u32 %v1147, %v1143
      %v1149 = vrot.slane %v1148, 4
      %v1151 = vshll.u32 %v992, 16
      %v1153 = vrot.slane %v1151, 5
      %v1154 = vsel %vm1034, %v1149, %v1153
      %v1156 = vshrl.u32 %v993, 16
      %v1158 = vrot.slane %v1156, 4
      %v1159 = vshll.u32 %v993, 16
      %v1161 = vrot.slane %v1159, 5
      %v1162 = vor.u32 %v1158, %v1161
      %v1163 = vrot.slane %v1162, 4
      %v1165 = vshll.u32 %v994, 16
      %v1167 = vrot.slane %v1165, 5
      %v1168 = vsel %vm1034, %v1163, %v1167
      %v1169 = vshrl.u32 %v994, 16
      %v1171 = vrot.slane %v1169, 4
      %v1172 = vor.u32 %v1171, %v1167
      %v1173 = vrot.slane %v1172, 4
      %v1175 = vshll.u32 %v995, 16
      %v1177 = vrot.slane %v1175, 5
      %v1178 = vsel %vm1034, %v1173, %v1177
      %v1180 = vshrl.u32 %v996, 16
      %v1182 = vrot.slane %v1180, 4
      %v1183 = vshll.u32 %v996, 16
      %v1185 = vrot.slane %v1183, 5
      %v1186 = vor.u32 %v1182, %v1185
      %v1187 = vrot.slane %v1186, 4
      %v1189 = vshll.u32 %v997, 16
      %v1191 = vrot.slane %v1189, 5
      %v1192 = vsel %vm1034, %v1187, %v1191
      %v1193 = vshrl.u32 %v997, 16
      %v1195 = vrot.slane %v1193, 4
      %v1196 = vor.u32 %v1195, %v1191
      %v1197 = vrot.slane %v1196, 4
      %v1199 = vshll.u32 %v998, 16
      %v1201 = vrot.slane %v1199, 5
      %v1202 = vsel %vm1034, %v1197, %v1201
      %v1204 = vshrl.u32 %v999, 16
      %v1206 = vrot.slane %v1204, 4
      %v1207 = vshll.u32 %v999, 16
      %v1209 = vrot.slane %v1207, 5
      %v1210 = vor.u32 %v1206, %v1209
      %v1211 = vrot.slane %v1210, 4
      %v1213 = vshll.u32 %v1000, 16
      %v1215 = vrot.slane %v1213, 5
      %v1216 = vsel %vm1034, %v1211, %v1215
      %v1217 = vshrl.u32 %v1000, 16
      %v1219 = vrot.slane %v1217, 4
      %v1220 = vor.u32 %v1219, %v1215
      %v1221 = vrot.slane %v1220, 4
      %v1223 = vshll.u32 %v1001, 16
      %v1225 = vrot.slane %v1223, 5
      %v1226 = vsel %vm1034, %v1221, %v1225
      %v1228 = vshrl.u32 %v1002, 16
      %v1230 = vrot.slane %v1228, 4
      %v1231 = vshll.u32 %v1002, 16
      %v1233 = vrot.slane %v1231, 5
      %v1234 = vor.u32 %v1230, %v1233
      %v1235 = vrot.slane %v1234, 4
      %v1237 = vshll.u32 %v1003, 16
      %v1239 = vrot.slane %v1237, 5
      %v1240 = vsel %vm1034, %v1235, %v1239
      %v1241 = vshrl.u32 %v1003, 16
      %v1243 = vrot.slane %v1241, 4
      %v1244 = vor.u32 %v1243, %v1239
      %v1245 = vrot.slane %v1244, 4
      %v1247 = vshll.u32 %v1004, 16
      %v1249 = vrot.slane %v1247, 5
      %v1250 = vsel %vm1034, %v1245, %v1249
      %v1252 = vshrl.u32 %v1005, 16
      %v1254 = vrot.slane %v1252, 4
      %v1255 = vshll.u32 %v1005, 16
      %v1257 = vrot.slane %v1255, 5
      %v1258 = vor.u32 %v1254, %v1257
      %v1259 = vrot.slane %v1258, 4
      %v1261 = vshll.u32 %v1006, 16
      %v1263 = vrot.slane %v1261, 5
      %v1264 = vsel %vm1034, %v1259, %v1263
      %v1265 = vshrl.u32 %v1006, 16
      %v1267 = vrot.slane %v1265, 4
      %v1268 = vor.u32 %v1267, %v1263
      %v1269 = vrot.slane %v1268, 4
      %v1271 = vshll.u32 %v1007, 16
      %v1273 = vrot.slane %v1271, 5
      %v1274 = vsel %vm1034, %v1269, %v1273
      %v1276 = vshrl.u32 %v1008, 16
      %v1278 = vrot.slane %v1276, 4
      %v1279 = vshll.u32 %v1008, 16
      %v1281 = vrot.slane %v1279, 5
      %v1282 = vor.u32 %v1278, %v1281
      %v1283 = vrot.slane %v1282, 4
      %v1285 = vshll.u32 %v1009, 16
      %v1287 = vrot.slane %v1285, 5
      %v1288 = vsel %vm1034, %v1283, %v1287
      %v1289 = vshrl.u32 %v1009, 16
      %v1291 = vrot.slane %v1289, 4
      %v1292 = vor.u32 %v1291, %v1287
      %v1293 = vrot.slane %v1292, 4
      %v1295 = vshll.u32 %v1010, 16
      %v1297 = vrot.slane %v1295, 5
      %v1298 = vsel %vm1034, %v1293, %v1297
      %v1300 = vshrl.u32 %v1011, 16
      %v1302 = vrot.slane %v1300, 4
      %v1303 = vshll.u32 %v1011, 16
      %v1305 = vrot.slane %v1303, 5
      %v1306 = vor.u32 %v1302, %v1305
      %v1307 = vrot.slane %v1306, 4
      %v1309 = vshll.u32 %v1012, 16
      %v1311 = vrot.slane %v1309, 5
      %v1312 = vsel %vm1034, %v1307, %v1311
      %v1313 = vshrl.u32 %v1012, 16
      %v1315 = vrot.slane %v1313, 4
      %v1316 = vor.u32 %v1315, %v1311
      %v1317 = vrot.slane %v1316, 4
      %v1319 = vshll.u32 %v1013, 16
      %v1321 = vrot.slane %v1319, 5
      %v1322 = vsel %vm1034, %v1317, %v1321
      %v1324 = vshrl.u32 %v1014, 16
      %v1326 = vrot.slane %v1324, 4
      %v1327 = vshll.u32 %v1014, 16
      %v1329 = vrot.slane %v1327, 5
      %v1330 = vor.u32 %v1326, %v1329
      %v1331 = vrot.slane %v1330, 4
      %v1333 = vshll.u32 %v1015, 16
      %v1335 = vrot.slane %v1333, 5
      %v1336 = vsel %vm1034, %v1331, %v1335
      %v1337 = vshrl.u32 %v1015, 16
      %v1339 = vrot.slane %v1337, 4
      %v1340 = vor.u32 %v1339, %v1335
      %v1341 = vrot.slane %v1340, 4
      %v1343 = vshll.u32 %v1016, 16
      %v1345 = vrot.slane %v1343, 5
      %v1346 = vsel %vm1034, %v1341, %v1345
      %v1348 = vshrl.u32 %v1017, 16
      %v1350 = vrot.slane %v1348, 4
      %v1351 = vshll.u32 %v1017, 16
      %v1353 = vrot.slane %v1351, 5
      %v1354 = vor.u32 %v1350, %v1353
      %v1355 = vrot.slane %v1354, 4
      %v1357 = vshll.u32 %v1018, 16
      %v1359 = vrot.slane %v1357, 5
      %v1360 = vsel %vm1034, %v1355, %v1359
      %v1361 = vshrl.u32 %v1018, 16
      %v1363 = vrot.slane %v1361, 4
      %v1364 = vor.u32 %v1363, %v1359
      %v1365 = vrot.slane %v1364, 4
      %v1367 = vshll.u32 %v1019, 16
      %v1369 = vrot.slane %v1367, 5
      %v1370 = vsel %vm1034, %v1365, %v1369
      %v1372 = vshrl.u32 %v1020, 16
      %v1374 = vrot.slane %v1372, 4
      %v1375 = vshll.u32 %v1020, 16
      %v1377 = vrot.slane %v1375, 5
      %v1378 = vor.u32 %v1374, %v1377
      %v1379 = vrot.slane %v1378, 4
      %v1381 = vshll.u32 %v1021, 16
      %v1383 = vrot.slane %v1381, 5
      %v1384 = vsel %vm1034, %v1379, %v1383
      %v1385 = vshrl.u32 %v1021, 16
      %v1387 = vrot.slane %v1385, 4
      %v1388 = vor.u32 %v1387, %v1383
      %v1389 = vrot.slane %v1388, 4
      %v1391 = vshll.u32 %v1022, 16
      %v1393 = vrot.slane %v1391, 5
      %v1394 = vsel %vm1034, %v1389, %v1393
      %v1396 = vshrl.u32 %v1023, 16
      %v1398 = vrot.slane %v1396, 4
      %v1399 = vshll.u32 %v1023, 16
      %v1401 = vrot.slane %v1399, 5
      %v1402 = vor.u32 %v1398, %v1401
      %v1403 = vrot.slane %v1402, 4
      %v1405 = vshll.u32 %v1024, 16
      %v1407 = vrot.slane %v1405, 5
      %v1408 = vsel %vm1034, %v1403, %v1407
      %v1409 = vshrl.u32 %v1024, 16
      %v1411 = vrot.slane %v1409, 4
      %v1412 = vor.u32 %v1411, %v1407
      %v1413 = vrot.slane %v1412, 4
      %v1415 = vshll.u32 %v1025, 16
      %v1417 = vrot.slane %v1415, 5
      %v1418 = vsel %vm1034, %v1413, %v1417
      %v1420 = vshrl.u32 %v1026, 16
      %v1422 = vrot.slane %v1420, 4
      %v1423 = vshll.u32 %v1026, 16
      %v1425 = vrot.slane %v1423, 5
      %v1426 = vor.u32 %v1422, %v1425
      %v1427 = vrot.slane %v1426, 4
      %v1429 = vshll.u32 %v1027, 16
      %v1431 = vrot.slane %v1429, 5
      %v1432 = vsel %vm1034, %v1427, %v1431
      %v1433 = vshrl.u32 %v1027, 16
      %v1435 = vrot.slane %v1433, 4
      %v1436 = vor.u32 %v1435, %v1431
      %v1437 = vrot.slane %v1436, 4
      %v1439 = vshll.u32 %v1028, 16
      %v1441 = vrot.slane %v1439, 5
      %v1442 = vsel %vm1034, %v1437, %v1441
      %v1444 = vshrl.u32 %v1029, 16
      %v1446 = vrot.slane %v1444, 4
      %v1447 = vshll.u32 %v1029, 16
      %v1449 = vrot.slane %v1447, 5
      %v1450 = vor.u32 %v1446, %v1449
      %v1451 = vrot.slane %v1450, 4
      %v1453 = vshll.u32 %v1030, 16
      %v1455 = vrot.slane %v1453, 5
      %v1456 = vsel %vm1034, %v1451, %v1455
      %v1457 = vshrl.u32 %v1030, 16
      %v1459 = vrot.slane %v1457, 4
      %v1460 = vor.u32 %v1459, %v1455
      %v1461 = vrot.slane %v1460, 4
      %v1463 = vshll.u32 %v1031, 16
      %v1465 = vrot.slane %v1463, 5
      %v1466 = vsel %vm1034, %v1461, %v1465
      %v1467 = vunpack.c.l.b16 %v1048
      %v1468 = vunpack.c.l.b16 %v1058
      %v1469 = vunpack.c.l.b16 %v1072
      %v1470 = vunpack.c.l.b16 %v1082
      %v1471 = vunpack.c.l.b16 %v1096
      %v1472 = vunpack.c.l.b16 %v1106
      %v1473 = vunpack.c.l.b16 %v1120
      %v1474 = vunpack.c.l.b16 %v1130
      %v1475 = vunpack.c.l.b16 %v1144
      %v1476 = vunpack.c.l.b16 %v1154
      %v1477 = vunpack.c.l.b16 %v1168
      %v1478 = vunpack.c.l.b16 %v1178
      %v1479 = vunpack.c.l.b16 %v1192
      %v1480 = vunpack.c.l.b16 %v1202
      %v1481 = vunpack.c.l.b16 %v1216
      %v1482 = vunpack.c.l.b16 %v1226
      %v1483 = vunpack.c.l.b16 %v1240
      %v1484 = vunpack.c.l.b16 %v1250
      %v1485 = vunpack.c.l.b16 %v1264
      %v1486 = vunpack.c.l.b16 %v1274
      %v1487 = vunpack.c.l.b16 %v1288
      %v1488 = vunpack.c.l.b16 %v1298
      %v1489 = vunpack.c.l.b16 %v1312
      %v1490 = vunpack.c.l.b16 %v1322
      %v1491 = vunpack.c.l.b16 %v1336
      %v1492 = vunpack.c.l.b16 %v1346
      %v1493 = vunpack.c.l.b16 %v1360
      %v1494 = vunpack.c.l.b16 %v1370
      %v1495 = vunpack.c.l.b16 %v1384
      %v1496 = vunpack.c.l.b16 %v1394
      %v1497 = vunpack.c.l.b16 %v1408
      %v1498 = vunpack.c.l.b16 %v1418
      %v1499 = vunpack.c.l.b16 %v1432
      %v1500 = vunpack.c.l.b16 %v1442
      %v1501 = vunpack.c.l.b16 %v1456
      %v1502 = vunpack.c.l.b16 %v1466
      %v1503 = vpack.c.b16 %v1468, %v1467
      %v1504 = vpack.c.b16 %v1470, %v1469
      %v1505 = vpack.c.b16 %v1472, %v1471
      %v1506 = vpack.c.b16 %v1474, %v1473
      %v1507 = vpack.c.b16 %v1476, %v1475
      %v1508 = vpack.c.b16 %v1478, %v1477
      %v1509 = vpack.c.b16 %v1480, %v1479
      %v1510 = vpack.c.b16 %v1482, %v1481
      %v1511 = vpack.c.b16 %v1484, %v1483
      %v1512 = vpack.c.b16 %v1486, %v1485
      %v1513 = vpack.c.b16 %v1488, %v1487
      %v1514 = vpack.c.b16 %v1490, %v1489
      %v1515 = vpack.c.b16 %v1492, %v1491
      %v1516 = vpack.c.b16 %v1494, %v1493
      %v1517 = vpack.c.b16 %v1496, %v1495
      %v1518 = vpack.c.b16 %v1498, %v1497
      %v1519 = vpack.c.b16 %v1500, %v1499
      %v1520 = vpack.c.b16 %v1502, %v1501
      %1521 = vrot.lane.b32.xlu0 %v1503, 64
      %v1522 = vpop.permute.xlu0 %1521
      %1523 = vrot.lane.b32.xlu0 %v1504, 64
      %v1524 = vpop.permute.xlu0 %1523
      %1525 = vrot.lane.b32.xlu0 %v1505, 64
      %v1526 = vpop.permute.xlu0 %1525
      %1527 = vrot.lane.b32.xlu0 %v1506, 64
      %v1528 = vpop.permute.xlu0 %1527
      %1529 = vrot.lane.b32.xlu0 %v1507, 64
      %v1530 = vpop.permute.xlu0 %1529
      %1531 = vrot.lane.b32.xlu0 %v1508, 64
      %v1532 = vpop.permute.xlu0 %1531
      %1533 = vrot.lane.b32.xlu0 %v1509, 64
      %v1534 = vpop.permute.xlu0 %1533
      %1535 = vrot.lane.b32.xlu0 %v1510, 64
      %v1536 = vpop.permute.xlu0 %1535
      %1537 = vrot.lane.b32.xlu0 %v1511, 64
      %v1538 = vpop.permute.xlu0 %1537
      %1539 = vrot.lane.b32.xlu0 %v1512, 64
      %v1540 = vpop.permute.xlu0 %1539
      %1541 = vrot.lane.b32.xlu0 %v1513, 64
      %v1542 = vpop.permute.xlu0 %1541
      %1543 = vrot.lane.b32.xlu0 %v1514, 64
      %v1544 = vpop.permute.xlu0 %1543
      %1545 = vrot.lane.b32.xlu0 %v1515, 64
      %v1546 = vpop.permute.xlu0 %1545
      %1547 = vrot.lane.b32.xlu0 %v1516, 64
      %v1548 = vpop.permute.xlu0 %1547
      %1549 = vrot.lane.b32.xlu0 %v1517, 64
      %v1550 = vpop.permute.xlu0 %1549
      %1551 = vrot.lane.b32.xlu0 %v1518, 64
      %v1552 = vpop.permute.xlu0 %1551
      %1553 = vrot.lane.b32.xlu0 %v1519, 64
      %v1554 = vpop.permute.xlu0 %1553
      %1555 = vrot.lane.b32.xlu0 %v1520, 64
      %v1556 = vpop.permute.xlu0 %1555
      %vm1575 = vcmask 1048064
      %1576 = vst.msk [vmem:[#allocation3] sm:$0xff] %vm1575, %v1522
      %1577 = vst.msk [vmem:[#allocation3 + $0x10] sm:$0xff] %vm1575, %v1524
      %1578 = vst.msk [vmem:[#allocation3 + $0x20] sm:$0xff] %vm1575, %v1526
      %1579 = vst.msk [vmem:[#allocation3 + $0x30] sm:$0xff] %vm1575, %v1528
      %1580 = vst.msk [vmem:[#allocation3 + $0x40] sm:$0xff] %vm1575, %v1530
      %1581 = vst.msk [vmem:[#allocation3 + $0x50] sm:$0xff] %vm1575, %v1532
      %1582 = vst.msk [vmem:[#allocation3 + $0x60] sm:$0xff] %vm1575, %v1534
      %1583 = vst.msk [vmem:[#allocation3 + $0x70] sm:$0xff] %vm1575, %v1536
      %1584 = vst.msk [vmem:[#allocation3 + $0x80] sm:$0xff] %vm1575, %v1538
      %1585 = vst.msk [vmem:[#allocation3 + $0x90] sm:$0xff] %vm1575, %v1540
      %1586 = vst.msk [vmem:[#allocation3 + $0xa0] sm:$0xff] %vm1575, %v1542
      %1587 = vst.msk [vmem:[#allocation3 + $0xb0] sm:$0xff] %vm1575, %v1544
      %1588 = vst.msk [vmem:[#allocation3 + $0xc0] sm:$0xff] %vm1575, %v1546
      %1589 = vst.msk [vmem:[#allocation3 + $0xd0] sm:$0xff] %vm1575, %v1548
      %1590 = vst.msk [vmem:[#allocation3 + $0xe0] sm:$0xff] %vm1575, %v1550
      %1591 = vst.msk [vmem:[#allocation3 + $0xf0] sm:$0xff] %vm1575, %v1552
      %1592 = vst.msk [vmem:[#allocation3 + $0x100] sm:$0xff] %vm1575, %v1554
      %1593 = vst.msk [vmem:[#allocation3 + $0x110] sm:$0xff] %vm1575, %v1556
      %v1594 = vld [vmem:[#allocation2] sm:$0xe]
      %v1595 = vld [vmem:[#allocation2 + $0x4] sm:$0xf]
      %v1596 = vld [vmem:[#allocation2 + $0x8] sm:$0x1]
      %v1597 = vld [vmem:[#allocation2 + $0xc] sm:$0xe]
      %v1598 = vld [vmem:[#allocation2 + $0x10] sm:$0xf]
      %v1599 = vld [vmem:[#allocation2 + $0x14] sm:$0x1]
      %v1600 = vld [vmem:[#allocation2 + $0x18] sm:$0xe]
      %v1601 = vld [vmem:[#allocation2 + $0x1c] sm:$0xf]
      %v1602 = vld [vmem:[#allocation2 + $0x20] sm:$0x1]
      %v1603 = vld [vmem:[#allocation2 + $0x24] sm:$0xe]
      %v1604 = vld [vmem:[#allocation2 + $0x28] sm:$0xf]
      %v1605 = vld [vmem:[#allocation2 + $0x2c] sm:$0x1]
      %v1606 = vld [vmem:[#allocation2 + $0x30] sm:$0xe]
      %v1607 = vld [vmem:[#allocation2 + $0x34] sm:$0xf]
      %v1608 = vld [vmem:[#allocation2 + $0x38] sm:$0x1]
      %v1609 = vld [vmem:[#allocation2 + $0x3c] sm:$0xe]
      %v1610 = vld [vmem:[#allocation2 + $0x40] sm:$0xf]
      %v1611 = vld [vmem:[#allocation2 + $0x44] sm:$0x1]
      %v1612 = vld [vmem:[#allocation2 + $0x48] sm:$0xe]
      %v1613 = vld [vmem:[#allocation2 + $0x4c] sm:$0xf]
      %v1614 = vld [vmem:[#allocation2 + $0x50] sm:$0x1]
      %v1615 = vld [vmem:[#allocation2 + $0x54] sm:$0xe]
      %v1616 = vld [vmem:[#allocation2 + $0x58] sm:$0xf]
      %v1617 = vld [vmem:[#allocation2 + $0x5c] sm:$0x1]
      %v1618 = vld [vmem:[#allocation2 + $0x60] sm:$0xe]
      %v1619 = vld [vmem:[#allocation2 + $0x64] sm:$0xf]
      %v1620 = vld [vmem:[#allocation2 + $0x68] sm:$0x1]
      %v1621 = vld [vmem:[#allocation2 + $0x6c] sm:$0xe]
      %v1622 = vld [vmem:[#allocation2 + $0x70] sm:$0xf]
      %v1623 = vld [vmem:[#allocation2 + $0x74] sm:$0x1]
      %v1624 = vld [vmem:[#allocation2 + $0x78] sm:$0xe]
      %v1625 = vld [vmem:[#allocation2 + $0x7c] sm:$0xf]
      %v1626 = vld [vmem:[#allocation2 + $0x80] sm:$0x1]
      %v1627 = vld [vmem:[#allocation2 + $0x84] sm:$0xe]
      %v1628 = vld [vmem:[#allocation2 + $0x88] sm:$0xf]
      %v1629 = vld [vmem:[#allocation2 + $0x8c] sm:$0x1]
      %v1630 = vld [vmem:[#allocation2 + $0x90] sm:$0xe]
      %v1631 = vld [vmem:[#allocation2 + $0x94] sm:$0xf]
      %v1632 = vld [vmem:[#allocation2 + $0x98] sm:$0x1]
      %v1633 = vld [vmem:[#allocation2 + $0x9c] sm:$0xe]
      %v1634 = vld [vmem:[#allocation2 + $0xa0] sm:$0xf]
      %v1635 = vld [vmem:[#allocation2 + $0xa4] sm:$0x1]
      %v1636 = vld [vmem:[#allocation2 + $0xa8] sm:$0xe]
      %v1637 = vld [vmem:[#allocation2 + $0xac] sm:$0xf]
      %v1638 = vld [vmem:[#allocation2 + $0xb0] sm:$0x1]
      %v1639 = vld [vmem:[#allocation2 + $0xb4] sm:$0xe]
      %v1640 = vld [vmem:[#allocation2 + $0xb8] sm:$0xf]
      %v1641 = vld [vmem:[#allocation2 + $0xbc] sm:$0x1]
      %v1642 = vld [vmem:[#allocation2 + $0xc0] sm:$0xe]
      %v1643 = vld [vmem:[#allocation2 + $0xc4] sm:$0xf]
      %v1644 = vld [vmem:[#allocation2 + $0xc8] sm:$0x1]
      %v1645 = vld [vmem:[#allocation2 + $0xcc] sm:$0xe]
      %v1646 = vld [vmem:[#allocation2 + $0xd0] sm:$0xf]
      %v1647 = vld [vmem:[#allocation2 + $0xd4] sm:$0x1]
      %vm1702 = vcmask 1042432
      %vm1703 = vcmask 1046532
      %vm1704 = vmor %vm1702, %vm1703
      %v1705 = vrot.slane %v1594, 5
      %v1706 = vrot.slane %v1705, 4
      %v1707 = vrot.slane %v1595, 5
      %v1708 = vsel %vm1704, %v1706, %v1707
      %v1709 = vrot.slane %v1707, 4
      %v1710 = vrot.slane %v1596, 5
      %v1711 = vsel %vm1704, %v1709, %v1710
      %v1712 = vrot.slane %v1597, 5
      %v1713 = vrot.slane %v1712, 4
      %v1714 = vrot.slane %v1598, 5
      %v1715 = vsel %vm1704, %v1713, %v1714
      %v1716 = vrot.slane %v1714, 4
      %v1717 = vrot.slane %v1599, 5
      %v1718 = vsel %vm1704, %v1716, %v1717
      %v1719 = vrot.slane %v1600, 5
      %v1720 = vrot.slane %v1719, 4
      %v1721 = vrot.slane %v1601, 5
      %v1722 = vsel %vm1704, %v1720, %v1721
      %v1723 = vrot.slane %v1721, 4
      %v1724 = vrot.slane %v1602, 5
      %v1725 = vsel %vm1704, %v1723, %v1724
      %v1726 = vrot.slane %v1603, 5
      %v1727 = vrot.slane %v1726, 4
      %v1728 = vrot.slane %v1604, 5
      %v1729 = vsel %vm1704, %v1727, %v1728
      %v1730 = vrot.slane %v1728, 4
      %v1731 = vrot.slane %v1605, 5
      %v1732 = vsel %vm1704, %v1730, %v1731
      %v1733 = vrot.slane %v1606, 5
      %v1734 = vrot.slane %v1733, 4
      %v1735 = vrot.slane %v1607, 5
      %v1736 = vsel %vm1704, %v1734, %v1735
      %v1737 = vrot.slane %v1735, 4
      %v1738 = vrot.slane %v1608, 5
      %v1739 = vsel %vm1704, %v1737, %v1738
      %v1740 = vrot.slane %v1609, 5
      %v1741 = vrot.slane %v1740, 4
      %v1742 = vrot.slane %v1610, 5
      %v1743 = vsel %vm1704, %v1741, %v1742
      %v1744 = vrot.slane %v1742, 4
      %v1745 = vrot.slane %v1611, 5
      %v1746 = vsel %vm1704, %v1744, %v1745
      %v1747 = vrot.slane %v1612, 5
      %v1748 = vrot.slane %v1747, 4
      %v1749 = vrot.slane %v1613, 5
      %v1750 = vsel %vm1704, %v1748, %v1749
      %v1751 = vrot.slane %v1749, 4
      %v1752 = vrot.slane %v1614, 5
      %v1753 = vsel %vm1704, %v1751, %v1752
      %v1754 = vrot.slane %v1615, 5
      %v1755 = vrot.slane %v1754, 4
      %v1756 = vrot.slane %v1616, 5
      %v1757 = vsel %vm1704, %v1755, %v1756
      %v1758 = vrot.slane %v1756, 4
      %v1759 = vrot.slane %v1617, 5
      %v1760 = vsel %vm1704, %v1758, %v1759
      %v1761 = vrot.slane %v1618, 5
      %v1762 = vrot.slane %v1761, 4
      %v1763 = vrot.slane %v1619, 5
      %v1764 = vsel %vm1704, %v1762, %v1763
      %v1765 = vrot.slane %v1763, 4
      %v1766 = vrot.slane %v1620, 5
      %v1767 = vsel %vm1704, %v1765, %v1766
      %v1768 = vrot.slane %v1621, 5
      %v1769 = vrot.slane %v1768, 4
      %v1770 = vrot.slane %v1622, 5
      %v1771 = vsel %vm1704, %v1769, %v1770
      %v1772 = vrot.slane %v1770, 4
      %v1773 = vrot.slane %v1623, 5
      %v1774 = vsel %vm1704, %v1772, %v1773
      %v1775 = vrot.slane %v1624, 5
      %v1776 = vrot.slane %v1775, 4
      %v1777 = vrot.slane %v1625, 5
      %v1778 = vsel %vm1704, %v1776, %v1777
      %v1779 = vrot.slane %v1777, 4
      %v1780 = vrot.slane %v1626, 5
      %v1781 = vsel %vm1704, %v1779, %v1780
      %v1782 = vrot.slane %v1627, 5
      %v1783 = vrot.slane %v1782, 4
      %v1784 = vrot.slane %v1628, 5
      %v1785 = vsel %vm1704, %v1783, %v1784
      %v1786 = vrot.slane %v1784, 4
      %v1787 = vrot.slane %v1629, 5
      %v1788 = vsel %vm1704, %v1786, %v1787
      %v1789 = vrot.slane %v1630, 5
      %v1790 = vrot.slane %v1789, 4
      %v1791 = vrot.slane %v1631, 5
      %v1792 = vsel %vm1704, %v1790, %v1791
      %v1793 = vrot.slane %v1791, 4
      %v1794 = vrot.slane %v1632, 5
      %v1795 = vsel %vm1704, %v1793, %v1794
      %v1796 = vrot.slane %v1633, 5
      %v1797 = vrot.slane %v1796, 4
      %v1798 = vrot.slane %v1634, 5
      %v1799 = vsel %vm1704, %v1797, %v1798
      %v1800 = vrot.slane %v1798, 4
      %v1801 = vrot.slane %v1635, 5
      %v1802 = vsel %vm1704, %v1800, %v1801
      %v1803 = vrot.slane %v1636, 5
      %v1804 = vrot.slane %v1803, 4
      %v1805 = vrot.slane %v1637, 5
      %v1806 = vsel %vm1704, %v1804, %v1805
      %v1807 = vrot.slane %v1805, 4
      %v1808 = vrot.slane %v1638, 5
      %v1809 = vsel %vm1704, %v1807, %v1808
      %v1810 = vrot.slane %v1639, 5
      %v1811 = vrot.slane %v1810, 4
      %v1812 = vrot.slane %v1640, 5
      %v1813 = vsel %vm1704, %v1811, %v1812
      %v1814 = vrot.slane %v1812, 4
      %v1815 = vrot.slane %v1641, 5
      %v1816 = vsel %vm1704, %v1814, %v1815
      %v1817 = vrot.slane %v1642, 5
      %v1818 = vrot.slane %v1817, 4
      %v1819 = vrot.slane %v1643, 5
      %v1820 = vsel %vm1704, %v1818, %v1819
      %v1821 = vrot.slane %v1819, 4
      %v1822 = vrot.slane %v1644, 5
      %v1823 = vsel %vm1704, %v1821, %v1822
      %v1824 = vrot.slane %v1645, 5
      %v1825 = vrot.slane %v1824, 4
      %v1826 = vrot.slane %v1646, 5
      %v1827 = vsel %vm1704, %v1825, %v1826
      %v1828 = vrot.slane %v1826, 4
      %v1829 = vrot.slane %v1647, 5
      %v1830 = vsel %vm1704, %v1828, %v1829
      %v1831 = vunpack.c.l.b16 %v1708
      %v1832 = vunpack.c.l.b16 %v1711
      %v1833 = vunpack.c.l.b16 %v1715
      %v1834 = vunpack.c.l.b16 %v1718
      %v1835 = vunpack.c.l.b16 %v1722
      %v1836 = vunpack.c.l.b16 %v1725
      %v1837 = vunpack.c.l.b16 %v1729
      %v1838 = vunpack.c.l.b16 %v1732
      %v1839 = vunpack.c.l.b16 %v1736
      %v1840 = vunpack.c.l.b16 %v1739
      %v1841 = vunpack.c.l.b16 %v1743
      %v1842 = vunpack.c.l.b16 %v1746
      %v1843 = vunpack.c.l.b16 %v1750
      %v1844 = vunpack.c.l.b16 %v1753
      %v1845 = vunpack.c.l.b16 %v1757
      %v1846 = vunpack.c.l.b16 %v1760
      %v1847 = vunpack.c.l.b16 %v1764
      %v1848 = vunpack.c.l.b16 %v1767
      %v1849 = vunpack.c.l.b16 %v1771
      %v1850 = vunpack.c.l.b16 %v1774
      %v1851 = vunpack.c.l.b16 %v1778
      %v1852 = vunpack.c.l.b16 %v1781
      %v1853 = vunpack.c.l.b16 %v1785
      %v1854 = vunpack.c.l.b16 %v1788
      %v1855 = vunpack.c.l.b16 %v1792
      %v1856 = vunpack.c.l.b16 %v1795
      %v1857 = vunpack.c.l.b16 %v1799
      %v1858 = vunpack.c.l.b16 %v1802
      %v1859 = vunpack.c.l.b16 %v1806
      %v1860 = vunpack.c.l.b16 %v1809
      %v1861 = vunpack.c.l.b16 %v1813
      %v1862 = vunpack.c.l.b16 %v1816
      %v1863 = vunpack.c.l.b16 %v1820
      %v1864 = vunpack.c.l.b16 %v1823
      %v1865 = vunpack.c.l.b16 %v1827
      %v1866 = vunpack.c.l.b16 %v1830
      %v1867 = vpack.c.b16 %v1832, %v1831
      %v1868 = vpack.c.b16 %v1834, %v1833
      %v1869 = vpack.c.b16 %v1836, %v1835
      %v1870 = vpack.c.b16 %v1838, %v1837
      %v1871 = vpack.c.b16 %v1840, %v1839
      %v1872 = vpack.c.b16 %v1842, %v1841
      %v1873 = vpack.c.b16 %v1844, %v1843
      %v1874 = vpack.c.b16 %v1846, %v1845
      %v1875 = vpack.c.b16 %v1848, %v1847
      %v1876 = vpack.c.b16 %v1850, %v1849
      %v1877 = vpack.c.b16 %v1852, %v1851
      %v1878 = vpack.c.b16 %v1854, %v1853
      %v1879 = vpack.c.b16 %v1856, %v1855
      %v1880 = vpack.c.b16 %v1858, %v1857
      %v1881 = vpack.c.b16 %v1860, %v1859
      %v1882 = vpack.c.b16 %v1862, %v1861
      %v1883 = vpack.c.b16 %v1864, %v1863
      %v1884 = vpack.c.b16 %v1866, %v1865
      %1903 = vst.msk [vmem:[#allocation3 + $0x8] sm:$0xff] %vm959, %v1867
      %1904 = vst.msk [vmem:[#allocation3 + $0x18] sm:$0xff] %vm959, %v1868
      %1905 = vst.msk [vmem:[#allocation3 + $0x28] sm:$0xff] %vm959, %v1869
      %1906 = vst.msk [vmem:[#allocation3 + $0x38] sm:$0xff] %vm959, %v1870
      %1907 = vst.msk [vmem:[#allocation3 + $0x48] sm:$0xff] %vm959, %v1871
      %1908 = vst.msk [vmem:[#allocation3 + $0x58] sm:$0xff] %vm959, %v1872
      %1909 = vst.msk [vmem:[#allocation3 + $0x68] sm:$0xff] %vm959, %v1873
      %1910 = vst.msk [vmem:[#allocation3 + $0x78] sm:$0xff] %vm959, %v1874
      %1911 = vst.msk [vmem:[#allocation3 + $0x88] sm:$0xff] %vm959, %v1875
      %1912 = vst.msk [vmem:[#allocation3 + $0x98] sm:$0xff] %vm959, %v1876
      %1913 = vst.msk [vmem:[#allocation3 + $0xa8] sm:$0xff] %vm959, %v1877
      %1914 = vst.msk [vmem:[#allocation3 + $0xb8] sm:$0xff] %vm959, %v1878
      %1915 = vst.msk [vmem:[#allocation3 + $0xc8] sm:$0xff] %vm959, %v1879
      %1916 = vst.msk [vmem:[#allocation3 + $0xd8] sm:$0xff] %vm959, %v1880
      %1917 = vst.msk [vmem:[#allocation3 + $0xe8] sm:$0xff] %vm959, %v1881
      %1918 = vst.msk [vmem:[#allocation3 + $0xf8] sm:$0xff] %vm959, %v1882
      %1919 = vst.msk [vmem:[#allocation3 + $0x108] sm:$0xff] %vm959, %v1883
      %1920 = vst.msk [vmem:[#allocation3 + $0x118] sm:$0xff] %vm959, %v1884
      %v1921 = vld [vmem:[#allocation3] sm:$0xff]
      %v1922 = vld [vmem:[#allocation3 + $0x8] sm:$0xff]
      %v1923 = vld [vmem:[#allocation3 + $0x10] sm:$0xff]
      %v1924 = vld [vmem:[#allocation3 + $0x18] sm:$0xff]
      %v1925 = vld [vmem:[#allocation3 + $0x20] sm:$0xff]
      %v1926 = vld [vmem:[#allocation3 + $0x28] sm:$0xff]
      %v1927 = vld [vmem:[#allocation3 + $0x30] sm:$0xff]
      %v1928 = vld [vmem:[#allocation3 + $0x38] sm:$0xff]
      %v1929 = vld [vmem:[#allocation3 + $0x40] sm:$0xff]
      %v1930 = vld [vmem:[#allocation3 + $0x48] sm:$0xff]
      %v1931 = vld [vmem:[#allocation3 + $0x50] sm:$0xff]
      %v1932 = vld [vmem:[#allocation3 + $0x58] sm:$0xff]
      %v1933 = vld [vmem:[#allocation3 + $0x60] sm:$0xff]
      %v1934 = vld [vmem:[#allocation3 + $0x68] sm:$0xff]
      %v1935 = vld [vmem:[#allocation3 + $0x70] sm:$0xff]
      %v1936 = vld [vmem:[#allocation3 + $0x78] sm:$0xff]
      %v1937 = vld [vmem:[#allocation3 + $0x80] sm:$0xff]
      %v1938 = vld [vmem:[#allocation3 + $0x88] sm:$0xff]
      %v1939 = vld [vmem:[#allocation3 + $0x90] sm:$0xff]
      %v1940 = vld [vmem:[#allocation3 + $0x98] sm:$0xff]
      %v1941 = vld [vmem:[#allocation3 + $0xa0] sm:$0xff]
      %v1942 = vld [vmem:[#allocation3 + $0xa8] sm:$0xff]
      %v1943 = vld [vmem:[#allocation3 + $0xb0] sm:$0xff]
      %v1944 = vld [vmem:[#allocation3 + $0xb8] sm:$0xff]
      %v1945 = vld [vmem:[#allocation3 + $0xc0] sm:$0xff]
      %v1946 = vld [vmem:[#allocation3 + $0xc8] sm:$0xff]
      %v1947 = vld [vmem:[#allocation3 + $0xd0] sm:$0xff]
      %v1948 = vld [vmem:[#allocation3 + $0xd8] sm:$0xff]
      %v1949 = vld [vmem:[#allocation3 + $0xe0] sm:$0xff]
      %v1950 = vld [vmem:[#allocation3 + $0xe8] sm:$0xff]
      %v1951 = vld [vmem:[#allocation3 + $0xf0] sm:$0xff]
      %v1952 = vld [vmem:[#allocation3 + $0xf8] sm:$0xff]
      %v1953 = vld [vmem:[%s1] sm:$0xf]
      %v1954 = vld [vmem:[%s1 + $0x4] sm:$0xf]
      %v1955 = vld [vmem:[%s1 + $0x8] sm:$0xf]
      %v1956 = vld [vmem:[%s1 + $0xc] sm:$0xf]
      %v1957 = vld [vmem:[%s1 + $0x10] sm:$0xf]
      %v1958 = vld [vmem:[%s1 + $0x14] sm:$0xf]
      %v1959 = vld [vmem:[%s1 + $0x18] sm:$0xf]
      %v1960 = vld [vmem:[%s1 + $0x1c] sm:$0xf]
      %v1961 = vld [vmem:[%s1 + $0x20] sm:$0xf]
      %v1962 = vld [vmem:[%s1 + $0x24] sm:$0xf]
      %v1963 = vld [vmem:[%s1 + $0x28] sm:$0xf]
      %v1964 = vld [vmem:[%s1 + $0x2c] sm:$0xf]
      %v1965 = vld [vmem:[%s1 + $0x30] sm:$0xf]
      %v1966 = vld [vmem:[%s1 + $0x34] sm:$0xf]
      %v1967 = vld [vmem:[%s1 + $0x38] sm:$0xf]
      %v1968 = vld [vmem:[%s1 + $0x3c] sm:$0xf]
      %v1969 = vld [vmem:[%s1 + $0x40] sm:$0xf]
      %v1970 = vld [vmem:[%s1 + $0x44] sm:$0xf]
      %v1971 = vld [vmem:[%s1 + $0x48] sm:$0xf]
      %v1972 = vld [vmem:[%s1 + $0x4c] sm:$0xf]
      %v1973 = vld [vmem:[%s1 + $0x50] sm:$0xf]
      %v1974 = vld [vmem:[%s1 + $0x54] sm:$0xf]
      %v1975 = vld [vmem:[%s1 + $0x58] sm:$0xf]
      %v1976 = vld [vmem:[%s1 + $0x5c] sm:$0xf]
      %v1977 = vld [vmem:[#allocation3 + $0x100] sm:$0xff]
      %v1978 = vld [vmem:[#allocation3 + $0x108] sm:$0xff]
      %s1979 = scalar_lea.vmem %s1, 96
      %v1980 = vld [vmem:[%s1979] sm:$0xf]
      %v1981 = vld [vmem:[%s1979 + $0x4] sm:$0xf]
      %v1982 = vld [vmem:[%s1979 + $0x8] sm:$0xf]
      %v1983 = vld [vmem:[%s1979 + $0xc] sm:$0xf]
      %v1984 = vld [vmem:[%s1979 + $0x10] sm:$0xf]
      %v1985 = vld [vmem:[%s1979 + $0x14] sm:$0xf]
      %v1986 = vld [vmem:[%s1979 + $0x18] sm:$0xf]
      %v1987 = vld [vmem:[%s1979 + $0x1c] sm:$0xf]
      %v1988 = vld [vmem:[%s1979 + $0x20] sm:$0xf]
      %v1989 = vld [vmem:[%s1979 + $0x24] sm:$0xf]
      %v1990 = vld [vmem:[%s1979 + $0x28] sm:$0xf]
      %v1991 = vld [vmem:[%s1979 + $0x2c] sm:$0xf]
      %v1992 = vld [vmem:[%s1979 + $0x30] sm:$0xf]
      %v1993 = vld [vmem:[%s1979 + $0x34] sm:$0xf]
      %v1994 = vld [vmem:[%s1979 + $0x38] sm:$0xf]
      %v1995 = vld [vmem:[%s1979 + $0x3c] sm:$0xf]
      %v1996 = vld [vmem:[%s1979 + $0x40] sm:$0xf]
      %v1997 = vld [vmem:[%s1979 + $0x44] sm:$0xf]
      %v1998 = vld [vmem:[%s1979 + $0x48] sm:$0xf]
      %v1999 = vld [vmem:[%s1979 + $0x4c] sm:$0xf]
      %v2000 = vld [vmem:[%s1979 + $0x50] sm:$0xf]
      %v2001 = vld [vmem:[%s1979 + $0x54] sm:$0xf]
      %v2002 = vld [vmem:[%s1979 + $0x58] sm:$0xf]
      %v2003 = vld [vmem:[%s1979 + $0x5c] sm:$0xf]
      %v2028 = vunpack.c.l.b16 %v1980
      %v2029 = vunpack.c.l.b16 %v1981
      %v2030 = vunpack.c.l.b16 %v1982
      %v2031 = vunpack.c.l.b16 %v1983
      %v2032 = vunpack.c.l.b16 %v1984
      %v2033 = vunpack.c.l.b16 %v1985
      %v2034 = vunpack.c.l.b16 %v1986
      %v2035 = vunpack.c.l.b16 %v1987
      %v2036 = vunpack.c.l.b16 %v1988
      %v2037 = vunpack.c.l.b16 %v1989
      %v2038 = vunpack.c.l.b16 %v1990
      %v2039 = vunpack.c.l.b16 %v1991
      %v2040 = vunpack.c.l.b16 %v1992
      %v2041 = vunpack.c.l.b16 %v1993
      %v2042 = vunpack.c.l.b16 %v1994
      %v2043 = vunpack.c.l.b16 %v1995
      %v2044 = vunpack.c.l.b16 %v1996
      %v2045 = vunpack.c.l.b16 %v1997
      %v2046 = vunpack.c.l.b16 %v1998
      %v2047 = vunpack.c.l.b16 %v1999
      %v2048 = vunpack.c.l.b16 %v2000
      %v2049 = vunpack.c.l.b16 %v2001
      %v2050 = vunpack.c.l.b16 %v2002
      %v2051 = vunpack.c.l.b16 %v2003
      %v2052 = vpack.c.b16 %v2029, %v2028
      %v2053 = vpack.c.b16 %v2031, %v2030
      %v2054 = vpack.c.b16 %v2033, %v2032
      %v2055 = vpack.c.b16 %v2035, %v2034
      %v2056 = vpack.c.b16 %v2037, %v2036
      %v2057 = vpack.c.b16 %v2039, %v2038
      %v2058 = vpack.c.b16 %v2041, %v2040
      %v2059 = vpack.c.b16 %v2043, %v2042
      %v2060 = vpack.c.b16 %v2045, %v2044
      %v2061 = vpack.c.b16 %v2047, %v2046
      %v2062 = vpack.c.b16 %v2049, %v2048
      %v2063 = vpack.c.b16 %v2051, %v2050
      %v2077 = vsel %vm959, %v1924, 0
      %v2080 = vsel %vm959, %v1926, 0
      %v2083 = vsel %vm959, %v1928, 0
      %v2086 = vsel %vm959, %v1930, 0
      %v2089 = vsel %vm959, %v1932, 0
      %v2092 = vsel %vm959, %v1934, 0
      %v2095 = vsel %vm959, %v1936, 0
      %v2098 = vsel %vm959, %v1938, 0
      %v2101 = vsel %vm959, %v1940, 0
      %v2104 = vsel %vm959, %v1942, 0
      %v2107 = vsel %vm959, %v1944, 0
      %v2110 = vsel %vm959, %v1946, 0
      %v2113 = vsel %vm959, %v1948, 0
      %v2116 = vsel %vm959, %v1950, 0
      %v2119 = vsel %vm959, %v1952, 0
      %v2122 = vsel %vm959, %v1978, 0
      %2124 = vmatprep.subr.bf16.mxu0 0
      %2125 = vmatpush1.bf16.msra.mxu0 %v2052
      %2126 = vmatprep.subr.bf16.mxu0 0
      %2127 = vmatpush1.bf16.msra.mxu0 %v2053
      %2128 = vmatprep.subr.bf16.mxu0 0
      %2129 = vmatpush1.bf16.msra.mxu0 %v2054
      %2130 = vmatprep.subr.bf16.mxu0 0
      %2131 = vmatpush1.bf16.msra.mxu0 %v2055
      %2132 = vmatprep.subr.bf16.mxu0 0
      %2133 = vmatpush1.bf16.msra.mxu0 %v2056
      %2134 = vmatprep.subr.bf16.mxu0 0
      %2135 = vmatpush1.bf16.msra.mxu0 %v2057
      %2136 = vmatprep.subr.bf16.mxu0 0
      %2137 = vmatpush1.bf16.msra.mxu0 %v2058
      %2138 = vmatprep.subr.bf16.mxu0 0
      %2139 = vmatpush1.bf16.msra.mxu0 %v2059
      %2140 = vmatprep.subr.bf16.mxu0 0
      %2141 = vmatpush1.bf16.msra.mxu0 %v2060
      %2142 = vmatprep.subr.bf16.mxu0 0
      %2143 = vmatpush1.bf16.msra.mxu0 %v2061
      %2144 = vmatprep.subr.bf16.mxu0 0
      %2145 = vmatpush1.bf16.msra.mxu0 %v2062
      %2146 = vmatprep.subr.bf16.mxu0 0
      %2147 = vmatpush1.bf16.msra.mxu0 %v2063
      %2148 = vmatprep.subr.bf16.mxu0 0
      %2149 = vmatpush1.bf16.msra.mxu0 0
      %2150 = vmatprep.subr.bf16.mxu0 0
      %2151 = vmatpush1.bf16.msra.mxu0 0
      %2152 = vmatprep.subr.bf16.mxu0 0
      %2153 = vmatpush1.bf16.msra.mxu0 0
      %2154 = vmatprep.subr.bf16.mxu0 0
      %2155 = vmatpush1.bf16.msra.mxu0 0
      %2156 = vmatprep.mubr.bf16.mxu0 %v2077
      %2157 = vmatmul.mubr.bf16.gmra.mrb[0].mxu0 %v1923
      %v2158 = vpop.f32.mrb[0].mxu0
      %v2159 = vadd.f32 0.0, %v2158
      %v2160 = vpop.f32.mrb[0].mxu0
      %v2161 = vpop.f32.mrb[0].mxu0
      %v2162 = vadd.f32 0.0, %v2161
      %v2163 = vpop.f32.mrb[0].mxu0
      %2164 = vmatprep.mubr.bf16.mxu0 %v2080
      %2165 = vmatmul.mubr.bf16.gmra.mrb[0].mxu0 %v1925
      %v2166 = vpop.f32.mrb[0].mxu0
      %v2167 = vadd.f32 0.0, %v2166
      %v2168 = vpop.f32.mrb[0].mxu0
      %v2169 = vpop.f32.mrb[0].mxu0
      %v2170 = vadd.f32 0.0, %v2169
      %v2171 = vpop.f32.mrb[0].mxu0
      %2172 = vmatprep.mubr.bf16.mxu0 %v2083
      %2173 = vmatmul.mubr.bf16.gmra.mrb[0].mxu0 %v1927
      %v2174 = vpop.f32.mrb[0].mxu0
      %v2175 = vadd.f32 0.0, %v2174
      %v2176 = vpop.f32.mrb[0].mxu0
      %v2177 = vpop.f32.mrb[0].mxu0
      %v2178 = vadd.f32 0.0, %v2177
      %v2179 = vpop.f32.mrb[0].mxu0
      %2180 = vmatprep.mubr.bf16.mxu0 %v2086
      %2181 = vmatmul.mubr.bf16.gmra.mrb[0].mxu0 %v1929
      %v2182 = vpop.f32.mrb[0].mxu0
      %v2183 = vadd.f32 0.0, %v2182
      %v2184 = vpop.f32.mrb[0].mxu0
      %v2185 = vpop.f32.mrb[0].mxu0
      %v2186 = vadd.f32 0.0, %v2185
      %v2187 = vpop.f32.mrb[0].mxu0
      %2188 = vmatprep.mubr.bf16.mxu0 %v2089
      %2189 = vmatmul.mubr.bf16.gmra.mrb[0].mxu0 %v1931
      %v2190 = vpop.f32.mrb[0].mxu0
      %v2191 = vadd.f32 0.0, %v2190
      %v2192 = vpop.f32.mrb[0].mxu0
      %v2193 = vpop.f32.mrb[0].mxu0
      %v2194 = vadd.f32 0.0, %v2193
      %v2195 = vpop.f32.mrb[0].mxu0
      %2196 = vmatprep.mubr.bf16.mxu0 %v2092
      %2197 = vmatmul.mubr.bf16.gmra.mrb[0].mxu0 %v1933
      %v2198 = vpop.f32.mrb[0].mxu0
      %v2199 = vadd.f32 0.0, %v2198
      %v2200 = vpop.f32.mrb[0].mxu0
      %v2201 = vpop.f32.mrb[0].mxu0
      %v2202 = vadd.f32 0.0, %v2201
      %v2203 = vpop.f32.mrb[0].mxu0
      %2204 = vmatprep.mubr.bf16.mxu0 %v2095
      %2205 = vmatmul.mubr.bf16.gmra.mrb[0].mxu0 %v1935
      %v2206 = vpop.f32.mrb[0].mxu0
      %v2207 = vadd.f32 0.0, %v2206
      %v2208 = vpop.f32.mrb[0].mxu0
      %v2209 = vpop.f32.mrb[0].mxu0
      %v2210 = vadd.f32 0.0, %v2209
      %v2211 = vpop.f32.mrb[0].mxu0
      %2212 = vmatprep.mubr.bf16.mxu0 %v2098
      %2213 = vmatmul.mubr.bf16.gmra.mrb[0].mxu0 %v1937
      %v2214 = vpop.f32.mrb[0].mxu0
      %v2215 = vadd.f32 0.0, %v2214
      %v2216 = vpop.f32.mrb[0].mxu0
      %v2217 = vpop.f32.mrb[0].mxu0
      %v2218 = vadd.f32 0.0, %v2217
      %v2219 = vpop.f32.mrb[0].mxu0
      %2220 = vmatprep.mubr.bf16.mxu0 %v2101
      %2221 = vmatmul.mubr.bf16.gmra.mrb[0].mxu0 %v1939
      %v2222 = vpop.f32.mrb[0].mxu0
      %v2223 = vadd.f32 0.0, %v2222
      %v2224 = vpop.f32.mrb[0].mxu0
      %v2225 = vpop.f32.mrb[0].mxu0
      %v2226 = vadd.f32 0.0, %v2225
      %v2227 = vpop.f32.mrb[0].mxu0
      %2228 = vmatprep.mubr.bf16.mxu0 %v2104
      %2229 = vmatmul.mubr.bf16.gmra.mrb[0].mxu0 %v1941
      %v2230 = vpop.f32.mrb[0].mxu0
      %v2231 = vadd.f32 0.0, %v2230
      %v2232 = vpop.f32.mrb[0].mxu0
      %v2233 = vpop.f32.mrb[0].mxu0
      %v2234 = vadd.f32 0.0, %v2233
      %v2235 = vpop.f32.mrb[0].mxu0
      %2236 = vmatprep.mubr.bf16.mxu0 %v2107
      %2237 = vmatmul.mubr.bf16.gmra.mrb[0].mxu0 %v1943
      %v2238 = vpop.f32.mrb[0].mxu0
      %v2239 = vadd.f32 0.0, %v2238
      %v2240 = vpop.f32.mrb[0].mxu0
      %v2241 = vpop.f32.mrb[0].mxu0
      %v2242 = vadd.f32 0.0, %v2241
      %v2243 = vpop.f32.mrb[0].mxu0
      %2244 = vmatprep.mubr.bf16.mxu0 %v2110
      %2245 = vmatmul.mubr.bf16.gmra.mrb[0].mxu0 %v1945
      %v2246 = vpop.f32.mrb[0].mxu0
      %v2247 = vadd.f32 0.0, %v2246
      %v2248 = vpop.f32.mrb[0].mxu0
      %v2249 = vpop.f32.mrb[0].mxu0
      %v2250 = vadd.f32 0.0, %v2249
      %v2251 = vpop.f32.mrb[0].mxu0
      %2252 = vmatprep.mubr.bf16.mxu0 %v2113
      %2253 = vmatmul.mubr.bf16.gmra.mrb[0].mxu0 %v1947
      %v2254 = vpop.f32.mrb[0].mxu0
      %v2255 = vadd.f32 0.0, %v2254
      %v2256 = vpop.f32.mrb[0].mxu0
      %v2257 = vpop.f32.mrb[0].mxu0
      %v2258 = vadd.f32 0.0, %v2257
      %v2259 = vpop.f32.mrb[0].mxu0
      %2260 = vmatprep.mubr.bf16.mxu0 %v2116
      %2261 = vmatmul.mubr.bf16.gmra.mrb[0].mxu0 %v1949
      %v2262 = vpop.f32.mrb[0].mxu0
      %v2263 = vadd.f32 0.0, %v2262
      %v2264 = vpop.f32.mrb[0].mxu0
      %v2265 = vpop.f32.mrb[0].mxu0
      %v2266 = vadd.f32 0.0, %v2265
      %v2267 = vpop.f32.mrb[0].mxu0
      %2268 = vmatprep.mubr.bf16.mxu0 %v2119
      %2269 = vmatmul.mubr.bf16.gmra.mrb[0].mxu0 %v1951
      %v2270 = vpop.f32.mrb[0].mxu0
      %v2271 = vadd.f32 0.0, %v2270
      %v2272 = vpop.f32.mrb[0].mxu0
      %v2273 = vpop.f32.mrb[0].mxu0
      %v2274 = vadd.f32 0.0, %v2273
      %v2275 = vpop.f32.mrb[0].mxu0
      %2276 = vmatprep.mubr.bf16.mxu0 %v2122
      %2277 = vmatmul.mubr.bf16.gmra.mrb[0].mxu0 %v1977
      %v2278 = vpop.f32.mrb[0].mxu0
      %v2279 = vadd.f32 0.0, %v2278
      %v2280 = vpop.f32.mrb[0].mxu0
      %v2281 = vpop.f32.mrb[0].mxu0
      %v2282 = vadd.f32 0.0, %v2281
      %v2283 = vpop.f32.mrb[0].mxu0
      %2284 = vdwg.mxu0
      %v2309 = vunpack.c.l.b16 %v1953
      %v2310 = vunpack.c.l.b16 %v1954
      %v2311 = vunpack.c.l.b16 %v1955
      %v2312 = vunpack.c.l.b16 %v1956
      %v2313 = vunpack.c.l.b16 %v1957
      %v2314 = vunpack.c.l.b16 %v1958
      %v2315 = vunpack.c.l.b16 %v1959
      %v2316 = vunpack.c.l.b16 %v1960
      %v2317 = vunpack.c.l.b16 %v1961
      %v2318 = vunpack.c.l.b16 %v1962
      %v2319 = vunpack.c.l.b16 %v1963
      %v2320 = vunpack.c.l.b16 %v1964
      %v2321 = vunpack.c.l.b16 %v1965
      %v2322 = vunpack.c.l.b16 %v1966
      %v2323 = vunpack.c.l.b16 %v1967
      %v2324 = vunpack.c.l.b16 %v1968
      %v2325 = vunpack.c.l.b16 %v1969
      %v2326 = vunpack.c.l.b16 %v1970
      %v2327 = vunpack.c.l.b16 %v1971
      %v2328 = vunpack.c.l.b16 %v1972
      %v2329 = vunpack.c.l.b16 %v1973
      %v2330 = vunpack.c.l.b16 %v1974
      %v2331 = vunpack.c.l.b16 %v1975
      %v2332 = vunpack.c.l.b16 %v1976
      %v2333 = vpack.c.b16 %v2310, %v2309
      %v2334 = vpack.c.b16 %v2312, %v2311
      %v2335 = vpack.c.b16 %v2314, %v2313
      %v2336 = vpack.c.b16 %v2316, %v2315
      %v2337 = vpack.c.b16 %v2318, %v2317
      %v2338 = vpack.c.b16 %v2320, %v2319
      %v2339 = vpack.c.b16 %v2322, %v2321
      %v2340 = vpack.c.b16 %v2324, %v2323
      %v2341 = vpack.c.b16 %v2326, %v2325
      %v2342 = vpack.c.b16 %v2328, %v2327
      %v2343 = vpack.c.b16 %v2330, %v2329
      %v2344 = vpack.c.b16 %v2332, %v2331
      %v2358 = vsel %vm959, %v1922, 0
      %2360 = vmatprep.subr.bf16.mxu0 0
      %2361 = vmatpush1.bf16.msra.mxu0 %v2333
      %2362 = vmatprep.subr.bf16.mxu0 0
      %2363 = vmatpush1.bf16.msra.mxu0 %v2334
      %2364 = vmatprep.subr.bf16.mxu0 0
      %2365 = vmatpush1.bf16.msra.mxu0 %v2335
      %2366 = vmatprep.subr.bf16.mxu0 0
      %2367 = vmatpush1.bf16.msra.mxu0 %v2336
      %2368 = vmatprep.subr.bf16.mxu0 0
      %2369 = vmatpush1.bf16.msra.mxu0 %v2337
      %2370 = vmatprep.subr.bf16.mxu0 0
      %2371 = vmatpush1.bf16.msra.mxu0 %v2338
      %2372 = vmatprep.subr.bf16.mxu0 0
      %2373 = vmatpush1.bf16.msra.mxu0 %v2339
      %2374 = vmatprep.subr.bf16.mxu0 0
      %2375 = vmatpush1.bf16.msra.mxu0 %v2340
      %2376 = vmatprep.subr.bf16.mxu0 0
      %2377 = vmatpush1.bf16.msra.mxu0 %v2341
      %2378 = vmatprep.subr.bf16.mxu0 0
      %2379 = vmatpush1.bf16.msra.mxu0 %v2342
      %2380 = vmatprep.subr.bf16.mxu0 0
      %2381 = vmatpush1.bf16.msra.mxu0 %v2343
      %2382 = vmatprep.subr.bf16.mxu0 0
      %2383 = vmatpush1.bf16.msra.mxu0 %v2344
      %2384 = vmatprep.subr.bf16.mxu0 0
      %2385 = vmatpush1.bf16.msra.mxu0 0
      %2386 = vmatprep.subr.bf16.mxu0 0
      %2387 = vmatpush1.bf16.msra.mxu0 0
      %2388 = vmatprep.subr.bf16.mxu0 0
      %2389 = vmatpush1.bf16.msra.mxu0 0
      %2390 = vmatprep.subr.bf16.mxu0 0
      %2391 = vmatpush1.bf16.msra.mxu0 0
      %2392 = vmatprep.mubr.bf16.mxu0 %v2358
      %2393 = vmatmul.mubr.bf16.gmra.mrb[0].mxu0 %v1921
      %v2394 = vpop.f32.mrb[0].mxu0
      %v2395 = vadd.f32 %v2159, %v2394
      %v2396 = vpop.f32.mrb[0].mxu0
      %v2397 = vpop.f32.mrb[0].mxu0
      %v2398 = vadd.f32 %v2162, %v2397
      %v2399 = vpop.f32.mrb[0].mxu0
      %2400 = vmatprep.mubr.bf16.mxu0 %v2077
      %2401 = vmatmul.mubr.bf16.gmra.mrb[0].mxu0 %v1923
      %v2402 = vpop.f32.mrb[0].mxu0
      %v2403 = vadd.f32 %v2167, %v2402
      %v2404 = vpop.f32.mrb[0].mxu0
      %v2405 = vpop.f32.mrb[0].mxu0
      %v2406 = vadd.f32 %v2170, %v2405
      %v2407 = vpop.f32.mrb[0].mxu0
      %2408 = vmatprep.mubr.bf16.mxu0 %v2080
      %2409 = vmatmul.mubr.bf16.gmra.mrb[0].mxu0 %v1925
      %v2410 = vpop.f32.mrb[0].mxu0
      %v2411 = vadd.f32 %v2175, %v2410
      %v2412 = vpop.f32.mrb[0].mxu0
      %v2413 = vpop.f32.mrb[0].mxu0
      %v2414 = vadd.f32 %v2178, %v2413
      %v2415 = vpop.f32.mrb[0].mxu0
      %2416 = vmatprep.mubr.bf16.mxu0 %v2083
      %2417 = vmatmul.mubr.bf16.gmra.mrb[0].mxu0 %v1927
      %v2418 = vpop.f32.mrb[0].mxu0
      %v2419 = vadd.f32 %v2183, %v2418
      %v2420 = vpop.f32.mrb[0].mxu0
      %v2421 = vpop.f32.mrb[0].mxu0
      %v2422 = vadd.f32 %v2186, %v2421
      %v2423 = vpop.f32.mrb[0].mxu0
      %2424 = vmatprep.mubr.bf16.mxu0 %v2086
      %2425 = vmatmul.mubr.bf16.gmra.mrb[0].mxu0 %v1929
      %v2426 = vpop.f32.mrb[0].mxu0
      %v2427 = vadd.f32 %v2191, %v2426
      %v2428 = vpop.f32.mrb[0].mxu0
      %v2429 = vpop.f32.mrb[0].mxu0
      %v2430 = vadd.f32 %v2194, %v2429
      %v2431 = vpop.f32.mrb[0].mxu0
      %2432 = vmatprep.mubr.bf16.mxu0 %v2089
      %2433 = vmatmul.mubr.bf16.gmra.mrb[0].mxu0 %v1931
      %v2434 = vpop.f32.mrb[0].mxu0
      %v2435 = vadd.f32 %v2199, %v2434
      %v2436 = vpop.f32.mrb[0].mxu0
      %v2437 = vpop.f32.mrb[0].mxu0
      %v2438 = vadd.f32 %v2202, %v2437
      %v2439 = vpop.f32.mrb[0].mxu0
      %2440 = vmatprep.mubr.bf16.mxu0 %v2092
      %2441 = vmatmul.mubr.bf16.gmra.mrb[0].mxu0 %v1933
      %v2442 = vpop.f32.mrb[0].mxu0
      %v2443 = vadd.f32 %v2207, %v2442
      %v2444 = vpop.f32.mrb[0].mxu0
      %v2445 = vpop.f32.mrb[0].mxu0
      %v2446 = vadd.f32 %v2210, %v2445
      %v2447 = vpop.f32.mrb[0].mxu0
      %2448 = vmatprep.mubr.bf16.mxu0 %v2095
      %2449 = vmatmul.mubr.bf16.gmra.mrb[0].mxu0 %v1935
      %v2450 = vpop.f32.mrb[0].mxu0
      %v2451 = vadd.f32 %v2215, %v2450
      %v2452 = vpop.f32.mrb[0].mxu0
      %v2453 = vpop.f32.mrb[0].mxu0
      %v2454 = vadd.f32 %v2218, %v2453
      %v2455 = vpop.f32.mrb[0].mxu0
      %2456 = vmatprep.mubr.bf16.mxu0 %v2098
      %2457 = vmatmul.mubr.bf16.gmra.mrb[0].mxu0 %v1937
      %v2458 = vpop.f32.mrb[0].mxu0
      %v2459 = vadd.f32 %v2223, %v2458
      %v2460 = vpop.f32.mrb[0].mxu0
      %v2461 = vpop.f32.mrb[0].mxu0
      %v2462 = vadd.f32 %v2226, %v2461
      %v2463 = vpop.f32.mrb[0].mxu0
      %2464 = vmatprep.mubr.bf16.mxu0 %v2101
      %2465 = vmatmul.mubr.bf16.gmra.mrb[0].mxu0 %v1939
      %v2466 = vpop.f32.mrb[0].mxu0
      %v2467 = vadd.f32 %v2231, %v2466
      %v2468 = vpop.f32.mrb[0].mxu0
      %v2469 = vpop.f32.mrb[0].mxu0
      %v2470 = vadd.f32 %v2234, %v2469
      %v2471 = vpop.f32.mrb[0].mxu0
      %2472 = vmatprep.mubr.bf16.mxu0 %v2104
      %2473 = vmatmul.mubr.bf16.gmra.mrb[0].mxu0 %v1941
      %v2474 = vpop.f32.mrb[0].mxu0
      %v2475 = vadd.f32 %v2239, %v2474
      %v2476 = vpop.f32.mrb[0].mxu0
      %v2477 = vpop.f32.mrb[0].mxu0
      %v2478 = vadd.f32 %v2242, %v2477
      %v2479 = vpop.f32.mrb[0].mxu0
      %2480 = vmatprep.mubr.bf16.mxu0 %v2107
      %2481 = vmatmul.mubr.bf16.gmra.mrb[0].mxu0 %v1943
      %v2482 = vpop.f32.mrb[0].mxu0
      %v2483 = vadd.f32 %v2247, %v2482
      %v2484 = vpop.f32.mrb[0].mxu0
      %v2485 = vpop.f32.mrb[0].mxu0
      %v2486 = vadd.f32 %v2250, %v2485
      %v2487 = vpop.f32.mrb[0].mxu0
      %2488 = vmatprep.mubr.bf16.mxu0 %v2110
      %2489 = vmatmul.mubr.bf16.gmra.mrb[0].mxu0 %v1945
      %v2490 = vpop.f32.mrb[0].mxu0
      %v2491 = vadd.f32 %v2255, %v2490
      %v2492 = vpop.f32.mrb[0].mxu0
      %v2493 = vpop.f32.mrb[0].mxu0
      %v2494 = vadd.f32 %v2258, %v2493
      %v2495 = vpop.f32.mrb[0].mxu0
      %2496 = vmatprep.mubr.bf16.mxu0 %v2113
      %2497 = vmatmul.mubr.bf16.gmra.mrb[0].mxu0 %v1947
      %v2498 = vpop.f32.mrb[0].mxu0
      %v2499 = vadd.f32 %v2263, %v2498
      %v2500 = vpop.f32.mrb[0].mxu0
      %v2501 = vpop.f32.mrb[0].mxu0
      %v2502 = vadd.f32 %v2266, %v2501
      %v2503 = vpop.f32.mrb[0].mxu0
      %2504 = vmatprep.mubr.bf16.mxu0 %v2116
      %2505 = vmatmul.mubr.bf16.gmra.mrb[0].mxu0 %v1949
      %v2506 = vpop.f32.mrb[0].mxu0
      %v2507 = vadd.f32 %v2271, %v2506
      %v2508 = vpop.f32.mrb[0].mxu0
      %v2509 = vpop.f32.mrb[0].mxu0
      %v2510 = vadd.f32 %v2274, %v2509
      %v2511 = vpop.f32.mrb[0].mxu0
      %2512 = vmatprep.mubr.bf16.mxu0 %v2119
      %2513 = vmatmul.mubr.bf16.gmra.mrb[0].mxu0 %v1951
      %v2514 = vpop.f32.mrb[0].mxu0
      %v2515 = vadd.f32 %v2279, %v2514
      %v2516 = vpop.f32.mrb[0].mxu0
      %v2517 = vpop.f32.mrb[0].mxu0
      %v2518 = vadd.f32 %v2282, %v2517
      %v2519 = vpop.f32.mrb[0].mxu0
      %2520 = vdwg.mxu0
      %v2521 = vld [vmem:[#allocation3 + $0x20] sm:$0xff]
      %v2522 = vld [vmem:[#allocation3 + $0x28] sm:$0xff]
      %v2523 = vld [vmem:[#allocation3 + $0x30] sm:$0xff]
      %v2524 = vld [vmem:[#allocation3 + $0x38] sm:$0xff]
      %v2525 = vld [vmem:[#allocation3 + $0x40] sm:$0xff]
      %v2526 = vld [vmem:[#allocation3 + $0x48] sm:$0xff]
      %v2527 = vld [vmem:[#allocation3 + $0x50] sm:$0xff]
      %v2528 = vld [vmem:[#allocation3 + $0x58] sm:$0xff]
      %v2529 = vld [vmem:[#allocation3 + $0x60] sm:$0xff]
      %v2530 = vld [vmem:[#allocation3 + $0x68] sm:$0xff]
      %v2531 = vld [vmem:[#allocation3 + $0x70] sm:$0xff]
      %v2532 = vld [vmem:[#allocation3 + $0x78] sm:$0xff]
      %v2533 = vld [vmem:[#allocation3 + $0x80] sm:$0xff]
      %v2534 = vld [vmem:[#allocation3 + $0x88] sm:$0xff]
      %v2535 = vld [vmem:[#allocation3 + $0x90] sm:$0xff]
      %v2536 = vld [vmem:[#allocation3 + $0x98] sm:$0xff]
      %v2537 = vld [vmem:[#allocation3 + $0xa0] sm:$0xff]
      %v2538 = vld [vmem:[#allocation3 + $0xa8] sm:$0xff]
      %v2539 = vld [vmem:[#allocation3 + $0xb0] sm:$0xff]
      %v2540 = vld [vmem:[#allocation3 + $0xb8] sm:$0xff]
      %v2541 = vld [vmem:[#allocation3 + $0xc0] sm:$0xff]
      %v2542 = vld [vmem:[#allocation3 + $0xc8] sm:$0xff]
      %v2543 = vld [vmem:[#allocation3 + $0xd0] sm:$0xff]
      %v2544 = vld [vmem:[#allocation3 + $0xd8] sm:$0xff]
      %v2545 = vld [vmem:[#allocation3 + $0xe0] sm:$0xff]
      %v2546 = vld [vmem:[#allocation3 + $0xe8] sm:$0xff]
      %v2547 = vld [vmem:[#allocation3 + $0xf0] sm:$0xff]
      %v2548 = vld [vmem:[#allocation3 + $0xf8] sm:$0xff]
      %v2549 = vld [vmem:[#allocation3 + $0x100] sm:$0xff]
      %v2550 = vld [vmem:[#allocation3 + $0x108] sm:$0xff]
      %v2551 = vld [vmem:[#allocation3 + $0x110] sm:$0xff]
      %v2552 = vld [vmem:[#allocation3 + $0x118] sm:$0xff]
      %s2553 = scalar_lea.vmem %s1, 192
      %v2554 = vld [vmem:[%s2553] sm:$0xf]
      %v2555 = vld [vmem:[%s2553 + $0x4] sm:$0xf]
      %v2556 = vld [vmem:[%s2553 + $0x8] sm:$0xf]
      %v2557 = vld [vmem:[%s2553 + $0xc] sm:$0xf]
      %v2558 = vld [vmem:[%s2553 + $0x10] sm:$0xf]
      %v2559 = vld [vmem:[%s2553 + $0x14] sm:$0xf]
      %v2560 = vld [vmem:[%s2553 + $0x18] sm:$0xf]
      %v2561 = vld [vmem:[%s2553 + $0x1c] sm:$0xf]
      %v2562 = vld [vmem:[%s2553 + $0x20] sm:$0xf]
      %v2563 = vld [vmem:[%s2553 + $0x24] sm:$0xf]
      %v2564 = vld [vmem:[%s2553 + $0x28] sm:$0xf]
      %v2565 = vld [vmem:[%s2553 + $0x2c] sm:$0xf]
      %v2566 = vld [vmem:[%s2553 + $0x30] sm:$0xf]
      %v2567 = vld [vmem:[%s2553 + $0x34] sm:$0xf]
      %v2568 = vld [vmem:[%s2553 + $0x38] sm:$0xf]
      %v2569 = vld [vmem:[%s2553 + $0x3c] sm:$0xf]
      %v2570 = vld [vmem:[%s2553 + $0x40] sm:$0xf]
      %v2571 = vld [vmem:[%s2553 + $0x44] sm:$0xf]
      %v2572 = vld [vmem:[%s2553 + $0x48] sm:$0xf]
      %v2573 = vld [vmem:[%s2553 + $0x4c] sm:$0xf]
      %v2574 = vld [vmem:[%s2553 + $0x50] sm:$0xf]
      %v2575 = vld [vmem:[%s2553 + $0x54] sm:$0xf]
      %v2576 = vld [vmem:[%s2553 + $0x58] sm:$0xf]
      %v2577 = vld [vmem:[%s2553 + $0x5c] sm:$0xf]
      %v2602 = vunpack.c.l.b16 %v2554
      %v2603 = vunpack.c.l.b16 %v2555
      %v2604 = vunpack.c.l.b16 %v2556
      %v2605 = vunpack.c.l.b16 %v2557
      %v2606 = vunpack.c.l.b16 %v2558
      %v2607 = vunpack.c.l.b16 %v2559
      %v2608 = vunpack.c.l.b16 %v2560
      %v2609 = vunpack.c.l.b16 %v2561
      %v2610 = vunpack.c.l.b16 %v2562
      %v2611 = vunpack.c.l.b16 %v2563
      %v2612 = vunpack.c.l.b16 %v2564
      %v2613 = vunpack.c.l.b16 %v2565
      %v2614 = vunpack.c.l.b16 %v2566
      %v2615 = vunpack.c.l.b16 %v2567
      %v2616 = vunpack.c.l.b16 %v2568
      %v2617 = vunpack.c.l.b16 %v2569
      %v2618 = vunpack.c.l.b16 %v2570
      %v2619 = vunpack.c.l.b16 %v2571
      %v2620 = vunpack.c.l.b16 %v2572
      %v2621 = vunpack.c.l.b16 %v2573
      %v2622 = vunpack.c.l.b16 %v2574
      %v2623 = vunpack.c.l.b16 %v2575
      %v2624 = vunpack.c.l.b16 %v2576
      %v2625 = vunpack.c.l.b16 %v2577
      %v2626 = vpack.c.b16 %v2603, %v2602
      %v2627 = vpack.c.b16 %v2605, %v2604
      %v2628 = vpack.c.b16 %v2607, %v2606
      %v2629 = vpack.c.b16 %v2609, %v2608
      %v2630 = vpack.c.b16 %v2611, %v2610
      %v2631 = vpack.c.b16 %v2613, %v2612
      %v2632 = vpack.c.b16 %v2615, %v2614
      %v2633 = vpack.c.b16 %v2617, %v2616
      %v2634 = vpack.c.b16 %v2619, %v2618
      %v2635 = vpack.c.b16 %v2621, %v2620
      %v2636 = vpack.c.b16 %v2623, %v2622
      %v2637 = vpack.c.b16 %v2625, %v2624
      %v2651 = vsel %vm959, %v2522, 0
      %v2654 = vsel %vm959, %v2524, 0
      %v2657 = vsel %vm959, %v2526, 0
      %v2660 = vsel %vm959, %v2528, 0
      %v2663 = vsel %vm959, %v2530, 0
      %v2666 = vsel %vm959, %v2532, 0
      %v2669 = vsel %vm959, %v2534, 0
      %v2672 = vsel %vm959, %v2536, 0
      %v2675 = vsel %vm959, %v2538, 0
      %v2678 = vsel %vm959, %v2540, 0
      %v2681 = vsel %vm959, %v2542, 0
      %v2684 = vsel %vm959, %v2544, 0
      %v2687 = vsel %vm959, %v2546, 0
      %v2690 = vsel %vm959, %v2548, 0
      %v2693 = vsel %vm959, %v2550, 0
      %v2696 = vsel %vm959, %v2552, 0
      %2698 = vmatprep.subr.bf16.mxu0 0
      %2699 = vmatpush1.bf16.msra.mxu0 %v2626
      %2700 = vmatprep.subr.bf16.mxu0 0
      %2701 = vmatpush1.bf16.msra.mxu0 %v2627
      %2702 = vmatprep.subr.bf16.mxu0 0
      %2703 = vmatpush1.bf16.msra.mxu0 %v2628
      %2704 = vmatprep.subr.bf16.mxu0 0
      %2705 = vmatpush1.bf16.msra.mxu0 %v2629
      %2706 = vmatprep.subr.bf16.mxu0 0
      %2707 = vmatpush1.bf16.msra.mxu0 %v2630
      %2708 = vmatprep.subr.bf16.mxu0 0
      %2709 = vmatpush1.bf16.msra.mxu0 %v2631
      %2710 = vmatprep.subr.bf16.mxu0 0
      %2711 = vmatpush1.bf16.msra.mxu0 %v2632
      %2712 = vmatprep.subr.bf16.mxu0 0
      %2713 = vmatpush1.bf16.msra.mxu0 %v2633
      %2714 = vmatprep.subr.bf16.mxu0 0
      %2715 = vmatpush1.bf16.msra.mxu0 %v2634
      %2716 = vmatprep.subr.bf16.mxu0 0
      %2717 = vmatpush1.bf16.msra.mxu0 %v2635
      %2718 = vmatprep.subr.bf16.mxu0 0
      %2719 = vmatpush1.bf16.msra.mxu0 %v2636
      %2720 = vmatprep.subr.bf16.mxu0 0
      %2721 = vmatpush1.bf16.msra.mxu0 %v2637
      %2722 = vmatprep.subr.bf16.mxu0 0
      %2723 = vmatpush1.bf16.msra.mxu0 0
      %2724 = vmatprep.subr.bf16.mxu0 0
      %2725 = vmatpush1.bf16.msra.mxu0 0
      %2726 = vmatprep.subr.bf16.mxu0 0
      %2727 = vmatpush1.bf16.msra.mxu0 0
      %2728 = vmatprep.subr.bf16.mxu0 0
      %2729 = vmatpush1.bf16.msra.mxu0 0
      %2730 = vmatprep.mubr.bf16.mxu0 %v2651
      %2731 = vmatmul.mubr.bf16.gmra.mrb[0].mxu0 %v2521
      %v2732 = vpop.f32.mrb[0].mxu0
      %v2733 = vadd.f32 0.0, %v2732
      %v2734 = vpop.f32.mrb[0].mxu0
      %v2735 = vpop.f32.mrb[0].mxu0
      %v2736 = vadd.f32 0.0, %v2735
      %v2737 = vpop.f32.mrb[0].mxu0
      %2738 = vmatprep.mubr.bf16.mxu0 %v2654
      %2739 = vmatmul.mubr.bf16.gmra.mrb[0].mxu0 %v2523
      %v2740 = vpop.f32.mrb[0].mxu0
      %v2741 = vadd.f32 0.0, %v2740
      %v2742 = vpop.f32.mrb[0].mxu0
      %v2743 = vpop.f32.mrb[0].mxu0
      %v2744 = vadd.f32 0.0, %v2743
      %v2745 = vpop.f32.mrb[0].mxu0
      %2746 = vmatprep.mubr.bf16.mxu0 %v2657
      %2747 = vmatmul.mubr.bf16.gmra.mrb[0].mxu0 %v2525
      %v2748 = vpop.f32.mrb[0].mxu0
      %v2749 = vadd.f32 0.0, %v2748
      %v2750 = vpop.f32.mrb[0].mxu0
      %v2751 = vpop.f32.mrb[0].mxu0
      %v2752 = vadd.f32 0.0, %v2751
      %v2753 = vpop.f32.mrb[0].mxu0
      %2754 = vmatprep.mubr.bf16.mxu0 %v2660
      %2755 = vmatmul.mubr.bf16.gmra.mrb[0].mxu0 %v2527
      %v2756 = vpop.f32.mrb[0].mxu0
      %v2757 = vadd.f32 0.0, %v2756
      %v2758 = vpop.f32.mrb[0].mxu0
      %v2759 = vpop.f32.mrb[0].mxu0
      %v2760 = vadd.f32 0.0, %v2759
      %v2761 = vpop.f32.mrb[0].mxu0
      %2762 = vmatprep.mubr.bf16.mxu0 %v2663
      %2763 = vmatmul.mubr.bf16.gmra.mrb[0].mxu0 %v2529
      %v2764 = vpop.f32.mrb[0].mxu0
      %v2765 = vadd.f32 0.0, %v2764
      %v2766 = vpop.f32.mrb[0].mxu0
      %v2767 = vpop.f32.mrb[0].mxu0
      %v2768 = vadd.f32 0.0, %v2767
      %v2769 = vpop.f32.mrb[0].mxu0
      %2770 = vmatprep.mubr.bf16.mxu0 %v2666
      %2771 = vmatmul.mubr.bf16.gmra.mrb[0].mxu0 %v2531
      %v2772 = vpop.f32.mrb[0].mxu0
      %v2773 = vadd.f32 0.0, %v2772
      %v2774 = vpop.f32.mrb[0].mxu0
      %v2775 = vpop.f32.mrb[0].mxu0
      %v2776 = vadd.f32 0.0, %v2775
      %v2777 = vpop.f32.mrb[0].mxu0
      %2778 = vmatprep.mubr.bf16.mxu0 %v2669
      %2779 = vmatmul.mubr.bf16.gmra.mrb[0].mxu0 %v2533
      %v2780 = vpop.f32.mrb[0].mxu0
      %v2781 = vadd.f32 0.0, %v2780
      %v2782 = vpop.f32.mrb[0].mxu0
      %v2783 = vpop.f32.mrb[0].mxu0
      %v2784 = vadd.f32 0.0, %v2783
      %v2785 = vpop.f32.mrb[0].mxu0
      %2786 = vmatprep.mubr.bf16.mxu0 %v2672
      %2787 = vmatmul.mubr.bf16.gmra.mrb[0].mxu0 %v2535
      %v2788 = vpop.f32.mrb[0].mxu0
      %v2789 = vadd.f32 0.0, %v2788
      %v2790 = vpop.f32.mrb[0].mxu0
      %v2791 = vpop.f32.mrb[0].mxu0
      %v2792 = vadd.f32 0.0, %v2791
      %v2793 = vpop.f32.mrb[0].mxu0
      %2794 = vmatprep.mubr.bf16.mxu0 %v2675
      %2795 = vmatmul.mubr.bf16.gmra.mrb[0].mxu0 %v2537
      %v2796 = vpop.f32.mrb[0].mxu0
      %v2797 = vadd.f32 0.0, %v2796
      %v2798 = vpop.f32.mrb[0].mxu0
      %v2799 = vpop.f32.mrb[0].mxu0
      %v2800 = vadd.f32 0.0, %v2799
      %v2801 = vpop.f32.mrb[0].mxu0
      %2802 = vmatprep.mubr.bf16.mxu0 %v2678
      %2803 = vmatmul.mubr.bf16.gmra.mrb[0].mxu0 %v2539
      %v2804 = vpop.f32.mrb[0].mxu0
      %v2805 = vadd.f32 0.0, %v2804
      %v2806 = vpop.f32.mrb[0].mxu0
      %v2807 = vpop.f32.mrb[0].mxu0
      %v2808 = vadd.f32 0.0, %v2807
      %v2809 = vpop.f32.mrb[0].mxu0
      %2810 = vmatprep.mubr.bf16.mxu0 %v2681
      %2811 = vmatmul.mubr.bf16.gmra.mrb[0].mxu0 %v2541
      %v2812 = vpop.f32.mrb[0].mxu0
      %v2813 = vadd.f32 0.0, %v2812
      %v2814 = vpop.f32.mrb[0].mxu0
      %v2815 = vpop.f32.mrb[0].mxu0
      %v2816 = vadd.f32 0.0, %v2815
      %v2817 = vpop.f32.mrb[0].mxu0
      %2818 = vmatprep.mubr.bf16.mxu0 %v2684
      %2819 = vmatmul.mubr.bf16.gmra.mrb[0].mxu0 %v2543
      %v2820 = vpop.f32.mrb[0].mxu0
      %v2821 = vadd.f32 0.0, %v2820
      %v2822 = vpop.f32.mrb[0].mxu0
      %v2823 = vpop.f32.mrb[0].mxu0
      %v2824 = vadd.f32 0.0, %v2823
      %v2825 = vpop.f32.mrb[0].mxu0
      %2826 = vmatprep.mubr.bf16.mxu0 %v2687
      %2827 = vmatmul.mubr.bf16.gmra.mrb[0].mxu0 %v2545
      %v2828 = vpop.f32.mrb[0].mxu0
      %v2829 = vadd.f32 0.0, %v2828
      %v2830 = vpop.f32.mrb[0].mxu0
      %v2831 = vpop.f32.mrb[0].mxu0
      %v2832 = vadd.f32 0.0, %v2831
      %v2833 = vpop.f32.mrb[0].mxu0
      %2834 = vmatprep.mubr.bf16.mxu0 %v2690
      %2835 = vmatmul.mubr.bf16.gmra.mrb[0].mxu0 %v2547
      %v2836 = vpop.f32.mrb[0].mxu0
      %v2837 = vadd.f32 0.0, %v2836
      %v2838 = vpop.f32.mrb[0].mxu0
      %v2839 = vpop.f32.mrb[0].mxu0
      %v2840 = vadd.f32 0.0, %v2839
      %v2841 = vpop.f32.mrb[0].mxu0
      %2842 = vmatprep.mubr.bf16.mxu0 %v2693
      %2843 = vmatmul.mubr.bf16.gmra.mrb[0].mxu0 %v2549
      %v2844 = vpop.f32.mrb[0].mxu0
      %v2845 = vadd.f32 0.0, %v2844
      %v2846 = vpop.f32.mrb[0].mxu0
      %v2847 = vpop.f32.mrb[0].mxu0
      %v2848 = vadd.f32 0.0, %v2847
      %v2849 = vpop.f32.mrb[0].mxu0
      %2850 = vmatprep.mubr.bf16.mxu0 %v2696
      %2851 = vmatmul.mubr.bf16.gmra.mrb[0].mxu0 %v2551
      %v2852 = vpop.f32.mrb[0].mxu0
      %v2853 = vadd.f32 0.0, %v2852
      %v2854 = vpop.f32.mrb[0].mxu0
      %v2855 = vpop.f32.mrb[0].mxu0
      %v2856 = vadd.f32 0.0, %v2855
      %v2857 = vpop.f32.mrb[0].mxu0
      %2858 = vdwg.mxu0
      %v2859 = vadd.f32 %v2395, %v2733
      %v2860 = vadd.f32 %v2398, %v2736
      %v2861 = vadd.f32 %v2403, %v2741
      %v2862 = vadd.f32 %v2406, %v2744
      %v2863 = vadd.f32 %v2411, %v2749
      %v2864 = vadd.f32 %v2414, %v2752
      %v2865 = vadd.f32 %v2419, %v2757
      %v2866 = vadd.f32 %v2422, %v2760
      %v2867 = vadd.f32 %v2427, %v2765
      %v2868 = vadd.f32 %v2430, %v2768
      %v2869 = vadd.f32 %v2435, %v2773
      %v2870 = vadd.f32 %v2438, %v2776
      %v2871 = vadd.f32 %v2443, %v2781
      %v2872 = vadd.f32 %v2446, %v2784
      %v2873 = vadd.f32 %v2451, %v2789
      %v2874 = vadd.f32 %v2454, %v2792
      %v2875 = vadd.f32 %v2459, %v2797
      %v2876 = vadd.f32 %v2462, %v2800
      %v2877 = vadd.f32 %v2467, %v2805
      %v2878 = vadd.f32 %v2470, %v2808
      %v2879 = vadd.f32 %v2475, %v2813
      %v2880 = vadd.f32 %v2478, %v2816
      %v2881 = vadd.f32 %v2483, %v2821
      %v2882 = vadd.f32 %v2486, %v2824
      %v2883 = vadd.f32 %v2491, %v2829
      %v2884 = vadd.f32 %v2494, %v2832
      %v2885 = vadd.f32 %v2499, %v2837
      %v2886 = vadd.f32 %v2502, %v2840
      %v2887 = vadd.f32 %v2507, %v2845
      %v2888 = vadd.f32 %v2510, %v2848
      %v2889 = vadd.f32 %v2515, %v2853
      %v2890 = vadd.f32 %v2518, %v2856
      %v2891 = vld [vmem:[%s2] sm:$0x1]
      %v2893 = vlaneseq
      %v2894 = vshrl.u32 %v2893, 7
      %v2895 = vsub.s32 0, %v2894
      %v2896 = vrot.slane %v2891, %v2895
      %v2898 = vadd.f32 %v2859, %v2896
      %v2899 = vadd.f32 %v2860, %v2896
      %v2900 = vadd.f32 %v2861, %v2896
      %v2901 = vadd.f32 %v2862, %v2896
      %v2902 = vadd.f32 %v2863, %v2896
      %v2903 = vadd.f32 %v2864, %v2896
      %v2904 = vadd.f32 %v2865, %v2896
      %v2905 = vadd.f32 %v2866, %v2896
      %v2906 = vadd.f32 %v2867, %v2896
      %v2907 = vadd.f32 %v2868, %v2896
      %v2908 = vadd.f32 %v2869, %v2896
      %v2909 = vadd.f32 %v2870, %v2896
      %v2910 = vadd.f32 %v2871, %v2896
      %v2911 = vadd.f32 %v2872, %v2896
      %v2912 = vadd.f32 %v2873, %v2896
      %v2913 = vadd.f32 %v2874, %v2896
      %v2914 = vadd.f32 %v2875, %v2896
      %v2915 = vadd.f32 %v2876, %v2896
      %v2916 = vadd.f32 %v2877, %v2896
      %v2917 = vadd.f32 %v2878, %v2896
      %v2918 = vadd.f32 %v2879, %v2896
      %v2919 = vadd.f32 %v2880, %v2896
      %v2920 = vadd.f32 %v2881, %v2896
      %v2921 = vadd.f32 %v2882, %v2896
      %v2922 = vadd.f32 %v2883, %v2896
      %v2923 = vadd.f32 %v2884, %v2896
      %v2924 = vadd.f32 %v2885, %v2896
      %v2925 = vadd.f32 %v2886, %v2896
      %v2926 = vadd.f32 %v2887, %v2896
      %v2927 = vadd.f32 %v2888, %v2896
      %v2928 = vadd.f32 %v2889, %v2896
      %v2929 = vadd.f32 %v2890, %v2896
      %v2930 = vxor.u32 %v2898, 2147483648
      %v2931 = vxor.u32 %v2899, 2147483648
      %v2932 = vxor.u32 %v2900, 2147483648
      %v2933 = vxor.u32 %v2901, 2147483648
      %v2934 = vxor.u32 %v2902, 2147483648
      %v2935 = vxor.u32 %v2903, 2147483648
      %v2936 = vxor.u32 %v2904, 2147483648
      %v2937 = vxor.u32 %v2905, 2147483648
      %v2938 = vxor.u32 %v2906, 2147483648
      %v2939 = vxor.u32 %v2907, 2147483648
      %v2940 = vxor.u32 %v2908, 2147483648
      %v2941 = vxor.u32 %v2909, 2147483648
      %v2942 = vxor.u32 %v2910, 2147483648
      %v2943 = vxor.u32 %v2911, 2147483648
      %v2944 = vxor.u32 %v2912, 2147483648
      %v2945 = vxor.u32 %v2913, 2147483648
      %v2946 = vxor.u32 %v2914, 2147483648
      %v2947 = vxor.u32 %v2915, 2147483648
      %v2948 = vxor.u32 %v2916, 2147483648
      %v2949 = vxor.u32 %v2917, 2147483648
      %v2950 = vxor.u32 %v2918, 2147483648
      %v2951 = vxor.u32 %v2919, 2147483648
      %v2952 = vxor.u32 %v2920, 2147483648
      %v2953 = vxor.u32 %v2921, 2147483648
      %v2954 = vxor.u32 %v2922, 2147483648
      %v2955 = vxor.u32 %v2923, 2147483648
      %v2956 = vxor.u32 %v2924, 2147483648
      %v2957 = vxor.u32 %v2925, 2147483648
      %v2958 = vxor.u32 %v2926, 2147483648
      %v2959 = vxor.u32 %v2927, 2147483648
      %v2960 = vxor.u32 %v2928, 2147483648
      %v2961 = vxor.u32 %v2929, 2147483648
      %v2962 = vmul.f32 %v2930, 1.442695
      %v2963 = vpow.pop %v2962
      %v2964 = vmul.f32 %v2931, 1.442695
      %v2965 = vpow.pop %v2964
      %v2966 = vmul.f32 %v2932, 1.442695
      %v2967 = vpow.pop %v2966
      %v2968 = vmul.f32 %v2933, 1.442695
      %v2969 = vpow.pop %v2968
      %v2970 = vmul.f32 %v2934, 1.442695
      %v2971 = vpow.pop %v2970
      %v2972 = vmul.f32 %v2935, 1.442695
      %v2973 = vpow.pop %v2972
      %v2974 = vmul.f32 %v2936, 1.442695
      %v2975 = vpow.pop %v2974
      %v2976 = vmul.f32 %v2937, 1.442695
      %v2977 = vpow.pop %v2976
      %v2978 = vmul.f32 %v2938, 1.442695
      %v2979 = vpow.pop %v2978
      %v2980 = vmul.f32 %v2939, 1.442695
      %v2981 = vpow.pop %v2980
      %v2982 = vmul.f32 %v2940, 1.442695
      %v2983 = vpow.pop %v2982
      %v2984 = vmul.f32 %v2941, 1.442695
      %v2985 = vpow.pop %v2984
      %v2986 = vmul.f32 %v2942, 1.442695
      %v2987 = vpow.pop %v2986
      %v2988 = vmul.f32 %v2943, 1.442695
      %v2989 = vpow.pop %v2988
      %v2990 = vmul.f32 %v2944, 1.442695
      %v2991 = vpow.pop %v2990
      %v2992 = vmul.f32 %v2945, 1.442695
      %v2993 = vpow.pop %v2992
      %v2994 = vmul.f32 %v2946, 1.442695
      %v2995 = vpow.pop %v2994
      %v2996 = vmul.f32 %v2947, 1.442695
      %v2997 = vpow.pop %v2996
      %v2998 = vmul.f32 %v2948, 1.442695
      %v2999 = vpow.pop %v2998
      %v3000 = vmul.f32 %v2949, 1.442695
      %v3001 = vpow.pop %v3000
      %v3002 = vmul.f32 %v2950, 1.442695
      %v3003 = vpow.pop %v3002
      %v3004 = vmul.f32 %v2951, 1.442695
      %v3005 = vpow.pop %v3004
      %v3006 = vmul.f32 %v2952, 1.442695
      %v3007 = vpow.pop %v3006
      %v3008 = vmul.f32 %v2953, 1.442695
      %v3009 = vpow.pop %v3008
      %v3010 = vmul.f32 %v2954, 1.442695
      %v3011 = vpow.pop %v3010
      %v3012 = vmul.f32 %v2955, 1.442695
      %v3013 = vpow.pop %v3012
      %v3014 = vmul.f32 %v2956, 1.442695
      %v3015 = vpow.pop %v3014
      %v3016 = vmul.f32 %v2957, 1.442695
      %v3017 = vpow.pop %v3016
      %v3018 = vmul.f32 %v2958, 1.442695
      %v3019 = vpow.pop %v3018
      %v3020 = vmul.f32 %v2959, 1.442695
      %v3021 = vpow.pop %v3020
      %v3022 = vmul.f32 %v2960, 1.442695
      %v3023 = vpow.pop %v3022
      %v3024 = vmul.f32 %v2961, 1.442695
      %v3025 = vpow.pop %v3024
      %v3026 = vadd.f32 %v2963, 1.0
      %v3027 = vadd.f32 %v2965, 1.0
      %v3028 = vadd.f32 %v2967, 1.0
      %v3029 = vadd.f32 %v2969, 1.0
      %v3030 = vadd.f32 %v2971, 1.0
      %v3031 = vadd.f32 %v2973, 1.0
      %v3032 = vadd.f32 %v2975, 1.0
      %v3033 = vadd.f32 %v2977, 1.0
      %v3034 = vadd.f32 %v2979, 1.0
      %v3035 = vadd.f32 %v2981, 1.0
      %v3036 = vadd.f32 %v2983, 1.0
      %v3037 = vadd.f32 %v2985, 1.0
      %v3038 = vadd.f32 %v2987, 1.0
      %v3039 = vadd.f32 %v2989, 1.0
      %v3040 = vadd.f32 %v2991, 1.0
      %v3041 = vadd.f32 %v2993, 1.0
      %v3042 = vadd.f32 %v2995, 1.0
      %v3043 = vadd.f32 %v2997, 1.0
      %v3044 = vadd.f32 %v2999, 1.0
      %v3045 = vadd.f32 %v3001, 1.0
      %v3046 = vadd.f32 %v3003, 1.0
      %v3047 = vadd.f32 %v3005, 1.0
      %v3048 = vadd.f32 %v3007, 1.0
      %v3049 = vadd.f32 %v3009, 1.0
      %v3050 = vadd.f32 %v3011, 1.0
      %v3051 = vadd.f32 %v3013, 1.0
      %v3052 = vadd.f32 %v3015, 1.0
      %v3053 = vadd.f32 %v3017, 1.0
      %v3054 = vadd.f32 %v3019, 1.0
      %v3055 = vadd.f32 %v3021, 1.0
      %v3056 = vadd.f32 %v3023, 1.0
      %v3057 = vadd.f32 %v3025, 1.0
      %v3058 = vrcp.pop %v3026
      %v3059 = vmul.f32 1.0, %v3058
      %v3060 = vrcp.pop %v3027
      %v3061 = vmul.f32 1.0, %v3060
      %v3062 = vrcp.pop %v3028
      %v3063 = vmul.f32 1.0, %v3062
      %v3064 = vrcp.pop %v3029
      %v3065 = vmul.f32 1.0, %v3064
      %v3066 = vrcp.pop %v3030
      %v3067 = vmul.f32 1.0, %v3066
      %v3068 = vrcp.pop %v3031
      %v3069 = vmul.f32 1.0, %v3068
      %v3070 = vrcp.pop %v3032
      %v3071 = vmul.f32 1.0, %v3070
      %v3072 = vrcp.pop %v3033
      %v3073 = vmul.f32 1.0, %v3072
      %v3074 = vrcp.pop %v3034
      %v3075 = vmul.f32 1.0, %v3074
      %v3076 = vrcp.pop %v3035
      %v3077 = vmul.f32 1.0, %v3076
      %v3078 = vrcp.pop %v3036
      %v3079 = vmul.f32 1.0, %v3078
      %v3080 = vrcp.pop %v3037
      %v3081 = vmul.f32 1.0, %v3080
      %v3082 = vrcp.pop %v3038
      %v3083 = vmul.f32 1.0, %v3082
      %v3084 = vrcp.pop %v3039
      %v3085 = vmul.f32 1.0, %v3084
      %v3086 = vrcp.pop %v3040
      %v3087 = vmul.f32 1.0, %v3086
      %v3088 = vrcp.pop %v3041
      %v3089 = vmul.f32 1.0, %v3088
      %v3090 = vrcp.pop %v3042
      %v3091 = vmul.f32 1.0, %v3090
      %v3092 = vrcp.pop %v3043
      %v3093 = vmul.f32 1.0, %v3092
      %v3094 = vrcp.pop %v3044
      %v3095 = vmul.f32 1.0, %v3094
      %v3096 = vrcp.pop %v3045
      %v3097 = vmul.f32 1.0, %v3096
      %v3098 = vrcp.pop %v3046
      %v3099 = vmul.f32 1.0, %v3098
      %v3100 = vrcp.pop %v3047
      %v3101 = vmul.f32 1.0, %v3100
      %v3102 = vrcp.pop %v3048
      %v3103 = vmul.f32 1.0, %v3102
      %v3104 = vrcp.pop %v3049
      %v3105 = vmul.f32 1.0, %v3104
      %v3106 = vrcp.pop %v3050
      %v3107 = vmul.f32 1.0, %v3106
      %v3108 = vrcp.pop %v3051
      %v3109 = vmul.f32 1.0, %v3108
      %v3110 = vrcp.pop %v3052
      %v3111 = vmul.f32 1.0, %v3110
      %v3112 = vrcp.pop %v3053
      %v3113 = vmul.f32 1.0, %v3112
      %v3114 = vrcp.pop %v3054
      %v3115 = vmul.f32 1.0, %v3114
      %v3116 = vrcp.pop %v3055
      %v3117 = vmul.f32 1.0, %v3116
      %v3118 = vrcp.pop %v3056
      %v3119 = vmul.f32 1.0, %v3118
      %v3120 = vrcp.pop %v3057
      %v3121 = vmul.f32 1.0, %v3120
      %v3122 = vtanh.pop %v2898
      %v3123 = vtanh.pop %v2899
      %v3124 = vtanh.pop %v2900
      %v3125 = vtanh.pop %v2901
      %v3126 = vtanh.pop %v2902
      %v3127 = vtanh.pop %v2903
      %v3128 = vtanh.pop %v2904
      %v3129 = vtanh.pop %v2905
      %v3130 = vtanh.pop %v2906
      %v3131 = vtanh.pop %v2907
      %v3132 = vtanh.pop %v2908
      %v3133 = vtanh.pop %v2909
      %v3134 = vtanh.pop %v2910
      %v3135 = vtanh.pop %v2911
      %v3136 = vtanh.pop %v2912
      %v3137 = vtanh.pop %v2913
      %v3138 = vtanh.pop %v2914
      %v3139 = vtanh.pop %v2915
      %v3140 = vtanh.pop %v2916
      %v3141 = vtanh.pop %v2917
      %v3142 = vtanh.pop %v2918
      %v3143 = vtanh.pop %v2919
      %v3144 = vtanh.pop %v2920
      %v3145 = vtanh.pop %v2921
      %v3146 = vtanh.pop %v2922
      %v3147 = vtanh.pop %v2923
      %v3148 = vtanh.pop %v2924
      %v3149 = vtanh.pop %v2925
      %v3150 = vtanh.pop %v2926
      %v3151 = vtanh.pop %v2927
      %v3152 = vtanh.pop %v2928
      %v3153 = vtanh.pop %v2929
      %v3154 = vld [vmem:[%s246] sm:$0xff]
      %v3155 = vld [vmem:[%s246 + $0x8] sm:$0xff]
      %v3156 = vld [vmem:[%s246 + $0x10] sm:$0xff]
      %v3157 = vld [vmem:[%s246 + $0x18] sm:$0xff]
      %v3158 = vld [vmem:[%s246 + $0x20] sm:$0xff]
      %v3159 = vld [vmem:[%s246 + $0x28] sm:$0xff]
      %v3160 = vld [vmem:[%s246 + $0x30] sm:$0xff]
      %v3161 = vld [vmem:[%s246 + $0x38] sm:$0xff]
      %v3162 = vld [vmem:[%s246 + $0x40] sm:$0xff]
      %v3163 = vld [vmem:[%s246 + $0x48] sm:$0xff]
      %v3164 = vld [vmem:[%s246 + $0x50] sm:$0xff]
      %v3165 = vld [vmem:[%s246 + $0x58] sm:$0xff]
      %v3166 = vld [vmem:[%s246 + $0x60] sm:$0xff]
      %v3167 = vld [vmem:[%s246 + $0x68] sm:$0xff]
      %v3168 = vld [vmem:[%s246 + $0x70] sm:$0xff]
      %v3169 = vld [vmem:[%s246 + $0x78] sm:$0xff]
      %v3170 = vld [vmem:[%s246 + $0x80] sm:$0xff]
      %v3171 = vld [vmem:[%s246 + $0x88] sm:$0xff]
      %v3172 = vld [vmem:[%s246 + $0x90] sm:$0xff]
      %v3173 = vld [vmem:[%s246 + $0x98] sm:$0xff]
      %v3174 = vld [vmem:[%s246 + $0xa0] sm:$0xff]
      %v3175 = vld [vmem:[%s246 + $0xa8] sm:$0xff]
      %v3176 = vld [vmem:[%s246 + $0xb0] sm:$0xff]
      %v3177 = vld [vmem:[%s246 + $0xb8] sm:$0xff]
      %v3178 = vld [vmem:[%s246 + $0xc0] sm:$0xff]
      %v3179 = vld [vmem:[%s246 + $0xc8] sm:$0xff]
      %v3180 = vld [vmem:[%s246 + $0xd0] sm:$0xff]
      %v3181 = vld [vmem:[%s246 + $0xd8] sm:$0xff]
      %v3182 = vld [vmem:[%s246 + $0xe0] sm:$0xff]
      %v3183 = vld [vmem:[%s246 + $0xe8] sm:$0xff]
      %v3184 = vld [vmem:[%s246 + $0xf0] sm:$0xff]
      %v3185 = vld [vmem:[%s246 + $0xf8] sm:$0xff]
      %3218 = vrot.lane.b32.xlu0 %v3154, 32
      %v3219 = vpop.permute.xlu0 %3218
      %3220 = vrot.lane.b32.xlu0 %v3155, 32
      %v3221 = vpop.permute.xlu0 %3220
      %3222 = vrot.lane.b32.xlu0 %v3156, 32
      %v3223 = vpop.permute.xlu0 %3222
      %3224 = vrot.lane.b32.xlu0 %v3157, 32
      %v3225 = vpop.permute.xlu0 %3224
      %3226 = vrot.lane.b32.xlu0 %v3158, 32
      %v3227 = vpop.permute.xlu0 %3226
      %3228 = vrot.lane.b32.xlu0 %v3159, 32
      %v3229 = vpop.permute.xlu0 %3228
      %3230 = vrot.lane.b32.xlu0 %v3160, 32
      %v3231 = vpop.permute.xlu0 %3230
      %3232 = vrot.lane.b32.xlu0 %v3161, 32
      %v3233 = vpop.permute.xlu0 %3232
      %3234 = vrot.lane.b32.xlu0 %v3162, 32
      %v3235 = vpop.permute.xlu0 %3234
      %3236 = vrot.lane.b32.xlu0 %v3163, 32
      %v3237 = vpop.permute.xlu0 %3236
      %3238 = vrot.lane.b32.xlu0 %v3164, 32
      %v3239 = vpop.permute.xlu0 %3238
      %3240 = vrot.lane.b32.xlu0 %v3165, 32
      %v3241 = vpop.permute.xlu0 %3240
      %3242 = vrot.lane.b32.xlu0 %v3166, 32
      %v3243 = vpop.permute.xlu0 %3242
      %3244 = vrot.lane.b32.xlu0 %v3167, 32
      %v3245 = vpop.permute.xlu0 %3244
      %3246 = vrot.lane.b32.xlu0 %v3168, 32
      %v3247 = vpop.permute.xlu0 %3246
      %3248 = vrot.lane.b32.xlu0 %v3169, 32
      %v3249 = vpop.permute.xlu0 %3248
      %3250 = vrot.lane.b32.xlu0 %v3170, 32
      %v3251 = vpop.permute.xlu0 %3250
      %3252 = vrot.lane.b32.xlu0 %v3171, 32
      %v3253 = vpop.permute.xlu0 %3252
      %3254 = vrot.lane.b32.xlu0 %v3172, 32
      %v3255 = vpop.permute.xlu0 %3254
      %3256 = vrot.lane.b32.xlu0 %v3173, 32
      %v3257 = vpop.permute.xlu0 %3256
      %3258 = vrot.lane.b32.xlu0 %v3174, 32
      %v3259 = vpop.permute.xlu0 %3258
      %3260 = vrot.lane.b32.xlu0 %v3175, 32
      %v3261 = vpop.permute.xlu0 %3260
      %3262 = vrot.lane.b32.xlu0 %v3176, 32
      %v3263 = vpop.permute.xlu0 %3262
      %3264 = vrot.lane.b32.xlu0 %v3177, 32
      %v3265 = vpop.permute.xlu0 %3264
      %3266 = vrot.lane.b32.xlu0 %v3178, 32
      %v3267 = vpop.permute.xlu0 %3266
      %3268 = vrot.lane.b32.xlu0 %v3179, 32
      %v3269 = vpop.permute.xlu0 %3268
      %3270 = vrot.lane.b32.xlu0 %v3180, 32
      %v3271 = vpop.permute.xlu0 %3270
      %3272 = vrot.lane.b32.xlu0 %v3181, 32
      %v3273 = vpop.permute.xlu0 %3272
      %3274 = vrot.lane.b32.xlu0 %v3182, 32
      %v3275 = vpop.permute.xlu0 %3274
      %3276 = vrot.lane.b32.xlu0 %v3183, 32
      %v3277 = vpop.permute.xlu0 %3276
      %3278 = vrot.lane.b32.xlu0 %v3184, 32
      %v3279 = vpop.permute.xlu0 %3278
      %3280 = vrot.lane.b32.xlu0 %v3185, 32
      %v3281 = vpop.permute.xlu0 %3280
      %v3314 = vmul.f32 %v3059, %v3219
      %v3315 = vmul.f32 %v3061, %v3221
      %v3316 = vmul.f32 %v3063, %v3223
      %v3317 = vmul.f32 %v3065, %v3225
      %v3318 = vmul.f32 %v3067, %v3227
      %v3319 = vmul.f32 %v3069, %v3229
      %v3320 = vmul.f32 %v3071, %v3231
      %v3321 = vmul.f32 %v3073, %v3233
      %v3322 = vmul.f32 %v3075, %v3235
      %v3323 = vmul.f32 %v3077, %v3237
      %v3324 = vmul.f32 %v3079, %v3239
      %v3325 = vmul.f32 %v3081, %v3241
      %v3326 = vmul.f32 %v3083, %v3243
      %v3327 = vmul.f32 %v3085, %v3245
      %v3328 = vmul.f32 %v3087, %v3247
      %v3329 = vmul.f32 %v3089, %v3249
      %v3330 = vmul.f32 %v3091, %v3251
      %v3331 = vmul.f32 %v3093, %v3253
      %v3332 = vmul.f32 %v3095, %v3255
      %v3333 = vmul.f32 %v3097, %v3257
      %v3334 = vmul.f32 %v3099, %v3259
      %v3335 = vmul.f32 %v3101, %v3261
      %v3336 = vmul.f32 %v3103, %v3263
      %v3337 = vmul.f32 %v3105, %v3265
      %v3338 = vmul.f32 %v3107, %v3267
      %v3339 = vmul.f32 %v3109, %v3269
      %v3340 = vmul.f32 %v3111, %v3271
      %v3341 = vmul.f32 %v3113, %v3273
      %v3342 = vmul.f32 %v3115, %v3275
      %v3343 = vmul.f32 %v3117, %v3277
      %v3344 = vmul.f32 %v3119, %v3279
      %v3345 = vmul.f32 %v3121, %v3281
      %3378 = vrot.lane.b32.xlu0 %v3122, 32
      %v3379 = vpop.permute.xlu0 %3378
      %3380 = vrot.lane.b32.xlu0 %v3123, 32
      %v3381 = vpop.permute.xlu0 %3380
      %3382 = vrot.lane.b32.xlu0 %v3124, 32
      %v3383 = vpop.permute.xlu0 %3382
      %3384 = vrot.lane.b32.xlu0 %v3125, 32
      %v3385 = vpop.permute.xlu0 %3384
      %3386 = vrot.lane.b32.xlu0 %v3126, 32
      %v3387 = vpop.permute.xlu0 %3386
      %3388 = vrot.lane.b32.xlu0 %v3127, 32
      %v3389 = vpop.permute.xlu0 %3388
      %3390 = vrot.lane.b32.xlu0 %v3128, 32
      %v3391 = vpop.permute.xlu0 %3390
      %3392 = vrot.lane.b32.xlu0 %v3129, 32
      %v3393 = vpop.permute.xlu0 %3392
      %3394 = vrot.lane.b32.xlu0 %v3130, 32
      %v3395 = vpop.permute.xlu0 %3394
      %3396 = vrot.lane.b32.xlu0 %v3131, 32
      %v3397 = vpop.permute.xlu0 %3396
      %3398 = vrot.lane.b32.xlu0 %v3132, 32
      %v3399 = vpop.permute.xlu0 %3398
      %3400 = vrot.lane.b32.xlu0 %v3133, 32
      %v3401 = vpop.permute.xlu0 %3400
      %3402 = vrot.lane.b32.xlu0 %v3134, 32
      %v3403 = vpop.permute.xlu0 %3402
      %3404 = vrot.lane.b32.xlu0 %v3135, 32
      %v3405 = vpop.permute.xlu0 %3404
      %3406 = vrot.lane.b32.xlu0 %v3136, 32
      %v3407 = vpop.permute.xlu0 %3406
      %3408 = vrot.lane.b32.xlu0 %v3137, 32
      %v3409 = vpop.permute.xlu0 %3408
      %3410 = vrot.lane.b32.xlu0 %v3138, 32
      %v3411 = vpop.permute.xlu0 %3410
      %3412 = vrot.lane.b32.xlu0 %v3139, 32
      %v3413 = vpop.permute.xlu0 %3412
      %3414 = vrot.lane.b32.xlu0 %v3140, 32
      %v3415 = vpop.permute.xlu0 %3414
      %3416 = vrot.lane.b32.xlu0 %v3141, 32
      %v3417 = vpop.permute.xlu0 %3416
      %3418 = vrot.lane.b32.xlu0 %v3142, 32
      %v3419 = vpop.permute.xlu0 %3418
      %3420 = vrot.lane.b32.xlu0 %v3143, 32
      %v3421 = vpop.permute.xlu0 %3420
      %3422 = vrot.lane.b32.xlu0 %v3144, 32
      %v3423 = vpop.permute.xlu0 %3422
      %3424 = vrot.lane.b32.xlu0 %v3145, 32
      %v3425 = vpop.permute.xlu0 %3424
      %3426 = vrot.lane.b32.xlu0 %v3146, 32
      %v3427 = vpop.permute.xlu0 %3426
      %3428 = vrot.lane.b32.xlu0 %v3147, 32
      %v3429 = vpop.permute.xlu0 %3428
      %3430 = vrot.lane.b32.xlu0 %v3148, 32
      %v3431 = vpop.permute.xlu0 %3430
      %3432 = vrot.lane.b32.xlu0 %v3149, 32
      %v3433 = vpop.permute.xlu0 %3432
      %3434 = vrot.lane.b32.xlu0 %v3150, 32
      %v3435 = vpop.permute.xlu0 %3434
      %3436 = vrot.lane.b32.xlu0 %v3151, 32
      %v3437 = vpop.permute.xlu0 %3436
      %3438 = vrot.lane.b32.xlu0 %v3152, 32
      %v3439 = vpop.permute.xlu0 %3438
      %3440 = vrot.lane.b32.xlu0 %v3153, 32
      %v3441 = vpop.permute.xlu0 %3440
      %v3474 = vmul.f32 %v3059, %v3379
      %v3475 = vmul.f32 %v3061, %v3381
      %v3476 = vmul.f32 %v3063, %v3383
      %v3477 = vmul.f32 %v3065, %v3385
      %v3478 = vmul.f32 %v3067, %v3387
      %v3479 = vmul.f32 %v3069, %v3389
      %v3480 = vmul.f32 %v3071, %v3391
      %v3481 = vmul.f32 %v3073, %v3393
      %v3482 = vmul.f32 %v3075, %v3395
      %v3483 = vmul.f32 %v3077, %v3397
      %v3484 = vmul.f32 %v3079, %v3399
      %v3485 = vmul.f32 %v3081, %v3401
      %v3486 = vmul.f32 %v3083, %v3403
      %v3487 = vmul.f32 %v3085, %v3405
      %v3488 = vmul.f32 %v3087, %v3407
      %v3489 = vmul.f32 %v3089, %v3409
      %v3490 = vmul.f32 %v3091, %v3411
      %v3491 = vmul.f32 %v3093, %v3413
      %v3492 = vmul.f32 %v3095, %v3415
      %v3493 = vmul.f32 %v3097, %v3417
      %v3494 = vmul.f32 %v3099, %v3419
      %v3495 = vmul.f32 %v3101, %v3421
      %v3496 = vmul.f32 %v3103, %v3423
      %v3497 = vmul.f32 %v3105, %v3425
      %v3498 = vmul.f32 %v3107, %v3427
      %v3499 = vmul.f32 %v3109, %v3429
      %v3500 = vmul.f32 %v3111, %v3431
      %v3501 = vmul.f32 %v3113, %v3433
      %v3502 = vmul.f32 %v3115, %v3435
      %v3503 = vmul.f32 %v3117, %v3437
      %v3504 = vmul.f32 %v3119, %v3439
      %v3505 = vmul.f32 %v3121, %v3441
      %3538 = vrot.lane.b32.xlu0 %v3474, 32
      %v3539 = vpop.permute.xlu0 %3538
      %3540 = vrot.lane.b32.xlu0 %v3475, 32
      %v3541 = vpop.permute.xlu0 %3540
      %3542 = vrot.lane.b32.xlu0 %v3476, 32
      %v3543 = vpop.permute.xlu0 %3542
      %3544 = vrot.lane.b32.xlu0 %v3477, 32
      %v3545 = vpop.permute.xlu0 %3544
      %3546 = vrot.lane.b32.xlu0 %v3478, 32
      %v3547 = vpop.permute.xlu0 %3546
      %3548 = vrot.lane.b32.xlu0 %v3479, 32
      %v3549 = vpop.permute.xlu0 %3548
      %3550 = vrot.lane.b32.xlu0 %v3480, 32
      %v3551 = vpop.permute.xlu0 %3550
      %3552 = vrot.lane.b32.xlu0 %v3481, 32
      %v3553 = vpop.permute.xlu0 %3552
      %3554 = vrot.lane.b32.xlu0 %v3482, 32
      %v3555 = vpop.permute.xlu0 %3554
      %3556 = vrot.lane.b32.xlu0 %v3483, 32
      %v3557 = vpop.permute.xlu0 %3556
      %3558 = vrot.lane.b32.xlu0 %v3484, 32
      %v3559 = vpop.permute.xlu0 %3558
      %3560 = vrot.lane.b32.xlu0 %v3485, 32
      %v3561 = vpop.permute.xlu0 %3560
      %3562 = vrot.lane.b32.xlu0 %v3486, 32
      %v3563 = vpop.permute.xlu0 %3562
      %3564 = vrot.lane.b32.xlu0 %v3487, 32
      %v3565 = vpop.permute.xlu0 %3564
      %3566 = vrot.lane.b32.xlu0 %v3488, 32
      %v3567 = vpop.permute.xlu0 %3566
      %3568 = vrot.lane.b32.xlu0 %v3489, 32
      %v3569 = vpop.permute.xlu0 %3568
      %3570 = vrot.lane.b32.xlu0 %v3490, 32
      %v3571 = vpop.permute.xlu0 %3570
      %3572 = vrot.lane.b32.xlu0 %v3491, 32
      %v3573 = vpop.permute.xlu0 %3572
      %3574 = vrot.lane.b32.xlu0 %v3492, 32
      %v3575 = vpop.permute.xlu0 %3574
      %3576 = vrot.lane.b32.xlu0 %v3493, 32
      %v3577 = vpop.permute.xlu0 %3576
      %3578 = vrot.lane.b32.xlu0 %v3494, 32
      %v3579 = vpop.permute.xlu0 %3578
      %3580 = vrot.lane.b32.xlu0 %v3495, 32
      %v3581 = vpop.permute.xlu0 %3580
      %3582 = vrot.lane.b32.xlu0 %v3496, 32
      %v3583 = vpop.permute.xlu0 %3582
      %3584 = vrot.lane.b32.xlu0 %v3497, 32
      %v3585 = vpop.permute.xlu0 %3584
      %3586 = vrot.lane.b32.xlu0 %v3498, 32
      %v3587 = vpop.permute.xlu0 %3586
      %3588 = vrot.lane.b32.xlu0 %v3499, 32
      %v3589 = vpop.permute.xlu0 %3588
      %3590 = vrot.lane.b32.xlu0 %v3500, 32
      %v3591 = vpop.permute.xlu0 %3590
      %3592 = vrot.lane.b32.xlu0 %v3501, 32
      %v3593 = vpop.permute.xlu0 %3592
      %3594 = vrot.lane.b32.xlu0 %v3502, 32
      %v3595 = vpop.permute.xlu0 %3594
      %3596 = vrot.lane.b32.xlu0 %v3503, 32
      %v3597 = vpop.permute.xlu0 %3596
      %3598 = vrot.lane.b32.xlu0 %v3504, 32
      %v3599 = vpop.permute.xlu0 %3598
      %3600 = vrot.lane.b32.xlu0 %v3505, 32
      %v3601 = vpop.permute.xlu0 %3600
      %v3634 = vadd.f32 %v3314, %v3539
      %v3635 = vadd.f32 %v3315, %v3541
      %v3636 = vadd.f32 %v3316, %v3543
      %v3637 = vadd.f32 %v3317, %v3545
      %v3638 = vadd.f32 %v3318, %v3547
      %v3639 = vadd.f32 %v3319, %v3549
      %v3640 = vadd.f32 %v3320, %v3551
      %v3641 = vadd.f32 %v3321, %v3553
      %v3642 = vadd.f32 %v3322, %v3555
      %v3643 = vadd.f32 %v3323, %v3557
      %v3644 = vadd.f32 %v3324, %v3559
      %v3645 = vadd.f32 %v3325, %v3561
      %v3646 = vadd.f32 %v3326, %v3563
      %v3647 = vadd.f32 %v3327, %v3565
      %v3648 = vadd.f32 %v3328, %v3567
      %v3649 = vadd.f32 %v3329, %v3569
      %v3650 = vadd.f32 %v3330, %v3571
      %v3651 = vadd.f32 %v3331, %v3573
      %v3652 = vadd.f32 %v3332, %v3575
      %v3653 = vadd.f32 %v3333, %v3577
      %v3654 = vadd.f32 %v3334, %v3579
      %v3655 = vadd.f32 %v3335, %v3581
      %v3656 = vadd.f32 %v3336, %v3583
      %v3657 = vadd.f32 %v3337, %v3585
      %v3658 = vadd.f32 %v3338, %v3587
      %v3659 = vadd.f32 %v3339, %v3589
      %v3660 = vadd.f32 %v3340, %v3591
      %v3661 = vadd.f32 %v3341, %v3593
      %v3662 = vadd.f32 %v3342, %v3595
      %v3663 = vadd.f32 %v3343, %v3597
      %v3664 = vadd.f32 %v3344, %v3599
      %v3665 = vadd.f32 %v3345, %v3601
      %v3666 = vtanh.pop %v3634
      %v3667 = vtanh.pop %v3635
      %v3668 = vtanh.pop %v3636
      %v3669 = vtanh.pop %v3637
      %v3670 = vtanh.pop %v3638
      %v3671 = vtanh.pop %v3639
      %v3672 = vtanh.pop %v3640
      %v3673 = vtanh.pop %v3641
      %v3674 = vtanh.pop %v3642
      %v3675 = vtanh.pop %v3643
      %v3676 = vtanh.pop %v3644
      %v3677 = vtanh.pop %v3645
      %v3678 = vtanh.pop %v3646
      %v3679 = vtanh.pop %v3647
      %v3680 = vtanh.pop %v3648
      %v3681 = vtanh.pop %v3649
      %v3682 = vtanh.pop %v3650
      %v3683 = vtanh.pop %v3651
      %v3684 = vtanh.pop %v3652
      %v3685 = vtanh.pop %v3653
      %v3686 = vtanh.pop %v3654
      %v3687 = vtanh.pop %v3655
      %v3688 = vtanh.pop %v3656
      %v3689 = vtanh.pop %v3657
      %v3690 = vtanh.pop %v3658
      %v3691 = vtanh.pop %v3659
      %v3692 = vtanh.pop %v3660
      %v3693 = vtanh.pop %v3661
      %v3694 = vtanh.pop %v3662
      %v3695 = vtanh.pop %v3663
      %v3696 = vtanh.pop %v3664
      %v3697 = vtanh.pop %v3665
      %3730 = vrot.lane.b32.xlu0 %v3666, 32
      %v3731 = vpop.permute.xlu0 %3730
      %3732 = vrot.lane.b32.xlu0 %v3667, 32
      %v3733 = vpop.permute.xlu0 %3732
      %3734 = vrot.lane.b32.xlu0 %v3668, 32
      %v3735 = vpop.permute.xlu0 %3734
      %3736 = vrot.lane.b32.xlu0 %v3669, 32
      %v3737 = vpop.permute.xlu0 %3736
      %3738 = vrot.lane.b32.xlu0 %v3670, 32
      %v3739 = vpop.permute.xlu0 %3738
      %3740 = vrot.lane.b32.xlu0 %v3671, 32
      %v3741 = vpop.permute.xlu0 %3740
      %3742 = vrot.lane.b32.xlu0 %v3672, 32
      %v3743 = vpop.permute.xlu0 %3742
      %3744 = vrot.lane.b32.xlu0 %v3673, 32
      %v3745 = vpop.permute.xlu0 %3744
      %3746 = vrot.lane.b32.xlu0 %v3674, 32
      %v3747 = vpop.permute.xlu0 %3746
      %3748 = vrot.lane.b32.xlu0 %v3675, 32
      %v3749 = vpop.permute.xlu0 %3748
      %3750 = vrot.lane.b32.xlu0 %v3676, 32
      %v3751 = vpop.permute.xlu0 %3750
      %3752 = vrot.lane.b32.xlu0 %v3677, 32
      %v3753 = vpop.permute.xlu0 %3752
      %3754 = vrot.lane.b32.xlu0 %v3678, 32
      %v3755 = vpop.permute.xlu0 %3754
      %3756 = vrot.lane.b32.xlu0 %v3679, 32
      %v3757 = vpop.permute.xlu0 %3756
      %3758 = vrot.lane.b32.xlu0 %v3680, 32
      %v3759 = vpop.permute.xlu0 %3758
      %3760 = vrot.lane.b32.xlu0 %v3681, 32
      %v3761 = vpop.permute.xlu0 %3760
      %3762 = vrot.lane.b32.xlu0 %v3682, 32
      %v3763 = vpop.permute.xlu0 %3762
      %3764 = vrot.lane.b32.xlu0 %v3683, 32
      %v3765 = vpop.permute.xlu0 %3764
      %3766 = vrot.lane.b32.xlu0 %v3684, 32
      %v3767 = vpop.permute.xlu0 %3766
      %3768 = vrot.lane.b32.xlu0 %v3685, 32
      %v3769 = vpop.permute.xlu0 %3768
      %3770 = vrot.lane.b32.xlu0 %v3686, 32
      %v3771 = vpop.permute.xlu0 %3770
      %3772 = vrot.lane.b32.xlu0 %v3687, 32
      %v3773 = vpop.permute.xlu0 %3772
      %3774 = vrot.lane.b32.xlu0 %v3688, 32
      %v3775 = vpop.permute.xlu0 %3774
      %3776 = vrot.lane.b32.xlu0 %v3689, 32
      %v3777 = vpop.permute.xlu0 %3776
      %3778 = vrot.lane.b32.xlu0 %v3690, 32
      %v3779 = vpop.permute.xlu0 %3778
      %3780 = vrot.lane.b32.xlu0 %v3691, 32
      %v3781 = vpop.permute.xlu0 %3780
      %3782 = vrot.lane.b32.xlu0 %v3692, 32
      %v3783 = vpop.permute.xlu0 %3782
      %3784 = vrot.lane.b32.xlu0 %v3693, 32
      %v3785 = vpop.permute.xlu0 %3784
      %3786 = vrot.lane.b32.xlu0 %v3694, 32
      %v3787 = vpop.permute.xlu0 %3786
      %3788 = vrot.lane.b32.xlu0 %v3695, 32
      %v3789 = vpop.permute.xlu0 %3788
      %3790 = vrot.lane.b32.xlu0 %v3696, 32
      %v3791 = vpop.permute.xlu0 %3790
      %3792 = vrot.lane.b32.xlu0 %v3697, 32
      %v3793 = vpop.permute.xlu0 %3792
      %v3826 = vmul.f32 %v3059, %v3731
      %v3827 = vmul.f32 %v3061, %v3733
      %v3828 = vmul.f32 %v3063, %v3735
      %v3829 = vmul.f32 %v3065, %v3737
      %v3830 = vmul.f32 %v3067, %v3739
      %v3831 = vmul.f32 %v3069, %v3741
      %v3832 = vmul.f32 %v3071, %v3743
      %v3833 = vmul.f32 %v3073, %v3745
      %v3834 = vmul.f32 %v3075, %v3747
      %v3835 = vmul.f32 %v3077, %v3749
      %v3836 = vmul.f32 %v3079, %v3751
      %v3837 = vmul.f32 %v3081, %v3753
      %v3838 = vmul.f32 %v3083, %v3755
      %v3839 = vmul.f32 %v3085, %v3757
      %v3840 = vmul.f32 %v3087, %v3759
      %v3841 = vmul.f32 %v3089, %v3761
      %v3842 = vmul.f32 %v3091, %v3763
      %v3843 = vmul.f32 %v3093, %v3765
      %v3844 = vmul.f32 %v3095, %v3767
      %v3845 = vmul.f32 %v3097, %v3769
      %v3846 = vmul.f32 %v3099, %v3771
      %v3847 = vmul.f32 %v3101, %v3773
      %v3848 = vmul.f32 %v3103, %v3775
      %v3849 = vmul.f32 %v3105, %v3777
      %v3850 = vmul.f32 %v3107, %v3779
      %v3851 = vmul.f32 %v3109, %v3781
      %v3852 = vmul.f32 %v3111, %v3783
      %v3853 = vmul.f32 %v3113, %v3785
      %v3854 = vmul.f32 %v3115, %v3787
      %v3855 = vmul.f32 %v3117, %v3789
      %v3856 = vmul.f32 %v3119, %v3791
      %v3857 = vmul.f32 %v3121, %v3793
      %3890 = vrot.lane.b32.xlu0 %v3634, 96
      %v3891 = vpop.permute.xlu0 %3890
      %3892 = vrot.lane.b32.xlu0 %v3635, 96
      %v3893 = vpop.permute.xlu0 %3892
      %3894 = vrot.lane.b32.xlu0 %v3636, 96
      %v3895 = vpop.permute.xlu0 %3894
      %3896 = vrot.lane.b32.xlu0 %v3637, 96
      %v3897 = vpop.permute.xlu0 %3896
      %3898 = vrot.lane.b32.xlu0 %v3638, 96
      %v3899 = vpop.permute.xlu0 %3898
      %3900 = vrot.lane.b32.xlu0 %v3639, 96
      %v3901 = vpop.permute.xlu0 %3900
      %3902 = vrot.lane.b32.xlu0 %v3640, 96
      %v3903 = vpop.permute.xlu0 %3902
      %3904 = vrot.lane.b32.xlu0 %v3641, 96
      %v3905 = vpop.permute.xlu0 %3904
      %3906 = vrot.lane.b32.xlu0 %v3642, 96
      %v3907 = vpop.permute.xlu0 %3906
      %3908 = vrot.lane.b32.xlu0 %v3643, 96
      %v3909 = vpop.permute.xlu0 %3908
      %3910 = vrot.lane.b32.xlu0 %v3644, 96
      %v3911 = vpop.permute.xlu0 %3910
      %3912 = vrot.lane.b32.xlu0 %v3645, 96
      %v3913 = vpop.permute.xlu0 %3912
      %3914 = vrot.lane.b32.xlu0 %v3646, 96
      %v3915 = vpop.permute.xlu0 %3914
      %3916 = vrot.lane.b32.xlu0 %v3647, 96
      %v3917 = vpop.permute.xlu0 %3916
      %3918 = vrot.lane.b32.xlu0 %v3648, 96
      %v3919 = vpop.permute.xlu0 %3918
      %3920 = vrot.lane.b32.xlu0 %v3649, 96
      %v3921 = vpop.permute.xlu0 %3920
      %3922 = vrot.lane.b32.xlu0 %v3650, 96
      %v3923 = vpop.permute.xlu0 %3922
      %3924 = vrot.lane.b32.xlu0 %v3651, 96
      %v3925 = vpop.permute.xlu0 %3924
      %3926 = vrot.lane.b32.xlu0 %v3652, 96
      %v3927 = vpop.permute.xlu0 %3926
      %3928 = vrot.lane.b32.xlu0 %v3653, 96
      %v3929 = vpop.permute.xlu0 %3928
      %3930 = vrot.lane.b32.xlu0 %v3654, 96
      %v3931 = vpop.permute.xlu0 %3930
      %3932 = vrot.lane.b32.xlu0 %v3655, 96
      %v3933 = vpop.permute.xlu0 %3932
      %3934 = vrot.lane.b32.xlu0 %v3656, 96
      %v3935 = vpop.permute.xlu0 %3934
      %3936 = vrot.lane.b32.xlu0 %v3657, 96
      %v3937 = vpop.permute.xlu0 %3936
      %3938 = vrot.lane.b32.xlu0 %v3658, 96
      %v3939 = vpop.permute.xlu0 %3938
      %3940 = vrot.lane.b32.xlu0 %v3659, 96
      %v3941 = vpop.permute.xlu0 %3940
      %3942 = vrot.lane.b32.xlu0 %v3660, 96
      %v3943 = vpop.permute.xlu0 %3942
      %3944 = vrot.lane.b32.xlu0 %v3661, 96
      %v3945 = vpop.permute.xlu0 %3944
      %3946 = vrot.lane.b32.xlu0 %v3662, 96
      %v3947 = vpop.permute.xlu0 %3946
      %3948 = vrot.lane.b32.xlu0 %v3663, 96
      %v3949 = vpop.permute.xlu0 %3948
      %3950 = vrot.lane.b32.xlu0 %v3664, 96
      %v3951 = vpop.permute.xlu0 %3950
      %3952 = vrot.lane.b32.xlu0 %v3665, 96
      %v3953 = vpop.permute.xlu0 %3952
      %vm3986 = vcmask 261120
      %3987 = vst.msk [vmem:[%s246] sm:$0xff] %vm3986, %v3891
      %3988 = vst.msk [vmem:[%s246 + $0x8] sm:$0xff] %vm3986, %v3893
      %3989 = vst.msk [vmem:[%s246 + $0x10] sm:$0xff] %vm3986, %v3895
      %3990 = vst.msk [vmem:[%s246 + $0x18] sm:$0xff] %vm3986, %v3897
      %3991 = vst.msk [vmem:[%s246 + $0x20] sm:$0xff] %vm3986, %v3899
      %3992 = vst.msk [vmem:[%s246 + $0x28] sm:$0xff] %vm3986, %v3901
      %3993 = vst.msk [vmem:[%s246 + $0x30] sm:$0xff] %vm3986, %v3903
      %3994 = vst.msk [vmem:[%s246 + $0x38] sm:$0xff] %vm3986, %v3905
      %3995 = vst.msk [vmem:[%s246 + $0x40] sm:$0xff] %vm3986, %v3907
      %3996 = vst.msk [vmem:[%s246 + $0x48] sm:$0xff] %vm3986, %v3909
      %3997 = vst.msk [vmem:[%s246 + $0x50] sm:$0xff] %vm3986, %v3911
      %3998 = vst.msk [vmem:[%s246 + $0x58] sm:$0xff] %vm3986, %v3913
      %3999 = vst.msk [vmem:[%s246 + $0x60] sm:$0xff] %vm3986, %v3915
      %4000 = vst.msk [vmem:[%s246 + $0x68] sm:$0xff] %vm3986, %v3917
      %4001 = vst.msk [vmem:[%s246 + $0x70] sm:$0xff] %vm3986, %v3919
      %4002 = vst.msk [vmem:[%s246 + $0x78] sm:$0xff] %vm3986, %v3921
      %4003 = vst.msk [vmem:[%s246 + $0x80] sm:$0xff] %vm3986, %v3923
      %4004 = vst.msk [vmem:[%s246 + $0x88] sm:$0xff] %vm3986, %v3925
      %4005 = vst.msk [vmem:[%s246 + $0x90] sm:$0xff] %vm3986, %v3927
      %4006 = vst.msk [vmem:[%s246 + $0x98] sm:$0xff] %vm3986, %v3929
      %4007 = vst.msk [vmem:[%s246 + $0xa0] sm:$0xff] %vm3986, %v3931
      %4008 = vst.msk [vmem:[%s246 + $0xa8] sm:$0xff] %vm3986, %v3933
      %4009 = vst.msk [vmem:[%s246 + $0xb0] sm:$0xff] %vm3986, %v3935
      %4010 = vst.msk [vmem:[%s246 + $0xb8] sm:$0xff] %vm3986, %v3937
      %4011 = vst.msk [vmem:[%s246 + $0xc0] sm:$0xff] %vm3986, %v3939
      %4012 = vst.msk [vmem:[%s246 + $0xc8] sm:$0xff] %vm3986, %v3941
      %4013 = vst.msk [vmem:[%s246 + $0xd0] sm:$0xff] %vm3986, %v3943
      %4014 = vst.msk [vmem:[%s246 + $0xd8] sm:$0xff] %vm3986, %v3945
      %4015 = vst.msk [vmem:[%s246 + $0xe0] sm:$0xff] %vm3986, %v3947
      %4016 = vst.msk [vmem:[%s246 + $0xe8] sm:$0xff] %vm3986, %v3949
      %4017 = vst.msk [vmem:[%s246 + $0xf0] sm:$0xff] %vm3986, %v3951
      %4018 = vst.msk [vmem:[%s246 + $0xf8] sm:$0xff] %vm3986, %v3953
      %v4019 = vpack.c.bf16 %v3827, %v3826
      %v4020 = vpack.c.bf16 %v3829, %v3828
      %v4021 = vpack.c.bf16 %v3831, %v3830
      %v4022 = vpack.c.bf16 %v3833, %v3832
      %v4023 = vpack.c.bf16 %v3835, %v3834
      %v4024 = vpack.c.bf16 %v3837, %v3836
      %v4025 = vpack.c.bf16 %v3839, %v3838
      %v4026 = vpack.c.bf16 %v3841, %v3840
      %v4027 = vpack.c.bf16 %v3843, %v3842
      %v4028 = vpack.c.bf16 %v3845, %v3844
      %v4029 = vpack.c.bf16 %v3847, %v3846
      %v4030 = vpack.c.bf16 %v3849, %v3848
      %v4031 = vpack.c.bf16 %v3851, %v3850
      %v4032 = vpack.c.bf16 %v3853, %v3852
      %v4033 = vpack.c.bf16 %v3855, %v3854
      %v4034 = vpack.c.bf16 %v3857, %v3856
      %v4051 = vunpack.c.l.b16 %v4019
      %v4052 = vunpack.c.h.b16 %v4019
      %v4053 = vunpack.c.l.b16 %v4020
      %v4054 = vunpack.c.h.b16 %v4020
      %v4055 = vunpack.c.l.b16 %v4021
      %v4056 = vunpack.c.h.b16 %v4021
      %v4057 = vunpack.c.l.b16 %v4022
      %v4058 = vunpack.c.h.b16 %v4022
      %v4059 = vunpack.c.l.b16 %v4023
      %v4060 = vunpack.c.h.b16 %v4023
      %v4061 = vunpack.c.l.b16 %v4024
      %v4062 = vunpack.c.h.b16 %v4024
      %v4063 = vunpack.c.l.b16 %v4025
      %v4064 = vunpack.c.h.b16 %v4025
      %v4065 = vunpack.c.l.b16 %v4026
      %v4066 = vunpack.c.h.b16 %v4026
      %v4067 = vunpack.c.l.b16 %v4027
      %v4068 = vunpack.c.h.b16 %v4027
      %v4069 = vunpack.c.l.b16 %v4028
      %v4070 = vunpack.c.h.b16 %v4028
      %v4071 = vunpack.c.l.b16 %v4029
      %v4072 = vunpack.c.h.b16 %v4029
      %v4073 = vunpack.c.l.b16 %v4030
      %v4074 = vunpack.c.h.b16 %v4030
      %v4075 = vunpack.c.l.b16 %v4031
      %v4076 = vunpack.c.h.b16 %v4031
      %v4077 = vunpack.c.l.b16 %v4032
      %v4078 = vunpack.c.h.b16 %v4032
      %v4079 = vunpack.c.l.b16 %v4033
      %v4080 = vunpack.c.h.b16 %v4033
      %v4081 = vunpack.c.l.b16 %v4034
      %v4082 = vunpack.c.h.b16 %v4034
      %v4083 = vpack.c.b16 %v4051, %v4051
      %v4084 = vpack.c.b16 %v4052, %v4052
      %v4085 = vpack.c.b16 %v4053, %v4053
      %v4086 = vpack.c.b16 %v4054, %v4054
      %v4087 = vpack.c.b16 %v4055, %v4055
      %v4088 = vpack.c.b16 %v4056, %v4056
      %v4089 = vpack.c.b16 %v4057, %v4057
      %v4090 = vpack.c.b16 %v4058, %v4058
      %v4091 = vpack.c.b16 %v4059, %v4059
      %v4092 = vpack.c.b16 %v4060, %v4060
      %v4093 = vpack.c.b16 %v4061, %v4061
      %v4094 = vpack.c.b16 %v4062, %v4062
      %v4095 = vpack.c.b16 %v4063, %v4063
      %v4096 = vpack.c.b16 %v4064, %v4064
      %v4097 = vpack.c.b16 %v4065, %v4065
      %v4098 = vpack.c.b16 %v4066, %v4066
      %v4099 = vpack.c.b16 %v4067, %v4067
      %v4100 = vpack.c.b16 %v4068, %v4068
      %v4101 = vpack.c.b16 %v4069, %v4069
      %v4102 = vpack.c.b16 %v4070, %v4070
      %v4103 = vpack.c.b16 %v4071, %v4071
      %v4104 = vpack.c.b16 %v4072, %v4072
      %v4105 = vpack.c.b16 %v4073, %v4073
      %v4106 = vpack.c.b16 %v4074, %v4074
      %v4107 = vpack.c.b16 %v4075, %v4075
      %v4108 = vpack.c.b16 %v4076, %v4076
      %v4109 = vpack.c.b16 %v4077, %v4077
      %v4110 = vpack.c.b16 %v4078, %v4078
      %v4111 = vpack.c.b16 %v4079, %v4079
      %v4112 = vpack.c.b16 %v4080, %v4080
      %v4113 = vpack.c.b16 %v4081, %v4081
      %v4114 = vpack.c.b16 %v4082, %v4082
      %4115 = vrot.lane.b32.xlu0 %v4083, 64
      %v4116 = vpop.permute.xlu0 %4115
      %4117 = vrot.lane.b32.xlu0 %v4084, 64
      %v4118 = vpop.permute.xlu0 %4117
      %4119 = vrot.lane.b32.xlu0 %v4085, 64
      %v4120 = vpop.permute.xlu0 %4119
      %4121 = vrot.lane.b32.xlu0 %v4086, 64
      %v4122 = vpop.permute.xlu0 %4121
      %4123 = vrot.lane.b32.xlu0 %v4087, 64
      %v4124 = vpop.permute.xlu0 %4123
      %4125 = vrot.lane.b32.xlu0 %v4088, 64
      %v4126 = vpop.permute.xlu0 %4125
      %4127 = vrot.lane.b32.xlu0 %v4089, 64
      %v4128 = vpop.permute.xlu0 %4127
      %4129 = vrot.lane.b32.xlu0 %v4090, 64
      %v4130 = vpop.permute.xlu0 %4129
      %4131 = vrot.lane.b32.xlu0 %v4091, 64
      %v4132 = vpop.permute.xlu0 %4131
      %4133 = vrot.lane.b32.xlu0 %v4092, 64
      %v4134 = vpop.permute.xlu0 %4133
      %4135 = vrot.lane.b32.xlu0 %v4093, 64
      %v4136 = vpop.permute.xlu0 %4135
      %4137 = vrot.lane.b32.xlu0 %v4094, 64
      %v4138 = vpop.permute.xlu0 %4137
      %4139 = vrot.lane.b32.xlu0 %v4095, 64
      %v4140 = vpop.permute.xlu0 %4139
      %4141 = vrot.lane.b32.xlu0 %v4096, 64
      %v4142 = vpop.permute.xlu0 %4141
      %4143 = vrot.lane.b32.xlu0 %v4097, 64
      %v4144 = vpop.permute.xlu0 %4143
      %4145 = vrot.lane.b32.xlu0 %v4098, 64
      %v4146 = vpop.permute.xlu0 %4145
      %4147 = vrot.lane.b32.xlu0 %v4099, 64
      %v4148 = vpop.permute.xlu0 %4147
      %4149 = vrot.lane.b32.xlu0 %v4100, 64
      %v4150 = vpop.permute.xlu0 %4149
      %4151 = vrot.lane.b32.xlu0 %v4101, 64
      %v4152 = vpop.permute.xlu0 %4151
      %4153 = vrot.lane.b32.xlu0 %v4102, 64
      %v4154 = vpop.permute.xlu0 %4153
      %4155 = vrot.lane.b32.xlu0 %v4103, 64
      %v4156 = vpop.permute.xlu0 %4155
      %4157 = vrot.lane.b32.xlu0 %v4104, 64
      %v4158 = vpop.permute.xlu0 %4157
      %4159 = vrot.lane.b32.xlu0 %v4105, 64
      %v4160 = vpop.permute.xlu0 %4159
      %4161 = vrot.lane.b32.xlu0 %v4106, 64
      %v4162 = vpop.permute.xlu0 %4161
      %4163 = vrot.lane.b32.xlu0 %v4107, 64
      %v4164 = vpop.permute.xlu0 %4163
      %4165 = vrot.lane.b32.xlu0 %v4108, 64
      %v4166 = vpop.permute.xlu0 %4165
      %4167 = vrot.lane.b32.xlu0 %v4109, 64
      %v4168 = vpop.permute.xlu0 %4167
      %4169 = vrot.lane.b32.xlu0 %v4110, 64
      %v4170 = vpop.permute.xlu0 %4169
      %4171 = vrot.lane.b32.xlu0 %v4111, 64
      %v4172 = vpop.permute.xlu0 %4171
      %4173 = vrot.lane.b32.xlu0 %v4112, 64
      %v4174 = vpop.permute.xlu0 %4173
      %4175 = vrot.lane.b32.xlu0 %v4113, 64
      %v4176 = vpop.permute.xlu0 %4175
      %4177 = vrot.lane.b32.xlu0 %v4114, 64
      %v4178 = vpop.permute.xlu0 %4177
      %4211 = vst.msk [vmem:[%s241] sm:$0xf] %vm703, %v4116
      %4212 = vst.msk [vmem:[%s241 + $0x4] sm:$0xf] %vm703, %v4118
      %4213 = vst.msk [vmem:[%s241 + $0x8] sm:$0xf] %vm703, %v4120
      %4214 = vst.msk [vmem:[%s241 + $0xc] sm:$0xf] %vm703, %v4122
      %4215 = vst.msk [vmem:[%s241 + $0x10] sm:$0xf] %vm703, %v4124
      %4216 = vst.msk [vmem:[%s241 + $0x14] sm:$0xf] %vm703, %v4126
      %4217 = vst.msk [vmem:[%s241 + $0x18] sm:$0xf] %vm703, %v4128
      %4218 = vst.msk [vmem:[%s241 + $0x1c] sm:$0xf] %vm703, %v4130
      %4219 = vst.msk [vmem:[%s241 + $0x20] sm:$0xf] %vm703, %v4132
      %4220 = vst.msk [vmem:[%s241 + $0x24] sm:$0xf] %vm703, %v4134
      %4221 = vst.msk [vmem:[%s241 + $0x28] sm:$0xf] %vm703, %v4136
      %4222 = vst.msk [vmem:[%s241 + $0x2c] sm:$0xf] %vm703, %v4138
      %4223 = vst.msk [vmem:[%s241 + $0x30] sm:$0xf] %vm703, %v4140
      %4224 = vst.msk [vmem:[%s241 + $0x34] sm:$0xf] %vm703, %v4142
      %4225 = vst.msk [vmem:[%s241 + $0x38] sm:$0xf] %vm703, %v4144
      %4226 = vst.msk [vmem:[%s241 + $0x3c] sm:$0xf] %vm703, %v4146
      %4227 = vst.msk [vmem:[%s241 + $0x40] sm:$0xf] %vm703, %v4148
      %4228 = vst.msk [vmem:[%s241 + $0x44] sm:$0xf] %vm703, %v4150
      %4229 = vst.msk [vmem:[%s241 + $0x48] sm:$0xf] %vm703, %v4152
      %4230 = vst.msk [vmem:[%s241 + $0x4c] sm:$0xf] %vm703, %v4154
      %4231 = vst.msk [vmem:[%s241 + $0x50] sm:$0xf] %vm703, %v4156
      %4232 = vst.msk [vmem:[%s241 + $0x54] sm:$0xf] %vm703, %v4158
      %4233 = vst.msk [vmem:[%s241 + $0x58] sm:$0xf] %vm703, %v4160
      %4234 = vst.msk [vmem:[%s241 + $0x5c] sm:$0xf] %vm703, %v4162
      %4235 = vst.msk [vmem:[%s241 + $0x60] sm:$0xf] %vm703, %v4164
      %4236 = vst.msk [vmem:[%s241 + $0x64] sm:$0xf] %vm703, %v4166
      %4237 = vst.msk [vmem:[%s241 + $0x68] sm:$0xf] %vm703, %v4168
      %4238 = vst.msk [vmem:[%s241 + $0x6c] sm:$0xf] %vm703, %v4170
      %4239 = vst.msk [vmem:[%s241 + $0x70] sm:$0xf] %vm703, %v4172
      %4240 = vst.msk [vmem:[%s241 + $0x74] sm:$0xf] %vm703, %v4174
      %4241 = vst.msk [vmem:[%s241 + $0x78] sm:$0xf] %vm703, %v4176
      %4242 = vst.msk [vmem:[%s241 + $0x7c] sm:$0xf] %vm703, %v4178
      %v4244 = vshrl.u32 %v4083, 16
      %v4246 = vrot.slane %v4244, 7
      %v4247 = vshll.u32 %v4083, 16
      %v4249 = vor.u32 %v4246, %v4247
      %v4250 = vrot.slane %v4246, 4
      %v4252 = vshrl.u32 %v4084, 16
      %v4254 = vrot.slane %v4252, 7
      %v4255 = vshll.u32 %v4084, 16
      %v4257 = vor.u32 %v4254, %v4255
      %v4258 = vsel %vm375, %v4250, %v4257
      %v4259 = vrot.slane %v4254, 4
      %v4261 = vshrl.u32 %v4085, 16
      %v4263 = vrot.slane %v4261, 7
      %v4264 = vshll.u32 %v4085, 16
      %v4266 = vor.u32 %v4263, %v4264
      %v4267 = vrot.slane %v4263, 4
      %v4269 = vshrl.u32 %v4086, 16
      %v4271 = vrot.slane %v4269, 7
      %v4272 = vshll.u32 %v4086, 16
      %v4274 = vor.u32 %v4271, %v4272
      %v4275 = vsel %vm375, %v4267, %v4274
      %v4276 = vrot.slane %v4271, 4
      %v4278 = vshrl.u32 %v4087, 16
      %v4280 = vrot.slane %v4278, 7
      %v4281 = vshll.u32 %v4087, 16
      %v4283 = vor.u32 %v4280, %v4281
      %v4284 = vrot.slane %v4280, 4
      %v4286 = vshrl.u32 %v4088, 16
      %v4288 = vrot.slane %v4286, 7
      %v4289 = vshll.u32 %v4088, 16
      %v4291 = vor.u32 %v4288, %v4289
      %v4292 = vsel %vm375, %v4284, %v4291
      %v4293 = vrot.slane %v4288, 4
      %v4295 = vshrl.u32 %v4089, 16
      %v4297 = vrot.slane %v4295, 7
      %v4298 = vshll.u32 %v4089, 16
      %v4300 = vor.u32 %v4297, %v4298
      %v4301 = vrot.slane %v4297, 4
      %v4303 = vshrl.u32 %v4090, 16
      %v4305 = vrot.slane %v4303, 7
      %v4306 = vshll.u32 %v4090, 16
      %v4308 = vor.u32 %v4305, %v4306
      %v4309 = vsel %vm375, %v4301, %v4308
      %v4310 = vrot.slane %v4305, 4
      %v4312 = vshrl.u32 %v4091, 16
      %v4314 = vrot.slane %v4312, 7
      %v4315 = vshll.u32 %v4091, 16
      %v4317 = vor.u32 %v4314, %v4315
      %v4318 = vrot.slane %v4314, 4
      %v4320 = vshrl.u32 %v4092, 16
      %v4322 = vrot.slane %v4320, 7
      %v4323 = vshll.u32 %v4092, 16
      %v4325 = vor.u32 %v4322, %v4323
      %v4326 = vsel %vm375, %v4318, %v4325
      %v4327 = vrot.slane %v4322, 4
      %v4329 = vshrl.u32 %v4093, 16
      %v4331 = vrot.slane %v4329, 7
      %v4332 = vshll.u32 %v4093, 16
      %v4334 = vor.u32 %v4331, %v4332
      %v4335 = vrot.slane %v4331, 4
      %v4337 = vshrl.u32 %v4094, 16
      %v4339 = vrot.slane %v4337, 7
      %v4340 = vshll.u32 %v4094, 16
      %v4342 = vor.u32 %v4339, %v4340
      %v4343 = vsel %vm375, %v4335, %v4342
      %v4344 = vrot.slane %v4339, 4
      %v4346 = vshrl.u32 %v4095, 16
      %v4348 = vrot.slane %v4346, 7
      %v4349 = vshll.u32 %v4095, 16
      %v4351 = vor.u32 %v4348, %v4349
      %v4352 = vrot.slane %v4348, 4
      %v4354 = vshrl.u32 %v4096, 16
      %v4356 = vrot.slane %v4354, 7
      %v4357 = vshll.u32 %v4096, 16
      %v4359 = vor.u32 %v4356, %v4357
      %v4360 = vsel %vm375, %v4352, %v4359
      %v4361 = vrot.slane %v4356, 4
      %v4363 = vshrl.u32 %v4097, 16
      %v4365 = vrot.slane %v4363, 7
      %v4366 = vshll.u32 %v4097, 16
      %v4368 = vor.u32 %v4365, %v4366
      %v4369 = vrot.slane %v4365, 4
      %v4371 = vshrl.u32 %v4098, 16
      %v4373 = vrot.slane %v4371, 7
      %v4374 = vshll.u32 %v4098, 16
      %v4376 = vor.u32 %v4373, %v4374
      %v4377 = vsel %vm375, %v4369, %v4376
      %v4378 = vrot.slane %v4373, 4
      %v4380 = vshrl.u32 %v4099, 16
      %v4382 = vrot.slane %v4380, 7
      %v4383 = vshll.u32 %v4099, 16
      %v4385 = vor.u32 %v4382, %v4383
      %v4386 = vrot.slane %v4382, 4
      %v4388 = vshrl.u32 %v4100, 16
      %v4390 = vrot.slane %v4388, 7
      %v4391 = vshll.u32 %v4100, 16
      %v4393 = vor.u32 %v4390, %v4391
      %v4394 = vsel %vm375, %v4386, %v4393
      %v4395 = vrot.slane %v4390, 4
      %v4397 = vshrl.u32 %v4101, 16
      %v4399 = vrot.slane %v4397, 7
      %v4400 = vshll.u32 %v4101, 16
      %v4402 = vor.u32 %v4399, %v4400
      %v4403 = vrot.slane %v4399, 4
      %v4405 = vshrl.u32 %v4102, 16
      %v4407 = vrot.slane %v4405, 7
      %v4408 = vshll.u32 %v4102, 16
      %v4410 = vor.u32 %v4407, %v4408
      %v4411 = vsel %vm375, %v4403, %v4410
      %v4412 = vrot.slane %v4407, 4
      %v4414 = vshrl.u32 %v4103, 16
      %v4416 = vrot.slane %v4414, 7
      %v4417 = vshll.u32 %v4103, 16
      %v4419 = vor.u32 %v4416, %v4417
      %v4420 = vrot.slane %v4416, 4
      %v4422 = vshrl.u32 %v4104, 16
      %v4424 = vrot.slane %v4422, 7
      %v4425 = vshll.u32 %v4104, 16
      %v4427 = vor.u32 %v4424, %v4425
      %v4428 = vsel %vm375, %v4420, %v4427
      %v4429 = vrot.slane %v4424, 4
      %v4431 = vshrl.u32 %v4105, 16
      %v4433 = vrot.slane %v4431, 7
      %v4434 = vshll.u32 %v4105, 16
      %v4436 = vor.u32 %v4433, %v4434
      %v4437 = vrot.slane %v4433, 4
      %v4439 = vshrl.u32 %v4106, 16
      %v4441 = vrot.slane %v4439, 7
      %v4442 = vshll.u32 %v4106, 16
      %v4444 = vor.u32 %v4441, %v4442
      %v4445 = vsel %vm375, %v4437, %v4444
      %v4446 = vrot.slane %v4441, 4
      %v4448 = vshrl.u32 %v4107, 16
      %v4450 = vrot.slane %v4448, 7
      %v4451 = vshll.u32 %v4107, 16
      %v4453 = vor.u32 %v4450, %v4451
      %v4454 = vrot.slane %v4450, 4
      %v4456 = vshrl.u32 %v4108, 16
      %v4458 = vrot.slane %v4456, 7
      %v4459 = vshll.u32 %v4108, 16
      %v4461 = vor.u32 %v4458, %v4459
      %v4462 = vsel %vm375, %v4454, %v4461
      %v4463 = vrot.slane %v4458, 4
      %v4465 = vshrl.u32 %v4109, 16
      %v4467 = vrot.slane %v4465, 7
      %v4468 = vshll.u32 %v4109, 16
      %v4470 = vor.u32 %v4467, %v4468
      %v4471 = vrot.slane %v4467, 4
      %v4473 = vshrl.u32 %v4110, 16
      %v4475 = vrot.slane %v4473, 7
      %v4476 = vshll.u32 %v4110, 16
      %v4478 = vor.u32 %v4475, %v4476
      %v4479 = vsel %vm375, %v4471, %v4478
      %v4480 = vrot.slane %v4475, 4
      %v4482 = vshrl.u32 %v4111, 16
      %v4484 = vrot.slane %v4482, 7
      %v4485 = vshll.u32 %v4111, 16
      %v4487 = vor.u32 %v4484, %v4485
      %v4488 = vrot.slane %v4484, 4
      %v4490 = vshrl.u32 %v4112, 16
      %v4492 = vrot.slane %v4490, 7
      %v4493 = vshll.u32 %v4112, 16
      %v4495 = vor.u32 %v4492, %v4493
      %v4496 = vsel %vm375, %v4488, %v4495
      %v4497 = vrot.slane %v4492, 4
      %v4499 = vshrl.u32 %v4113, 16
      %v4501 = vrot.slane %v4499, 7
      %v4502 = vshll.u32 %v4113, 16
      %v4504 = vor.u32 %v4501, %v4502
      %v4505 = vrot.slane %v4501, 4
      %v4507 = vshrl.u32 %v4114, 16
      %v4509 = vrot.slane %v4507, 7
      %v4510 = vshll.u32 %v4114, 16
      %v4512 = vor.u32 %v4509, %v4510
      %v4513 = vsel %vm375, %v4505, %v4512
      %v4514 = vrot.slane %v4509, 4
      %4515 = vrot.lane.b32.xlu0 %v4249, 96
      %v4516 = vpop.permute.xlu0 %4515
      %4517 = vrot.lane.b32.xlu0 %v4258, 96
      %v4518 = vpop.permute.xlu0 %4517
      %4519 = vrot.lane.b32.xlu0 %v4259, 96
      %v4520 = vpop.permute.xlu0 %4519
      %4521 = vrot.lane.b32.xlu0 %v4266, 96
      %v4522 = vpop.permute.xlu0 %4521
      %4523 = vrot.lane.b32.xlu0 %v4275, 96
      %v4524 = vpop.permute.xlu0 %4523
      %4525 = vrot.lane.b32.xlu0 %v4276, 96
      %v4526 = vpop.permute.xlu0 %4525
      %4527 = vrot.lane.b32.xlu0 %v4283, 96
      %v4528 = vpop.permute.xlu0 %4527
      %4529 = vrot.lane.b32.xlu0 %v4292, 96
      %v4530 = vpop.permute.xlu0 %4529
      %4531 = vrot.lane.b32.xlu0 %v4293, 96
      %v4532 = vpop.permute.xlu0 %4531
      %4533 = vrot.lane.b32.xlu0 %v4300, 96
      %v4534 = vpop.permute.xlu0 %4533
      %4535 = vrot.lane.b32.xlu0 %v4309, 96
      %v4536 = vpop.permute.xlu0 %4535
      %4537 = vrot.lane.b32.xlu0 %v4310, 96
      %v4538 = vpop.permute.xlu0 %4537
      %4539 = vrot.lane.b32.xlu0 %v4317, 96
      %v4540 = vpop.permute.xlu0 %4539
      %4541 = vrot.lane.b32.xlu0 %v4326, 96
      %v4542 = vpop.permute.xlu0 %4541
      %4543 = vrot.lane.b32.xlu0 %v4327, 96
      %v4544 = vpop.permute.xlu0 %4543
      %4545 = vrot.lane.b32.xlu0 %v4334, 96
      %v4546 = vpop.permute.xlu0 %4545
      %4547 = vrot.lane.b32.xlu0 %v4343, 96
      %v4548 = vpop.permute.xlu0 %4547
      %4549 = vrot.lane.b32.xlu0 %v4344, 96
      %v4550 = vpop.permute.xlu0 %4549
      %4551 = vrot.lane.b32.xlu0 %v4351, 96
      %v4552 = vpop.permute.xlu0 %4551
      %4553 = vrot.lane.b32.xlu0 %v4360, 96
      %v4554 = vpop.permute.xlu0 %4553
      %4555 = vrot.lane.b32.xlu0 %v4361, 96
      %v4556 = vpop.permute.xlu0 %4555
      %4557 = vrot.lane.b32.xlu0 %v4368, 96
      %v4558 = vpop.permute.xlu0 %4557
      %4559 = vrot.lane.b32.xlu0 %v4377, 96
      %v4560 = vpop.permute.xlu0 %4559
      %4561 = vrot.lane.b32.xlu0 %v4378, 96
      %v4562 = vpop.permute.xlu0 %4561
      %4563 = vrot.lane.b32.xlu0 %v4385, 96
      %v4564 = vpop.permute.xlu0 %4563
      %4565 = vrot.lane.b32.xlu0 %v4394, 96
      %v4566 = vpop.permute.xlu0 %4565
      %4567 = vrot.lane.b32.xlu0 %v4395, 96
      %v4568 = vpop.permute.xlu0 %4567
      %4569 = vrot.lane.b32.xlu0 %v4402, 96
      %v4570 = vpop.permute.xlu0 %4569
      %4571 = vrot.lane.b32.xlu0 %v4411, 96
      %v4572 = vpop.permute.xlu0 %4571
      %4573 = vrot.lane.b32.xlu0 %v4412, 96
      %v4574 = vpop.permute.xlu0 %4573
      %4575 = vrot.lane.b32.xlu0 %v4419, 96
      %v4576 = vpop.permute.xlu0 %4575
      %4577 = vrot.lane.b32.xlu0 %v4428, 96
      %v4578 = vpop.permute.xlu0 %4577
      %4579 = vrot.lane.b32.xlu0 %v4429, 96
      %v4580 = vpop.permute.xlu0 %4579
      %4581 = vrot.lane.b32.xlu0 %v4436, 96
      %v4582 = vpop.permute.xlu0 %4581
      %4583 = vrot.lane.b32.xlu0 %v4445, 96
      %v4584 = vpop.permute.xlu0 %4583
      %4585 = vrot.lane.b32.xlu0 %v4446, 96
      %v4586 = vpop.permute.xlu0 %4585
      %4587 = vrot.lane.b32.xlu0 %v4453, 96
      %v4588 = vpop.permute.xlu0 %4587
      %4589 = vrot.lane.b32.xlu0 %v4462, 96
      %v4590 = vpop.permute.xlu0 %4589
      %4591 = vrot.lane.b32.xlu0 %v4463, 96
      %v4592 = vpop.permute.xlu0 %4591
      %4593 = vrot.lane.b32.xlu0 %v4470, 96
      %v4594 = vpop.permute.xlu0 %4593
      %4595 = vrot.lane.b32.xlu0 %v4479, 96
      %v4596 = vpop.permute.xlu0 %4595
      %4597 = vrot.lane.b32.xlu0 %v4480, 96
      %v4598 = vpop.permute.xlu0 %4597
      %4599 = vrot.lane.b32.xlu0 %v4487, 96
      %v4600 = vpop.permute.xlu0 %4599
      %4601 = vrot.lane.b32.xlu0 %v4496, 96
      %v4602 = vpop.permute.xlu0 %4601
      %4603 = vrot.lane.b32.xlu0 %v4497, 96
      %v4604 = vpop.permute.xlu0 %4603
      %4605 = vrot.lane.b32.xlu0 %v4504, 96
      %v4606 = vpop.permute.xlu0 %4605
      %4607 = vrot.lane.b32.xlu0 %v4513, 96
      %v4608 = vpop.permute.xlu0 %4607
      %4609 = vrot.lane.b32.xlu0 %v4514, 96
      %v4610 = vpop.permute.xlu0 %4609
      %vm4659 = vcmask 519424
      %vm4660 = vmand %vm4659, %vm698
      %v4661 = vld [vmem:[%s696] sm:$0xf]
      %v4662 = vsel %vm4660, %v4516, %v4661
      %4663 = vst [vmem:[%s696] sm:$0xf] %v4662
      %vm4664 = vcmask 519424
      %4665 = vst.msk [vmem:[%s696 + $0x4] sm:$0xf] %vm4664, %v4518
      %vm4666 = vcmask 516352
      %vm4667 = vmand %vm4666, %vm373
      %v4668 = vld [vmem:[%s696 + $0x8] sm:$0x1]
      %v4669 = vsel %vm4667, %v4520, %v4668
      %4670 = vst [vmem:[%s696 + $0x8] sm:$0x1] %v4669
      %v4671 = vld [vmem:[%s696 + $0xc] sm:$0xf]
      %v4672 = vsel %vm4660, %v4522, %v4671
      %4673 = vst [vmem:[%s696 + $0xc] sm:$0xf] %v4672
      %4674 = vst.msk [vmem:[%s696 + $0x10] sm:$0xf] %vm4664, %v4524
      %v4675 = vld [vmem:[%s696 + $0x14] sm:$0x1]
      %v4676 = vsel %vm4667, %v4526, %v4675
      %4677 = vst [vmem:[%s696 + $0x14] sm:$0x1] %v4676
      %v4678 = vld [vmem:[%s696 + $0x18] sm:$0xf]
      %v4679 = vsel %vm4660, %v4528, %v4678
      %4680 = vst [vmem:[%s696 + $0x18] sm:$0xf] %v4679
      %4681 = vst.msk [vmem:[%s696 + $0x1c] sm:$0xf] %vm4664, %v4530
      %v4682 = vld [vmem:[%s696 + $0x20] sm:$0x1]
      %v4683 = vsel %vm4667, %v4532, %v4682
      %4684 = vst [vmem:[%s696 + $0x20] sm:$0x1] %v4683
      %v4685 = vld [vmem:[%s696 + $0x24] sm:$0xf]
      %v4686 = vsel %vm4660, %v4534, %v4685
      %4687 = vst [vmem:[%s696 + $0x24] sm:$0xf] %v4686
      %4688 = vst.msk [vmem:[%s696 + $0x28] sm:$0xf] %vm4664, %v4536
      %v4689 = vld [vmem:[%s696 + $0x2c] sm:$0x1]
      %v4690 = vsel %vm4667, %v4538, %v4689
      %4691 = vst [vmem:[%s696 + $0x2c] sm:$0x1] %v4690
      %v4692 = vld [vmem:[%s696 + $0x30] sm:$0xf]
      %v4693 = vsel %vm4660, %v4540, %v4692
      %4694 = vst [vmem:[%s696 + $0x30] sm:$0xf] %v4693
      %4695 = vst.msk [vmem:[%s696 + $0x34] sm:$0xf] %vm4664, %v4542
      %v4696 = vld [vmem:[%s696 + $0x38] sm:$0x1]
      %v4697 = vsel %vm4667, %v4544, %v4696
      %4698 = vst [vmem:[%s696 + $0x38] sm:$0x1] %v4697
      %v4699 = vld [vmem:[%s696 + $0x3c] sm:$0xf]
      %v4700 = vsel %vm4660, %v4546, %v4699
      %4701 = vst [vmem:[%s696 + $0x3c] sm:$0xf] %v4700
      %4702 = vst.msk [vmem:[%s696 + $0x40] sm:$0xf] %vm4664, %v4548
      %v4703 = vld [vmem:[%s696 + $0x44] sm:$0x1]
      %v4704 = vsel %vm4667, %v4550, %v4703
      %4705 = vst [vmem:[%s696 + $0x44] sm:$0x1] %v4704
      %v4706 = vld [vmem:[%s696 + $0x48] sm:$0xf]
      %v4707 = vsel %vm4660, %v4552, %v4706
      %4708 = vst [vmem:[%s696 + $0x48] sm:$0xf] %v4707
      %4709 = vst.msk [vmem:[%s696 + $0x4c] sm:$0xf] %vm4664, %v4554
      %v4710 = vld [vmem:[%s696 + $0x50] sm:$0x1]
      %v4711 = vsel %vm4667, %v4556, %v4710
      %4712 = vst [vmem:[%s696 + $0x50] sm:$0x1] %v4711
      %v4713 = vld [vmem:[%s696 + $0x54] sm:$0xf]
      %v4714 = vsel %vm4660, %v4558, %v4713
      %4715 = vst [vmem:[%s696 + $0x54] sm:$0xf] %v4714
      %4716 = vst.msk [vmem:[%s696 + $0x58] sm:$0xf] %vm4664, %v4560
      %v4717 = vld [vmem:[%s696 + $0x5c] sm:$0x1]
      %v4718 = vsel %vm4667, %v4562, %v4717
      %4719 = vst [vmem:[%s696 + $0x5c] sm:$0x1] %v4718
      %v4720 = vld [vmem:[%s696 + $0x60] sm:$0xf]
      %v4721 = vsel %vm4660, %v4564, %v4720
      %4722 = vst [vmem:[%s696 + $0x60] sm:$0xf] %v4721
      %4723 = vst.msk [vmem:[%s696 + $0x64] sm:$0xf] %vm4664, %v4566
      %v4724 = vld [vmem:[%s696 + $0x68] sm:$0x1]
      %v4725 = vsel %vm4667, %v4568, %v4724
      %4726 = vst [vmem:[%s696 + $0x68] sm:$0x1] %v4725
      %v4727 = vld [vmem:[%s696 + $0x6c] sm:$0xf]
      %v4728 = vsel %vm4660, %v4570, %v4727
      %4729 = vst [vmem:[%s696 + $0x6c] sm:$0xf] %v4728
      %4730 = vst.msk [vmem:[%s696 + $0x70] sm:$0xf] %vm4664, %v4572
      %v4731 = vld [vmem:[%s696 + $0x74] sm:$0x1]
      %v4732 = vsel %vm4667, %v4574, %v4731
      %4733 = vst [vmem:[%s696 + $0x74] sm:$0x1] %v4732
      %v4734 = vld [vmem:[%s696 + $0x78] sm:$0xf]
      %v4735 = vsel %vm4660, %v4576, %v4734
      %4736 = vst [vmem:[%s696 + $0x78] sm:$0xf] %v4735
      %4737 = vst.msk [vmem:[%s696 + $0x7c] sm:$0xf] %vm4664, %v4578
      %v4738 = vld [vmem:[%s696 + $0x80] sm:$0x1]
      %v4739 = vsel %vm4667, %v4580, %v4738
      %4740 = vst [vmem:[%s696 + $0x80] sm:$0x1] %v4739
      %v4741 = vld [vmem:[%s696 + $0x84] sm:$0xf]
      %v4742 = vsel %vm4660, %v4582, %v4741
      %4743 = vst [vmem:[%s696 + $0x84] sm:$0xf] %v4742
      %4744 = vst.msk [vmem:[%s696 + $0x88] sm:$0xf] %vm4664, %v4584
      %v4745 = vld [vmem:[%s696 + $0x8c] sm:$0x1]
      %v4746 = vsel %vm4667, %v4586, %v4745
      %4747 = vst [vmem:[%s696 + $0x8c] sm:$0x1] %v4746
      %v4748 = vld [vmem:[%s696 + $0x90] sm:$0xf]
      %v4749 = vsel %vm4660, %v4588, %v4748
      %4750 = vst [vmem:[%s696 + $0x90] sm:$0xf] %v4749
      %4751 = vst.msk [vmem:[%s696 + $0x94] sm:$0xf] %vm4664, %v4590
      %v4752 = vld [vmem:[%s696 + $0x98] sm:$0x1]
      %v4753 = vsel %vm4667, %v4592, %v4752
      %4754 = vst [vmem:[%s696 + $0x98] sm:$0x1] %v4753
      %v4755 = vld [vmem:[%s696 + $0x9c] sm:$0xf]
      %v4756 = vsel %vm4660, %v4594, %v4755
      %4757 = vst [vmem:[%s696 + $0x9c] sm:$0xf] %v4756
      %4758 = vst.msk [vmem:[%s696 + $0xa0] sm:$0xf] %vm4664, %v4596
      %v4759 = vld [vmem:[%s696 + $0xa4] sm:$0x1]
      %v4760 = vsel %vm4667, %v4598, %v4759
      %4761 = vst [vmem:[%s696 + $0xa4] sm:$0x1] %v4760
      %v4762 = vld [vmem:[%s696 + $0xa8] sm:$0xf]
      %v4763 = vsel %vm4660, %v4600, %v4762
      %4764 = vst [vmem:[%s696 + $0xa8] sm:$0xf] %v4763
      %4765 = vst.msk [vmem:[%s696 + $0xac] sm:$0xf] %vm4664, %v4602
      %v4766 = vld [vmem:[%s696 + $0xb0] sm:$0x1]
      %v4767 = vsel %vm4667, %v4604, %v4766
      %4768 = vst [vmem:[%s696 + $0xb0] sm:$0x1] %v4767
      %v4769 = vld [vmem:[%s696 + $0xb4] sm:$0xf]
      %v4770 = vsel %vm4660, %v4606, %v4769
      %4771 = vst [vmem:[%s696 + $0xb4] sm:$0xf] %v4770
      %4772 = vst.msk [vmem:[%s696 + $0xb8] sm:$0xf] %vm4664, %v4608
      %v4773 = vld [vmem:[%s696 + $0xbc] sm:$0x1]
      %v4774 = vsel %vm4667, %v4610, %v4773
      %4775 = vst [vmem:[%s696 + $0xbc] sm:$0x1] %v4774
      %p4776 = scmp.lt.s32.totalorder %s21, 7
      %s4777 = scalar_select %p4776, %s21, 7
      %p4778 = scmp.lt.s32.totalorder %s20, 1
      %s4779 = scalar_select %p4778, %s20, 1
      %s4780 = smul.addr %s4779, 32
      %s4781 = smul.addr %s4777, 64
      %s4782 = sadd.s32 %s4780, %s4781
      %s4783 = smul.addr %s4782, 4
      %s4784 = scalar_lea.vmem %s3, %s4783
      %p4785 = scmp.lt.s32.totalorder %s20, 1
      %s4786 = scalar_select %p4785, %s20, 1
      %s4787 = smul.addr %s4786, 32
      %s4788 = smul.addr %s4787, 8
      %s4789 = scalar_lea.vmem %s4, %s4788
      // Predicated region
      $region37: #{_lambda_.3} parent=31 // pred_check
        %p4790 = pneg %p118
      $region38: #{_lambda_.3} parent=31 // pred_check_branch
        %4792 = sbr.rel (%p4790) target = $region40
      $region39: #{_lambda_.3} parent=31 // pred_region
        _
      $region40: #{_lambda_.3} parent=31 // pred_fallthru
        _
      // Predicated region
      $region41: #{_lambda_.3} parent=31 // pred_check
        %p4793 = pneg %p144
      $region42: #{_lambda_.3} parent=31 // pred_check_branch
        %4795 = sbr.rel (%p4793) target = $region44
      $region43: #{_lambda_.3} parent=31 // pred_region
        _
      $region44: #{_lambda_.3} parent=31 // pred_fallthru
        _
    $region32: #{_lambda_.3} parent=5 // pred_fallthru
      _
    %p4796 = scmp.le.s32.totalorder 2, %s11
    // Predicated region
    $region45: #{_lambda_.3} parent=5 // pred_check
      %p4797 = pneg %p4796
    $region46: #{_lambda_.3} parent=5 // pred_check_branch
      %4799 = sbr.rel (%p4797) target = $region48
    $region47: #{_lambda_.3} parent=5 // pred_region
      %s4800 = ssub.s32 %s11, 2
      // Predicated region
      $region49: #{_lambda_.3} parent=47 // pred_check
        %p4801 = pneg %p124
      $region50: #{_lambda_.3} parent=47 // pred_check_branch
        %4803 = sbr.rel (%p4801) target = $region52
      $region51: #{_lambda_.3} parent=47 // pred_region
        %p4804 = scmp.lt.s32.totalorder %s23, 7
        %s4805 = scalar_select %p4804, %s23, 7
        %p4806 = scmp.lt.s32.totalorder %s22, 1
        %s4807 = scalar_select %p4806, %s22, 1
        %s4808 = smul.addr %s4807, 32
        %s4809 = smul.addr %s4805, 64
        %s4810 = sadd.s32 %s4808, %s4809
        %s4811 = smul.addr %s4810, 4
        %s4812 = scalar_lea.vmem %s3, %s4811
      $region52: #{_lambda_.3} parent=47 // pred_fallthru
        _
      // Predicated region
      $region53: #{_lambda_.3} parent=47 // pred_check
        %p4813 = pneg %p150
      $region54: #{_lambda_.3} parent=47 // pred_check_branch
        %4815 = sbr.rel (%p4813) target = $region56
      $region55: #{_lambda_.3} parent=47 // pred_region
        %p4816 = scmp.lt.s32.totalorder %s22, 1
        %s4817 = scalar_select %p4816, %s22, 1
        %s4818 = smul.addr %s4817, 32
        %s4819 = smul.addr %s4818, 8
        %s4820 = scalar_lea.vmem %s4, %s4819
      $region56: #{_lambda_.3} parent=47 // pred_fallthru
        _
    $region48: #{_lambda_.3} parent=5 // pred_fallthru
      _
  $region6: #{_lambda_.3} parent=0 // loop_footer
    %s15 = sadd.s32 1, %s11
  $region7: #{_lambda_.3} parent=0 // loop_footer_branch
    %10 = sbr.rel target = $region3
  $region8: #{_lambda_.3} parent=0 // loop_exit
    _

</llo_original>
